<compile_context>
chip_gen: v5e
topology: v5e:2x2
jax: 0.10.0
libtpu: 0.0.40
codegen_flags: <defaults>
</compile_context>

<pallas_src>
import jax
import jax.numpy as jnp
from jax.experimental import pallas as pl
from jax.experimental.pallas import tpu as pltpu

LEAK = 0.2  # LeakyReLU negative slope


def _leaky(y):
    # max(y, a*y) == LeakyReLU(a) for 0 < a < 1; one VALU op fewer than where().
    return jnp.maximum(y, LEAK * y)


def _round_up(n, m):
    return (n + m - 1) // m * m


# ----------------------------- Pallas kernel ------------------------------ #

def xz_disc_kernel(x_ref, z_ref,
                   wx1, bx1, wx2, bx2, wx3, bx3, wx4, bx4,
                   wz1, bz1, wz2, bz2,
                   wd1, bd1, wd2_row, bd2,
                   out_ref, hcat_ref):
    def lin(h_bf16, w_ref, b_ref):
        # bf16 x bf16 matmul on the MXU, f32 accumulation; bias + LeakyReLU in f32.
        y = jnp.dot(h_bf16, w_ref[...], preferred_element_type=jnp.float32)
        return _leaky(y + b_ref[...])

    # Inputs may arrive f32 (no-pad fast path) — cast to bf16 on the VPU here,
    # avoiding a wrapper-side HBM round trip.
    xb = x_ref[...].astype(jnp.bfloat16)
    zb = z_ref[...].astype(jnp.bfloat16)

    # --- x_discrimination: 4x (Linear + LeakyReLU(0.2)) ---
    hx = lin(xb, wx1, bx1).astype(jnp.bfloat16)
    hx = lin(hx, wx2, bx2).astype(jnp.bfloat16)
    hx = lin(hx, wx3, bx3).astype(jnp.bfloat16)
    hx = lin(hx, wx4, bx4).astype(jnp.bfloat16)        # (TB, 128)

    # --- z_discrimination: 2x (Linear + LeakyReLU(0.2)) ---
    hz = lin(zb, wz1, bz1).astype(jnp.bfloat16)
    hz = lin(hz, wz2, bz2).astype(jnp.bfloat16)        # (TB, 128)

    # --- discriminator on concat([hx, hz], dim=1) ---
    # Materialize the concat in a (TB, 256) bf16 scratch so the first joint
    # layer runs as ONE K=256 MXU dot (fills the 256-deep MXU on v6e/v7x;
    # neutral on v5e's 128x128 MXU).
    hx_w = hx.shape[-1]
    hcat_ref[:, :hx_w] = hx
    hcat_ref[:, hx_w:] = hz
    h = jnp.dot(hcat_ref[...], wd1[...], preferred_element_type=jnp.float32)
    h = _leaky(h + bd1[...])                           # (TB, 512) f32

    # Final 512 -> 1 layer: a 1-column MXU dot is the worst-shaped op in the
    # chain, so do it as a VPU multiply + lane reduction. Store lane-dense as a
    # (1, TB) row so the writeback is unmasked vst + a contiguous DMA.
    row = jnp.sum(h * wd2_row[...], axis=-1)           # (TB,) f32
    out_ref[...] = row[None, :] + bd2[...]             # (1, TB)


# ------------------------------ JAX wrapper ------------------------------- #

def _device_kind():
    try:
        return jax.devices()[0].device_kind.lower()
    except Exception:
        return ""


def xz_discriminator_ft(x, z, params, *, tb=None):
    B = x.shape[0]
    out_dim = params["bd2"].shape[1]
    z_in = params["wz1"].shape[0]          # padded latent width (128-multiple)
    d1_in = params["wd1"].shape[0]         # 256 for channels=1024

    kind = _device_kind()
    is_v5 = "v5" in kind
    is_v7 = ("v7" in kind) or ("7x" in kind)

    # Batch tile: 256 fills the 256-row MXU on v6e/v7x; 128 already fills v5e's.
    if tb is None:
        tb = 128 if is_v5 else 256
    b8 = _round_up(max(B, 8), 8)
    TB = min(tb, b8)
    if is_v7 and TB >= b8 and b8 > 128:
        # Keep >= 2 grid steps so CORE_PARALLEL actually splits across both TCs.
        TB = 128
    B_pad = _round_up(B, TB)

    # Pad only when needed (batch to a TB multiple, z features to the padded
    # latent width). When no padding is needed, feed x/z untouched (any dtype)
    # and let the kernel cast to bf16 — saves an HBM round trip + a dispatch.
    if B_pad != B:
        x = jnp.pad(x.astype(jnp.bfloat16), ((0, B_pad - B), (0, 0)))
    if B_pad != B or z.shape[1] != z_in:
        z = jnp.pad(z.astype(jnp.bfloat16),
                    ((0, B_pad - B), (0, z_in - z.shape[1])))

    order = ["wx1", "bx1", "wx2", "bx2", "wx3", "bx3", "wx4", "bx4",
             "wz1", "bz1", "wz2", "bz2",
             "wd1", "bd1", "wd2_row", "bd2"]
    weights = [params[k] for k in order]

    def batch_spec(feat):
        # Tiled along the batch axis, full extent in features.
        return pl.BlockSpec((TB, feat), lambda i: (i, 0))

    def resident_spec(shape):
        # Constant index map -> block is revisited: fetched once, stays VMEM
        # resident for the whole grid instead of being re-DMA'd every tile.
        return pl.BlockSpec(tuple(shape), lambda i: (0, 0))

    # Lane-dense output: (out_dim, B_pad) tiled as (out_dim, TB) row blocks.
    out_spec = pl.BlockSpec((out_dim, TB), lambda i: (0, i))

    # Advisory cost for XLA's scheduler around the custom call.
    flops = 2 * B_pad * sum(int(params[k].size) for k in order if k.startswith("w"))
    bytes_accessed = (sum(int(w.size) * w.dtype.itemsize for w in weights)
                      + int(x.size) * x.dtype.itemsize
                      + int(z.size) * z.dtype.itemsize
                      + B_pad * out_dim * 4)

    batch_sem = getattr(pltpu, "CORE_PARALLEL", "parallel") if is_v7 else "parallel"

    out = pl.pallas_call(
        xz_disc_kernel,
        out_shape=jax.ShapeDtypeStruct((out_dim, B_pad), jnp.float32),
        grid=(B_pad // TB,),
        in_specs=[batch_spec(x.shape[1]), batch_spec(z.shape[1])]
                 + [resident_spec(w.shape) for w in weights],
        out_specs=out_spec,
        scratch_shapes=[pltpu.VMEM((TB, d1_in), jnp.bfloat16)],
        compiler_params=pltpu.CompilerParams(
            dimension_semantics=(batch_sem,),
        ),
        cost_estimate=pl.CostEstimate(
            flops=flops, transcendentals=0, bytes_accessed=bytes_accessed),
    )(x, z, *weights)

    # TODO(synk): for repeated small-batch invocations, amortize the ~1.7 MiB
    # weight DMA (batch several forwards per call, or cross-call weight prefetch
    # via semaphore + VMEM-ref outputs).
    return out[:, :B].T


# --------------------------- parameter building --------------------------- #

def _init_linear(key, in_f, out_f):
    # Matches torch.nn.Linear default init bounds (uniform +/- 1/sqrt(fan_in)).
    kw, kb = jax.random.split(key)
    bound = 1.0 / (in_f ** 0.5)
    w_pt = jax.random.uniform(kw, (out_f, in_f), jnp.float32, -bound, bound)
    b = jax.random.uniform(kb, (out_f,), jnp.float32, -bound, bound)
    return w_pt, b


def _spectral_normalize(w_pt, key, n_power_iterations=1, eps=1e-12):
    # TODO(synk): exactly reproducing torch.nn.utils.spectral_norm would require
    # its persistent u/v buffers (updated every forward); here a 1-step power
    # iteration from a fixed seed estimates sigma_max once at build time.
    u = jax.random.normal(key, (w_pt.shape[0],), jnp.float32)
    u = u / (jnp.linalg.norm(u) + eps)
    v = jnp.zeros((w_pt.shape[1],), jnp.float32)
    for _ in range(n_power_iterations):
        v = w_pt.T @ u
        v = v / (jnp.linalg.norm(v) + eps)
        u = w_pt @ v
        u = u / (jnp.linalg.norm(u) + eps)
    sigma = u @ (w_pt @ v)
    return w_pt / sigma


def make_params(key, latent_dim, channels=1024, output_dim=1, spectral_norm=True):
    c = channels
    # TODO(synk): output_dim > 1 would need a (TB, out) MXU epilogue instead of
    # the lane-dense VPU reduce used for the final 512->1 layer.
    assert output_dim == 1, "fused kernel implements the module default output_dim=1"
    layer_dims = {
        "x1": (c, c // 2), "x2": (c // 2, c // 4),
        "x3": (c // 4, c // 8), "x4": (c // 8, c // 8),
        "z1": (latent_dim, 128), "z2": (128, 128),
        "d1": (c // 8 + 128, 512),   # == 256 for channels=1024 (module hardcodes 256)
        "d2": (512, output_dim),
    }
    params = {}
    for name, (fin, fout) in layer_dims.items():
        key, k_init, k_sn = jax.random.split(key, 3)
        w_pt, b = _init_linear(k_init, fin, fout)          # (out, in), (out,)
        if spectral_norm:
            w_pt = _spectral_normalize(w_pt, k_sn)
        w = w_pt.T                                          # (in, out)
        b = b.reshape(1, fout).astype(jnp.float32)          # f32 bias, 2D for VMEM
        if name == "z1":
            # Zero-pad the latent input width to a 128-lane multiple so the z
            # DMA and K-dim are cleanly shaped (done once, offline).
            fin_pad = _round_up(fin, 128)
            w = jnp.pad(w, ((0, fin_pad - fin), (0, 0)))
        if name == "d2":
            params["wd2_row"] = w.T.astype(jnp.float32)     # (1, 512) row for VPU reduce
            params["bd2"] = b                               # (1, 1)
        else:
            params["w" + name] = w.astype(jnp.bfloat16)     # (in, out) bf16 for the MXU
            params["b" + name] = b
    return params


# ------------------------------ pure-JAX ref ------------------------------ #

def reference_forward(x, z, params):
    # Mirrors the kernel's numerics: bf16 matmul inputs, f32 accumulation/epilogue.
    def lin(h, w, b):
        y = jax.lax.dot(h.astype(jnp.bfloat16), w,
                        preferred_element_type=jnp.float32) + b
        return jnp.maximum(y, LEAK * y)

    z_in = params["wz1"].shape[0]
    if z.shape[1] != z_in:
        z = jnp.pad(z, ((0, 0), (0, z_in - z.shape[1])))

    hx = lin(x, params["wx1"], params["bx1"])
    hx = lin(hx, params["wx2"], params["bx2"])
    hx = lin(hx, params["wx3"], params["bx3"])
    hx = lin(hx, params["wx4"], params["bx4"])
    hz = lin(z, params["wz1"], params["bz1"])
    hz = lin(hz, params["wz2"], params["bz2"])
    hcat = jnp.concatenate([hx.astype(jnp.bfloat16), hz.astype(jnp.bfloat16)], axis=-1)
    h = jax.lax.dot(hcat, params["wd1"],
                    preferred_element_type=jnp.float32) + params["bd1"]
    h = jnp.maximum(h, LEAK * h)
    return jnp.sum(h * params["wd2_row"], axis=-1, keepdims=True) + params["bd2"]


# ---------------------------------- main ----------------------------------- #

if __name__ == "__main__":
    # channels must be 1024 so that channels//8 + 128 == 256 (the hard-coded
    # input width of self.discriminator). Batch chosen so the grid has >1 tile
    # on every generation and padding + the lane-dense output are exercised.
    BATCH, LATENT_DIM, CHANNELS, OUT_DIM = 300, 64, 1024, 1

    key = jax.random.PRNGKey(0)
    k_params, k_x, k_z = jax.random.split(key, 3)

    params = make_params(k_params, LATENT_DIM, CHANNELS, OUT_DIM, spectral_norm=True)
    x = jax.random.normal(k_x, (BATCH, CHANNELS), jnp.float32)
    z = jax.random.normal(k_z, (BATCH, LATENT_DIM), jnp.float32)

    out = jax.block_until_ready(xz_discriminator_ft(x, z, params))
    ref = reference_forward(x, z, params)

    assert out.shape == (BATCH, OUT_DIM), out.shape
    max_err = jnp.max(jnp.abs(out - ref))
    assert jnp.allclose(out, ref, atol=2e-3, rtol=2e-3), f"max abs err {max_err}"

    print("KERNEL_OK")
</pallas_src>

<mosaic_0001>
module attributes {stable_mosaic.version = 11 : i64} {
  func.func @xz_disc_kernel(%arg0: i32, %arg1: memref<256x1024xbf16, #tpu.memory_space<vmem>>, %arg2: memref<256x128xbf16, #tpu.memory_space<vmem>>, %arg3: memref<1024x512xbf16, #tpu.memory_space<vmem>>, %arg4: memref<1x512xf32, #tpu.memory_space<vmem>>, %arg5: memref<512x256xbf16, #tpu.memory_space<vmem>>, %arg6: memref<1x256xf32, #tpu.memory_space<vmem>>, %arg7: memref<256x128xbf16, #tpu.memory_space<vmem>>, %arg8: memref<1x128xf32, #tpu.memory_space<vmem>>, %arg9: memref<128x128xbf16, #tpu.memory_space<vmem>>, %arg10: memref<1x128xf32, #tpu.memory_space<vmem>>, %arg11: memref<128x128xbf16, #tpu.memory_space<vmem>>, %arg12: memref<1x128xf32, #tpu.memory_space<vmem>>, %arg13: memref<128x128xbf16, #tpu.memory_space<vmem>>, %arg14: memref<1x128xf32, #tpu.memory_space<vmem>>, %arg15: memref<256x512xbf16, #tpu.memory_space<vmem>>, %arg16: memref<1x512xf32, #tpu.memory_space<vmem>>, %arg17: memref<1x512xf32, #tpu.memory_space<vmem>>, %arg18: memref<1x1xf32, #tpu.memory_space<vmem>>, %arg19: memref<1x256xf32, #tpu.memory_space<vmem>>, %arg20: memref<256x256xbf16, #tpu.memory_space<vmem>>) attributes {dimension_semantics = [#tpu.dimension_semantics<parallel>], iteration_bounds = array<i64: 2>, scalar_prefetch = 0 : i64, scratch_operands = 1 : i64, tpu.core_type = #tpu.core_type<tc>, window_params = [{transform_indices = @transform_0, window_bounds = array<i64: 256, 1024>}, {transform_indices = @transform_1, window_bounds = array<i64: 256, 128>}, {pipeline_mode = #tpu.pipeline_mode<synchronous>, transform_indices = @transform_2, window_bounds = array<i64: 1024, 512>}, {pipeline_mode = #tpu.pipeline_mode<synchronous>, transform_indices = @transform_3, window_bounds = array<i64: 1, 512>}, {pipeline_mode = #tpu.pipeline_mode<synchronous>, transform_indices = @transform_4, window_bounds = array<i64: 512, 256>}, {pipeline_mode = #tpu.pipeline_mode<synchronous>, transform_indices = @transform_5, window_bounds = array<i64: 1, 256>}, {pipeline_mode = #tpu.pipeline_mode<synchronous>, transform_indices = @transform_6, window_bounds = array<i64: 256, 128>}, {pipeline_mode = #tpu.pipeline_mode<synchronous>, transform_indices = @transform_7, window_bounds = array<i64: 1, 128>}, {pipeline_mode = #tpu.pipeline_mode<synchronous>, transform_indices = @transform_8, window_bounds = array<i64: 128, 128>}, {pipeline_mode = #tpu.pipeline_mode<synchronous>, transform_indices = @transform_9, window_bounds = array<i64: 1, 128>}, {pipeline_mode = #tpu.pipeline_mode<synchronous>, transform_indices = @transform_10, window_bounds = array<i64: 128, 128>}, {pipeline_mode = #tpu.pipeline_mode<synchronous>, transform_indices = @transform_11, window_bounds = array<i64: 1, 128>}, {pipeline_mode = #tpu.pipeline_mode<synchronous>, transform_indices = @transform_12, window_bounds = array<i64: 128, 128>}, {pipeline_mode = #tpu.pipeline_mode<synchronous>, transform_indices = @transform_13, window_bounds = array<i64: 1, 128>}, {pipeline_mode = #tpu.pipeline_mode<synchronous>, transform_indices = @transform_14, window_bounds = array<i64: 256, 512>}, {pipeline_mode = #tpu.pipeline_mode<synchronous>, transform_indices = @transform_15, window_bounds = array<i64: 1, 512>}, {pipeline_mode = #tpu.pipeline_mode<synchronous>, transform_indices = @transform_16, window_bounds = array<i64: 1, 512>}, {pipeline_mode = #tpu.pipeline_mode<synchronous>, transform_indices = @transform_17, window_bounds = array<i64: 1, 1>}, {transform_indices = @transform_18, window_bounds = array<i64: 1, 256>}]} {
    %c0 = arith.constant 0 : index
    %c0_0 = arith.constant 0 : index
    %0 = vector.load %arg1[%c0, %c0_0] : memref<256x1024xbf16, #tpu.memory_space<vmem>>, vector<256x1024xbf16>
    %c0_1 = arith.constant 0 : index
    %c0_2 = arith.constant 0 : index
    %1 = vector.load %arg2[%c0_1, %c0_2] : memref<256x128xbf16, #tpu.memory_space<vmem>>, vector<256x128xbf16>
    %c0_3 = arith.constant 0 : index
    %c0_4 = arith.constant 0 : index
    %2 = vector.load %arg3[%c0_3, %c0_4] : memref<1024x512xbf16, #tpu.memory_space<vmem>>, vector<1024x512xbf16>
    %cst = arith.constant dense<0.000000e+00> : vector<256x512xf32>
    %3 = tpu.matmul %0, %2, %cst {dimension_numbers = #tpu.dot_dimension_numbers<[1], [0], [0], [1], [0, 0, 1, 1], [], []>} : vector<256x1024xbf16>, vector<1024x512xbf16>, vector<256x512xf32> -> vector<256x512xf32>
    %c0_5 = arith.constant 0 : index
    %c0_6 = arith.constant 0 : index
    %4 = vector.load %arg4[%c0_5, %c0_6] : memref<1x512xf32, #tpu.memory_space<vmem>>, vector<1x512xf32>
    %5 = vector.broadcast %4 : vector<1x512xf32> to vector<256x512xf32>
    %6 = arith.addf %3, %5 : vector<256x512xf32>
    %cst_7 = arith.constant 2.000000e-01 : f32
    %7 = vector.broadcast %cst_7 : f32 to vector<256x512xf32>
    %8 = arith.mulf %7, %6 : vector<256x512xf32>
    %9 = arith.maximumf %6, %8 : vector<256x512xf32>
    %10 = arith.truncf %9 : vector<256x512xf32> to vector<256x512xbf16>
    %c0_8 = arith.constant 0 : index
    %c0_9 = arith.constant 0 : index
    %11 = vector.load %arg5[%c0_8, %c0_9] : memref<512x256xbf16, #tpu.memory_space<vmem>>, vector<512x256xbf16>
    %cst_10 = arith.constant dense<0.000000e+00> : vector<256x256xf32>
    %12 = tpu.matmul %10, %11, %cst_10 {dimension_numbers = #tpu.dot_dimension_numbers<[1], [0], [0], [1], [0, 0, 1, 1], [], []>} : vector<256x512xbf16>, vector<512x256xbf16>, vector<256x256xf32> -> vector<256x256xf32>
    %c0_11 = arith.constant 0 : index
    %c0_12 = arith.constant 0 : index
    %13 = vector.load %arg6[%c0_11, %c0_12] : memref<1x256xf32, #tpu.memory_space<vmem>>, vector<1x256xf32>
    %14 = vector.broadcast %13 : vector<1x256xf32> to vector<256x256xf32>
    %15 = arith.addf %12, %14 : vector<256x256xf32>
    %cst_13 = arith.constant 2.000000e-01 : f32
    %16 = vector.broadcast %cst_13 : f32 to vector<256x256xf32>
    %17 = arith.mulf %16, %15 : vector<256x256xf32>
    %18 = arith.maximumf %15, %17 : vector<256x256xf32>
    %19 = arith.truncf %18 : vector<256x256xf32> to vector<256x256xbf16>
    %c0_14 = arith.constant 0 : index
    %c0_15 = arith.constant 0 : index
    %20 = vector.load %arg7[%c0_14, %c0_15] : memref<256x128xbf16, #tpu.memory_space<vmem>>, vector<256x128xbf16>
    %cst_16 = arith.constant dense<0.000000e+00> : vector<256x128xf32>
    %21 = tpu.matmul %19, %20, %cst_16 {dimension_numbers = #tpu.dot_dimension_numbers<[1], [0], [0], [1], [0, 0, 1, 1], [], []>} : vector<256x256xbf16>, vector<256x128xbf16>, vector<256x128xf32> -> vector<256x128xf32>
    %c0_17 = arith.constant 0 : index
    %c0_18 = arith.constant 0 : index
    %22 = vector.load %arg8[%c0_17, %c0_18] : memref<1x128xf32, #tpu.memory_space<vmem>>, vector<1x128xf32>
    %23 = vector.broadcast %22 : vector<1x128xf32> to vector<256x128xf32>
    %24 = arith.addf %21, %23 : vector<256x128xf32>
    %cst_19 = arith.constant 2.000000e-01 : f32
    %25 = vector.broadcast %cst_19 : f32 to vector<256x128xf32>
    %26 = arith.mulf %25, %24 : vector<256x128xf32>
    %27 = arith.maximumf %24, %26 : vector<256x128xf32>
    %28 = arith.truncf %27 : vector<256x128xf32> to vector<256x128xbf16>
    %c0_20 = arith.constant 0 : index
    %c0_21 = arith.constant 0 : index
    %29 = vector.load %arg9[%c0_20, %c0_21] : memref<128x128xbf16, #tpu.memory_space<vmem>>, vector<128x128xbf16>
    %cst_22 = arith.constant dense<0.000000e+00> : vector<256x128xf32>
    %30 = tpu.matmul %28, %29, %cst_22 {dimension_numbers = #tpu.dot_dimension_numbers<[1], [0], [0], [1], [0, 0, 1, 1], [], []>} : vector<256x128xbf16>, vector<128x128xbf16>, vector<256x128xf32> -> vector<256x128xf32>
    %c0_23 = arith.constant 0 : index
    %c0_24 = arith.constant 0 : index
    %31 = vector.load %arg10[%c0_23, %c0_24] : memref<1x128xf32, #tpu.memory_space<vmem>>, vector<1x128xf32>
    %32 = vector.broadcast %31 : vector<1x128xf32> to vector<256x128xf32>
    %33 = arith.addf %30, %32 : vector<256x128xf32>
    %cst_25 = arith.constant 2.000000e-01 : f32
    %34 = vector.broadcast %cst_25 : f32 to vector<256x128xf32>
    %35 = arith.mulf %34, %33 : vector<256x128xf32>
    %36 = arith.maximumf %33, %35 : vector<256x128xf32>
    %37 = arith.truncf %36 : vector<256x128xf32> to vector<256x128xbf16>
    %c0_26 = arith.constant 0 : index
    %c0_27 = arith.constant 0 : index
    %38 = vector.load %arg11[%c0_26, %c0_27] : memref<128x128xbf16, #tpu.memory_space<vmem>>, vector<128x128xbf16>
    %cst_28 = arith.constant dense<0.000000e+00> : vector<256x128xf32>
    %39 = tpu.matmul %1, %38, %cst_28 {dimension_numbers = #tpu.dot_dimension_numbers<[1], [0], [0], [1], [0, 0, 1, 1], [], []>} : vector<256x128xbf16>, vector<128x128xbf16>, vector<256x128xf32> -> vector<256x128xf32>
    %c0_29 = arith.constant 0 : index
    %c0_30 = arith.constant 0 : index
    %40 = vector.load %arg12[%c0_29, %c0_30] : memref<1x128xf32, #tpu.memory_space<vmem>>, vector<1x128xf32>
    %41 = vector.broadcast %40 : vector<1x128xf32> to vector<256x128xf32>
    %42 = arith.addf %39, %41 : vector<256x128xf32>
    %cst_31 = arith.constant 2.000000e-01 : f32
    %43 = vector.broadcast %cst_31 : f32 to vector<256x128xf32>
    %44 = arith.mulf %43, %42 : vector<256x128xf32>
    %45 = arith.maximumf %42, %44 : vector<256x128xf32>
    %46 = arith.truncf %45 : vector<256x128xf32> to vector<256x128xbf16>
    %c0_32 = arith.constant 0 : index
    %c0_33 = arith.constant 0 : index
    %47 = vector.load %arg13[%c0_32, %c0_33] : memref<128x128xbf16, #tpu.memory_space<vmem>>, vector<128x128xbf16>
    %cst_34 = arith.constant dense<0.000000e+00> : vector<256x128xf32>
    %48 = tpu.matmul %46, %47, %cst_34 {dimension_numbers = #tpu.dot_dimension_numbers<[1], [0], [0], [1], [0, 0, 1, 1], [], []>} : vector<256x128xbf16>, vector<128x128xbf16>, vector<256x128xf32> -> vector<256x128xf32>
    %c0_35 = arith.constant 0 : index
    %c0_36 = arith.constant 0 : index
    %49 = vector.load %arg14[%c0_35, %c0_36] : memref<1x128xf32, #tpu.memory_space<vmem>>, vector<1x128xf32>
    %50 = vector.broadcast %49 : vector<1x128xf32> to vector<256x128xf32>
    %51 = arith.addf %48, %50 : vector<256x128xf32>
    %cst_37 = arith.constant 2.000000e-01 : f32
    %52 = vector.broadcast %cst_37 : f32 to vector<256x128xf32>
    %53 = arith.mulf %52, %51 : vector<256x128xf32>
    %54 = arith.maximumf %51, %53 : vector<256x128xf32>
    %55 = arith.truncf %54 : vector<256x128xf32> to vector<256x128xbf16>
    %c0_38 = arith.constant 0 : index
    %c0_39 = arith.constant 0 : index
    %56 = vector.load %arg20[%c0_38, %c0_39] : memref<256x256xbf16, #tpu.memory_space<vmem>>, vector<256x128xbf16>
    tpu.vector_store %arg20[%c0_38, %c0_39], %37 {strides = array<i32>} : memref<256x256xbf16, #tpu.memory_space<vmem>>, vector<256x128xbf16>,
    %c0_40 = arith.constant 0 : index
    %c128 = arith.constant 128 : index
    %57 = vector.load %arg20[%c0_40, %c128] : memref<256x256xbf16, #tpu.memory_space<vmem>>, vector<256x128xbf16>
    tpu.vector_store %arg20[%c0_40, %c128], %55 {strides = array<i32>} : memref<256x256xbf16, #tpu.memory_space<vmem>>, vector<256x128xbf16>,
    %c0_41 = arith.constant 0 : index
    %c0_42 = arith.constant 0 : index
    %58 = vector.load %arg20[%c0_41, %c0_42] : memref<256x256xbf16, #tpu.memory_space<vmem>>, vector<256x256xbf16>
    %c0_43 = arith.constant 0 : index
    %c0_44 = arith.constant 0 : index
    %59 = vector.load %arg15[%c0_43, %c0_44] : memref<256x512xbf16, #tpu.memory_space<vmem>>, vector<256x512xbf16>
    %cst_45 = arith.constant dense<0.000000e+00> : vector<256x512xf32>
    %60 = tpu.matmul %58, %59, %cst_45 {dimension_numbers = #tpu.dot_dimension_numbers<[1], [0], [0], [1], [0, 0, 1, 1], [], []>} : vector<256x256xbf16>, vector<256x512xbf16>, vector<256x512xf32> -> vector<256x512xf32>
    %c0_46 = arith.constant 0 : index
    %c0_47 = arith.constant 0 : index
    %61 = vector.load %arg16[%c0_46, %c0_47] : memref<1x512xf32, #tpu.memory_space<vmem>>, vector<1x512xf32>
    %62 = vector.broadcast %61 : vector<1x512xf32> to vector<256x512xf32>
    %63 = arith.addf %60, %62 : vector<256x512xf32>
    %cst_48 = arith.constant 2.000000e-01 : f32
    %64 = vector.broadcast %cst_48 : f32 to vector<256x512xf32>
    %65 = arith.mulf %64, %63 : vector<256x512xf32>
    %66 = arith.maximumf %63, %65 : vector<256x512xf32>
    %c0_49 = arith.constant 0 : index
    %c0_50 = arith.constant 0 : index
    %67 = vector.load %arg17[%c0_49, %c0_50] : memref<1x512xf32, #tpu.memory_space<vmem>>, vector<1x512xf32>
    %68 = vector.broadcast %67 : vector<1x512xf32> to vector<256x512xf32>
    %69 = arith.mulf %66, %68 : vector<256x512xf32>
    %cst_51 = arith.constant dense<0.000000e+00> : vector<256xf32>
    %70 = vector.multi_reduction <add>, %69, %cst_51 [1] : vector<256x512xf32> to vector<256xf32>
    %71 = vector.shape_cast %70 : vector<256xf32> to vector<1x256xf32>
    %c0_52 = arith.constant 0 : index
    %c0_53 = arith.constant 0 : index
    %72 = vector.load %arg18[%c0_52, %c0_53] : memref<1x1xf32, #tpu.memory_space<vmem>>, vector<1x1xf32>
    %73 = vector.broadcast %72 : vector<1x1xf32> to vector<1x256xf32>
    %74 = arith.addf %71, %73 : vector<1x256xf32>
    %c0_54 = arith.constant 0 : index
    %c0_55 = arith.constant 0 : index
    %75 = vector.load %arg19[%c0_54, %c0_55] : memref<1x256xf32, #tpu.memory_space<vmem>>, vector<1x256xf32>
    tpu.vector_store %arg19[%c0_54, %c0_55], %74 {strides = array<i32>} : memref<1x256xf32, #tpu.memory_space<vmem>>, vector<1x256xf32>,
    return
  }
  func.func @transform_0(%arg0: i32) -> (i32, i32) {
    %c0_i32 = arith.constant 0 : i32
    %c0_i32_0 = arith.constant 0 : i32
    return %arg0, %c0_i32 : i32, i32
  }
  func.func @transform_1(%arg0: i32) -> (i32, i32) {
    %c0_i32 = arith.constant 0 : i32
    %c0_i32_0 = arith.constant 0 : i32
    return %arg0, %c0_i32 : i32, i32
  }
  func.func @transform_2(%arg0: i32) -> (i32, i32) {
    %c0_i32 = arith.constant 0 : i32
    %c0_i32_0 = arith.constant 0 : i32
    %c0_i32_1 = arith.constant 0 : i32
    return %c0_i32, %c0_i32_0 : i32, i32
  }
  func.func @transform_3(%arg0: i32) -> (i32, i32) {
    %c0_i32 = arith.constant 0 : i32
    %c0_i32_0 = arith.constant 0 : i32
    %c0_i32_1 = arith.constant 0 : i32
    return %c0_i32, %c0_i32_0 : i32, i32
  }
  func.func @transform_4(%arg0: i32) -> (i32, i32) {
    %c0_i32 = arith.constant 0 : i32
    %c0_i32_0 = arith.constant 0 : i32
    %c0_i32_1 = arith.constant 0 : i32
    return %c0_i32, %c0_i32_0 : i32, i32
  }
  func.func @transform_5(%arg0: i32) -> (i32, i32) {
    %c0_i32 = arith.constant 0 : i32
    %c0_i32_0 = arith.constant 0 : i32
    %c0_i32_1 = arith.constant 0 : i32
    return %c0_i32, %c0_i32_0 : i32, i32
  }
  func.func @transform_6(%arg0: i32) -> (i32, i32) {
    %c0_i32 = arith.constant 0 : i32
    %c0_i32_0 = arith.constant 0 : i32
    %c0_i32_1 = arith.constant 0 : i32
    return %c0_i32, %c0_i32_0 : i32, i32
  }
  func.func @transform_7(%arg0: i32) -> (i32, i32) {
    %c0_i32 = arith.constant 0 : i32
    %c0_i32_0 = arith.constant 0 : i32
    %c0_i32_1 = arith.constant 0 : i32
    return %c0_i32, %c0_i32_0 : i32, i32
  }
  func.func @transform_8(%arg0: i32) -> (i32, i32) {
    %c0_i32 = arith.constant 0 : i32
    %c0_i32_0 = arith.constant 0 : i32
    %c0_i32_1 = arith.constant 0 : i32
    return %c0_i32, %c0_i32_0 : i32, i32
  }
  func.func @transform_9(%arg0: i32) -> (i32, i32) {
    %c0_i32 = arith.constant 0 : i32
    %c0_i32_0 = arith.constant 0 : i32
    %c0_i32_1 = arith.constant 0 : i32
    return %c0_i32, %c0_i32_0 : i32, i32
  }
  func.func @transform_10(%arg0: i32) -> (i32, i32) {
    %c0_i32 = arith.constant 0 : i32
    %c0_i32_0 = arith.constant 0 : i32
    %c0_i32_1 = arith.constant 0 : i32
    return %c0_i32, %c0_i32_0 : i32, i32
  }
  func.func @transform_11(%arg0: i32) -> (i32, i32) {
    %c0_i32 = arith.constant 0 : i32
    %c0_i32_0 = arith.constant 0 : i32
    %c0_i32_1 = arith.constant 0 : i32
    return %c0_i32, %c0_i32_0 : i32, i32
  }
  func.func @transform_12(%arg0: i32) -> (i32, i32) {
    %c0_i32 = arith.constant 0 : i32
    %c0_i32_0 = arith.constant 0 : i32
    %c0_i32_1 = arith.constant 0 : i32
    return %c0_i32, %c0_i32_0 : i32, i32
  }
  func.func @transform_13(%arg0: i32) -> (i32, i32) {
    %c0_i32 = arith.constant 0 : i32
    %c0_i32_0 = arith.constant 0 : i32
    %c0_i32_1 = arith.constant 0 : i32
    return %c0_i32, %c0_i32_0 : i32, i32
  }
  func.func @transform_14(%arg0: i32) -> (i32, i32) {
    %c0_i32 = arith.constant 0 : i32
    %c0_i32_0 = arith.constant 0 : i32
    %c0_i32_1 = arith.constant 0 : i32
    return %c0_i32, %c0_i32_0 : i32, i32
  }
  func.func @transform_15(%arg0: i32) -> (i32, i32) {
    %c0_i32 = arith.constant 0 : i32
    %c0_i32_0 = arith.constant 0 : i32
    %c0_i32_1 = arith.constant 0 : i32
    return %c0_i32, %c0_i32_0 : i32, i32
  }
  func.func @transform_16(%arg0: i32) -> (i32, i32) {
    %c0_i32 = arith.constant 0 : i32
    %c0_i32_0 = arith.constant 0 : i32
    %c0_i32_1 = arith.constant 0 : i32
    return %c0_i32, %c0_i32_0 : i32, i32
  }
  func.func @transform_17(%arg0: i32) -> (i32, i32) {
    %c0_i32 = arith.constant 0 : i32
    %c0_i32_0 = arith.constant 0 : i32
    %c0_i32_1 = arith.constant 0 : i32
    return %c0_i32, %c0_i32_0 : i32, i32
  }
  func.func @transform_18(%arg0: i32) -> (i32, i32) {
    %c0_i32 = arith.constant 0 : i32
    %c0_i32_0 = arith.constant 0 : i32
    return %c0_i32, %arg0 : i32, i32
  }
}

</mosaic_0001>

<llo_original>
// kernel: tpu_custom_call.1
$region0: #{tpu_custom_call.1}
  #allocation0 [shape = 'u32[]', space=smem, size = 0x4, offset = 0x4, fixed_abs, tag = 'smem constant byte address 0x4 - core index']
  #allocation1 [shape = 'u32[72,128]{1,0:T(1,128)}', space=vmem, size = 0x9000, scoped, tag = 'internal scratch']
  #allocation2 [shape = 'bf16[256,256]{1,0:T(8,128)(2,1)}', space=vmem, size = 0x20000, scoped, tag = 'scratch operand']
  #allocation3 [shape = 'f32[1,1]{1,0:T(1,128)S(1)}', space=vmem, size = 0x200, scoped, tag = 'scoped memory for tpu_custom_call.1']
  %s0 = inlined_call_operand.hbm [shape: bf16[512,1024], index: 0, kind: input, shape index: {}]
  %s1 = inlined_call_operand.hbm [shape: bf16[512,128], index: 1, kind: input, shape index: {}]
  %s2 = inlined_call_operand.hbm [shape: bf16[1024,512], index: 2, kind: input, shape index: {}]
  %s3 = inlined_call_operand.vmem [shape: f32[1,512], index: 3, kind: input, shape index: {}]
  %s4 = inlined_call_operand.hbm [shape: bf16[512,256], index: 4, kind: input, shape index: {}]
  %s5 = inlined_call_operand.hbm [shape: f32[1,256], index: 5, kind: input, shape index: {}]
  %s6 = inlined_call_operand.hbm [shape: bf16[256,128], index: 6, kind: input, shape index: {}]
  %s7 = inlined_call_operand.hbm [shape: f32[1,128], index: 7, kind: input, shape index: {}]
  %s8 = inlined_call_operand.hbm [shape: bf16[128,128], index: 8, kind: input, shape index: {}]
  %s9 = inlined_call_operand.hbm [shape: f32[1,128], index: 9, kind: input, shape index: {}]
  %s10 = inlined_call_operand.hbm [shape: bf16[128,128], index: 10, kind: input, shape index: {}]
  %s11 = inlined_call_operand.hbm [shape: f32[1,128], index: 11, kind: input, shape index: {}]
  %s12 = inlined_call_operand.hbm [shape: bf16[128,128], index: 12, kind: input, shape index: {}]
  %s13 = inlined_call_operand.vmem [shape: f32[1,128], index: 13, kind: input, shape index: {}]
  %s14 = inlined_call_operand.hbm [shape: bf16[256,512], index: 14, kind: input, shape index: {}]
  %s15 = inlined_call_operand.vmem [shape: f32[1,512], index: 15, kind: input, shape index: {}]
  %s16 = inlined_call_operand.vmem [shape: f32[1,512], index: 16, kind: input, shape index: {}]
  %s17 = inlined_call_operand.<no memory space> [shape: f32[1,1], index: 17, kind: input, shape index: {}]
  %s18 = inlined_call_operand.hbm [shape: f32[1,512], index: 18, kind: output, shape index: {}]
  %s19 = sld [smem:[#allocation0]]
  $region157: #{tpu_custom_call.1} parent=0
    _
  %s21 = ssub.s32 1, %s19
  %s22 = scalar_select 0, %s21, %s19
  %v23 = vstv %s17
  %24 = vst [vmem:[#allocation3] sm:$0x1] %v23
  $region1: #{tpu_custom_call.1} parent=0
    #allocation4 [shape = 'u8[1048576]{0}', space=vmem, size = 0x100000, scoped, tag = 'input window, operand 0']
    #allocation5 [shape = 's32[2]{0}', space=sflag, size = 0x8, scoped, tag = 'scoped memory for tpu_custom_call.1']
    #allocation6 [shape = 's32[2]{0}', space=sflag, size = 0x8, scoped, tag = 'scoped memory for tpu_custom_call.1']
    #allocation7 [shape = 'u8[131072]{0}', space=vmem, size = 0x20000, scoped, tag = 'input window, operand 1']
    #allocation8 [shape = 's32[2]{0}', space=sflag, size = 0x8, scoped, tag = 'scoped memory for tpu_custom_call.1']
    #allocation9 [shape = 'u8[1048576]{0}', space=vmem, size = 0x100000, scoped, tag = 'input window, operand 2, single buffered']
    #allocation10 [shape = 'u8[262144]{0}', space=vmem, size = 0x40000, scoped, tag = 'input window, operand 4, single buffered']
    #allocation11 [shape = 's32[1]{0}', space=sflag, size = 0x4, scoped, tag = 'scoped memory for tpu_custom_call.1']
    #allocation12 [shape = 'u8[1024]{0}', space=vmem, size = 0x400, scoped, tag = 'input window, operand 5, single buffered']
    #allocation13 [shape = 'u8[65536]{0}', space=vmem, size = 0x10000, scoped, tag = 'input window, operand 6, single buffered']
    #allocation14 [shape = 's32[1]{0}', space=sflag, size = 0x4, scoped, tag = 'scoped memory for tpu_custom_call.1']
    #allocation15 [shape = 'u8[512]{0}', space=vmem, size = 0x400, scoped, tag = 'input window, operand 7, single buffered']
    #allocation16 [shape = 'u8[32768]{0}', space=vmem, size = 0x8000, scoped, tag = 'input window, operand 8, single buffered']
    #allocation17 [shape = 's32[1]{0}', space=sflag, size = 0x4, scoped, tag = 'scoped memory for tpu_custom_call.1']
    #allocation18 [shape = 'u8[512]{0}', space=vmem, size = 0x400, scoped, tag = 'input window, operand 9, single buffered']
    #allocation19 [shape = 'u8[32768]{0}', space=vmem, size = 0x8000, scoped, tag = 'input window, operand 10, single buffered']
    #allocation20 [shape = 's32[1]{0}', space=sflag, size = 0x4, scoped, tag = 'scoped memory for tpu_custom_call.1']
    #allocation21 [shape = 'u8[512]{0}', space=vmem, size = 0x400, scoped, tag = 'input window, operand 11, single buffered']
    #allocation22 [shape = 'u8[32768]{0}', space=vmem, size = 0x8000, scoped, tag = 'input window, operand 12, single buffered']
    #allocation23 [shape = 's32[1]{0}', space=sflag, size = 0x4, scoped, tag = 'scoped memory for tpu_custom_call.1']
    #allocation24 [shape = 'u8[262144]{0}', space=vmem, size = 0x40000, scoped, tag = 'input window, operand 14, single buffered']
    #allocation25 [shape = 'u8[2048]{0}', space=vmem, size = 0x800, scoped, tag = 'output window, operand 0']
    %25 = vsyncpa [#allocation5], 0
    %s26 = scalar_lea.sflag [#allocation5], 1
    %27 = vsyncpa %s26, 0
    %28 = vsyncpa [#allocation8], 0
    %s29 = scalar_lea.sflag [#allocation8], 1
    %30 = vsyncpa %s29, 0
    %31 = vsyncpa [#allocation11], 0
    %32 = vsyncpa [#allocation14], 0
    %33 = vsyncpa [#allocation17], 0
    %34 = vsyncpa [#allocation20], 0
    %35 = vsyncpa [#allocation23], 0
    %36 = vsyncpa [#allocation6], 0
    %s37 = scalar_lea.sflag [#allocation6], 1
    %38 = vsyncpa %s37, 0
    loop: start=0, step=1, limit=4
    $region2: #{tpu_custom_call.1} parent=1 // loop_pre_header
      _
    $region3: #{tpu_custom_call.1} parent=1 // loop_header
      %s40 = sphi 0, %s44
      %p41 = scmp.ge.s32.totalorder %s40, 4
      %s50 = sphi 0, %s52
      %s53 = sphi 0, %s50
      %s54 = sphi 0, %s53
      %s70 = sphi 0, %s54
      %s76 = sphi 0, %s78
      %s79 = sphi 0, %s76
      %s80 = sphi 0, %s79
      %s96 = sphi 0, %s80
      %s100 = sphi 0, %s100
      %s102 = sphi 0, %s100
      %s103 = sphi 0, %s102
      %s117 = sphi 0, %s103
      %s121 = sphi 0, %s121
      %s123 = sphi 0, %s121
      %s124 = sphi 0, %s123
      %s138 = sphi 0, %s124
      %s142 = sphi 0, %s142
      %s144 = sphi 0, %s142
      %s145 = sphi 0, %s144
      %s159 = sphi 0, %s145
      %s163 = sphi 0, %s163
      %s165 = sphi 0, %s163
      %s166 = sphi 0, %s165
      %s180 = sphi 0, %s166
      %s184 = sphi 0, %s184
      %s186 = sphi 0, %s184
      %s187 = sphi 0, %s186
      %s201 = sphi 0, %s187
      %s205 = sphi 0, %s205
      %s207 = sphi 0, %s205
      %s208 = sphi 0, %s207
      %s222 = sphi 0, %s208
      %s226 = sphi 0, %s226
      %s228 = sphi 0, %s226
      %s229 = sphi 0, %s228
      %s243 = sphi 0, %s229
      %s247 = sphi 0, %s247
      %s249 = sphi 0, %s247
      %s250 = sphi 0, %s249
      %s264 = sphi 0, %s250
      %s268 = sphi 0, %s268
      %s270 = sphi 0, %s268
      %s271 = sphi 0, %s270
      %s285 = sphi 0, %s271
      %s289 = sphi 0, %s289
      %s291 = sphi 0, %s289
      %s292 = sphi 0, %s291
      %s306 = sphi 0, %s292
      %s310 = sphi 0, %s310
      %s312 = sphi 0, %s310
      %s313 = sphi 0, %s312
      %s327 = sphi 0, %s313
      %s331 = sphi 0, %s331
      %s333 = sphi 0, %s331
      %s334 = sphi 0, %s333
      %s348 = sphi 0, %s334
      %s352 = sphi 0, %s352
      %s354 = sphi 0, %s352
      %s355 = sphi 0, %s354
      %s369 = sphi 0, %s355
      %s373 = sphi 0, %s373
      %s375 = sphi 0, %s373
      %s376 = sphi 0, %s375
      %s390 = sphi 0, %s376
      %s394 = sphi 0, %s394
      %s396 = sphi 0, %s394
      %s397 = sphi 0, %s396
      %s411 = sphi 0, %s397
      %s415 = sphi 0, %s415
      %s417 = sphi 0, %s415
      %s418 = sphi 0, %s417
      %s432 = sphi 0, %s418
      %s438 = sphi 0, %s440
      %s441 = sphi 0, %s438
      %s442 = sphi 0, %s441
      %s458 = sphi 0, %s442
    $region4: #{tpu_custom_call.1} parent=1 // loop_header_branch
      %43 = sbr.rel (%p41) target = $region8
    $region5: #{tpu_custom_call.1} parent=1 // loop_body
      %s45 = ssub.s32 %s40, 1
      %s46 = ssub.s32 %s40, 2
      %s47 = sadd.s32 %s40, 1
      %s48 = ssub.s32 %s40, %s47
      %p49 = scmp.eq.s32.totalorder %s48, 0
      %s51 = sadd.s32 %s50, 1
      %s52 = scalar_select %p49, %s50, %s51
      %p55 = pneg %p49
      %p56 = scmp.eq.s32.totalorder %s40, 1
      %p57 = por %p55, %p56
      %p58 = scmp.ne.s32.totalorder %s50, %s53
      %p59 = scmp.eq.s32.totalorder %s40, 0
      %p60 = por %p58, %p59
      %p61 = scmp.ne.s32.totalorder %s50, %s53
      %p62 = scmp.eq.s32.totalorder %s45, 1
      %p63 = por %p61, %p62
      %p64 = scmp.ne.s32.totalorder %s53, %s54
      %p65 = scmp.eq.s32.totalorder %s45, 0
      %p66 = por %p64, %p65
      %p67 = scmp.ne.s32.totalorder %s53, %s54
      %p68 = scmp.eq.s32.totalorder %s46, 1
      %p69 = por %p67, %p68
      %p71 = scmp.ne.s32.totalorder %s54, %s70
      %p72 = scmp.eq.s32.totalorder %s46, 0
      %p73 = por %p71, %p72
      %s74 = ssub.s32 %s40, %s47
      %p75 = scmp.eq.s32.totalorder %s74, 0
      %s77 = sadd.s32 %s76, 1
      %s78 = scalar_select %p75, %s76, %s77
      %p81 = pneg %p75
      %p82 = scmp.eq.s32.totalorder %s40, 1
      %p83 = por %p81, %p82
      %p84 = scmp.ne.s32.totalorder %s76, %s79
      %p85 = scmp.eq.s32.totalorder %s40, 0
      %p86 = por %p84, %p85
      %p87 = scmp.ne.s32.totalorder %s76, %s79
      %p88 = scmp.eq.s32.totalorder %s45, 1
      %p89 = por %p87, %p88
      %p90 = scmp.ne.s32.totalorder %s79, %s80
      %p91 = scmp.eq.s32.totalorder %s45, 0
      %p92 = por %p90, %p91
      %p93 = scmp.ne.s32.totalorder %s79, %s80
      %p94 = scmp.eq.s32.totalorder %s46, 1
      %p95 = por %p93, %p94
      %p97 = scmp.ne.s32.totalorder %s80, %s96
      %p98 = scmp.eq.s32.totalorder %s46, 0
      %p99 = por %p97, %p98
      %s101 = sadd.s32 %s100, 1
      %p104 = scmp.eq.s32.totalorder %s40, 1
      %p105 = scmp.ne.s32.totalorder %s100, %s102
      %p106 = scmp.eq.s32.totalorder %s40, 0
      %p107 = por %p105, %p106
      %p108 = scmp.ne.s32.totalorder %s100, %s102
      %p109 = scmp.eq.s32.totalorder %s45, 1
      %p110 = por %p108, %p109
      %p111 = scmp.ne.s32.totalorder %s102, %s103
      %p112 = scmp.eq.s32.totalorder %s45, 0
      %p113 = por %p111, %p112
      %p114 = scmp.ne.s32.totalorder %s102, %s103
      %p115 = scmp.eq.s32.totalorder %s46, 1
      %p116 = por %p114, %p115
      %p118 = scmp.ne.s32.totalorder %s103, %s117
      %p119 = scmp.eq.s32.totalorder %s46, 0
      %p120 = por %p118, %p119
      %s122 = sadd.s32 %s121, 1
      %p125 = scmp.eq.s32.totalorder %s40, 1
      %p126 = scmp.ne.s32.totalorder %s121, %s123
      %p127 = scmp.eq.s32.totalorder %s40, 0
      %p128 = por %p126, %p127
      %p129 = scmp.ne.s32.totalorder %s121, %s123
      %p130 = scmp.eq.s32.totalorder %s45, 1
      %p131 = por %p129, %p130
      %p132 = scmp.ne.s32.totalorder %s123, %s124
      %p133 = scmp.eq.s32.totalorder %s45, 0
      %p134 = por %p132, %p133
      %p135 = scmp.ne.s32.totalorder %s123, %s124
      %p136 = scmp.eq.s32.totalorder %s46, 1
      %p137 = por %p135, %p136
      %p139 = scmp.ne.s32.totalorder %s124, %s138
      %p140 = scmp.eq.s32.totalorder %s46, 0
      %p141 = por %p139, %p140
      %s143 = sadd.s32 %s142, 1
      %p146 = scmp.eq.s32.totalorder %s40, 1
      %p147 = scmp.ne.s32.totalorder %s142, %s144
      %p148 = scmp.eq.s32.totalorder %s40, 0
      %p149 = por %p147, %p148
      %p150 = scmp.ne.s32.totalorder %s142, %s144
      %p151 = scmp.eq.s32.totalorder %s45, 1
      %p152 = por %p150, %p151
      %p153 = scmp.ne.s32.totalorder %s144, %s145
      %p154 = scmp.eq.s32.totalorder %s45, 0
      %p155 = por %p153, %p154
      %p156 = scmp.ne.s32.totalorder %s144, %s145
      %p157 = scmp.eq.s32.totalorder %s46, 1
      %p158 = por %p156, %p157
      %p160 = scmp.ne.s32.totalorder %s145, %s159
      %p161 = scmp.eq.s32.totalorder %s46, 0
      %p162 = por %p160, %p161
      %s164 = sadd.s32 %s163, 1
      %p167 = scmp.eq.s32.totalorder %s40, 1
      %p168 = scmp.ne.s32.totalorder %s163, %s165
      %p169 = scmp.eq.s32.totalorder %s40, 0
      %p170 = por %p168, %p169
      %p171 = scmp.ne.s32.totalorder %s163, %s165
      %p172 = scmp.eq.s32.totalorder %s45, 1
      %p173 = por %p171, %p172
      %p174 = scmp.ne.s32.totalorder %s165, %s166
      %p175 = scmp.eq.s32.totalorder %s45, 0
      %p176 = por %p174, %p175
      %p177 = scmp.ne.s32.totalorder %s165, %s166
      %p178 = scmp.eq.s32.totalorder %s46, 1
      %p179 = por %p177, %p178
      %p181 = scmp.ne.s32.totalorder %s166, %s180
      %p182 = scmp.eq.s32.totalorder %s46, 0
      %p183 = por %p181, %p182
      %s185 = sadd.s32 %s184, 1
      %p188 = scmp.eq.s32.totalorder %s40, 1
      %p189 = scmp.ne.s32.totalorder %s184, %s186
      %p190 = scmp.eq.s32.totalorder %s40, 0
      %p191 = por %p189, %p190
      %p192 = scmp.ne.s32.totalorder %s184, %s186
      %p193 = scmp.eq.s32.totalorder %s45, 1
      %p194 = por %p192, %p193
      %p195 = scmp.ne.s32.totalorder %s186, %s187
      %p196 = scmp.eq.s32.totalorder %s45, 0
      %p197 = por %p195, %p196
      %p198 = scmp.ne.s32.totalorder %s186, %s187
      %p199 = scmp.eq.s32.totalorder %s46, 1
      %p200 = por %p198, %p199
      %p202 = scmp.ne.s32.totalorder %s187, %s201
      %p203 = scmp.eq.s32.totalorder %s46, 0
      %p204 = por %p202, %p203
      %s206 = sadd.s32 %s205, 1
      %p209 = scmp.eq.s32.totalorder %s40, 1
      %p210 = scmp.ne.s32.totalorder %s205, %s207
      %p211 = scmp.eq.s32.totalorder %s40, 0
      %p212 = por %p210, %p211
      %p213 = scmp.ne.s32.totalorder %s205, %s207
      %p214 = scmp.eq.s32.totalorder %s45, 1
      %p215 = por %p213, %p214
      %p216 = scmp.ne.s32.totalorder %s207, %s208
      %p217 = scmp.eq.s32.totalorder %s45, 0
      %p218 = por %p216, %p217
      %p219 = scmp.ne.s32.totalorder %s207, %s208
      %p220 = scmp.eq.s32.totalorder %s46, 1
      %p221 = por %p219, %p220
      %p223 = scmp.ne.s32.totalorder %s208, %s222
      %p224 = scmp.eq.s32.totalorder %s46, 0
      %p225 = por %p223, %p224
      %s227 = sadd.s32 %s226, 1
      %p230 = scmp.eq.s32.totalorder %s40, 1
      %p231 = scmp.ne.s32.totalorder %s226, %s228
      %p232 = scmp.eq.s32.totalorder %s40, 0
      %p233 = por %p231, %p232
      %p234 = scmp.ne.s32.totalorder %s226, %s228
      %p235 = scmp.eq.s32.totalorder %s45, 1
      %p236 = por %p234, %p235
      %p237 = scmp.ne.s32.totalorder %s228, %s229
      %p238 = scmp.eq.s32.totalorder %s45, 0
      %p239 = por %p237, %p238
      %p240 = scmp.ne.s32.totalorder %s228, %s229
      %p241 = scmp.eq.s32.totalorder %s46, 1
      %p242 = por %p240, %p241
      %p244 = scmp.ne.s32.totalorder %s229, %s243
      %p245 = scmp.eq.s32.totalorder %s46, 0
      %p246 = por %p244, %p245
      %s248 = sadd.s32 %s247, 1
      %p251 = scmp.eq.s32.totalorder %s40, 1
      %p252 = scmp.ne.s32.totalorder %s247, %s249
      %p253 = scmp.eq.s32.totalorder %s40, 0
      %p254 = por %p252, %p253
      %p255 = scmp.ne.s32.totalorder %s247, %s249
      %p256 = scmp.eq.s32.totalorder %s45, 1
      %p257 = por %p255, %p256
      %p258 = scmp.ne.s32.totalorder %s249, %s250
      %p259 = scmp.eq.s32.totalorder %s45, 0
      %p260 = por %p258, %p259
      %p261 = scmp.ne.s32.totalorder %s249, %s250
      %p262 = scmp.eq.s32.totalorder %s46, 1
      %p263 = por %p261, %p262
      %p265 = scmp.ne.s32.totalorder %s250, %s264
      %p266 = scmp.eq.s32.totalorder %s46, 0
      %p267 = por %p265, %p266
      %s269 = sadd.s32 %s268, 1
      %p272 = scmp.eq.s32.totalorder %s40, 1
      %p273 = scmp.ne.s32.totalorder %s268, %s270
      %p274 = scmp.eq.s32.totalorder %s40, 0
      %p275 = por %p273, %p274
      %p276 = scmp.ne.s32.totalorder %s268, %s270
      %p277 = scmp.eq.s32.totalorder %s45, 1
      %p278 = por %p276, %p277
      %p279 = scmp.ne.s32.totalorder %s270, %s271
      %p280 = scmp.eq.s32.totalorder %s45, 0
      %p281 = por %p279, %p280
      %p282 = scmp.ne.s32.totalorder %s270, %s271
      %p283 = scmp.eq.s32.totalorder %s46, 1
      %p284 = por %p282, %p283
      %p286 = scmp.ne.s32.totalorder %s271, %s285
      %p287 = scmp.eq.s32.totalorder %s46, 0
      %p288 = por %p286, %p287
      %s290 = sadd.s32 %s289, 1
      %p293 = scmp.eq.s32.totalorder %s40, 1
      %p294 = scmp.ne.s32.totalorder %s289, %s291
      %p295 = scmp.eq.s32.totalorder %s40, 0
      %p296 = por %p294, %p295
      %p297 = scmp.ne.s32.totalorder %s289, %s291
      %p298 = scmp.eq.s32.totalorder %s45, 1
      %p299 = por %p297, %p298
      %p300 = scmp.ne.s32.totalorder %s291, %s292
      %p301 = scmp.eq.s32.totalorder %s45, 0
      %p302 = por %p300, %p301
      %p303 = scmp.ne.s32.totalorder %s291, %s292
      %p304 = scmp.eq.s32.totalorder %s46, 1
      %p305 = por %p303, %p304
      %p307 = scmp.ne.s32.totalorder %s292, %s306
      %p308 = scmp.eq.s32.totalorder %s46, 0
      %p309 = por %p307, %p308
      %s311 = sadd.s32 %s310, 1
      %p314 = scmp.eq.s32.totalorder %s40, 1
      %p315 = scmp.ne.s32.totalorder %s310, %s312
      %p316 = scmp.eq.s32.totalorder %s40, 0
      %p317 = por %p315, %p316
      %p318 = scmp.ne.s32.totalorder %s310, %s312
      %p319 = scmp.eq.s32.totalorder %s45, 1
      %p320 = por %p318, %p319
      %p321 = scmp.ne.s32.totalorder %s312, %s313
      %p322 = scmp.eq.s32.totalorder %s45, 0
      %p323 = por %p321, %p322
      %p324 = scmp.ne.s32.totalorder %s312, %s313
      %p325 = scmp.eq.s32.totalorder %s46, 1
      %p326 = por %p324, %p325
      %p328 = scmp.ne.s32.totalorder %s313, %s327
      %p329 = scmp.eq.s32.totalorder %s46, 0
      %p330 = por %p328, %p329
      %s332 = sadd.s32 %s331, 1
      %p335 = scmp.eq.s32.totalorder %s40, 1
      %p336 = scmp.ne.s32.totalorder %s331, %s333
      %p337 = scmp.eq.s32.totalorder %s40, 0
      %p338 = por %p336, %p337
      %p339 = scmp.ne.s32.totalorder %s331, %s333
      %p340 = scmp.eq.s32.totalorder %s45, 1
      %p341 = por %p339, %p340
      %p342 = scmp.ne.s32.totalorder %s333, %s334
      %p343 = scmp.eq.s32.totalorder %s45, 0
      %p344 = por %p342, %p343
      %p345 = scmp.ne.s32.totalorder %s333, %s334
      %p346 = scmp.eq.s32.totalorder %s46, 1
      %p347 = por %p345, %p346
      %p349 = scmp.ne.s32.totalorder %s334, %s348
      %p350 = scmp.eq.s32.totalorder %s46, 0
      %p351 = por %p349, %p350
      %s353 = sadd.s32 %s352, 1
      %p356 = scmp.eq.s32.totalorder %s40, 1
      %p357 = scmp.ne.s32.totalorder %s352, %s354
      %p358 = scmp.eq.s32.totalorder %s40, 0
      %p359 = por %p357, %p358
      %p360 = scmp.ne.s32.totalorder %s352, %s354
      %p361 = scmp.eq.s32.totalorder %s45, 1
      %p362 = por %p360, %p361
      %p363 = scmp.ne.s32.totalorder %s354, %s355
      %p364 = scmp.eq.s32.totalorder %s45, 0
      %p365 = por %p363, %p364
      %p366 = scmp.ne.s32.totalorder %s354, %s355
      %p367 = scmp.eq.s32.totalorder %s46, 1
      %p368 = por %p366, %p367
      %p370 = scmp.ne.s32.totalorder %s355, %s369
      %p371 = scmp.eq.s32.totalorder %s46, 0
      %p372 = por %p370, %p371
      %s374 = sadd.s32 %s373, 1
      %p377 = scmp.eq.s32.totalorder %s40, 1
      %p378 = scmp.ne.s32.totalorder %s373, %s375
      %p379 = scmp.eq.s32.totalorder %s40, 0
      %p380 = por %p378, %p379
      %p381 = scmp.ne.s32.totalorder %s373, %s375
      %p382 = scmp.eq.s32.totalorder %s45, 1
      %p383 = por %p381, %p382
      %p384 = scmp.ne.s32.totalorder %s375, %s376
      %p385 = scmp.eq.s32.totalorder %s45, 0
      %p386 = por %p384, %p385
      %p387 = scmp.ne.s32.totalorder %s375, %s376
      %p388 = scmp.eq.s32.totalorder %s46, 1
      %p389 = por %p387, %p388
      %p391 = scmp.ne.s32.totalorder %s376, %s390
      %p392 = scmp.eq.s32.totalorder %s46, 0
      %p393 = por %p391, %p392
      %s395 = sadd.s32 %s394, 1
      %p398 = scmp.eq.s32.totalorder %s40, 1
      %p399 = scmp.ne.s32.totalorder %s394, %s396
      %p400 = scmp.eq.s32.totalorder %s40, 0
      %p401 = por %p399, %p400
      %p402 = scmp.ne.s32.totalorder %s394, %s396
      %p403 = scmp.eq.s32.totalorder %s45, 1
      %p404 = por %p402, %p403
      %p405 = scmp.ne.s32.totalorder %s396, %s397
      %p406 = scmp.eq.s32.totalorder %s45, 0
      %p407 = por %p405, %p406
      %p408 = scmp.ne.s32.totalorder %s396, %s397
      %p409 = scmp.eq.s32.totalorder %s46, 1
      %p410 = por %p408, %p409
      %p412 = scmp.ne.s32.totalorder %s397, %s411
      %p413 = scmp.eq.s32.totalorder %s46, 0
      %p414 = por %p412, %p413
      %s416 = sadd.s32 %s415, 1
      %p419 = scmp.eq.s32.totalorder %s40, 1
      %p420 = scmp.ne.s32.totalorder %s415, %s417
      %p421 = scmp.eq.s32.totalorder %s40, 0
      %p422 = por %p420, %p421
      %p423 = scmp.ne.s32.totalorder %s415, %s417
      %p424 = scmp.eq.s32.totalorder %s45, 1
      %p425 = por %p423, %p424
      %p426 = scmp.ne.s32.totalorder %s417, %s418
      %p427 = scmp.eq.s32.totalorder %s45, 0
      %p428 = por %p426, %p427
      %p429 = scmp.ne.s32.totalorder %s417, %s418
      %p430 = scmp.eq.s32.totalorder %s46, 1
      %p431 = por %p429, %p430
      %p433 = scmp.ne.s32.totalorder %s418, %s432
      %p434 = scmp.eq.s32.totalorder %s46, 0
      %p435 = por %p433, %p434
      %s436 = ssub.s32 %s40, %s47
      %p437 = scmp.eq.s32.totalorder %s436, 0
      %s439 = sadd.s32 %s438, 1
      %s440 = scalar_select %p437, %s438, %s439
      %p443 = pneg %p437
      %p444 = scmp.eq.s32.totalorder %s40, 1
      %p445 = por %p443, %p444
      %p446 = scmp.ne.s32.totalorder %s438, %s441
      %p447 = scmp.eq.s32.totalorder %s40, 0
      %p448 = por %p446, %p447
      %p449 = scmp.ne.s32.totalorder %s438, %s441
      %p450 = scmp.eq.s32.totalorder %s45, 1
      %p451 = por %p449, %p450
      %p452 = scmp.ne.s32.totalorder %s441, %s442
      %p453 = scmp.eq.s32.totalorder %s45, 0
      %p454 = por %p452, %p453
      %p455 = scmp.ne.s32.totalorder %s441, %s442
      %p456 = scmp.eq.s32.totalorder %s46, 1
      %p457 = por %p455, %p456
      %p459 = scmp.ne.s32.totalorder %s442, %s458
      %p460 = scmp.eq.s32.totalorder %s46, 0
      %p461 = por %p459, %p460
      %p462 = scmp.le.s32.totalorder 1, %s40
      %p463 = scmp.lt.s32.totalorder %s40, 3
      %p464 = pnand %p462, %p463
      %p465 = pneg %p464
      // Predicated region
      $region9: #{tpu_custom_call.1} parent=5 // pred_check
        _
      $region10: #{tpu_custom_call.1} parent=5 // pred_check_branch
        %467 = sbr.rel (%p464) target = $region12
      $region11: #{tpu_custom_call.1} parent=5 // pred_region
        %s468 = ssub.s32 %s40, 1
        // Predicated region
        $region13: #{tpu_custom_call.1} parent=11 // pred_check
          %p469 = pneg %p113
        $region14: #{tpu_custom_call.1} parent=11 // pred_check_branch
          %471 = sbr.rel (%p469) target = $region16
        $region15: #{tpu_custom_call.1} parent=11 // pred_region
          %473 = vsyncadd [#allocation8], 0
          %s474 = sshll.u32 %s2, 4
          %s475 = int_to_ptr.hbm [resolvable:$true] %s474
          %s476 = sshll.u32 [#allocation9], 4
          %s477 = int_to_ptr.vmem [resolvable:$true] %s476
          %482 = dma.hbm_to_vmem [thread:$0]  %s475, 32768, %s477, [#allocation8], 256, 256, 16
        $region16: #{tpu_custom_call.1} parent=11 // pred_fallthru
          _
        // Predicated region
        $region17: #{tpu_custom_call.1} parent=11 // pred_check
          %p483 = pneg %p134
        $region18: #{tpu_custom_call.1} parent=11 // pred_check_branch
          %485 = sbr.rel (%p483) target = $region20
        $region19: #{tpu_custom_call.1} parent=11 // pred_region
          _
        $region20: #{tpu_custom_call.1} parent=11 // pred_fallthru
          _
        // Predicated region
        $region21: #{tpu_custom_call.1} parent=11 // pred_check
          %p486 = pneg %p155
        $region22: #{tpu_custom_call.1} parent=11 // pred_check_branch
          %488 = sbr.rel (%p486) target = $region24
        $region23: #{tpu_custom_call.1} parent=11 // pred_region
          %490 = vsyncadd [#allocation11], 0
          %s491 = sshll.u32 %s4, 4
          %s492 = int_to_ptr.hbm [resolvable:$true] %s491
          %s493 = sshll.u32 [#allocation10], 4
          %s494 = int_to_ptr.vmem [resolvable:$true] %s493
          %499 = dma.hbm_to_vmem [thread:$0]  %s492, 8192, %s494, [#allocation11], 128, 128, 8
        $region24: #{tpu_custom_call.1} parent=11 // pred_fallthru
          _
        // Predicated region
        $region25: #{tpu_custom_call.1} parent=11 // pred_check
          %p500 = pneg %p176
        $region26: #{tpu_custom_call.1} parent=11 // pred_check_branch
          %502 = sbr.rel (%p500) target = $region28
        $region27: #{tpu_custom_call.1} parent=11 // pred_region
          %504 = vsyncadd [#allocation11], 0
          %s506 = sshll.u32 %s5, 4
          %s507 = int_to_ptr.hbm [resolvable:$true] %s506
          %s508 = sshll.u32 [#allocation12], 4
          %s509 = int_to_ptr.vmem [resolvable:$true] %s508
          %511 = dma.hbm_to_vmem [thread:$0]  %s507, 32, %s509, [#allocation11]
        $region28: #{tpu_custom_call.1} parent=11 // pred_fallthru
          _
        // Predicated region
        $region29: #{tpu_custom_call.1} parent=11 // pred_check
          %p512 = pneg %p197
        $region30: #{tpu_custom_call.1} parent=11 // pred_check_branch
          %514 = sbr.rel (%p512) target = $region32
        $region31: #{tpu_custom_call.1} parent=11 // pred_region
          %516 = vsyncadd [#allocation14], 0
          %s517 = sshll.u32 %s6, 4
          %s518 = int_to_ptr.hbm [resolvable:$true] %s517
          %s519 = sshll.u32 [#allocation13], 4
          %s520 = int_to_ptr.vmem [resolvable:$true] %s519
          %525 = dma.hbm_to_vmem [thread:$0]  %s518, 2048, %s520, [#allocation14], 64, 64, 4
        $region32: #{tpu_custom_call.1} parent=11 // pred_fallthru
          _
        // Predicated region
        $region33: #{tpu_custom_call.1} parent=11 // pred_check
          %p526 = pneg %p218
        $region34: #{tpu_custom_call.1} parent=11 // pred_check_branch
          %528 = sbr.rel (%p526) target = $region36
        $region35: #{tpu_custom_call.1} parent=11 // pred_region
          %530 = vsyncadd [#allocation14], 0
          %s532 = sshll.u32 %s7, 4
          %s533 = int_to_ptr.hbm [resolvable:$true] %s532
          %s534 = sshll.u32 [#allocation15], 4
          %s535 = int_to_ptr.vmem [resolvable:$true] %s534
          %537 = dma.hbm_to_vmem [thread:$0]  %s533, 16, %s535, [#allocation14]
        $region36: #{tpu_custom_call.1} parent=11 // pred_fallthru
          _
        // Predicated region
        $region37: #{tpu_custom_call.1} parent=11 // pred_check
          %p538 = pneg %p239
        $region38: #{tpu_custom_call.1} parent=11 // pred_check_branch
          %540 = sbr.rel (%p538) target = $region40
        $region39: #{tpu_custom_call.1} parent=11 // pred_region
          %542 = vsyncadd [#allocation17], 0
          %s543 = sshll.u32 %s8, 4
          %s544 = int_to_ptr.hbm [resolvable:$true] %s543
          %s545 = sshll.u32 [#allocation16], 4
          %s546 = int_to_ptr.vmem [resolvable:$true] %s545
          %551 = dma.hbm_to_vmem [thread:$0]  %s544, 1024, %s546, [#allocation17], 64, 64, 4
        $region40: #{tpu_custom_call.1} parent=11 // pred_fallthru
          _
        // Predicated region
        $region41: #{tpu_custom_call.1} parent=11 // pred_check
          %p552 = pneg %p260
        $region42: #{tpu_custom_call.1} parent=11 // pred_check_branch
          %554 = sbr.rel (%p552) target = $region44
        $region43: #{tpu_custom_call.1} parent=11 // pred_region
          %556 = vsyncadd [#allocation17], 0
          %s558 = sshll.u32 %s9, 4
          %s559 = int_to_ptr.hbm [resolvable:$true] %s558
          %s560 = sshll.u32 [#allocation18], 4
          %s561 = int_to_ptr.vmem [resolvable:$true] %s560
          %563 = dma.hbm_to_vmem [thread:$0]  %s559, 16, %s561, [#allocation17]
        $region44: #{tpu_custom_call.1} parent=11 // pred_fallthru
          _
        // Predicated region
        $region45: #{tpu_custom_call.1} parent=11 // pred_check
          %p564 = pneg %p281
        $region46: #{tpu_custom_call.1} parent=11 // pred_check_branch
          %566 = sbr.rel (%p564) target = $region48
        $region47: #{tpu_custom_call.1} parent=11 // pred_region
          %568 = vsyncadd [#allocation20], 0
          %s569 = sshll.u32 %s10, 4
          %s570 = int_to_ptr.hbm [resolvable:$true] %s569
          %s571 = sshll.u32 [#allocation19], 4
          %s572 = int_to_ptr.vmem [resolvable:$true] %s571
          %577 = dma.hbm_to_vmem [thread:$0]  %s570, 1024, %s572, [#allocation20], 64, 64, 4
        $region48: #{tpu_custom_call.1} parent=11 // pred_fallthru
          _
        // Predicated region
        $region49: #{tpu_custom_call.1} parent=11 // pred_check
          %p578 = pneg %p302
        $region50: #{tpu_custom_call.1} parent=11 // pred_check_branch
          %580 = sbr.rel (%p578) target = $region52
        $region51: #{tpu_custom_call.1} parent=11 // pred_region
          %582 = vsyncadd [#allocation20], 0
          %s584 = sshll.u32 %s11, 4
          %s585 = int_to_ptr.hbm [resolvable:$true] %s584
          %s586 = sshll.u32 [#allocation21], 4
          %s587 = int_to_ptr.vmem [resolvable:$true] %s586
          %589 = dma.hbm_to_vmem [thread:$0]  %s585, 16, %s587, [#allocation20]
        $region52: #{tpu_custom_call.1} parent=11 // pred_fallthru
          _
        // Predicated region
        $region53: #{tpu_custom_call.1} parent=11 // pred_check
          %p590 = pneg %p323
        $region54: #{tpu_custom_call.1} parent=11 // pred_check_branch
          %592 = sbr.rel (%p590) target = $region56
        $region55: #{tpu_custom_call.1} parent=11 // pred_region
          %594 = vsyncadd [#allocation23], 0
          %s595 = sshll.u32 %s12, 4
          %s596 = int_to_ptr.hbm [resolvable:$true] %s595
          %s597 = sshll.u32 [#allocation22], 4
          %s598 = int_to_ptr.vmem [resolvable:$true] %s597
          %603 = dma.hbm_to_vmem [thread:$0]  %s596, 1024, %s598, [#allocation23], 64, 64, 4
        $region56: #{tpu_custom_call.1} parent=11 // pred_fallthru
          _
        // Predicated region
        $region57: #{tpu_custom_call.1} parent=11 // pred_check
          %p604 = pneg %p344
        $region58: #{tpu_custom_call.1} parent=11 // pred_check_branch
          %606 = sbr.rel (%p604) target = $region60
        $region59: #{tpu_custom_call.1} parent=11 // pred_region
          _
        $region60: #{tpu_custom_call.1} parent=11 // pred_fallthru
          _
        // Predicated region
        $region61: #{tpu_custom_call.1} parent=11 // pred_check
          %p607 = pneg %p365
        $region62: #{tpu_custom_call.1} parent=11 // pred_check_branch
          %609 = sbr.rel (%p607) target = $region64
        $region63: #{tpu_custom_call.1} parent=11 // pred_region
          %611 = vsyncadd [#allocation23], 0
          %s612 = sshll.u32 %s14, 4
          %s613 = int_to_ptr.hbm [resolvable:$true] %s612
          %s614 = sshll.u32 [#allocation24], 4
          %s615 = int_to_ptr.vmem [resolvable:$true] %s614
          %620 = dma.hbm_to_vmem [thread:$0]  %s613, 8192, %s615, [#allocation23], 256, 256, 16
        $region64: #{tpu_custom_call.1} parent=11 // pred_fallthru
          _
        // Predicated region
        $region65: #{tpu_custom_call.1} parent=11 // pred_check
          %p621 = pneg %p386
        $region66: #{tpu_custom_call.1} parent=11 // pred_check_branch
          %623 = sbr.rel (%p621) target = $region68
        $region67: #{tpu_custom_call.1} parent=11 // pred_region
          _
        $region68: #{tpu_custom_call.1} parent=11 // pred_fallthru
          _
        // Predicated region
        $region69: #{tpu_custom_call.1} parent=11 // pred_check
          %p624 = pneg %p407
        $region70: #{tpu_custom_call.1} parent=11 // pred_check_branch
          %626 = sbr.rel (%p624) target = $region72
        $region71: #{tpu_custom_call.1} parent=11 // pred_region
          _
        $region72: #{tpu_custom_call.1} parent=11 // pred_fallthru
          _
        // Predicated region
        $region73: #{tpu_custom_call.1} parent=11 // pred_check
          %p627 = pneg %p428
        $region74: #{tpu_custom_call.1} parent=11 // pred_check_branch
          %629 = sbr.rel (%p627) target = $region76
        $region75: #{tpu_custom_call.1} parent=11 // pred_region
          _
        $region76: #{tpu_custom_call.1} parent=11 // pred_fallthru
          _
      $region12: #{tpu_custom_call.1} parent=5 // pred_fallthru
        _
      %p630 = scmp.lt.s32.totalorder %s40, 2
      // Predicated region
      $region77: #{tpu_custom_call.1} parent=5 // pred_check
        %p631 = pneg %p630
      $region78: #{tpu_custom_call.1} parent=5 // pred_check_branch
        %633 = sbr.rel (%p631) target = $region80
      $region79: #{tpu_custom_call.1} parent=5 // pred_region
        // Predicated region
        $region81: #{tpu_custom_call.1} parent=79 // pred_check
          %p634 = pneg %p60
        $region82: #{tpu_custom_call.1} parent=79 // pred_check_branch
          %636 = sbr.rel (%p634) target = $region84
        $region83: #{tpu_custom_call.1} parent=79 // pred_region
          %s637 = sand.u32 %s50, 1
          %s638 = scalar_lea.sflag [#allocation5], %s637
          %s639 = sand.u32 %s50, 1
          %s640 = smul.addr %s639, 1024
          %s641 = scalar_lea.vmem [#allocation4], %s640
          %s642 = smul.u32 32, %s40
          %644 = vsyncadd %s638, 0
          %s645 = smul.addr %s642, 8
          %s646 = smul.addr %s645, 4
          %s647 = scalar_lea.hbm %s0, %s646
          %s648 = sshll.u32 %s647, 4
          %s649 = int_to_ptr.hbm [resolvable:$true] %s648
          %s650 = sshll.u32 %s641, 4
          %s651 = int_to_ptr.vmem [resolvable:$true] %s650
          %656 = dma.hbm_to_vmem [thread:$0]  %s649, 16384, %s651, %s638, 512, 512, 32
        $region84: #{tpu_custom_call.1} parent=79 // pred_fallthru
          _
        // Predicated region
        $region85: #{tpu_custom_call.1} parent=79 // pred_check
          %p657 = pneg %p86
        $region86: #{tpu_custom_call.1} parent=79 // pred_check_branch
          %659 = sbr.rel (%p657) target = $region88
        $region87: #{tpu_custom_call.1} parent=79 // pred_region
          %s660 = sand.u32 %s40, 1
          %s661 = scalar_lea.sflag [#allocation8], %s660
          %s662 = sand.u32 %s76, 1
          %s663 = smul.addr %s662, 128
          %s664 = scalar_lea.vmem [#allocation7], %s663
          %s665 = smul.u32 32, %s40
          %667 = vsyncadd %s661, 0
          %s668 = smul.addr %s665, 4
          %s669 = scalar_lea.hbm %s1, %s668
          %s670 = sshll.u32 %s669, 4
          %s671 = int_to_ptr.hbm [resolvable:$true] %s670
          %s672 = sshll.u32 %s664, 4
          %s673 = int_to_ptr.vmem [resolvable:$true] %s672
          %678 = dma.hbm_to_vmem [thread:$0]  %s671, 2048, %s673, %s661, 64, 64, 4
        $region88: #{tpu_custom_call.1} parent=79 // pred_fallthru
          _
      $region80: #{tpu_custom_call.1} parent=5 // pred_fallthru
        _
      %p679 = scmp.le.s32.totalorder 1, %s40
      %p680 = scmp.lt.s32.totalorder %s40, 3
      %p681 = pnand %p679, %p680
      %p682 = pneg %p681
      // Predicated region
      $region89: #{tpu_custom_call.1} parent=5 // pred_check
        _
      $region90: #{tpu_custom_call.1} parent=5 // pred_check_branch
        %684 = sbr.rel (%p681) target = $region92
      $region91: #{tpu_custom_call.1} parent=5 // pred_region
        %s685 = ssub.s32 %s40, 1
        %s686 = sand.u32 %s53, 1
        %s687 = scalar_lea.sflag [#allocation5], %s686
        %s688 = sand.u32 %s53, 1
        %s689 = smul.addr %s688, 1024
        %s690 = scalar_lea.vmem [#allocation4], %s689
        // Predicated region
        $region93: #{tpu_custom_call.1} parent=91 // pred_check
          %p691 = pneg %p66
        $region94: #{tpu_custom_call.1} parent=91 // pred_check_branch
          %693 = sbr.rel (%p691) target = $region96
        $region95: #{tpu_custom_call.1} parent=91 // pred_region
          %695 = dma.done %s687, 16384
        $region96: #{tpu_custom_call.1} parent=91 // pred_fallthru
          _
        %s696 = sand.u32 %s45, 1
        %s697 = scalar_lea.sflag [#allocation8], %s696
        %s698 = sand.u32 %s79, 1
        %s699 = smul.addr %s698, 128
        %s700 = scalar_lea.vmem [#allocation7], %s699
        // Predicated region
        $region97: #{tpu_custom_call.1} parent=91 // pred_check
          %p701 = pneg %p92
        $region98: #{tpu_custom_call.1} parent=91 // pred_check_branch
          %703 = sbr.rel (%p701) target = $region100
        $region99: #{tpu_custom_call.1} parent=91 // pred_region
          %705 = dma.done %s697, 2048
        $region100: #{tpu_custom_call.1} parent=91 // pred_fallthru
          _
        // Predicated region
        $region101: #{tpu_custom_call.1} parent=91 // pred_check
          %p706 = pneg %p113
        $region102: #{tpu_custom_call.1} parent=91 // pred_check_branch
          %708 = sbr.rel (%p706) target = $region104
        $region103: #{tpu_custom_call.1} parent=91 // pred_region
          %710 = dma.done [#allocation8], 32768
        $region104: #{tpu_custom_call.1} parent=91 // pred_fallthru
          _
        // Predicated region
        $region105: #{tpu_custom_call.1} parent=91 // pred_check
          %p711 = pneg %p155
        $region106: #{tpu_custom_call.1} parent=91 // pred_check_branch
          %713 = sbr.rel (%p711) target = $region108
        $region107: #{tpu_custom_call.1} parent=91 // pred_region
          %715 = dma.done [#allocation11], 8192
        $region108: #{tpu_custom_call.1} parent=91 // pred_fallthru
          _
        // Predicated region
        $region109: #{tpu_custom_call.1} parent=91 // pred_check
          %p716 = pneg %p176
        $region110: #{tpu_custom_call.1} parent=91 // pred_check_branch
          %718 = sbr.rel (%p716) target = $region112
        $region111: #{tpu_custom_call.1} parent=91 // pred_region
          %720 = dma.done [#allocation11], 32
        $region112: #{tpu_custom_call.1} parent=91 // pred_fallthru
          _
        // Predicated region
        $region113: #{tpu_custom_call.1} parent=91 // pred_check
          %p721 = pneg %p197
        $region114: #{tpu_custom_call.1} parent=91 // pred_check_branch
          %723 = sbr.rel (%p721) target = $region116
        $region115: #{tpu_custom_call.1} parent=91 // pred_region
          %725 = dma.done [#allocation14], 2048
        $region116: #{tpu_custom_call.1} parent=91 // pred_fallthru
          _
        // Predicated region
        $region117: #{tpu_custom_call.1} parent=91 // pred_check
          %p726 = pneg %p218
        $region118: #{tpu_custom_call.1} parent=91 // pred_check_branch
          %728 = sbr.rel (%p726) target = $region120
        $region119: #{tpu_custom_call.1} parent=91 // pred_region
          %730 = dma.done [#allocation14], 16
        $region120: #{tpu_custom_call.1} parent=91 // pred_fallthru
          _
        // Predicated region
        $region121: #{tpu_custom_call.1} parent=91 // pred_check
          %p731 = pneg %p239
        $region122: #{tpu_custom_call.1} parent=91 // pred_check_branch
          %733 = sbr.rel (%p731) target = $region124
        $region123: #{tpu_custom_call.1} parent=91 // pred_region
          %735 = dma.done [#allocation17], 1024
        $region124: #{tpu_custom_call.1} parent=91 // pred_fallthru
          _
        // Predicated region
        $region125: #{tpu_custom_call.1} parent=91 // pred_check
          %p736 = pneg %p260
        $region126: #{tpu_custom_call.1} parent=91 // pred_check_branch
          %738 = sbr.rel (%p736) target = $region128
        $region127: #{tpu_custom_call.1} parent=91 // pred_region
          %740 = dma.done [#allocation17], 16
        $region128: #{tpu_custom_call.1} parent=91 // pred_fallthru
          _
        // Predicated region
        $region129: #{tpu_custom_call.1} parent=91 // pred_check
          %p741 = pneg %p281
        $region130: #{tpu_custom_call.1} parent=91 // pred_check_branch
          %743 = sbr.rel (%p741) target = $region132
        $region131: #{tpu_custom_call.1} parent=91 // pred_region
          %745 = dma.done [#allocation20], 1024
        $region132: #{tpu_custom_call.1} parent=91 // pred_fallthru
          _
        // Predicated region
        $region133: #{tpu_custom_call.1} parent=91 // pred_check
          %p746 = pneg %p302
        $region134: #{tpu_custom_call.1} parent=91 // pred_check_branch
          %748 = sbr.rel (%p746) target = $region136
        $region135: #{tpu_custom_call.1} parent=91 // pred_region
          %750 = dma.done [#allocation20], 16
        $region136: #{tpu_custom_call.1} parent=91 // pred_fallthru
          _
        // Predicated region
        $region137: #{tpu_custom_call.1} parent=91 // pred_check
          %p751 = pneg %p323
        $region138: #{tpu_custom_call.1} parent=91 // pred_check_branch
          %753 = sbr.rel (%p751) target = $region140
        $region139: #{tpu_custom_call.1} parent=91 // pred_region
          %755 = dma.done [#allocation23], 1024
        $region140: #{tpu_custom_call.1} parent=91 // pred_fallthru
          _
        // Predicated region
        $region141: #{tpu_custom_call.1} parent=91 // pred_check
          %p756 = pneg %p365
        $region142: #{tpu_custom_call.1} parent=91 // pred_check_branch
          %758 = sbr.rel (%p756) target = $region144
        $region143: #{tpu_custom_call.1} parent=91 // pred_region
          %760 = dma.done [#allocation23], 8192
        $region144: #{tpu_custom_call.1} parent=91 // pred_fallthru
          _
        %s761 = sand.u32 %s53, 1
        %s762 = scalar_lea.sflag [#allocation5], %s761
        %s763 = sand.u32 %s53, 1
        %s764 = smul.addr %s763, 1024
        %s765 = scalar_lea.vmem [#allocation4], %s764
        %p766 = pneg %p66
        %p767 = pneg %p63
        %s768 = sand.u32 %s45, 1
        %s769 = scalar_lea.sflag [#allocation8], %s768
        %s770 = sand.u32 %s79, 1
        %s771 = smul.addr %s770, 128
        %s772 = scalar_lea.vmem [#allocation7], %s771
        %p773 = pneg %p92
        %p774 = pneg %p89
        %p775 = pneg %p113
        %p776 = pneg %p110
        %p777 = pneg %p134
        %p778 = pneg %p131
        %p779 = pneg %p155
        %p780 = pneg %p152
        %p781 = pneg %p176
        %p782 = pneg %p173
        %p783 = pneg %p197
        %p784 = pneg %p194
        %p785 = pneg %p218
        %p786 = pneg %p215
        %p787 = pneg %p239
        %p788 = pneg %p236
        %p789 = pneg %p260
        %p790 = pneg %p257
        %p791 = pneg %p281
        %p792 = pneg %p278
        %p793 = pneg %p302
        %p794 = pneg %p299
        %p795 = pneg %p323
        %p796 = pneg %p320
        %p797 = pneg %p344
        %p798 = pneg %p341
        %p799 = pneg %p365
        %p800 = pneg %p362
        %p801 = pneg %p386
        %p802 = pneg %p383
        %p803 = pneg %p407
        %p804 = pneg %p404
        %p805 = pneg %p428
        %p806 = pneg %p425
        %p807 = pneg %p454
        %p808 = pneg %p451
        %s809 = sand.u32 %s441, 1
        %s810 = scalar_lea.sflag [#allocation6], %s809
        %s811 = sand.u32 %s441, 1
        %s812 = smul.addr %s811, 2
        %s813 = scalar_lea.vmem [#allocation25], %s812
        %s814 = smul.u32 32, %s45
        %s815 = smul.u32 32, %s45
        %s816 = smul.u32 2, %s45
        %v817 = vld [vmem:[%s690] sm:$0xff]
        %v818 = vld [vmem:[%s690 + $0x8] sm:$0xff]
        %v819 = vld [vmem:[%s690 + $0x10] sm:$0xff]
        %v820 = vld [vmem:[%s690 + $0x18] sm:$0xff]
        %v821 = vld [vmem:[%s690 + $0x20] sm:$0xff]
        %v822 = vld [vmem:[%s690 + $0x28] sm:$0xff]
        %v823 = vld [vmem:[%s690 + $0x30] sm:$0xff]
        %v824 = vld [vmem:[%s690 + $0x38] sm:$0xff]
        %v825 = vld [vmem:[%s690 + $0x40] sm:$0xff]
        %v826 = vld [vmem:[%s690 + $0x48] sm:$0xff]
        %v827 = vld [vmem:[%s690 + $0x50] sm:$0xff]
        %v828 = vld [vmem:[%s690 + $0x58] sm:$0xff]
        %v829 = vld [vmem:[%s690 + $0x60] sm:$0xff]
        %v830 = vld [vmem:[%s690 + $0x68] sm:$0xff]
        %v831 = vld [vmem:[%s690 + $0x70] sm:$0xff]
        %v832 = vld [vmem:[%s690 + $0x78] sm:$0xff]
        %v833 = vld [vmem:[%s690 + $0x80] sm:$0xff]
        %v834 = vld [vmem:[%s690 + $0x88] sm:$0xff]
        %v835 = vld [vmem:[%s690 + $0x90] sm:$0xff]
        %v836 = vld [vmem:[%s690 + $0x98] sm:$0xff]
        %v837 = vld [vmem:[%s690 + $0xa0] sm:$0xff]
        %v838 = vld [vmem:[%s690 + $0xa8] sm:$0xff]
        %v839 = vld [vmem:[%s690 + $0xb0] sm:$0xff]
        %v840 = vld [vmem:[%s690 + $0xb8] sm:$0xff]
        %v841 = vld [vmem:[%s690 + $0xc0] sm:$0xff]
        %v842 = vld [vmem:[%s690 + $0xc8] sm:$0xff]
        %v843 = vld [vmem:[%s690 + $0xd0] sm:$0xff]
        %v844 = vld [vmem:[%s690 + $0xd8] sm:$0xff]
        %v845 = vld [vmem:[%s690 + $0xe0] sm:$0xff]
        %v846 = vld [vmem:[%s690 + $0xe8] sm:$0xff]
        %v847 = vld [vmem:[%s690 + $0xf0] sm:$0xff]
        %v848 = vld [vmem:[%s690 + $0xf8] sm:$0xff]
        %v849 = vld [vmem:[%s690 + $0x100] sm:$0xff]
        %v850 = vld [vmem:[%s690 + $0x108] sm:$0xff]
        %v851 = vld [vmem:[%s690 + $0x110] sm:$0xff]
        %v852 = vld [vmem:[%s690 + $0x118] sm:$0xff]
        %v853 = vld [vmem:[%s690 + $0x120] sm:$0xff]
        %v854 = vld [vmem:[%s690 + $0x128] sm:$0xff]
        %v855 = vld [vmem:[%s690 + $0x130] sm:$0xff]
        %v856 = vld [vmem:[%s690 + $0x138] sm:$0xff]
        %v857 = vld [vmem:[%s690 + $0x140] sm:$0xff]
        %v858 = vld [vmem:[%s690 + $0x148] sm:$0xff]
        %v859 = vld [vmem:[%s690 + $0x150] sm:$0xff]
        %v860 = vld [vmem:[%s690 + $0x158] sm:$0xff]
        %v861 = vld [vmem:[%s690 + $0x160] sm:$0xff]
        %v862 = vld [vmem:[%s690 + $0x168] sm:$0xff]
        %v863 = vld [vmem:[%s690 + $0x170] sm:$0xff]
        %v864 = vld [vmem:[%s690 + $0x178] sm:$0xff]
        %v865 = vld [vmem:[%s690 + $0x180] sm:$0xff]
        %v866 = vld [vmem:[%s690 + $0x188] sm:$0xff]
        %v867 = vld [vmem:[%s690 + $0x190] sm:$0xff]
        %v868 = vld [vmem:[%s690 + $0x198] sm:$0xff]
        %v869 = vld [vmem:[%s690 + $0x1a0] sm:$0xff]
        %v870 = vld [vmem:[%s690 + $0x1a8] sm:$0xff]
        %v871 = vld [vmem:[%s690 + $0x1b0] sm:$0xff]
        %v872 = vld [vmem:[%s690 + $0x1b8] sm:$0xff]
        %v873 = vld [vmem:[%s690 + $0x1c0] sm:$0xff]
        %v874 = vld [vmem:[%s690 + $0x1c8] sm:$0xff]
        %v875 = vld [vmem:[%s690 + $0x1d0] sm:$0xff]
        %v876 = vld [vmem:[%s690 + $0x1d8] sm:$0xff]
        %v877 = vld [vmem:[%s690 + $0x1e0] sm:$0xff]
        %v878 = vld [vmem:[%s690 + $0x1e8] sm:$0xff]
        %v879 = vld [vmem:[%s690 + $0x1f0] sm:$0xff]
        %v880 = vld [vmem:[%s690 + $0x1f8] sm:$0xff]
        %v881 = vld [vmem:[%s690 + $0x200] sm:$0xff]
        %v882 = vld [vmem:[%s690 + $0x208] sm:$0xff]
        %v883 = vld [vmem:[%s690 + $0x210] sm:$0xff]
        %v884 = vld [vmem:[%s690 + $0x218] sm:$0xff]
        %v885 = vld [vmem:[%s690 + $0x220] sm:$0xff]
        %v886 = vld [vmem:[%s690 + $0x228] sm:$0xff]
        %v887 = vld [vmem:[%s690 + $0x230] sm:$0xff]
        %v888 = vld [vmem:[%s690 + $0x238] sm:$0xff]
        %v889 = vld [vmem:[%s690 + $0x240] sm:$0xff]
        %v890 = vld [vmem:[%s690 + $0x248] sm:$0xff]
        %v891 = vld [vmem:[%s690 + $0x250] sm:$0xff]
        %v892 = vld [vmem:[%s690 + $0x258] sm:$0xff]
        %v893 = vld [vmem:[%s690 + $0x260] sm:$0xff]
        %v894 = vld [vmem:[%s690 + $0x268] sm:$0xff]
        %v895 = vld [vmem:[%s690 + $0x270] sm:$0xff]
        %v896 = vld [vmem:[%s690 + $0x278] sm:$0xff]
        %v897 = vld [vmem:[%s690 + $0x280] sm:$0xff]
        %v898 = vld [vmem:[%s690 + $0x288] sm:$0xff]
        %v899 = vld [vmem:[%s690 + $0x290] sm:$0xff]
        %v900 = vld [vmem:[%s690 + $0x298] sm:$0xff]
        %v901 = vld [vmem:[%s690 + $0x2a0] sm:$0xff]
        %v902 = vld [vmem:[%s690 + $0x2a8] sm:$0xff]
        %v903 = vld [vmem:[%s690 + $0x2b0] sm:$0xff]
        %v904 = vld [vmem:[%s690 + $0x2b8] sm:$0xff]
        %v905 = vld [vmem:[%s690 + $0x2c0] sm:$0xff]
        %v906 = vld [vmem:[%s690 + $0x2c8] sm:$0xff]
        %v907 = vld [vmem:[%s690 + $0x2d0] sm:$0xff]
        %v908 = vld [vmem:[%s690 + $0x2d8] sm:$0xff]
        %v909 = vld [vmem:[%s690 + $0x2e0] sm:$0xff]
        %v910 = vld [vmem:[%s690 + $0x2e8] sm:$0xff]
        %v911 = vld [vmem:[%s690 + $0x2f0] sm:$0xff]
        %v912 = vld [vmem:[%s690 + $0x2f8] sm:$0xff]
        %v913 = vld [vmem:[%s690 + $0x300] sm:$0xff]
        %v914 = vld [vmem:[%s690 + $0x308] sm:$0xff]
        %v915 = vld [vmem:[%s690 + $0x310] sm:$0xff]
        %v916 = vld [vmem:[%s690 + $0x318] sm:$0xff]
        %v917 = vld [vmem:[%s690 + $0x320] sm:$0xff]
        %v918 = vld [vmem:[%s690 + $0x328] sm:$0xff]
        %v919 = vld [vmem:[%s690 + $0x330] sm:$0xff]
        %v920 = vld [vmem:[%s690 + $0x338] sm:$0xff]
        %v921 = vld [vmem:[%s690 + $0x340] sm:$0xff]
        %v922 = vld [vmem:[%s690 + $0x348] sm:$0xff]
        %v923 = vld [vmem:[%s690 + $0x350] sm:$0xff]
        %v924 = vld [vmem:[%s690 + $0x358] sm:$0xff]
        %v925 = vld [vmem:[%s690 + $0x360] sm:$0xff]
        %v926 = vld [vmem:[%s690 + $0x368] sm:$0xff]
        %v927 = vld [vmem:[%s690 + $0x370] sm:$0xff]
        %v928 = vld [vmem:[%s690 + $0x378] sm:$0xff]
        %v929 = vld [vmem:[%s690 + $0x380] sm:$0xff]
        %v930 = vld [vmem:[%s690 + $0x388] sm:$0xff]
        %v931 = vld [vmem:[%s690 + $0x390] sm:$0xff]
        %v932 = vld [vmem:[%s690 + $0x398] sm:$0xff]
        %v933 = vld [vmem:[%s690 + $0x3a0] sm:$0xff]
        %v934 = vld [vmem:[%s690 + $0x3a8] sm:$0xff]
        %v935 = vld [vmem:[%s690 + $0x3b0] sm:$0xff]
        %v936 = vld [vmem:[%s690 + $0x3b8] sm:$0xff]
        %v937 = vld [vmem:[%s690 + $0x3c0] sm:$0xff]
        %v938 = vld [vmem:[%s690 + $0x3c8] sm:$0xff]
        %v939 = vld [vmem:[%s690 + $0x3d0] sm:$0xff]
        %v940 = vld [vmem:[%s690 + $0x3d8] sm:$0xff]
        %v941 = vld [vmem:[%s690 + $0x3e0] sm:$0xff]
        %v942 = vld [vmem:[%s690 + $0x3e8] sm:$0xff]
        %v943 = vld [vmem:[%s690 + $0x3f0] sm:$0xff]
        %v944 = vld [vmem:[%s690 + $0x3f8] sm:$0xff]
        %v945 = vld [vmem:[%s700] sm:$0xf]
        %v946 = vld [vmem:[%s700 + $0x4] sm:$0xf]
        %v947 = vld [vmem:[%s700 + $0x8] sm:$0xf]
        %v948 = vld [vmem:[%s700 + $0xc] sm:$0xf]
        %v949 = vld [vmem:[%s700 + $0x10] sm:$0xf]
        %v950 = vld [vmem:[%s700 + $0x14] sm:$0xf]
        %v951 = vld [vmem:[%s700 + $0x18] sm:$0xf]
        %v952 = vld [vmem:[%s700 + $0x1c] sm:$0xf]
        %v953 = vld [vmem:[%s700 + $0x20] sm:$0xf]
        %v954 = vld [vmem:[%s700 + $0x24] sm:$0xf]
        %v955 = vld [vmem:[%s700 + $0x28] sm:$0xf]
        %v956 = vld [vmem:[%s700 + $0x2c] sm:$0xf]
        %v957 = vld [vmem:[%s700 + $0x30] sm:$0xf]
        %v958 = vld [vmem:[%s700 + $0x34] sm:$0xf]
        %v959 = vld [vmem:[%s700 + $0x38] sm:$0xf]
        %v960 = vld [vmem:[%s700 + $0x3c] sm:$0xf]
        %v961 = vld [vmem:[%s700 + $0x40] sm:$0xf]
        %v962 = vld [vmem:[%s700 + $0x44] sm:$0xf]
        %v963 = vld [vmem:[%s700 + $0x48] sm:$0xf]
        %v964 = vld [vmem:[%s700 + $0x4c] sm:$0xf]
        %v965 = vld [vmem:[%s700 + $0x50] sm:$0xf]
        %v966 = vld [vmem:[%s700 + $0x54] sm:$0xf]
        %v967 = vld [vmem:[%s700 + $0x58] sm:$0xf]
        %v968 = vld [vmem:[%s700 + $0x5c] sm:$0xf]
        %v969 = vld [vmem:[%s700 + $0x60] sm:$0xf]
        %v970 = vld [vmem:[%s700 + $0x64] sm:$0xf]
        %v971 = vld [vmem:[%s700 + $0x68] sm:$0xf]
        %v972 = vld [vmem:[%s700 + $0x6c] sm:$0xf]
        %v973 = vld [vmem:[%s700 + $0x70] sm:$0xf]
        %v974 = vld [vmem:[%s700 + $0x74] sm:$0xf]
        %v975 = vld [vmem:[%s700 + $0x78] sm:$0xf]
        %v976 = vld [vmem:[%s700 + $0x7c] sm:$0xf]
        %v977 = vld [vmem:[#allocation9] sm:$0xff]
        %v978 = vld [vmem:[#allocation9 + $0x8] sm:$0xff]
        %v979 = vld [vmem:[#allocation9 + $0x10] sm:$0xff]
        %v980 = vld [vmem:[#allocation9 + $0x18] sm:$0xff]
        %v981 = vld [vmem:[#allocation9 + $0x20] sm:$0xff]
        %v982 = vld [vmem:[#allocation9 + $0x28] sm:$0xff]
        %v983 = vld [vmem:[#allocation9 + $0x30] sm:$0xff]
        %v984 = vld [vmem:[#allocation9 + $0x38] sm:$0xff]
        %v985 = vld [vmem:[#allocation9 + $0x40] sm:$0xff]
        %v986 = vld [vmem:[#allocation9 + $0x48] sm:$0xff]
        %v987 = vld [vmem:[#allocation9 + $0x50] sm:$0xff]
        %v988 = vld [vmem:[#allocation9 + $0x58] sm:$0xff]
        %v989 = vld [vmem:[#allocation9 + $0x60] sm:$0xff]
        %v990 = vld [vmem:[#allocation9 + $0x68] sm:$0xff]
        %v991 = vld [vmem:[#allocation9 + $0x70] sm:$0xff]
        %v992 = vld [vmem:[#allocation9 + $0x78] sm:$0xff]
        %v993 = vld [vmem:[#allocation9 + $0x80] sm:$0xff]
        %v994 = vld [vmem:[#allocation9 + $0x88] sm:$0xff]
        %v995 = vld [vmem:[#allocation9 + $0x90] sm:$0xff]
        %v996 = vld [vmem:[#allocation9 + $0x98] sm:$0xff]
        %v997 = vld [vmem:[#allocation9 + $0xa0] sm:$0xff]
        %v998 = vld [vmem:[#allocation9 + $0xa8] sm:$0xff]
        %v999 = vld [vmem:[#allocation9 + $0xb0] sm:$0xff]
        %v1000 = vld [vmem:[#allocation9 + $0xb8] sm:$0xff]
        %v1001 = vld [vmem:[#allocation9 + $0xc0] sm:$0xff]
        %v1002 = vld [vmem:[#allocation9 + $0xc8] sm:$0xff]
        %v1003 = vld [vmem:[#allocation9 + $0xd0] sm:$0xff]
        %v1004 = vld [vmem:[#allocation9 + $0xd8] sm:$0xff]
        %v1005 = vld [vmem:[#allocation9 + $0xe0] sm:$0xff]
        %v1006 = vld [vmem:[#allocation9 + $0xe8] sm:$0xff]
        %v1007 = vld [vmem:[#allocation9 + $0xf0] sm:$0xff]
        %v1008 = vld [vmem:[#allocation9 + $0xf8] sm:$0xff]
        %v1009 = vld [vmem:[#allocation9 + $0x100] sm:$0xff]
        %v1010 = vld [vmem:[#allocation9 + $0x108] sm:$0xff]
        %v1011 = vld [vmem:[#allocation9 + $0x110] sm:$0xff]
        %v1012 = vld [vmem:[#allocation9 + $0x118] sm:$0xff]
        %v1013 = vld [vmem:[#allocation9 + $0x120] sm:$0xff]
        %v1014 = vld [vmem:[#allocation9 + $0x128] sm:$0xff]
        %v1015 = vld [vmem:[#allocation9 + $0x130] sm:$0xff]
        %v1016 = vld [vmem:[#allocation9 + $0x138] sm:$0xff]
        %v1017 = vld [vmem:[#allocation9 + $0x140] sm:$0xff]
        %v1018 = vld [vmem:[#allocation9 + $0x148] sm:$0xff]
        %v1019 = vld [vmem:[#allocation9 + $0x150] sm:$0xff]
        %v1020 = vld [vmem:[#allocation9 + $0x158] sm:$0xff]
        %v1021 = vld [vmem:[#allocation9 + $0x160] sm:$0xff]
        %v1022 = vld [vmem:[#allocation9 + $0x168] sm:$0xff]
        %v1023 = vld [vmem:[#allocation9 + $0x170] sm:$0xff]
        %v1024 = vld [vmem:[#allocation9 + $0x178] sm:$0xff]
        %v1025 = vld [vmem:[#allocation9 + $0x180] sm:$0xff]
        %v1026 = vld [vmem:[#allocation9 + $0x188] sm:$0xff]
        %v1027 = vld [vmem:[#allocation9 + $0x190] sm:$0xff]
        %v1028 = vld [vmem:[#allocation9 + $0x198] sm:$0xff]
        %v1029 = vld [vmem:[#allocation9 + $0x1a0] sm:$0xff]
        %v1030 = vld [vmem:[#allocation9 + $0x1a8] sm:$0xff]
        %v1031 = vld [vmem:[#allocation9 + $0x1b0] sm:$0xff]
        %v1032 = vld [vmem:[#allocation9 + $0x1b8] sm:$0xff]
        %v1033 = vld [vmem:[#allocation9 + $0x1c0] sm:$0xff]
        %v1034 = vld [vmem:[#allocation9 + $0x1c8] sm:$0xff]
        %v1035 = vld [vmem:[#allocation9 + $0x1d0] sm:$0xff]
        %v1036 = vld [vmem:[#allocation9 + $0x1d8] sm:$0xff]
        %v1037 = vld [vmem:[#allocation9 + $0x1e0] sm:$0xff]
        %v1038 = vld [vmem:[#allocation9 + $0x1e8] sm:$0xff]
        %v1039 = vld [vmem:[#allocation9 + $0x1f0] sm:$0xff]
        %v1040 = vld [vmem:[#allocation9 + $0x1f8] sm:$0xff]
        %v1041 = vld [vmem:[#allocation9 + $0x200] sm:$0xff]
        %v1042 = vld [vmem:[#allocation9 + $0x208] sm:$0xff]
        %v1043 = vld [vmem:[#allocation9 + $0x210] sm:$0xff]
        %v1044 = vld [vmem:[#allocation9 + $0x218] sm:$0xff]
        %v1045 = vld [vmem:[#allocation9 + $0x220] sm:$0xff]
        %v1046 = vld [vmem:[#allocation9 + $0x228] sm:$0xff]
        %v1047 = vld [vmem:[#allocation9 + $0x230] sm:$0xff]
        %v1048 = vld [vmem:[#allocation9 + $0x238] sm:$0xff]
        %v1049 = vld [vmem:[#allocation9 + $0x240] sm:$0xff]
        %v1050 = vld [vmem:[#allocation9 + $0x248] sm:$0xff]
        %v1051 = vld [vmem:[#allocation9 + $0x250] sm:$0xff]
        %v1052 = vld [vmem:[#allocation9 + $0x258] sm:$0xff]
        %v1053 = vld [vmem:[#allocation9 + $0x260] sm:$0xff]
        %v1054 = vld [vmem:[#allocation9 + $0x268] sm:$0xff]
        %v1055 = vld [vmem:[#allocation9 + $0x270] sm:$0xff]
        %v1056 = vld [vmem:[#allocation9 + $0x278] sm:$0xff]
        %v1057 = vld [vmem:[#allocation9 + $0x280] sm:$0xff]
        %v1058 = vld [vmem:[#allocation9 + $0x288] sm:$0xff]
        %v1059 = vld [vmem:[#allocation9 + $0x290] sm:$0xff]
        %v1060 = vld [vmem:[#allocation9 + $0x298] sm:$0xff]
        %v1061 = vld [vmem:[#allocation9 + $0x2a0] sm:$0xff]
        %v1062 = vld [vmem:[#allocation9 + $0x2a8] sm:$0xff]
        %v1063 = vld [vmem:[#allocation9 + $0x2b0] sm:$0xff]
        %v1064 = vld [vmem:[#allocation9 + $0x2b8] sm:$0xff]
        %v1065 = vld [vmem:[#allocation9 + $0x2c0] sm:$0xff]
        %v1066 = vld [vmem:[#allocation9 + $0x2c8] sm:$0xff]
        %v1067 = vld [vmem:[#allocation9 + $0x2d0] sm:$0xff]
        %v1068 = vld [vmem:[#allocation9 + $0x2d8] sm:$0xff]
        %v1069 = vld [vmem:[#allocation9 + $0x2e0] sm:$0xff]
        %v1070 = vld [vmem:[#allocation9 + $0x2e8] sm:$0xff]
        %v1071 = vld [vmem:[#allocation9 + $0x2f0] sm:$0xff]
        %v1072 = vld [vmem:[#allocation9 + $0x2f8] sm:$0xff]
        %v1073 = vld [vmem:[#allocation9 + $0x300] sm:$0xff]
        %v1074 = vld [vmem:[#allocation9 + $0x308] sm:$0xff]
        %v1075 = vld [vmem:[#allocation9 + $0x310] sm:$0xff]
        %v1076 = vld [vmem:[#allocation9 + $0x318] sm:$0xff]
        %v1077 = vld [vmem:[#allocation9 + $0x320] sm:$0xff]
        %v1078 = vld [vmem:[#allocation9 + $0x328] sm:$0xff]
        %v1079 = vld [vmem:[#allocation9 + $0x330] sm:$0xff]
        %v1080 = vld [vmem:[#allocation9 + $0x338] sm:$0xff]
        %v1081 = vld [vmem:[#allocation9 + $0x340] sm:$0xff]
        %v1082 = vld [vmem:[#allocation9 + $0x348] sm:$0xff]
        %v1083 = vld [vmem:[#allocation9 + $0x350] sm:$0xff]
        %v1084 = vld [vmem:[#allocation9 + $0x358] sm:$0xff]
        %v1085 = vld [vmem:[#allocation9 + $0x360] sm:$0xff]
        %v1086 = vld [vmem:[#allocation9 + $0x368] sm:$0xff]
        %v1087 = vld [vmem:[#allocation9 + $0x370] sm:$0xff]
        %v1088 = vld [vmem:[#allocation9 + $0x378] sm:$0xff]
        %v1089 = vld [vmem:[#allocation9 + $0x380] sm:$0xff]
        %v1090 = vld [vmem:[#allocation9 + $0x388] sm:$0xff]
        %v1091 = vld [vmem:[#allocation9 + $0x390] sm:$0xff]
        %v1092 = vld [vmem:[#allocation9 + $0x398] sm:$0xff]
        %v1093 = vld [vmem:[#allocation9 + $0x3a0] sm:$0xff]
        %v1094 = vld [vmem:[#allocation9 + $0x3a8] sm:$0xff]
        %v1095 = vld [vmem:[#allocation9 + $0x3b0] sm:$0xff]
        %v1096 = vld [vmem:[#allocation9 + $0x3b8] sm:$0xff]
        %v1097 = vld [vmem:[#allocation9 + $0x3c0] sm:$0xff]
        %v1098 = vld [vmem:[#allocation9 + $0x3c8] sm:$0xff]
        %v1099 = vld [vmem:[#allocation9 + $0x3d0] sm:$0xff]
        %v1100 = vld [vmem:[#allocation9 + $0x3d8] sm:$0xff]
        %v1101 = vld [vmem:[#allocation9 + $0x3e0] sm:$0xff]
        %v1102 = vld [vmem:[#allocation9 + $0x3e8] sm:$0xff]
        %v1103 = vld [vmem:[#allocation9 + $0x3f0] sm:$0xff]
        %v1104 = vld [vmem:[#allocation9 + $0x3f8] sm:$0xff]
        %v1105 = vld [vmem:[#allocation9 + $0x400] sm:$0xff]
        %v1106 = vld [vmem:[#allocation9 + $0x408] sm:$0xff]
        %v1107 = vld [vmem:[#allocation9 + $0x410] sm:$0xff]
        %v1108 = vld [vmem:[#allocation9 + $0x418] sm:$0xff]
        %v1109 = vld [vmem:[#allocation9 + $0x420] sm:$0xff]
        %v1110 = vld [vmem:[#allocation9 + $0x428] sm:$0xff]
        %v1111 = vld [vmem:[#allocation9 + $0x430] sm:$0xff]
        %v1112 = vld [vmem:[#allocation9 + $0x438] sm:$0xff]
        %v1113 = vld [vmem:[#allocation9 + $0x440] sm:$0xff]
        %v1114 = vld [vmem:[#allocation9 + $0x448] sm:$0xff]
        %v1115 = vld [vmem:[#allocation9 + $0x450] sm:$0xff]
        %v1116 = vld [vmem:[#allocation9 + $0x458] sm:$0xff]
        %v1117 = vld [vmem:[#allocation9 + $0x460] sm:$0xff]
        %v1118 = vld [vmem:[#allocation9 + $0x468] sm:$0xff]
        %v1119 = vld [vmem:[#allocation9 + $0x470] sm:$0xff]
        %v1120 = vld [vmem:[#allocation9 + $0x478] sm:$0xff]
        %v1121 = vld [vmem:[#allocation9 + $0x480] sm:$0xff]
        %v1122 = vld [vmem:[#allocation9 + $0x488] sm:$0xff]
        %v1123 = vld [vmem:[#allocation9 + $0x490] sm:$0xff]
        %v1124 = vld [vmem:[#allocation9 + $0x498] sm:$0xff]
        %v1125 = vld [vmem:[#allocation9 + $0x4a0] sm:$0xff]
        %v1126 = vld [vmem:[#allocation9 + $0x4a8] sm:$0xff]
        %v1127 = vld [vmem:[#allocation9 + $0x4b0] sm:$0xff]
        %v1128 = vld [vmem:[#allocation9 + $0x4b8] sm:$0xff]
        %v1129 = vld [vmem:[#allocation9 + $0x4c0] sm:$0xff]
        %v1130 = vld [vmem:[#allocation9 + $0x4c8] sm:$0xff]
        %v1131 = vld [vmem:[#allocation9 + $0x4d0] sm:$0xff]
        %v1132 = vld [vmem:[#allocation9 + $0x4d8] sm:$0xff]
        %v1133 = vld [vmem:[#allocation9 + $0x4e0] sm:$0xff]
        %v1134 = vld [vmem:[#allocation9 + $0x4e8] sm:$0xff]
        %v1135 = vld [vmem:[#allocation9 + $0x4f0] sm:$0xff]
        %v1136 = vld [vmem:[#allocation9 + $0x4f8] sm:$0xff]
        %v1137 = vld [vmem:[#allocation9 + $0x500] sm:$0xff]
        %v1138 = vld [vmem:[#allocation9 + $0x508] sm:$0xff]
        %v1139 = vld [vmem:[#allocation9 + $0x510] sm:$0xff]
        %v1140 = vld [vmem:[#allocation9 + $0x518] sm:$0xff]
        %v1141 = vld [vmem:[#allocation9 + $0x520] sm:$0xff]
        %v1142 = vld [vmem:[#allocation9 + $0x528] sm:$0xff]
        %v1143 = vld [vmem:[#allocation9 + $0x530] sm:$0xff]
        %v1144 = vld [vmem:[#allocation9 + $0x538] sm:$0xff]
        %v1145 = vld [vmem:[#allocation9 + $0x540] sm:$0xff]
        %v1146 = vld [vmem:[#allocation9 + $0x548] sm:$0xff]
        %v1147 = vld [vmem:[#allocation9 + $0x550] sm:$0xff]
        %v1148 = vld [vmem:[#allocation9 + $0x558] sm:$0xff]
        %v1149 = vld [vmem:[#allocation9 + $0x560] sm:$0xff]
        %v1150 = vld [vmem:[#allocation9 + $0x568] sm:$0xff]
        %v1151 = vld [vmem:[#allocation9 + $0x570] sm:$0xff]
        %v1152 = vld [vmem:[#allocation9 + $0x578] sm:$0xff]
        %v1153 = vld [vmem:[#allocation9 + $0x580] sm:$0xff]
        %v1154 = vld [vmem:[#allocation9 + $0x588] sm:$0xff]
        %v1155 = vld [vmem:[#allocation9 + $0x590] sm:$0xff]
        %v1156 = vld [vmem:[#allocation9 + $0x598] sm:$0xff]
        %v1157 = vld [vmem:[#allocation9 + $0x5a0] sm:$0xff]
        %v1158 = vld [vmem:[#allocation9 + $0x5a8] sm:$0xff]
        %v1159 = vld [vmem:[#allocation9 + $0x5b0] sm:$0xff]
        %v1160 = vld [vmem:[#allocation9 + $0x5b8] sm:$0xff]
        %v1161 = vld [vmem:[#allocation9 + $0x5c0] sm:$0xff]
        %v1162 = vld [vmem:[#allocation9 + $0x5c8] sm:$0xff]
        %v1163 = vld [vmem:[#allocation9 + $0x5d0] sm:$0xff]
        %v1164 = vld [vmem:[#allocation9 + $0x5d8] sm:$0xff]
        %v1165 = vld [vmem:[#allocation9 + $0x5e0] sm:$0xff]
        %v1166 = vld [vmem:[#allocation9 + $0x5e8] sm:$0xff]
        %v1167 = vld [vmem:[#allocation9 + $0x5f0] sm:$0xff]
        %v1168 = vld [vmem:[#allocation9 + $0x5f8] sm:$0xff]
        %v1169 = vld [vmem:[#allocation9 + $0x600] sm:$0xff]
        %v1170 = vld [vmem:[#allocation9 + $0x608] sm:$0xff]
        %v1171 = vld [vmem:[#allocation9 + $0x610] sm:$0xff]
        %v1172 = vld [vmem:[#allocation9 + $0x618] sm:$0xff]
        %v1173 = vld [vmem:[#allocation9 + $0x620] sm:$0xff]
        %v1174 = vld [vmem:[#allocation9 + $0x628] sm:$0xff]
        %v1175 = vld [vmem:[#allocation9 + $0x630] sm:$0xff]
        %v1176 = vld [vmem:[#allocation9 + $0x638] sm:$0xff]
        %v1177 = vld [vmem:[#allocation9 + $0x640] sm:$0xff]
        %v1178 = vld [vmem:[#allocation9 + $0x648] sm:$0xff]
        %v1179 = vld [vmem:[#allocation9 + $0x650] sm:$0xff]
        %v1180 = vld [vmem:[#allocation9 + $0x658] sm:$0xff]
        %v1181 = vld [vmem:[#allocation9 + $0x660] sm:$0xff]
        %v1182 = vld [vmem:[#allocation9 + $0x668] sm:$0xff]
        %v1183 = vld [vmem:[#allocation9 + $0x670] sm:$0xff]
        %v1184 = vld [vmem:[#allocation9 + $0x678] sm:$0xff]
        %v1185 = vld [vmem:[#allocation9 + $0x680] sm:$0xff]
        %v1186 = vld [vmem:[#allocation9 + $0x688] sm:$0xff]
        %v1187 = vld [vmem:[#allocation9 + $0x690] sm:$0xff]
        %v1188 = vld [vmem:[#allocation9 + $0x698] sm:$0xff]
        %v1189 = vld [vmem:[#allocation9 + $0x6a0] sm:$0xff]
        %v1190 = vld [vmem:[#allocation9 + $0x6a8] sm:$0xff]
        %v1191 = vld [vmem:[#allocation9 + $0x6b0] sm:$0xff]
        %v1192 = vld [vmem:[#allocation9 + $0x6b8] sm:$0xff]
        %v1193 = vld [vmem:[#allocation9 + $0x6c0] sm:$0xff]
        %v1194 = vld [vmem:[#allocation9 + $0x6c8] sm:$0xff]
        %v1195 = vld [vmem:[#allocation9 + $0x6d0] sm:$0xff]
        %v1196 = vld [vmem:[#allocation9 + $0x6d8] sm:$0xff]
        %v1197 = vld [vmem:[#allocation9 + $0x6e0] sm:$0xff]
        %v1198 = vld [vmem:[#allocation9 + $0x6e8] sm:$0xff]
        %v1199 = vld [vmem:[#allocation9 + $0x6f0] sm:$0xff]
        %v1200 = vld [vmem:[#allocation9 + $0x6f8] sm:$0xff]
        %v1201 = vld [vmem:[#allocation9 + $0x700] sm:$0xff]
        %v1202 = vld [vmem:[#allocation9 + $0x708] sm:$0xff]
        %v1203 = vld [vmem:[#allocation9 + $0x710] sm:$0xff]
        %v1204 = vld [vmem:[#allocation9 + $0x718] sm:$0xff]
        %v1205 = vld [vmem:[#allocation9 + $0x720] sm:$0xff]
        %v1206 = vld [vmem:[#allocation9 + $0x728] sm:$0xff]
        %v1207 = vld [vmem:[#allocation9 + $0x730] sm:$0xff]
        %v1208 = vld [vmem:[#allocation9 + $0x738] sm:$0xff]
        %v1209 = vld [vmem:[#allocation9 + $0x740] sm:$0xff]
        %v1210 = vld [vmem:[#allocation9 + $0x748] sm:$0xff]
        %v1211 = vld [vmem:[#allocation9 + $0x750] sm:$0xff]
        %v1212 = vld [vmem:[#allocation9 + $0x758] sm:$0xff]
        %v1213 = vld [vmem:[#allocation9 + $0x760] sm:$0xff]
        %v1214 = vld [vmem:[#allocation9 + $0x768] sm:$0xff]
        %v1215 = vld [vmem:[#allocation9 + $0x770] sm:$0xff]
        %v1216 = vld [vmem:[#allocation9 + $0x778] sm:$0xff]
        %v1217 = vld [vmem:[#allocation9 + $0x780] sm:$0xff]
        %v1218 = vld [vmem:[#allocation9 + $0x788] sm:$0xff]
        %v1219 = vld [vmem:[#allocation9 + $0x790] sm:$0xff]
        %v1220 = vld [vmem:[#allocation9 + $0x798] sm:$0xff]
        %v1221 = vld [vmem:[#allocation9 + $0x7a0] sm:$0xff]
        %v1222 = vld [vmem:[#allocation9 + $0x7a8] sm:$0xff]
        %v1223 = vld [vmem:[#allocation9 + $0x7b0] sm:$0xff]
        %v1224 = vld [vmem:[#allocation9 + $0x7b8] sm:$0xff]
        %v1225 = vld [vmem:[#allocation9 + $0x7c0] sm:$0xff]
        %v1226 = vld [vmem:[#allocation9 + $0x7c8] sm:$0xff]
        %v1227 = vld [vmem:[#allocation9 + $0x7d0] sm:$0xff]
        %v1228 = vld [vmem:[#allocation9 + $0x7d8] sm:$0xff]
        %v1229 = vld [vmem:[#allocation9 + $0x7e0] sm:$0xff]
        %v1230 = vld [vmem:[#allocation9 + $0x7e8] sm:$0xff]
        %v1231 = vld [vmem:[#allocation9 + $0x7f0] sm:$0xff]
        %v1232 = vld [vmem:[#allocation9 + $0x7f8] sm:$0xff]
        %v1233 = vld [vmem:[%s3] sm:$0xf]
        %v1235 = vperm.slane %v1233, 0
        %v1236 = vperm.slane %v1233, 1
        %v1237 = vperm.slane %v1233, 2
        %v1238 = vperm.slane %v1233, 3
        %v1371 = vunpack.c.l.b16 %v817
        %v1372 = vunpack.c.h.b16 %v817
        %v1373 = vunpack.c.l.b16 %v818
        %v1374 = vunpack.c.h.b16 %v818
        %v1375 = vunpack.c.l.b16 %v819
        %v1376 = vunpack.c.h.b16 %v819
        %v1377 = vunpack.c.l.b16 %v820
        %v1378 = vunpack.c.h.b16 %v820
        %v1379 = vunpack.c.l.b16 %v821
        %v1380 = vunpack.c.h.b16 %v821
        %v1381 = vunpack.c.l.b16 %v822
        %v1382 = vunpack.c.h.b16 %v822
        %v1383 = vunpack.c.l.b16 %v823
        %v1384 = vunpack.c.h.b16 %v823
        %v1385 = vunpack.c.l.b16 %v824
        %v1386 = vunpack.c.h.b16 %v824
        %v1387 = vunpack.c.l.b16 %v825
        %v1388 = vunpack.c.h.b16 %v825
        %v1389 = vunpack.c.l.b16 %v826
        %v1390 = vunpack.c.h.b16 %v826
        %v1391 = vunpack.c.l.b16 %v827
        %v1392 = vunpack.c.h.b16 %v827
        %v1393 = vunpack.c.l.b16 %v828
        %v1394 = vunpack.c.h.b16 %v828
        %v1395 = vunpack.c.l.b16 %v829
        %v1396 = vunpack.c.h.b16 %v829
        %v1397 = vunpack.c.l.b16 %v830
        %v1398 = vunpack.c.h.b16 %v830
        %v1399 = vunpack.c.l.b16 %v831
        %v1400 = vunpack.c.h.b16 %v831
        %v1401 = vunpack.c.l.b16 %v832
        %v1402 = vunpack.c.h.b16 %v832
        %v1403 = vunpack.c.l.b16 %v833
        %v1404 = vunpack.c.h.b16 %v833
        %v1405 = vunpack.c.l.b16 %v834
        %v1406 = vunpack.c.h.b16 %v834
        %v1407 = vunpack.c.l.b16 %v835
        %v1408 = vunpack.c.h.b16 %v835
        %v1409 = vunpack.c.l.b16 %v836
        %v1410 = vunpack.c.h.b16 %v836
        %v1411 = vunpack.c.l.b16 %v837
        %v1412 = vunpack.c.h.b16 %v837
        %v1413 = vunpack.c.l.b16 %v838
        %v1414 = vunpack.c.h.b16 %v838
        %v1415 = vunpack.c.l.b16 %v839
        %v1416 = vunpack.c.h.b16 %v839
        %v1417 = vunpack.c.l.b16 %v840
        %v1418 = vunpack.c.h.b16 %v840
        %v1419 = vunpack.c.l.b16 %v841
        %v1420 = vunpack.c.h.b16 %v841
        %v1421 = vunpack.c.l.b16 %v842
        %v1422 = vunpack.c.h.b16 %v842
        %v1423 = vunpack.c.l.b16 %v843
        %v1424 = vunpack.c.h.b16 %v843
        %v1425 = vunpack.c.l.b16 %v844
        %v1426 = vunpack.c.h.b16 %v844
        %v1427 = vunpack.c.l.b16 %v845
        %v1428 = vunpack.c.h.b16 %v845
        %v1429 = vunpack.c.l.b16 %v846
        %v1430 = vunpack.c.h.b16 %v846
        %v1431 = vunpack.c.l.b16 %v847
        %v1432 = vunpack.c.h.b16 %v847
        %v1433 = vunpack.c.l.b16 %v848
        %v1434 = vunpack.c.h.b16 %v848
        %v1435 = vunpack.c.l.b16 %v849
        %v1436 = vunpack.c.h.b16 %v849
        %v1437 = vunpack.c.l.b16 %v850
        %v1438 = vunpack.c.h.b16 %v850
        %v1439 = vunpack.c.l.b16 %v851
        %v1440 = vunpack.c.h.b16 %v851
        %v1441 = vunpack.c.l.b16 %v852
        %v1442 = vunpack.c.h.b16 %v852
        %v1443 = vunpack.c.l.b16 %v853
        %v1444 = vunpack.c.h.b16 %v853
        %v1445 = vunpack.c.l.b16 %v854
        %v1446 = vunpack.c.h.b16 %v854
        %v1447 = vunpack.c.l.b16 %v855
        %v1448 = vunpack.c.h.b16 %v855
        %v1449 = vunpack.c.l.b16 %v856
        %v1450 = vunpack.c.h.b16 %v856
        %v1451 = vunpack.c.l.b16 %v857
        %v1452 = vunpack.c.h.b16 %v857
        %v1453 = vunpack.c.l.b16 %v858
        %v1454 = vunpack.c.h.b16 %v858
        %v1455 = vunpack.c.l.b16 %v859
        %v1456 = vunpack.c.h.b16 %v859
        %v1457 = vunpack.c.l.b16 %v860
        %v1458 = vunpack.c.h.b16 %v860
        %v1459 = vunpack.c.l.b16 %v861
        %v1460 = vunpack.c.h.b16 %v861
        %v1461 = vunpack.c.l.b16 %v862
        %v1462 = vunpack.c.h.b16 %v862
        %v1463 = vunpack.c.l.b16 %v863
        %v1464 = vunpack.c.h.b16 %v863
        %v1465 = vunpack.c.l.b16 %v864
        %v1466 = vunpack.c.h.b16 %v864
        %v1467 = vunpack.c.l.b16 %v865
        %v1468 = vunpack.c.h.b16 %v865
        %v1469 = vunpack.c.l.b16 %v866
        %v1470 = vunpack.c.h.b16 %v866
        %v1471 = vunpack.c.l.b16 %v867
        %v1472 = vunpack.c.h.b16 %v867
        %v1473 = vunpack.c.l.b16 %v868
        %v1474 = vunpack.c.h.b16 %v868
        %v1475 = vunpack.c.l.b16 %v869
        %v1476 = vunpack.c.h.b16 %v869
        %v1477 = vunpack.c.l.b16 %v870
        %v1478 = vunpack.c.h.b16 %v870
        %v1479 = vunpack.c.l.b16 %v871
        %v1480 = vunpack.c.h.b16 %v871
        %v1481 = vunpack.c.l.b16 %v872
        %v1482 = vunpack.c.h.b16 %v872
        %v1483 = vunpack.c.l.b16 %v873
        %v1484 = vunpack.c.h.b16 %v873
        %v1485 = vunpack.c.l.b16 %v874
        %v1486 = vunpack.c.h.b16 %v874
        %v1487 = vunpack.c.l.b16 %v875
        %v1488 = vunpack.c.h.b16 %v875
        %v1489 = vunpack.c.l.b16 %v876
        %v1490 = vunpack.c.h.b16 %v876
        %v1491 = vunpack.c.l.b16 %v877
        %v1492 = vunpack.c.h.b16 %v877
        %v1493 = vunpack.c.l.b16 %v878
        %v1494 = vunpack.c.h.b16 %v878
        %v1495 = vunpack.c.l.b16 %v879
        %v1496 = vunpack.c.h.b16 %v879
        %v1497 = vunpack.c.l.b16 %v880
        %v1498 = vunpack.c.h.b16 %v880
        %v1499 = vunpack.c.l.b16 %v881
        %v1500 = vunpack.c.h.b16 %v881
        %v1501 = vunpack.c.l.b16 %v882
        %v1502 = vunpack.c.h.b16 %v882
        %v1503 = vunpack.c.l.b16 %v883
        %v1504 = vunpack.c.h.b16 %v883
        %v1505 = vunpack.c.l.b16 %v884
        %v1506 = vunpack.c.h.b16 %v884
        %v1507 = vunpack.c.l.b16 %v885
        %v1508 = vunpack.c.h.b16 %v885
        %v1509 = vunpack.c.l.b16 %v886
        %v1510 = vunpack.c.h.b16 %v886
        %v1511 = vunpack.c.l.b16 %v887
        %v1512 = vunpack.c.h.b16 %v887
        %v1513 = vunpack.c.l.b16 %v888
        %v1514 = vunpack.c.h.b16 %v888
        %v1515 = vunpack.c.l.b16 %v889
        %v1516 = vunpack.c.h.b16 %v889
        %v1517 = vunpack.c.l.b16 %v890
        %v1518 = vunpack.c.h.b16 %v890
        %v1519 = vunpack.c.l.b16 %v891
        %v1520 = vunpack.c.h.b16 %v891
        %v1521 = vunpack.c.l.b16 %v892
        %v1522 = vunpack.c.h.b16 %v892
        %v1523 = vunpack.c.l.b16 %v893
        %v1524 = vunpack.c.h.b16 %v893
        %v1525 = vunpack.c.l.b16 %v894
        %v1526 = vunpack.c.h.b16 %v894
        %v1527 = vunpack.c.l.b16 %v895
        %v1528 = vunpack.c.h.b16 %v895
        %v1529 = vunpack.c.l.b16 %v896
        %v1530 = vunpack.c.h.b16 %v896
        %v1531 = vunpack.c.l.b16 %v897
        %v1532 = vunpack.c.h.b16 %v897
        %v1533 = vunpack.c.l.b16 %v898
        %v1534 = vunpack.c.h.b16 %v898
        %v1535 = vunpack.c.l.b16 %v899
        %v1536 = vunpack.c.h.b16 %v899
        %v1537 = vunpack.c.l.b16 %v900
        %v1538 = vunpack.c.h.b16 %v900
        %v1539 = vunpack.c.l.b16 %v901
        %v1540 = vunpack.c.h.b16 %v901
        %v1541 = vunpack.c.l.b16 %v902
        %v1542 = vunpack.c.h.b16 %v902
        %v1543 = vunpack.c.l.b16 %v903
        %v1544 = vunpack.c.h.b16 %v903
        %v1545 = vunpack.c.l.b16 %v904
        %v1546 = vunpack.c.h.b16 %v904
        %v1547 = vunpack.c.l.b16 %v905
        %v1548 = vunpack.c.h.b16 %v905
        %v1549 = vunpack.c.l.b16 %v906
        %v1550 = vunpack.c.h.b16 %v906
        %v1551 = vunpack.c.l.b16 %v907
        %v1552 = vunpack.c.h.b16 %v907
        %v1553 = vunpack.c.l.b16 %v908
        %v1554 = vunpack.c.h.b16 %v908
        %v1555 = vunpack.c.l.b16 %v909
        %v1556 = vunpack.c.h.b16 %v909
        %v1557 = vunpack.c.l.b16 %v910
        %v1558 = vunpack.c.h.b16 %v910
        %v1559 = vunpack.c.l.b16 %v911
        %v1560 = vunpack.c.h.b16 %v911
        %v1561 = vunpack.c.l.b16 %v912
        %v1562 = vunpack.c.h.b16 %v912
        %v1563 = vunpack.c.l.b16 %v913
        %v1564 = vunpack.c.h.b16 %v913
        %v1565 = vunpack.c.l.b16 %v914
        %v1566 = vunpack.c.h.b16 %v914
        %v1567 = vunpack.c.l.b16 %v915
        %v1568 = vunpack.c.h.b16 %v915
        %v1569 = vunpack.c.l.b16 %v916
        %v1570 = vunpack.c.h.b16 %v916
        %v1571 = vunpack.c.l.b16 %v917
        %v1572 = vunpack.c.h.b16 %v917
        %v1573 = vunpack.c.l.b16 %v918
        %v1574 = vunpack.c.h.b16 %v918
        %v1575 = vunpack.c.l.b16 %v919
        %v1576 = vunpack.c.h.b16 %v919
        %v1577 = vunpack.c.l.b16 %v920
        %v1578 = vunpack.c.h.b16 %v920
        %v1579 = vunpack.c.l.b16 %v921
        %v1580 = vunpack.c.h.b16 %v921
        %v1581 = vunpack.c.l.b16 %v922
        %v1582 = vunpack.c.h.b16 %v922
        %v1583 = vunpack.c.l.b16 %v923
        %v1584 = vunpack.c.h.b16 %v923
        %v1585 = vunpack.c.l.b16 %v924
        %v1586 = vunpack.c.h.b16 %v924
        %v1587 = vunpack.c.l.b16 %v925
        %v1588 = vunpack.c.h.b16 %v925
        %v1589 = vunpack.c.l.b16 %v926
        %v1590 = vunpack.c.h.b16 %v926
        %v1591 = vunpack.c.l.b16 %v927
        %v1592 = vunpack.c.h.b16 %v927
        %v1593 = vunpack.c.l.b16 %v928
        %v1594 = vunpack.c.h.b16 %v928
        %v1595 = vunpack.c.l.b16 %v929
        %v1596 = vunpack.c.h.b16 %v929
        %v1597 = vunpack.c.l.b16 %v930
        %v1598 = vunpack.c.h.b16 %v930
        %v1599 = vunpack.c.l.b16 %v931
        %v1600 = vunpack.c.h.b16 %v931
        %v1601 = vunpack.c.l.b16 %v932
        %v1602 = vunpack.c.h.b16 %v932
        %v1603 = vunpack.c.l.b16 %v933
        %v1604 = vunpack.c.h.b16 %v933
        %v1605 = vunpack.c.l.b16 %v934
        %v1606 = vunpack.c.h.b16 %v934
        %v1607 = vunpack.c.l.b16 %v935
        %v1608 = vunpack.c.h.b16 %v935
        %v1609 = vunpack.c.l.b16 %v936
        %v1610 = vunpack.c.h.b16 %v936
        %v1611 = vunpack.c.l.b16 %v937
        %v1612 = vunpack.c.h.b16 %v937
        %v1613 = vunpack.c.l.b16 %v938
        %v1614 = vunpack.c.h.b16 %v938
        %v1615 = vunpack.c.l.b16 %v939
        %v1616 = vunpack.c.h.b16 %v939
        %v1617 = vunpack.c.l.b16 %v940
        %v1618 = vunpack.c.h.b16 %v940
        %v1619 = vunpack.c.l.b16 %v941
        %v1620 = vunpack.c.h.b16 %v941
        %v1621 = vunpack.c.l.b16 %v942
        %v1622 = vunpack.c.h.b16 %v942
        %v1623 = vunpack.c.l.b16 %v943
        %v1624 = vunpack.c.h.b16 %v943
        %v1625 = vunpack.c.l.b16 %v944
        %v1626 = vunpack.c.h.b16 %v944
        %v1627 = vpack.c.b16 %v1379, %v1371
        %v1628 = vpack.c.b16 %v1380, %v1372
        %v1629 = vpack.c.b16 %v1381, %v1373
        %v1630 = vpack.c.b16 %v1382, %v1374
        %v1631 = vpack.c.b16 %v1383, %v1375
        %v1632 = vpack.c.b16 %v1384, %v1376
        %v1633 = vpack.c.b16 %v1385, %v1377
        %v1634 = vpack.c.b16 %v1386, %v1378
        %v1635 = vpack.c.b16 %v1395, %v1387
        %v1636 = vpack.c.b16 %v1396, %v1388
        %v1637 = vpack.c.b16 %v1397, %v1389
        %v1638 = vpack.c.b16 %v1398, %v1390
        %v1639 = vpack.c.b16 %v1399, %v1391
        %v1640 = vpack.c.b16 %v1400, %v1392
        %v1641 = vpack.c.b16 %v1401, %v1393
        %v1642 = vpack.c.b16 %v1402, %v1394
        %v1643 = vpack.c.b16 %v1411, %v1403
        %v1644 = vpack.c.b16 %v1412, %v1404
        %v1645 = vpack.c.b16 %v1413, %v1405
        %v1646 = vpack.c.b16 %v1414, %v1406
        %v1647 = vpack.c.b16 %v1415, %v1407
        %v1648 = vpack.c.b16 %v1416, %v1408
        %v1649 = vpack.c.b16 %v1417, %v1409
        %v1650 = vpack.c.b16 %v1418, %v1410
        %v1651 = vpack.c.b16 %v1427, %v1419
        %v1652 = vpack.c.b16 %v1428, %v1420
        %v1653 = vpack.c.b16 %v1429, %v1421
        %v1654 = vpack.c.b16 %v1430, %v1422
        %v1655 = vpack.c.b16 %v1431, %v1423
        %v1656 = vpack.c.b16 %v1432, %v1424
        %v1657 = vpack.c.b16 %v1433, %v1425
        %v1658 = vpack.c.b16 %v1434, %v1426
        %v1659 = vpack.c.b16 %v1443, %v1435
        %v1660 = vpack.c.b16 %v1444, %v1436
        %v1661 = vpack.c.b16 %v1445, %v1437
        %v1662 = vpack.c.b16 %v1446, %v1438
        %v1663 = vpack.c.b16 %v1447, %v1439
        %v1664 = vpack.c.b16 %v1448, %v1440
        %v1665 = vpack.c.b16 %v1449, %v1441
        %v1666 = vpack.c.b16 %v1450, %v1442
        %v1667 = vpack.c.b16 %v1459, %v1451
        %v1668 = vpack.c.b16 %v1460, %v1452
        %v1669 = vpack.c.b16 %v1461, %v1453
        %v1670 = vpack.c.b16 %v1462, %v1454
        %v1671 = vpack.c.b16 %v1463, %v1455
        %v1672 = vpack.c.b16 %v1464, %v1456
        %v1673 = vpack.c.b16 %v1465, %v1457
        %v1674 = vpack.c.b16 %v1466, %v1458
        %v1675 = vpack.c.b16 %v1475, %v1467
        %v1676 = vpack.c.b16 %v1476, %v1468
        %v1677 = vpack.c.b16 %v1477, %v1469
        %v1678 = vpack.c.b16 %v1478, %v1470
        %v1679 = vpack.c.b16 %v1479, %v1471
        %v1680 = vpack.c.b16 %v1480, %v1472
        %v1681 = vpack.c.b16 %v1481, %v1473
        %v1682 = vpack.c.b16 %v1482, %v1474
        %v1683 = vpack.c.b16 %v1491, %v1483
        %v1684 = vpack.c.b16 %v1492, %v1484
        %v1685 = vpack.c.b16 %v1493, %v1485
        %v1686 = vpack.c.b16 %v1494, %v1486
        %v1687 = vpack.c.b16 %v1495, %v1487
        %v1688 = vpack.c.b16 %v1496, %v1488
        %v1689 = vpack.c.b16 %v1497, %v1489
        %v1690 = vpack.c.b16 %v1498, %v1490
        %v1691 = vpack.c.b16 %v1507, %v1499
        %v1692 = vpack.c.b16 %v1508, %v1500
        %v1693 = vpack.c.b16 %v1509, %v1501
        %v1694 = vpack.c.b16 %v1510, %v1502
        %v1695 = vpack.c.b16 %v1511, %v1503
        %v1696 = vpack.c.b16 %v1512, %v1504
        %v1697 = vpack.c.b16 %v1513, %v1505
        %v1698 = vpack.c.b16 %v1514, %v1506
        %v1699 = vpack.c.b16 %v1523, %v1515
        %v1700 = vpack.c.b16 %v1524, %v1516
        %v1701 = vpack.c.b16 %v1525, %v1517
        %v1702 = vpack.c.b16 %v1526, %v1518
        %v1703 = vpack.c.b16 %v1527, %v1519
        %v1704 = vpack.c.b16 %v1528, %v1520
        %v1705 = vpack.c.b16 %v1529, %v1521
        %v1706 = vpack.c.b16 %v1530, %v1522
        %v1707 = vpack.c.b16 %v1539, %v1531
        %v1708 = vpack.c.b16 %v1540, %v1532
        %v1709 = vpack.c.b16 %v1541, %v1533
        %v1710 = vpack.c.b16 %v1542, %v1534
        %v1711 = vpack.c.b16 %v1543, %v1535
        %v1712 = vpack.c.b16 %v1544, %v1536
        %v1713 = vpack.c.b16 %v1545, %v1537
        %v1714 = vpack.c.b16 %v1546, %v1538
        %v1715 = vpack.c.b16 %v1555, %v1547
        %v1716 = vpack.c.b16 %v1556, %v1548
        %v1717 = vpack.c.b16 %v1557, %v1549
        %v1718 = vpack.c.b16 %v1558, %v1550
        %v1719 = vpack.c.b16 %v1559, %v1551
        %v1720 = vpack.c.b16 %v1560, %v1552
        %v1721 = vpack.c.b16 %v1561, %v1553
        %v1722 = vpack.c.b16 %v1562, %v1554
        %v1723 = vpack.c.b16 %v1571, %v1563
        %v1724 = vpack.c.b16 %v1572, %v1564
        %v1725 = vpack.c.b16 %v1573, %v1565
        %v1726 = vpack.c.b16 %v1574, %v1566
        %v1727 = vpack.c.b16 %v1575, %v1567
        %v1728 = vpack.c.b16 %v1576, %v1568
        %v1729 = vpack.c.b16 %v1577, %v1569
        %v1730 = vpack.c.b16 %v1578, %v1570
        %v1731 = vpack.c.b16 %v1587, %v1579
        %v1732 = vpack.c.b16 %v1588, %v1580
        %v1733 = vpack.c.b16 %v1589, %v1581
        %v1734 = vpack.c.b16 %v1590, %v1582
        %v1735 = vpack.c.b16 %v1591, %v1583
        %v1736 = vpack.c.b16 %v1592, %v1584
        %v1737 = vpack.c.b16 %v1593, %v1585
        %v1738 = vpack.c.b16 %v1594, %v1586
        %v1739 = vpack.c.b16 %v1603, %v1595
        %v1740 = vpack.c.b16 %v1604, %v1596
        %v1741 = vpack.c.b16 %v1605, %v1597
        %v1742 = vpack.c.b16 %v1606, %v1598
        %v1743 = vpack.c.b16 %v1607, %v1599
        %v1744 = vpack.c.b16 %v1608, %v1600
        %v1745 = vpack.c.b16 %v1609, %v1601
        %v1746 = vpack.c.b16 %v1610, %v1602
        %v1747 = vpack.c.b16 %v1619, %v1611
        %v1748 = vpack.c.b16 %v1620, %v1612
        %v1749 = vpack.c.b16 %v1621, %v1613
        %v1750 = vpack.c.b16 %v1622, %v1614
        %v1751 = vpack.c.b16 %v1623, %v1615
        %v1752 = vpack.c.b16 %v1624, %v1616
        %v1753 = vpack.c.b16 %v1625, %v1617
        %v1754 = vpack.c.b16 %v1626, %v1618
        %v2139 = vunpack.c.l.b16 %v977
        %v2140 = vunpack.c.h.b16 %v977
        %v2141 = vunpack.c.l.b16 %v978
        %v2142 = vunpack.c.h.b16 %v978
        %v2143 = vunpack.c.l.b16 %v979
        %v2144 = vunpack.c.h.b16 %v979
        %v2145 = vunpack.c.l.b16 %v980
        %v2146 = vunpack.c.h.b16 %v980
        %v2147 = vunpack.c.l.b16 %v981
        %v2148 = vunpack.c.h.b16 %v981
        %v2149 = vunpack.c.l.b16 %v982
        %v2150 = vunpack.c.h.b16 %v982
        %v2151 = vunpack.c.l.b16 %v983
        %v2152 = vunpack.c.h.b16 %v983
        %v2153 = vunpack.c.l.b16 %v984
        %v2154 = vunpack.c.h.b16 %v984
        %v2155 = vunpack.c.l.b16 %v985
        %v2156 = vunpack.c.h.b16 %v985
        %v2157 = vunpack.c.l.b16 %v986
        %v2158 = vunpack.c.h.b16 %v986
        %v2159 = vunpack.c.l.b16 %v987
        %v2160 = vunpack.c.h.b16 %v987
        %v2161 = vunpack.c.l.b16 %v988
        %v2162 = vunpack.c.h.b16 %v988
        %v2163 = vunpack.c.l.b16 %v989
        %v2164 = vunpack.c.h.b16 %v989
        %v2165 = vunpack.c.l.b16 %v990
        %v2166 = vunpack.c.h.b16 %v990
        %v2167 = vunpack.c.l.b16 %v991
        %v2168 = vunpack.c.h.b16 %v991
        %v2169 = vunpack.c.l.b16 %v992
        %v2170 = vunpack.c.h.b16 %v992
        %v2171 = vunpack.c.l.b16 %v993
        %v2172 = vunpack.c.h.b16 %v993
        %v2173 = vunpack.c.l.b16 %v994
        %v2174 = vunpack.c.h.b16 %v994
        %v2175 = vunpack.c.l.b16 %v995
        %v2176 = vunpack.c.h.b16 %v995
        %v2177 = vunpack.c.l.b16 %v996
        %v2178 = vunpack.c.h.b16 %v996
        %v2179 = vunpack.c.l.b16 %v997
        %v2180 = vunpack.c.h.b16 %v997
        %v2181 = vunpack.c.l.b16 %v998
        %v2182 = vunpack.c.h.b16 %v998
        %v2183 = vunpack.c.l.b16 %v999
        %v2184 = vunpack.c.h.b16 %v999
        %v2185 = vunpack.c.l.b16 %v1000
        %v2186 = vunpack.c.h.b16 %v1000
        %v2187 = vunpack.c.l.b16 %v1001
        %v2188 = vunpack.c.h.b16 %v1001
        %v2189 = vunpack.c.l.b16 %v1002
        %v2190 = vunpack.c.h.b16 %v1002
        %v2191 = vunpack.c.l.b16 %v1003
        %v2192 = vunpack.c.h.b16 %v1003
        %v2193 = vunpack.c.l.b16 %v1004
        %v2194 = vunpack.c.h.b16 %v1004
        %v2195 = vunpack.c.l.b16 %v1005
        %v2196 = vunpack.c.h.b16 %v1005
        %v2197 = vunpack.c.l.b16 %v1006
        %v2198 = vunpack.c.h.b16 %v1006
        %v2199 = vunpack.c.l.b16 %v1007
        %v2200 = vunpack.c.h.b16 %v1007
        %v2201 = vunpack.c.l.b16 %v1008
        %v2202 = vunpack.c.h.b16 %v1008
        %v2203 = vunpack.c.l.b16 %v1009
        %v2204 = vunpack.c.h.b16 %v1009
        %v2205 = vunpack.c.l.b16 %v1010
        %v2206 = vunpack.c.h.b16 %v1010
        %v2207 = vunpack.c.l.b16 %v1011
        %v2208 = vunpack.c.h.b16 %v1011
        %v2209 = vunpack.c.l.b16 %v1012
        %v2210 = vunpack.c.h.b16 %v1012
        %v2211 = vunpack.c.l.b16 %v1013
        %v2212 = vunpack.c.h.b16 %v1013
        %v2213 = vunpack.c.l.b16 %v1014
        %v2214 = vunpack.c.h.b16 %v1014
        %v2215 = vunpack.c.l.b16 %v1015
        %v2216 = vunpack.c.h.b16 %v1015
        %v2217 = vunpack.c.l.b16 %v1016
        %v2218 = vunpack.c.h.b16 %v1016
        %v2219 = vunpack.c.l.b16 %v1017
        %v2220 = vunpack.c.h.b16 %v1017
        %v2221 = vunpack.c.l.b16 %v1018
        %v2222 = vunpack.c.h.b16 %v1018
        %v2223 = vunpack.c.l.b16 %v1019
        %v2224 = vunpack.c.h.b16 %v1019
        %v2225 = vunpack.c.l.b16 %v1020
        %v2226 = vunpack.c.h.b16 %v1020
        %v2227 = vunpack.c.l.b16 %v1021
        %v2228 = vunpack.c.h.b16 %v1021
        %v2229 = vunpack.c.l.b16 %v1022
        %v2230 = vunpack.c.h.b16 %v1022
        %v2231 = vunpack.c.l.b16 %v1023
        %v2232 = vunpack.c.h.b16 %v1023
        %v2233 = vunpack.c.l.b16 %v1024
        %v2234 = vunpack.c.h.b16 %v1024
        %v2235 = vunpack.c.l.b16 %v1025
        %v2236 = vunpack.c.h.b16 %v1025
        %v2237 = vunpack.c.l.b16 %v1026
        %v2238 = vunpack.c.h.b16 %v1026
        %v2239 = vunpack.c.l.b16 %v1027
        %v2240 = vunpack.c.h.b16 %v1027
        %v2241 = vunpack.c.l.b16 %v1028
        %v2242 = vunpack.c.h.b16 %v1028
        %v2243 = vunpack.c.l.b16 %v1029
        %v2244 = vunpack.c.h.b16 %v1029
        %v2245 = vunpack.c.l.b16 %v1030
        %v2246 = vunpack.c.h.b16 %v1030
        %v2247 = vunpack.c.l.b16 %v1031
        %v2248 = vunpack.c.h.b16 %v1031
        %v2249 = vunpack.c.l.b16 %v1032
        %v2250 = vunpack.c.h.b16 %v1032
        %v2251 = vunpack.c.l.b16 %v1033
        %v2252 = vunpack.c.h.b16 %v1033
        %v2253 = vunpack.c.l.b16 %v1034
        %v2254 = vunpack.c.h.b16 %v1034
        %v2255 = vunpack.c.l.b16 %v1035
        %v2256 = vunpack.c.h.b16 %v1035
        %v2257 = vunpack.c.l.b16 %v1036
        %v2258 = vunpack.c.h.b16 %v1036
        %v2259 = vunpack.c.l.b16 %v1037
        %v2260 = vunpack.c.h.b16 %v1037
        %v2261 = vunpack.c.l.b16 %v1038
        %v2262 = vunpack.c.h.b16 %v1038
        %v2263 = vunpack.c.l.b16 %v1039
        %v2264 = vunpack.c.h.b16 %v1039
        %v2265 = vunpack.c.l.b16 %v1040
        %v2266 = vunpack.c.h.b16 %v1040
        %v2267 = vunpack.c.l.b16 %v1041
        %v2268 = vunpack.c.h.b16 %v1041
        %v2269 = vunpack.c.l.b16 %v1042
        %v2270 = vunpack.c.h.b16 %v1042
        %v2271 = vunpack.c.l.b16 %v1043
        %v2272 = vunpack.c.h.b16 %v1043
        %v2273 = vunpack.c.l.b16 %v1044
        %v2274 = vunpack.c.h.b16 %v1044
        %v2275 = vunpack.c.l.b16 %v1045
        %v2276 = vunpack.c.h.b16 %v1045
        %v2277 = vunpack.c.l.b16 %v1046
        %v2278 = vunpack.c.h.b16 %v1046
        %v2279 = vunpack.c.l.b16 %v1047
        %v2280 = vunpack.c.h.b16 %v1047
        %v2281 = vunpack.c.l.b16 %v1048
        %v2282 = vunpack.c.h.b16 %v1048
        %v2283 = vunpack.c.l.b16 %v1049
        %v2284 = vunpack.c.h.b16 %v1049
        %v2285 = vunpack.c.l.b16 %v1050
        %v2286 = vunpack.c.h.b16 %v1050
        %v2287 = vunpack.c.l.b16 %v1051
        %v2288 = vunpack.c.h.b16 %v1051
        %v2289 = vunpack.c.l.b16 %v1052
        %v2290 = vunpack.c.h.b16 %v1052
        %v2291 = vunpack.c.l.b16 %v1053
        %v2292 = vunpack.c.h.b16 %v1053
        %v2293 = vunpack.c.l.b16 %v1054
        %v2294 = vunpack.c.h.b16 %v1054
        %v2295 = vunpack.c.l.b16 %v1055
        %v2296 = vunpack.c.h.b16 %v1055
        %v2297 = vunpack.c.l.b16 %v1056
        %v2298 = vunpack.c.h.b16 %v1056
        %v2299 = vunpack.c.l.b16 %v1057
        %v2300 = vunpack.c.h.b16 %v1057
        %v2301 = vunpack.c.l.b16 %v1058
        %v2302 = vunpack.c.h.b16 %v1058
        %v2303 = vunpack.c.l.b16 %v1059
        %v2304 = vunpack.c.h.b16 %v1059
        %v2305 = vunpack.c.l.b16 %v1060
        %v2306 = vunpack.c.h.b16 %v1060
        %v2307 = vunpack.c.l.b16 %v1061
        %v2308 = vunpack.c.h.b16 %v1061
        %v2309 = vunpack.c.l.b16 %v1062
        %v2310 = vunpack.c.h.b16 %v1062
        %v2311 = vunpack.c.l.b16 %v1063
        %v2312 = vunpack.c.h.b16 %v1063
        %v2313 = vunpack.c.l.b16 %v1064
        %v2314 = vunpack.c.h.b16 %v1064
        %v2315 = vunpack.c.l.b16 %v1065
        %v2316 = vunpack.c.h.b16 %v1065
        %v2317 = vunpack.c.l.b16 %v1066
        %v2318 = vunpack.c.h.b16 %v1066
        %v2319 = vunpack.c.l.b16 %v1067
        %v2320 = vunpack.c.h.b16 %v1067
        %v2321 = vunpack.c.l.b16 %v1068
        %v2322 = vunpack.c.h.b16 %v1068
        %v2323 = vunpack.c.l.b16 %v1069
        %v2324 = vunpack.c.h.b16 %v1069
        %v2325 = vunpack.c.l.b16 %v1070
        %v2326 = vunpack.c.h.b16 %v1070
        %v2327 = vunpack.c.l.b16 %v1071
        %v2328 = vunpack.c.h.b16 %v1071
        %v2329 = vunpack.c.l.b16 %v1072
        %v2330 = vunpack.c.h.b16 %v1072
        %v2331 = vunpack.c.l.b16 %v1073
        %v2332 = vunpack.c.h.b16 %v1073
        %v2333 = vunpack.c.l.b16 %v1074
        %v2334 = vunpack.c.h.b16 %v1074
        %v2335 = vunpack.c.l.b16 %v1075
        %v2336 = vunpack.c.h.b16 %v1075
        %v2337 = vunpack.c.l.b16 %v1076
        %v2338 = vunpack.c.h.b16 %v1076
        %v2339 = vunpack.c.l.b16 %v1077
        %v2340 = vunpack.c.h.b16 %v1077
        %v2341 = vunpack.c.l.b16 %v1078
        %v2342 = vunpack.c.h.b16 %v1078
        %v2343 = vunpack.c.l.b16 %v1079
        %v2344 = vunpack.c.h.b16 %v1079
        %v2345 = vunpack.c.l.b16 %v1080
        %v2346 = vunpack.c.h.b16 %v1080
        %v2347 = vunpack.c.l.b16 %v1081
        %v2348 = vunpack.c.h.b16 %v1081
        %v2349 = vunpack.c.l.b16 %v1082
        %v2350 = vunpack.c.h.b16 %v1082
        %v2351 = vunpack.c.l.b16 %v1083
        %v2352 = vunpack.c.h.b16 %v1083
        %v2353 = vunpack.c.l.b16 %v1084
        %v2354 = vunpack.c.h.b16 %v1084
        %v2355 = vunpack.c.l.b16 %v1085
        %v2356 = vunpack.c.h.b16 %v1085
        %v2357 = vunpack.c.l.b16 %v1086
        %v2358 = vunpack.c.h.b16 %v1086
        %v2359 = vunpack.c.l.b16 %v1087
        %v2360 = vunpack.c.h.b16 %v1087
        %v2361 = vunpack.c.l.b16 %v1088
        %v2362 = vunpack.c.h.b16 %v1088
        %v2363 = vunpack.c.l.b16 %v1089
        %v2364 = vunpack.c.h.b16 %v1089
        %v2365 = vunpack.c.l.b16 %v1090
        %v2366 = vunpack.c.h.b16 %v1090
        %v2367 = vunpack.c.l.b16 %v1091
        %v2368 = vunpack.c.h.b16 %v1091
        %v2369 = vunpack.c.l.b16 %v1092
        %v2370 = vunpack.c.h.b16 %v1092
        %v2371 = vunpack.c.l.b16 %v1093
        %v2372 = vunpack.c.h.b16 %v1093
        %v2373 = vunpack.c.l.b16 %v1094
        %v2374 = vunpack.c.h.b16 %v1094
        %v2375 = vunpack.c.l.b16 %v1095
        %v2376 = vunpack.c.h.b16 %v1095
        %v2377 = vunpack.c.l.b16 %v1096
        %v2378 = vunpack.c.h.b16 %v1096
        %v2379 = vunpack.c.l.b16 %v1097
        %v2380 = vunpack.c.h.b16 %v1097
        %v2381 = vunpack.c.l.b16 %v1098
        %v2382 = vunpack.c.h.b16 %v1098
        %v2383 = vunpack.c.l.b16 %v1099
        %v2384 = vunpack.c.h.b16 %v1099
        %v2385 = vunpack.c.l.b16 %v1100
        %v2386 = vunpack.c.h.b16 %v1100
        %v2387 = vunpack.c.l.b16 %v1101
        %v2388 = vunpack.c.h.b16 %v1101
        %v2389 = vunpack.c.l.b16 %v1102
        %v2390 = vunpack.c.h.b16 %v1102
        %v2391 = vunpack.c.l.b16 %v1103
        %v2392 = vunpack.c.h.b16 %v1103
        %v2393 = vunpack.c.l.b16 %v1104
        %v2394 = vunpack.c.h.b16 %v1104
        %v2395 = vunpack.c.l.b16 %v1105
        %v2396 = vunpack.c.h.b16 %v1105
        %v2397 = vunpack.c.l.b16 %v1106
        %v2398 = vunpack.c.h.b16 %v1106
        %v2399 = vunpack.c.l.b16 %v1107
        %v2400 = vunpack.c.h.b16 %v1107
        %v2401 = vunpack.c.l.b16 %v1108
        %v2402 = vunpack.c.h.b16 %v1108
        %v2403 = vunpack.c.l.b16 %v1109
        %v2404 = vunpack.c.h.b16 %v1109
        %v2405 = vunpack.c.l.b16 %v1110
        %v2406 = vunpack.c.h.b16 %v1110
        %v2407 = vunpack.c.l.b16 %v1111
        %v2408 = vunpack.c.h.b16 %v1111
        %v2409 = vunpack.c.l.b16 %v1112
        %v2410 = vunpack.c.h.b16 %v1112
        %v2411 = vunpack.c.l.b16 %v1113
        %v2412 = vunpack.c.h.b16 %v1113
        %v2413 = vunpack.c.l.b16 %v1114
        %v2414 = vunpack.c.h.b16 %v1114
        %v2415 = vunpack.c.l.b16 %v1115
        %v2416 = vunpack.c.h.b16 %v1115
        %v2417 = vunpack.c.l.b16 %v1116
        %v2418 = vunpack.c.h.b16 %v1116
        %v2419 = vunpack.c.l.b16 %v1117
        %v2420 = vunpack.c.h.b16 %v1117
        %v2421 = vunpack.c.l.b16 %v1118
        %v2422 = vunpack.c.h.b16 %v1118
        %v2423 = vunpack.c.l.b16 %v1119
        %v2424 = vunpack.c.h.b16 %v1119
        %v2425 = vunpack.c.l.b16 %v1120
        %v2426 = vunpack.c.h.b16 %v1120
        %v2427 = vunpack.c.l.b16 %v1121
        %v2428 = vunpack.c.h.b16 %v1121
        %v2429 = vunpack.c.l.b16 %v1122
        %v2430 = vunpack.c.h.b16 %v1122
        %v2431 = vunpack.c.l.b16 %v1123
        %v2432 = vunpack.c.h.b16 %v1123
        %v2433 = vunpack.c.l.b16 %v1124
        %v2434 = vunpack.c.h.b16 %v1124
        %v2435 = vunpack.c.l.b16 %v1125
        %v2436 = vunpack.c.h.b16 %v1125
        %v2437 = vunpack.c.l.b16 %v1126
        %v2438 = vunpack.c.h.b16 %v1126
        %v2439 = vunpack.c.l.b16 %v1127
        %v2440 = vunpack.c.h.b16 %v1127
        %v2441 = vunpack.c.l.b16 %v1128
        %v2442 = vunpack.c.h.b16 %v1128
        %v2443 = vunpack.c.l.b16 %v1129
        %v2444 = vunpack.c.h.b16 %v1129
        %v2445 = vunpack.c.l.b16 %v1130
        %v2446 = vunpack.c.h.b16 %v1130
        %v2447 = vunpack.c.l.b16 %v1131
        %v2448 = vunpack.c.h.b16 %v1131
        %v2449 = vunpack.c.l.b16 %v1132
        %v2450 = vunpack.c.h.b16 %v1132
        %v2451 = vunpack.c.l.b16 %v1133
        %v2452 = vunpack.c.h.b16 %v1133
        %v2453 = vunpack.c.l.b16 %v1134
        %v2454 = vunpack.c.h.b16 %v1134
        %v2455 = vunpack.c.l.b16 %v1135
        %v2456 = vunpack.c.h.b16 %v1135
        %v2457 = vunpack.c.l.b16 %v1136
        %v2458 = vunpack.c.h.b16 %v1136
        %v2459 = vunpack.c.l.b16 %v1137
        %v2460 = vunpack.c.h.b16 %v1137
        %v2461 = vunpack.c.l.b16 %v1138
        %v2462 = vunpack.c.h.b16 %v1138
        %v2463 = vunpack.c.l.b16 %v1139
        %v2464 = vunpack.c.h.b16 %v1139
        %v2465 = vunpack.c.l.b16 %v1140
        %v2466 = vunpack.c.h.b16 %v1140
        %v2467 = vunpack.c.l.b16 %v1141
        %v2468 = vunpack.c.h.b16 %v1141
        %v2469 = vunpack.c.l.b16 %v1142
        %v2470 = vunpack.c.h.b16 %v1142
        %v2471 = vunpack.c.l.b16 %v1143
        %v2472 = vunpack.c.h.b16 %v1143
        %v2473 = vunpack.c.l.b16 %v1144
        %v2474 = vunpack.c.h.b16 %v1144
        %v2475 = vunpack.c.l.b16 %v1145
        %v2476 = vunpack.c.h.b16 %v1145
        %v2477 = vunpack.c.l.b16 %v1146
        %v2478 = vunpack.c.h.b16 %v1146
        %v2479 = vunpack.c.l.b16 %v1147
        %v2480 = vunpack.c.h.b16 %v1147
        %v2481 = vunpack.c.l.b16 %v1148
        %v2482 = vunpack.c.h.b16 %v1148
        %v2483 = vunpack.c.l.b16 %v1149
        %v2484 = vunpack.c.h.b16 %v1149
        %v2485 = vunpack.c.l.b16 %v1150
        %v2486 = vunpack.c.h.b16 %v1150
        %v2487 = vunpack.c.l.b16 %v1151
        %v2488 = vunpack.c.h.b16 %v1151
        %v2489 = vunpack.c.l.b16 %v1152
        %v2490 = vunpack.c.h.b16 %v1152
        %v2491 = vunpack.c.l.b16 %v1153
        %v2492 = vunpack.c.h.b16 %v1153
        %v2493 = vunpack.c.l.b16 %v1154
        %v2494 = vunpack.c.h.b16 %v1154
        %v2495 = vunpack.c.l.b16 %v1155
        %v2496 = vunpack.c.h.b16 %v1155
        %v2497 = vunpack.c.l.b16 %v1156
        %v2498 = vunpack.c.h.b16 %v1156
        %v2499 = vunpack.c.l.b16 %v1157
        %v2500 = vunpack.c.h.b16 %v1157
        %v2501 = vunpack.c.l.b16 %v1158
        %v2502 = vunpack.c.h.b16 %v1158
        %v2503 = vunpack.c.l.b16 %v1159
        %v2504 = vunpack.c.h.b16 %v1159
        %v2505 = vunpack.c.l.b16 %v1160
        %v2506 = vunpack.c.h.b16 %v1160
        %v2507 = vunpack.c.l.b16 %v1161
        %v2508 = vunpack.c.h.b16 %v1161
        %v2509 = vunpack.c.l.b16 %v1162
        %v2510 = vunpack.c.h.b16 %v1162
        %v2511 = vunpack.c.l.b16 %v1163
        %v2512 = vunpack.c.h.b16 %v1163
        %v2513 = vunpack.c.l.b16 %v1164
        %v2514 = vunpack.c.h.b16 %v1164
        %v2515 = vunpack.c.l.b16 %v1165
        %v2516 = vunpack.c.h.b16 %v1165
        %v2517 = vunpack.c.l.b16 %v1166
        %v2518 = vunpack.c.h.b16 %v1166
        %v2519 = vunpack.c.l.b16 %v1167
        %v2520 = vunpack.c.h.b16 %v1167
        %v2521 = vunpack.c.l.b16 %v1168
        %v2522 = vunpack.c.h.b16 %v1168
        %v2523 = vunpack.c.l.b16 %v1169
        %v2524 = vunpack.c.h.b16 %v1169
        %v2525 = vunpack.c.l.b16 %v1170
        %v2526 = vunpack.c.h.b16 %v1170
        %v2527 = vunpack.c.l.b16 %v1171
        %v2528 = vunpack.c.h.b16 %v1171
        %v2529 = vunpack.c.l.b16 %v1172
        %v2530 = vunpack.c.h.b16 %v1172
        %v2531 = vunpack.c.l.b16 %v1173
        %v2532 = vunpack.c.h.b16 %v1173
        %v2533 = vunpack.c.l.b16 %v1174
        %v2534 = vunpack.c.h.b16 %v1174
        %v2535 = vunpack.c.l.b16 %v1175
        %v2536 = vunpack.c.h.b16 %v1175
        %v2537 = vunpack.c.l.b16 %v1176
        %v2538 = vunpack.c.h.b16 %v1176
        %v2539 = vunpack.c.l.b16 %v1177
        %v2540 = vunpack.c.h.b16 %v1177
        %v2541 = vunpack.c.l.b16 %v1178
        %v2542 = vunpack.c.h.b16 %v1178
        %v2543 = vunpack.c.l.b16 %v1179
        %v2544 = vunpack.c.h.b16 %v1179
        %v2545 = vunpack.c.l.b16 %v1180
        %v2546 = vunpack.c.h.b16 %v1180
        %v2547 = vunpack.c.l.b16 %v1181
        %v2548 = vunpack.c.h.b16 %v1181
        %v2549 = vunpack.c.l.b16 %v1182
        %v2550 = vunpack.c.h.b16 %v1182
        %v2551 = vunpack.c.l.b16 %v1183
        %v2552 = vunpack.c.h.b16 %v1183
        %v2553 = vunpack.c.l.b16 %v1184
        %v2554 = vunpack.c.h.b16 %v1184
        %v2555 = vunpack.c.l.b16 %v1185
        %v2556 = vunpack.c.h.b16 %v1185
        %v2557 = vunpack.c.l.b16 %v1186
        %v2558 = vunpack.c.h.b16 %v1186
        %v2559 = vunpack.c.l.b16 %v1187
        %v2560 = vunpack.c.h.b16 %v1187
        %v2561 = vunpack.c.l.b16 %v1188
        %v2562 = vunpack.c.h.b16 %v1188
        %v2563 = vunpack.c.l.b16 %v1189
        %v2564 = vunpack.c.h.b16 %v1189
        %v2565 = vunpack.c.l.b16 %v1190
        %v2566 = vunpack.c.h.b16 %v1190
        %v2567 = vunpack.c.l.b16 %v1191
        %v2568 = vunpack.c.h.b16 %v1191
        %v2569 = vunpack.c.l.b16 %v1192
        %v2570 = vunpack.c.h.b16 %v1192
        %v2571 = vunpack.c.l.b16 %v1193
        %v2572 = vunpack.c.h.b16 %v1193
        %v2573 = vunpack.c.l.b16 %v1194
        %v2574 = vunpack.c.h.b16 %v1194
        %v2575 = vunpack.c.l.b16 %v1195
        %v2576 = vunpack.c.h.b16 %v1195
        %v2577 = vunpack.c.l.b16 %v1196
        %v2578 = vunpack.c.h.b16 %v1196
        %v2579 = vunpack.c.l.b16 %v1197
        %v2580 = vunpack.c.h.b16 %v1197
        %v2581 = vunpack.c.l.b16 %v1198
        %v2582 = vunpack.c.h.b16 %v1198
        %v2583 = vunpack.c.l.b16 %v1199
        %v2584 = vunpack.c.h.b16 %v1199
        %v2585 = vunpack.c.l.b16 %v1200
        %v2586 = vunpack.c.h.b16 %v1200
        %v2587 = vunpack.c.l.b16 %v1201
        %v2588 = vunpack.c.h.b16 %v1201
        %v2589 = vunpack.c.l.b16 %v1202
        %v2590 = vunpack.c.h.b16 %v1202
        %v2591 = vunpack.c.l.b16 %v1203
        %v2592 = vunpack.c.h.b16 %v1203
        %v2593 = vunpack.c.l.b16 %v1204
        %v2594 = vunpack.c.h.b16 %v1204
        %v2595 = vunpack.c.l.b16 %v1205
        %v2596 = vunpack.c.h.b16 %v1205
        %v2597 = vunpack.c.l.b16 %v1206
        %v2598 = vunpack.c.h.b16 %v1206
        %v2599 = vunpack.c.l.b16 %v1207
        %v2600 = vunpack.c.h.b16 %v1207
        %v2601 = vunpack.c.l.b16 %v1208
        %v2602 = vunpack.c.h.b16 %v1208
        %v2603 = vunpack.c.l.b16 %v1209
        %v2604 = vunpack.c.h.b16 %v1209
        %v2605 = vunpack.c.l.b16 %v1210
        %v2606 = vunpack.c.h.b16 %v1210
        %v2607 = vunpack.c.l.b16 %v1211
        %v2608 = vunpack.c.h.b16 %v1211
        %v2609 = vunpack.c.l.b16 %v1212
        %v2610 = vunpack.c.h.b16 %v1212
        %v2611 = vunpack.c.l.b16 %v1213
        %v2612 = vunpack.c.h.b16 %v1213
        %v2613 = vunpack.c.l.b16 %v1214
        %v2614 = vunpack.c.h.b16 %v1214
        %v2615 = vunpack.c.l.b16 %v1215
        %v2616 = vunpack.c.h.b16 %v1215
        %v2617 = vunpack.c.l.b16 %v1216
        %v2618 = vunpack.c.h.b16 %v1216
        %v2619 = vunpack.c.l.b16 %v1217
        %v2620 = vunpack.c.h.b16 %v1217
        %v2621 = vunpack.c.l.b16 %v1218
        %v2622 = vunpack.c.h.b16 %v1218
        %v2623 = vunpack.c.l.b16 %v1219
        %v2624 = vunpack.c.h.b16 %v1219
        %v2625 = vunpack.c.l.b16 %v1220
        %v2626 = vunpack.c.h.b16 %v1220
        %v2627 = vunpack.c.l.b16 %v1221
        %v2628 = vunpack.c.h.b16 %v1221
        %v2629 = vunpack.c.l.b16 %v1222
        %v2630 = vunpack.c.h.b16 %v1222
        %v2631 = vunpack.c.l.b16 %v1223
        %v2632 = vunpack.c.h.b16 %v1223
        %v2633 = vunpack.c.l.b16 %v1224
        %v2634 = vunpack.c.h.b16 %v1224
        %v2635 = vunpack.c.l.b16 %v1225
        %v2636 = vunpack.c.h.b16 %v1225
        %v2637 = vunpack.c.l.b16 %v1226
        %v2638 = vunpack.c.h.b16 %v1226
        %v2639 = vunpack.c.l.b16 %v1227
        %v2640 = vunpack.c.h.b16 %v1227
        %v2641 = vunpack.c.l.b16 %v1228
        %v2642 = vunpack.c.h.b16 %v1228
        %v2643 = vunpack.c.l.b16 %v1229
        %v2644 = vunpack.c.h.b16 %v1229
        %v2645 = vunpack.c.l.b16 %v1230
        %v2646 = vunpack.c.h.b16 %v1230
        %v2647 = vunpack.c.l.b16 %v1231
        %v2648 = vunpack.c.h.b16 %v1231
        %v2649 = vunpack.c.l.b16 %v1232
        %v2650 = vunpack.c.h.b16 %v1232
        %v2651 = vpack.c.b16 %v2143, %v2139
        %v2652 = vpack.c.b16 %v2144, %v2140
        %v2653 = vpack.c.b16 %v2145, %v2141
        %v2654 = vpack.c.b16 %v2146, %v2142
        %v2655 = vpack.c.b16 %v2151, %v2147
        %v2656 = vpack.c.b16 %v2152, %v2148
        %v2657 = vpack.c.b16 %v2153, %v2149
        %v2658 = vpack.c.b16 %v2154, %v2150
        %v2659 = vpack.c.b16 %v2159, %v2155
        %v2660 = vpack.c.b16 %v2160, %v2156
        %v2661 = vpack.c.b16 %v2161, %v2157
        %v2662 = vpack.c.b16 %v2162, %v2158
        %v2663 = vpack.c.b16 %v2167, %v2163
        %v2664 = vpack.c.b16 %v2168, %v2164
        %v2665 = vpack.c.b16 %v2169, %v2165
        %v2666 = vpack.c.b16 %v2170, %v2166
        %v2667 = vpack.c.b16 %v2175, %v2171
        %v2668 = vpack.c.b16 %v2176, %v2172
        %v2669 = vpack.c.b16 %v2177, %v2173
        %v2670 = vpack.c.b16 %v2178, %v2174
        %v2671 = vpack.c.b16 %v2183, %v2179
        %v2672 = vpack.c.b16 %v2184, %v2180
        %v2673 = vpack.c.b16 %v2185, %v2181
        %v2674 = vpack.c.b16 %v2186, %v2182
        %v2675 = vpack.c.b16 %v2191, %v2187
        %v2676 = vpack.c.b16 %v2192, %v2188
        %v2677 = vpack.c.b16 %v2193, %v2189
        %v2678 = vpack.c.b16 %v2194, %v2190
        %v2679 = vpack.c.b16 %v2199, %v2195
        %v2680 = vpack.c.b16 %v2200, %v2196
        %v2681 = vpack.c.b16 %v2201, %v2197
        %v2682 = vpack.c.b16 %v2202, %v2198
        %v2683 = vpack.c.b16 %v2207, %v2203
        %v2684 = vpack.c.b16 %v2208, %v2204
        %v2685 = vpack.c.b16 %v2209, %v2205
        %v2686 = vpack.c.b16 %v2210, %v2206
        %v2687 = vpack.c.b16 %v2215, %v2211
        %v2688 = vpack.c.b16 %v2216, %v2212
        %v2689 = vpack.c.b16 %v2217, %v2213
        %v2690 = vpack.c.b16 %v2218, %v2214
        %v2691 = vpack.c.b16 %v2223, %v2219
        %v2692 = vpack.c.b16 %v2224, %v2220
        %v2693 = vpack.c.b16 %v2225, %v2221
        %v2694 = vpack.c.b16 %v2226, %v2222
        %v2695 = vpack.c.b16 %v2231, %v2227
        %v2696 = vpack.c.b16 %v2232, %v2228
        %v2697 = vpack.c.b16 %v2233, %v2229
        %v2698 = vpack.c.b16 %v2234, %v2230
        %v2699 = vpack.c.b16 %v2239, %v2235
        %v2700 = vpack.c.b16 %v2240, %v2236
        %v2701 = vpack.c.b16 %v2241, %v2237
        %v2702 = vpack.c.b16 %v2242, %v2238
        %v2703 = vpack.c.b16 %v2247, %v2243
        %v2704 = vpack.c.b16 %v2248, %v2244
        %v2705 = vpack.c.b16 %v2249, %v2245
        %v2706 = vpack.c.b16 %v2250, %v2246
        %v2707 = vpack.c.b16 %v2255, %v2251
        %v2708 = vpack.c.b16 %v2256, %v2252
        %v2709 = vpack.c.b16 %v2257, %v2253
        %v2710 = vpack.c.b16 %v2258, %v2254
        %v2711 = vpack.c.b16 %v2263, %v2259
        %v2712 = vpack.c.b16 %v2264, %v2260
        %v2713 = vpack.c.b16 %v2265, %v2261
        %v2714 = vpack.c.b16 %v2266, %v2262
        %v2715 = vpack.c.b16 %v2271, %v2267
        %v2716 = vpack.c.b16 %v2272, %v2268
        %v2717 = vpack.c.b16 %v2273, %v2269
        %v2718 = vpack.c.b16 %v2274, %v2270
        %v2719 = vpack.c.b16 %v2279, %v2275
        %v2720 = vpack.c.b16 %v2280, %v2276
        %v2721 = vpack.c.b16 %v2281, %v2277
        %v2722 = vpack.c.b16 %v2282, %v2278
        %v2723 = vpack.c.b16 %v2287, %v2283
        %v2724 = vpack.c.b16 %v2288, %v2284
        %v2725 = vpack.c.b16 %v2289, %v2285
        %v2726 = vpack.c.b16 %v2290, %v2286
        %v2727 = vpack.c.b16 %v2295, %v2291
        %v2728 = vpack.c.b16 %v2296, %v2292
        %v2729 = vpack.c.b16 %v2297, %v2293
        %v2730 = vpack.c.b16 %v2298, %v2294
        %v2731 = vpack.c.b16 %v2303, %v2299
        %v2732 = vpack.c.b16 %v2304, %v2300
        %v2733 = vpack.c.b16 %v2305, %v2301
        %v2734 = vpack.c.b16 %v2306, %v2302
        %v2735 = vpack.c.b16 %v2311, %v2307
        %v2736 = vpack.c.b16 %v2312, %v2308
        %v2737 = vpack.c.b16 %v2313, %v2309
        %v2738 = vpack.c.b16 %v2314, %v2310
        %v2739 = vpack.c.b16 %v2319, %v2315
        %v2740 = vpack.c.b16 %v2320, %v2316
        %v2741 = vpack.c.b16 %v2321, %v2317
        %v2742 = vpack.c.b16 %v2322, %v2318
        %v2743 = vpack.c.b16 %v2327, %v2323
        %v2744 = vpack.c.b16 %v2328, %v2324
        %v2745 = vpack.c.b16 %v2329, %v2325
        %v2746 = vpack.c.b16 %v2330, %v2326
        %v2747 = vpack.c.b16 %v2335, %v2331
        %v2748 = vpack.c.b16 %v2336, %v2332
        %v2749 = vpack.c.b16 %v2337, %v2333
        %v2750 = vpack.c.b16 %v2338, %v2334
        %v2751 = vpack.c.b16 %v2343, %v2339
        %v2752 = vpack.c.b16 %v2344, %v2340
        %v2753 = vpack.c.b16 %v2345, %v2341
        %v2754 = vpack.c.b16 %v2346, %v2342
        %v2755 = vpack.c.b16 %v2351, %v2347
        %v2756 = vpack.c.b16 %v2352, %v2348
        %v2757 = vpack.c.b16 %v2353, %v2349
        %v2758 = vpack.c.b16 %v2354, %v2350
        %v2759 = vpack.c.b16 %v2359, %v2355
        %v2760 = vpack.c.b16 %v2360, %v2356
        %v2761 = vpack.c.b16 %v2361, %v2357
        %v2762 = vpack.c.b16 %v2362, %v2358
        %v2763 = vpack.c.b16 %v2367, %v2363
        %v2764 = vpack.c.b16 %v2368, %v2364
        %v2765 = vpack.c.b16 %v2369, %v2365
        %v2766 = vpack.c.b16 %v2370, %v2366
        %v2767 = vpack.c.b16 %v2375, %v2371
        %v2768 = vpack.c.b16 %v2376, %v2372
        %v2769 = vpack.c.b16 %v2377, %v2373
        %v2770 = vpack.c.b16 %v2378, %v2374
        %v2771 = vpack.c.b16 %v2383, %v2379
        %v2772 = vpack.c.b16 %v2384, %v2380
        %v2773 = vpack.c.b16 %v2385, %v2381
        %v2774 = vpack.c.b16 %v2386, %v2382
        %v2775 = vpack.c.b16 %v2391, %v2387
        %v2776 = vpack.c.b16 %v2392, %v2388
        %v2777 = vpack.c.b16 %v2393, %v2389
        %v2778 = vpack.c.b16 %v2394, %v2390
        %v2779 = vpack.c.b16 %v2399, %v2395
        %v2780 = vpack.c.b16 %v2400, %v2396
        %v2781 = vpack.c.b16 %v2401, %v2397
        %v2782 = vpack.c.b16 %v2402, %v2398
        %v2783 = vpack.c.b16 %v2407, %v2403
        %v2784 = vpack.c.b16 %v2408, %v2404
        %v2785 = vpack.c.b16 %v2409, %v2405
        %v2786 = vpack.c.b16 %v2410, %v2406
        %v2787 = vpack.c.b16 %v2415, %v2411
        %v2788 = vpack.c.b16 %v2416, %v2412
        %v2789 = vpack.c.b16 %v2417, %v2413
        %v2790 = vpack.c.b16 %v2418, %v2414
        %v2791 = vpack.c.b16 %v2423, %v2419
        %v2792 = vpack.c.b16 %v2424, %v2420
        %v2793 = vpack.c.b16 %v2425, %v2421
        %v2794 = vpack.c.b16 %v2426, %v2422
        %v2795 = vpack.c.b16 %v2431, %v2427
        %v2796 = vpack.c.b16 %v2432, %v2428
        %v2797 = vpack.c.b16 %v2433, %v2429
        %v2798 = vpack.c.b16 %v2434, %v2430
        %v2799 = vpack.c.b16 %v2439, %v2435
        %v2800 = vpack.c.b16 %v2440, %v2436
        %v2801 = vpack.c.b16 %v2441, %v2437
        %v2802 = vpack.c.b16 %v2442, %v2438
        %v2803 = vpack.c.b16 %v2447, %v2443
        %v2804 = vpack.c.b16 %v2448, %v2444
        %v2805 = vpack.c.b16 %v2449, %v2445
        %v2806 = vpack.c.b16 %v2450, %v2446
        %v2807 = vpack.c.b16 %v2455, %v2451
        %v2808 = vpack.c.b16 %v2456, %v2452
        %v2809 = vpack.c.b16 %v2457, %v2453
        %v2810 = vpack.c.b16 %v2458, %v2454
        %v2811 = vpack.c.b16 %v2463, %v2459
        %v2812 = vpack.c.b16 %v2464, %v2460
        %v2813 = vpack.c.b16 %v2465, %v2461
        %v2814 = vpack.c.b16 %v2466, %v2462
        %v2815 = vpack.c.b16 %v2471, %v2467
        %v2816 = vpack.c.b16 %v2472, %v2468
        %v2817 = vpack.c.b16 %v2473, %v2469
        %v2818 = vpack.c.b16 %v2474, %v2470
        %v2819 = vpack.c.b16 %v2479, %v2475
        %v2820 = vpack.c.b16 %v2480, %v2476
        %v2821 = vpack.c.b16 %v2481, %v2477
        %v2822 = vpack.c.b16 %v2482, %v2478
        %v2823 = vpack.c.b16 %v2487, %v2483
        %v2824 = vpack.c.b16 %v2488, %v2484
        %v2825 = vpack.c.b16 %v2489, %v2485
        %v2826 = vpack.c.b16 %v2490, %v2486
        %v2827 = vpack.c.b16 %v2495, %v2491
        %v2828 = vpack.c.b16 %v2496, %v2492
        %v2829 = vpack.c.b16 %v2497, %v2493
        %v2830 = vpack.c.b16 %v2498, %v2494
        %v2831 = vpack.c.b16 %v2503, %v2499
        %v2832 = vpack.c.b16 %v2504, %v2500
        %v2833 = vpack.c.b16 %v2505, %v2501
        %v2834 = vpack.c.b16 %v2506, %v2502
        %v2835 = vpack.c.b16 %v2511, %v2507
        %v2836 = vpack.c.b16 %v2512, %v2508
        %v2837 = vpack.c.b16 %v2513, %v2509
        %v2838 = vpack.c.b16 %v2514, %v2510
        %v2839 = vpack.c.b16 %v2519, %v2515
        %v2840 = vpack.c.b16 %v2520, %v2516
        %v2841 = vpack.c.b16 %v2521, %v2517
        %v2842 = vpack.c.b16 %v2522, %v2518
        %v2843 = vpack.c.b16 %v2527, %v2523
        %v2844 = vpack.c.b16 %v2528, %v2524
        %v2845 = vpack.c.b16 %v2529, %v2525
        %v2846 = vpack.c.b16 %v2530, %v2526
        %v2847 = vpack.c.b16 %v2535, %v2531
        %v2848 = vpack.c.b16 %v2536, %v2532
        %v2849 = vpack.c.b16 %v2537, %v2533
        %v2850 = vpack.c.b16 %v2538, %v2534
        %v2851 = vpack.c.b16 %v2543, %v2539
        %v2852 = vpack.c.b16 %v2544, %v2540
        %v2853 = vpack.c.b16 %v2545, %v2541
        %v2854 = vpack.c.b16 %v2546, %v2542
        %v2855 = vpack.c.b16 %v2551, %v2547
        %v2856 = vpack.c.b16 %v2552, %v2548
        %v2857 = vpack.c.b16 %v2553, %v2549
        %v2858 = vpack.c.b16 %v2554, %v2550
        %v2859 = vpack.c.b16 %v2559, %v2555
        %v2860 = vpack.c.b16 %v2560, %v2556
        %v2861 = vpack.c.b16 %v2561, %v2557
        %v2862 = vpack.c.b16 %v2562, %v2558
        %v2863 = vpack.c.b16 %v2567, %v2563
        %v2864 = vpack.c.b16 %v2568, %v2564
        %v2865 = vpack.c.b16 %v2569, %v2565
        %v2866 = vpack.c.b16 %v2570, %v2566
        %v2867 = vpack.c.b16 %v2575, %v2571
        %v2868 = vpack.c.b16 %v2576, %v2572
        %v2869 = vpack.c.b16 %v2577, %v2573
        %v2870 = vpack.c.b16 %v2578, %v2574
        %v2871 = vpack.c.b16 %v2583, %v2579
        %v2872 = vpack.c.b16 %v2584, %v2580
        %v2873 = vpack.c.b16 %v2585, %v2581
        %v2874 = vpack.c.b16 %v2586, %v2582
        %v2875 = vpack.c.b16 %v2591, %v2587
        %v2876 = vpack.c.b16 %v2592, %v2588
        %v2877 = vpack.c.b16 %v2593, %v2589
        %v2878 = vpack.c.b16 %v2594, %v2590
        %v2879 = vpack.c.b16 %v2599, %v2595
        %v2880 = vpack.c.b16 %v2600, %v2596
        %v2881 = vpack.c.b16 %v2601, %v2597
        %v2882 = vpack.c.b16 %v2602, %v2598
        %v2883 = vpack.c.b16 %v2607, %v2603
        %v2884 = vpack.c.b16 %v2608, %v2604
        %v2885 = vpack.c.b16 %v2609, %v2605
        %v2886 = vpack.c.b16 %v2610, %v2606
        %v2887 = vpack.c.b16 %v2615, %v2611
        %v2888 = vpack.c.b16 %v2616, %v2612
        %v2889 = vpack.c.b16 %v2617, %v2613
        %v2890 = vpack.c.b16 %v2618, %v2614
        %v2891 = vpack.c.b16 %v2623, %v2619
        %v2892 = vpack.c.b16 %v2624, %v2620
        %v2893 = vpack.c.b16 %v2625, %v2621
        %v2894 = vpack.c.b16 %v2626, %v2622
        %v2895 = vpack.c.b16 %v2631, %v2627
        %v2896 = vpack.c.b16 %v2632, %v2628
        %v2897 = vpack.c.b16 %v2633, %v2629
        %v2898 = vpack.c.b16 %v2634, %v2630
        %v2899 = vpack.c.b16 %v2639, %v2635
        %v2900 = vpack.c.b16 %v2640, %v2636
        %v2901 = vpack.c.b16 %v2641, %v2637
        %v2902 = vpack.c.b16 %v2642, %v2638
        %v2903 = vpack.c.b16 %v2647, %v2643
        %v2904 = vpack.c.b16 %v2648, %v2644
        %v2905 = vpack.c.b16 %v2649, %v2645
        %v2906 = vpack.c.b16 %v2650, %v2646
        %3163 = vmatpush.bf16.msra.mxu0 %v2679
        %3164 = vmatpush.bf16.msra.mxu0 %v2675
        %3165 = vmatpush.bf16.msra.mxu0 %v2671
        %3166 = vmatpush.bf16.msra.mxu0 %v2667
        %3167 = vmatpush.bf16.msra.mxu0 %v2663
        %3168 = vmatpush.bf16.msra.mxu0 %v2659
        %3169 = vmatpush.bf16.msra.mxu0 %v2655
        %3170 = vmatpush.bf16.msra.mxu0 %v2651
        %3171 = vmatmul.bf16.gmra.mxu0 %v1627
        %v3172 = vpop.f32.mrf.mxu0
        %v3173 = vadd.f32 %v1235, %v3172
        %v3174 = vpop.f32.mrf.mxu0
        %v3175 = vadd.f32 %v1235, %v3174
        %3176 = vmatmul.bf16.gmra.mxu0 %v1635
        %v3177 = vpop.f32.mrf.mxu0
        %v3178 = vadd.f32 %v1235, %v3177
        %v3179 = vpop.f32.mrf.mxu0
        %v3180 = vadd.f32 %v1235, %v3179
        %3181 = vmatmul.bf16.gmra.mxu0 %v1643
        %v3182 = vpop.f32.mrf.mxu0
        %v3183 = vadd.f32 %v1235, %v3182
        %v3184 = vpop.f32.mrf.mxu0
        %v3185 = vadd.f32 %v1235, %v3184
        %3186 = vmatmul.bf16.gmra.mxu0 %v1651
        %v3187 = vpop.f32.mrf.mxu0
        %v3188 = vadd.f32 %v1235, %v3187
        %v3189 = vpop.f32.mrf.mxu0
        %v3190 = vadd.f32 %v1235, %v3189
        %3191 = vmatmul.bf16.gmra.mxu0 %v1659
        %v3192 = vpop.f32.mrf.mxu0
        %v3193 = vadd.f32 %v1235, %v3192
        %v3194 = vpop.f32.mrf.mxu0
        %v3195 = vadd.f32 %v1235, %v3194
        %3196 = vmatmul.bf16.gmra.mxu0 %v1667
        %v3197 = vpop.f32.mrf.mxu0
        %v3198 = vadd.f32 %v1235, %v3197
        %v3199 = vpop.f32.mrf.mxu0
        %v3200 = vadd.f32 %v1235, %v3199
        %3201 = vmatmul.bf16.gmra.mxu0 %v1675
        %v3202 = vpop.f32.mrf.mxu0
        %v3203 = vadd.f32 %v1235, %v3202
        %v3204 = vpop.f32.mrf.mxu0
        %v3205 = vadd.f32 %v1235, %v3204
        %3206 = vmatmul.bf16.gmra.mxu0 %v1683
        %v3207 = vpop.f32.mrf.mxu0
        %v3208 = vadd.f32 %v1235, %v3207
        %v3209 = vpop.f32.mrf.mxu0
        %v3210 = vadd.f32 %v1235, %v3209
        %3211 = vmatmul.bf16.gmra.mxu0 %v1691
        %v3212 = vpop.f32.mrf.mxu0
        %v3213 = vadd.f32 %v1235, %v3212
        %v3214 = vpop.f32.mrf.mxu0
        %v3215 = vadd.f32 %v1235, %v3214
        %3216 = vmatmul.bf16.gmra.mxu0 %v1699
        %v3217 = vpop.f32.mrf.mxu0
        %v3218 = vadd.f32 %v1235, %v3217
        %v3219 = vpop.f32.mrf.mxu0
        %v3220 = vadd.f32 %v1235, %v3219
        %3221 = vmatmul.bf16.gmra.mxu0 %v1707
        %v3222 = vpop.f32.mrf.mxu0
        %v3223 = vadd.f32 %v1235, %v3222
        %v3224 = vpop.f32.mrf.mxu0
        %v3225 = vadd.f32 %v1235, %v3224
        %3226 = vmatmul.bf16.gmra.mxu0 %v1715
        %v3227 = vpop.f32.mrf.mxu0
        %v3228 = vadd.f32 %v1235, %v3227
        %v3229 = vpop.f32.mrf.mxu0
        %v3230 = vadd.f32 %v1235, %v3229
        %3231 = vmatmul.bf16.gmra.mxu0 %v1723
        %v3232 = vpop.f32.mrf.mxu0
        %v3233 = vadd.f32 %v1235, %v3232
        %v3234 = vpop.f32.mrf.mxu0
        %v3235 = vadd.f32 %v1235, %v3234
        %3236 = vmatmul.bf16.gmra.mxu0 %v1731
        %v3237 = vpop.f32.mrf.mxu0
        %v3238 = vadd.f32 %v1235, %v3237
        %v3239 = vpop.f32.mrf.mxu0
        %v3240 = vadd.f32 %v1235, %v3239
        %3241 = vmatmul.bf16.gmra.mxu0 %v1739
        %v3242 = vpop.f32.mrf.mxu0
        %v3243 = vadd.f32 %v1235, %v3242
        %v3244 = vpop.f32.mrf.mxu0
        %v3245 = vadd.f32 %v1235, %v3244
        %3246 = vmatmul.bf16.gmra.mxu0 %v1747
        %v3247 = vpop.f32.mrf.mxu0
        %v3248 = vadd.f32 %v1235, %v3247
        %v3249 = vpop.f32.mrf.mxu0
        %v3250 = vadd.f32 %v1235, %v3249
        %3251 = vdwg.mxu0
        %3252 = vmatpush.bf16.msra.mxu0 %v2711
        %3253 = vmatpush.bf16.msra.mxu0 %v2707
        %3254 = vmatpush.bf16.msra.mxu0 %v2703
        %3255 = vmatpush.bf16.msra.mxu0 %v2699
        %3256 = vmatpush.bf16.msra.mxu0 %v2695
        %3257 = vmatpush.bf16.msra.mxu0 %v2691
        %3258 = vmatpush.bf16.msra.mxu0 %v2687
        %3259 = vmatpush.bf16.msra.mxu0 %v2683
        %3260 = vmatmul.bf16.gmra.mxu0 %v1628
        %v3261 = vpop.f32.mrf.mxu0
        %v3262 = vadd.f32 %v3173, %v3261
        %v3263 = vpop.f32.mrf.mxu0
        %v3264 = vadd.f32 %v3175, %v3263
        %3265 = vmatmul.bf16.gmra.mxu0 %v1636
        %v3266 = vpop.f32.mrf.mxu0
        %v3267 = vadd.f32 %v3178, %v3266
        %v3268 = vpop.f32.mrf.mxu0
        %v3269 = vadd.f32 %v3180, %v3268
        %3270 = vmatmul.bf16.gmra.mxu0 %v1644
        %v3271 = vpop.f32.mrf.mxu0
        %v3272 = vadd.f32 %v3183, %v3271
        %v3273 = vpop.f32.mrf.mxu0
        %v3274 = vadd.f32 %v3185, %v3273
        %3275 = vmatmul.bf16.gmra.mxu0 %v1652
        %v3276 = vpop.f32.mrf.mxu0
        %v3277 = vadd.f32 %v3188, %v3276
        %v3278 = vpop.f32.mrf.mxu0
        %v3279 = vadd.f32 %v3190, %v3278
        %3280 = vmatmul.bf16.gmra.mxu0 %v1660
        %v3281 = vpop.f32.mrf.mxu0
        %v3282 = vadd.f32 %v3193, %v3281
        %v3283 = vpop.f32.mrf.mxu0
        %v3284 = vadd.f32 %v3195, %v3283
        %3285 = vmatmul.bf16.gmra.mxu0 %v1668
        %v3286 = vpop.f32.mrf.mxu0
        %v3287 = vadd.f32 %v3198, %v3286
        %v3288 = vpop.f32.mrf.mxu0
        %v3289 = vadd.f32 %v3200, %v3288
        %3290 = vmatmul.bf16.gmra.mxu0 %v1676
        %v3291 = vpop.f32.mrf.mxu0
        %v3292 = vadd.f32 %v3203, %v3291
        %v3293 = vpop.f32.mrf.mxu0
        %v3294 = vadd.f32 %v3205, %v3293
        %3295 = vmatmul.bf16.gmra.mxu0 %v1684
        %v3296 = vpop.f32.mrf.mxu0
        %v3297 = vadd.f32 %v3208, %v3296
        %v3298 = vpop.f32.mrf.mxu0
        %v3299 = vadd.f32 %v3210, %v3298
        %3300 = vmatmul.bf16.gmra.mxu0 %v1692
        %v3301 = vpop.f32.mrf.mxu0
        %v3302 = vadd.f32 %v3213, %v3301
        %v3303 = vpop.f32.mrf.mxu0
        %v3304 = vadd.f32 %v3215, %v3303
        %3305 = vmatmul.bf16.gmra.mxu0 %v1700
        %v3306 = vpop.f32.mrf.mxu0
        %v3307 = vadd.f32 %v3218, %v3306
        %v3308 = vpop.f32.mrf.mxu0
        %v3309 = vadd.f32 %v3220, %v3308
        %3310 = vmatmul.bf16.gmra.mxu0 %v1708
        %v3311 = vpop.f32.mrf.mxu0
        %v3312 = vadd.f32 %v3223, %v3311
        %v3313 = vpop.f32.mrf.mxu0
        %v3314 = vadd.f32 %v3225, %v3313
        %3315 = vmatmul.bf16.gmra.mxu0 %v1716
        %v3316 = vpop.f32.mrf.mxu0
        %v3317 = vadd.f32 %v3228, %v3316
        %v3318 = vpop.f32.mrf.mxu0
        %v3319 = vadd.f32 %v3230, %v3318
        %3320 = vmatmul.bf16.gmra.mxu0 %v1724
        %v3321 = vpop.f32.mrf.mxu0
        %v3322 = vadd.f32 %v3233, %v3321
        %v3323 = vpop.f32.mrf.mxu0
        %v3324 = vadd.f32 %v3235, %v3323
        %3325 = vmatmul.bf16.gmra.mxu0 %v1732
        %v3326 = vpop.f32.mrf.mxu0
        %v3327 = vadd.f32 %v3238, %v3326
        %v3328 = vpop.f32.mrf.mxu0
        %v3329 = vadd.f32 %v3240, %v3328
        %3330 = vmatmul.bf16.gmra.mxu0 %v1740
        %v3331 = vpop.f32.mrf.mxu0
        %v3332 = vadd.f32 %v3243, %v3331
        %v3333 = vpop.f32.mrf.mxu0
        %v3334 = vadd.f32 %v3245, %v3333
        %3335 = vmatmul.bf16.gmra.mxu0 %v1748
        %v3336 = vpop.f32.mrf.mxu0
        %v3337 = vadd.f32 %v3248, %v3336
        %v3338 = vpop.f32.mrf.mxu0
        %v3339 = vadd.f32 %v3250, %v3338
        %3340 = vdwg.mxu0
        %3341 = vmatpush.bf16.msra.mxu0 %v2743
        %3342 = vmatpush.bf16.msra.mxu0 %v2739
        %3343 = vmatpush.bf16.msra.mxu0 %v2735
        %3344 = vmatpush.bf16.msra.mxu0 %v2731
        %3345 = vmatpush.bf16.msra.mxu0 %v2727
        %3346 = vmatpush.bf16.msra.mxu0 %v2723
        %3347 = vmatpush.bf16.msra.mxu0 %v2719
        %3348 = vmatpush.bf16.msra.mxu0 %v2715
        %3349 = vmatmul.bf16.gmra.mxu0 %v1629
        %v3350 = vpop.f32.mrf.mxu0
        %v3351 = vadd.f32 %v3262, %v3350
        %v3352 = vpop.f32.mrf.mxu0
        %v3353 = vadd.f32 %v3264, %v3352
        %3354 = vmatmul.bf16.gmra.mxu0 %v1637
        %v3355 = vpop.f32.mrf.mxu0
        %v3356 = vadd.f32 %v3267, %v3355
        %v3357 = vpop.f32.mrf.mxu0
        %v3358 = vadd.f32 %v3269, %v3357
        %3359 = vmatmul.bf16.gmra.mxu0 %v1645
        %v3360 = vpop.f32.mrf.mxu0
        %v3361 = vadd.f32 %v3272, %v3360
        %v3362 = vpop.f32.mrf.mxu0
        %v3363 = vadd.f32 %v3274, %v3362
        %3364 = vmatmul.bf16.gmra.mxu0 %v1653
        %v3365 = vpop.f32.mrf.mxu0
        %v3366 = vadd.f32 %v3277, %v3365
        %v3367 = vpop.f32.mrf.mxu0
        %v3368 = vadd.f32 %v3279, %v3367
        %3369 = vmatmul.bf16.gmra.mxu0 %v1661
        %v3370 = vpop.f32.mrf.mxu0
        %v3371 = vadd.f32 %v3282, %v3370
        %v3372 = vpop.f32.mrf.mxu0
        %v3373 = vadd.f32 %v3284, %v3372
        %3374 = vmatmul.bf16.gmra.mxu0 %v1669
        %v3375 = vpop.f32.mrf.mxu0
        %v3376 = vadd.f32 %v3287, %v3375
        %v3377 = vpop.f32.mrf.mxu0
        %v3378 = vadd.f32 %v3289, %v3377
        %3379 = vmatmul.bf16.gmra.mxu0 %v1677
        %v3380 = vpop.f32.mrf.mxu0
        %v3381 = vadd.f32 %v3292, %v3380
        %v3382 = vpop.f32.mrf.mxu0
        %v3383 = vadd.f32 %v3294, %v3382
        %3384 = vmatmul.bf16.gmra.mxu0 %v1685
        %v3385 = vpop.f32.mrf.mxu0
        %v3386 = vadd.f32 %v3297, %v3385
        %v3387 = vpop.f32.mrf.mxu0
        %v3388 = vadd.f32 %v3299, %v3387
        %3389 = vmatmul.bf16.gmra.mxu0 %v1693
        %v3390 = vpop.f32.mrf.mxu0
        %v3391 = vadd.f32 %v3302, %v3390
        %v3392 = vpop.f32.mrf.mxu0
        %v3393 = vadd.f32 %v3304, %v3392
        %3394 = vmatmul.bf16.gmra.mxu0 %v1701
        %v3395 = vpop.f32.mrf.mxu0
        %v3396 = vadd.f32 %v3307, %v3395
        %v3397 = vpop.f32.mrf.mxu0
        %v3398 = vadd.f32 %v3309, %v3397
        %3399 = vmatmul.bf16.gmra.mxu0 %v1709
        %v3400 = vpop.f32.mrf.mxu0
        %v3401 = vadd.f32 %v3312, %v3400
        %v3402 = vpop.f32.mrf.mxu0
        %v3403 = vadd.f32 %v3314, %v3402
        %3404 = vmatmul.bf16.gmra.mxu0 %v1717
        %v3405 = vpop.f32.mrf.mxu0
        %v3406 = vadd.f32 %v3317, %v3405
        %v3407 = vpop.f32.mrf.mxu0
        %v3408 = vadd.f32 %v3319, %v3407
        %3409 = vmatmul.bf16.gmra.mxu0 %v1725
        %v3410 = vpop.f32.mrf.mxu0
        %v3411 = vadd.f32 %v3322, %v3410
        %v3412 = vpop.f32.mrf.mxu0
        %v3413 = vadd.f32 %v3324, %v3412
        %3414 = vmatmul.bf16.gmra.mxu0 %v1733
        %v3415 = vpop.f32.mrf.mxu0
        %v3416 = vadd.f32 %v3327, %v3415
        %v3417 = vpop.f32.mrf.mxu0
        %v3418 = vadd.f32 %v3329, %v3417
        %3419 = vmatmul.bf16.gmra.mxu0 %v1741
        %v3420 = vpop.f32.mrf.mxu0
        %v3421 = vadd.f32 %v3332, %v3420
        %v3422 = vpop.f32.mrf.mxu0
        %v3423 = vadd.f32 %v3334, %v3422
        %3424 = vmatmul.bf16.gmra.mxu0 %v1749
        %v3425 = vpop.f32.mrf.mxu0
        %v3426 = vadd.f32 %v3337, %v3425
        %v3427 = vpop.f32.mrf.mxu0
        %v3428 = vadd.f32 %v3339, %v3427
        %3429 = vdwg.mxu0
        %3430 = vmatpush.bf16.msra.mxu0 %v2775
        %3431 = vmatpush.bf16.msra.mxu0 %v2771
        %3432 = vmatpush.bf16.msra.mxu0 %v2767
        %3433 = vmatpush.bf16.msra.mxu0 %v2763
        %3434 = vmatpush.bf16.msra.mxu0 %v2759
        %3435 = vmatpush.bf16.msra.mxu0 %v2755
        %3436 = vmatpush.bf16.msra.mxu0 %v2751
        %3437 = vmatpush.bf16.msra.mxu0 %v2747
        %3438 = vmatmul.bf16.gmra.mxu0 %v1630
        %v3439 = vpop.f32.mrf.mxu0
        %v3440 = vadd.f32 %v3351, %v3439
        %v3441 = vpop.f32.mrf.mxu0
        %v3442 = vadd.f32 %v3353, %v3441
        %3443 = vmatmul.bf16.gmra.mxu0 %v1638
        %v3444 = vpop.f32.mrf.mxu0
        %v3445 = vadd.f32 %v3356, %v3444
        %v3446 = vpop.f32.mrf.mxu0
        %v3447 = vadd.f32 %v3358, %v3446
        %3448 = vmatmul.bf16.gmra.mxu0 %v1646
        %v3449 = vpop.f32.mrf.mxu0
        %v3450 = vadd.f32 %v3361, %v3449
        %v3451 = vpop.f32.mrf.mxu0
        %v3452 = vadd.f32 %v3363, %v3451
        %3453 = vmatmul.bf16.gmra.mxu0 %v1654
        %v3454 = vpop.f32.mrf.mxu0
        %v3455 = vadd.f32 %v3366, %v3454
        %v3456 = vpop.f32.mrf.mxu0
        %v3457 = vadd.f32 %v3368, %v3456
        %3458 = vmatmul.bf16.gmra.mxu0 %v1662
        %v3459 = vpop.f32.mrf.mxu0
        %v3460 = vadd.f32 %v3371, %v3459
        %v3461 = vpop.f32.mrf.mxu0
        %v3462 = vadd.f32 %v3373, %v3461
        %3463 = vmatmul.bf16.gmra.mxu0 %v1670
        %v3464 = vpop.f32.mrf.mxu0
        %v3465 = vadd.f32 %v3376, %v3464
        %v3466 = vpop.f32.mrf.mxu0
        %v3467 = vadd.f32 %v3378, %v3466
        %3468 = vmatmul.bf16.gmra.mxu0 %v1678
        %v3469 = vpop.f32.mrf.mxu0
        %v3470 = vadd.f32 %v3381, %v3469
        %v3471 = vpop.f32.mrf.mxu0
        %v3472 = vadd.f32 %v3383, %v3471
        %3473 = vmatmul.bf16.gmra.mxu0 %v1686
        %v3474 = vpop.f32.mrf.mxu0
        %v3475 = vadd.f32 %v3386, %v3474
        %v3476 = vpop.f32.mrf.mxu0
        %v3477 = vadd.f32 %v3388, %v3476
        %3478 = vmatmul.bf16.gmra.mxu0 %v1694
        %v3479 = vpop.f32.mrf.mxu0
        %v3480 = vadd.f32 %v3391, %v3479
        %v3481 = vpop.f32.mrf.mxu0
        %v3482 = vadd.f32 %v3393, %v3481
        %3483 = vmatmul.bf16.gmra.mxu0 %v1702
        %v3484 = vpop.f32.mrf.mxu0
        %v3485 = vadd.f32 %v3396, %v3484
        %v3486 = vpop.f32.mrf.mxu0
        %v3487 = vadd.f32 %v3398, %v3486
        %3488 = vmatmul.bf16.gmra.mxu0 %v1710
        %v3489 = vpop.f32.mrf.mxu0
        %v3490 = vadd.f32 %v3401, %v3489
        %v3491 = vpop.f32.mrf.mxu0
        %v3492 = vadd.f32 %v3403, %v3491
        %3493 = vmatmul.bf16.gmra.mxu0 %v1718
        %v3494 = vpop.f32.mrf.mxu0
        %v3495 = vadd.f32 %v3406, %v3494
        %v3496 = vpop.f32.mrf.mxu0
        %v3497 = vadd.f32 %v3408, %v3496
        %3498 = vmatmul.bf16.gmra.mxu0 %v1726
        %v3499 = vpop.f32.mrf.mxu0
        %v3500 = vadd.f32 %v3411, %v3499
        %v3501 = vpop.f32.mrf.mxu0
        %v3502 = vadd.f32 %v3413, %v3501
        %3503 = vmatmul.bf16.gmra.mxu0 %v1734
        %v3504 = vpop.f32.mrf.mxu0
        %v3505 = vadd.f32 %v3416, %v3504
        %v3506 = vpop.f32.mrf.mxu0
        %v3507 = vadd.f32 %v3418, %v3506
        %3508 = vmatmul.bf16.gmra.mxu0 %v1742
        %v3509 = vpop.f32.mrf.mxu0
        %v3510 = vadd.f32 %v3421, %v3509
        %v3511 = vpop.f32.mrf.mxu0
        %v3512 = vadd.f32 %v3423, %v3511
        %3513 = vmatmul.bf16.gmra.mxu0 %v1750
        %v3514 = vpop.f32.mrf.mxu0
        %v3515 = vadd.f32 %v3426, %v3514
        %v3516 = vpop.f32.mrf.mxu0
        %v3517 = vadd.f32 %v3428, %v3516
        %3518 = vdwg.mxu0
        %3519 = vmatpush.bf16.msra.mxu0 %v2807
        %3520 = vmatpush.bf16.msra.mxu0 %v2803
        %3521 = vmatpush.bf16.msra.mxu0 %v2799
        %3522 = vmatpush.bf16.msra.mxu0 %v2795
        %3523 = vmatpush.bf16.msra.mxu0 %v2791
        %3524 = vmatpush.bf16.msra.mxu0 %v2787
        %3525 = vmatpush.bf16.msra.mxu0 %v2783
        %3526 = vmatpush.bf16.msra.mxu0 %v2779
        %3527 = vmatmul.bf16.gmra.mxu0 %v1631
        %v3528 = vpop.f32.mrf.mxu0
        %v3529 = vadd.f32 %v3440, %v3528
        %v3530 = vpop.f32.mrf.mxu0
        %v3531 = vadd.f32 %v3442, %v3530
        %3532 = vmatmul.bf16.gmra.mxu0 %v1639
        %v3533 = vpop.f32.mrf.mxu0
        %v3534 = vadd.f32 %v3445, %v3533
        %v3535 = vpop.f32.mrf.mxu0
        %v3536 = vadd.f32 %v3447, %v3535
        %3537 = vmatmul.bf16.gmra.mxu0 %v1647
        %v3538 = vpop.f32.mrf.mxu0
        %v3539 = vadd.f32 %v3450, %v3538
        %v3540 = vpop.f32.mrf.mxu0
        %v3541 = vadd.f32 %v3452, %v3540
        %3542 = vmatmul.bf16.gmra.mxu0 %v1655
        %v3543 = vpop.f32.mrf.mxu0
        %v3544 = vadd.f32 %v3455, %v3543
        %v3545 = vpop.f32.mrf.mxu0
        %v3546 = vadd.f32 %v3457, %v3545
        %3547 = vmatmul.bf16.gmra.mxu0 %v1663
        %v3548 = vpop.f32.mrf.mxu0
        %v3549 = vadd.f32 %v3460, %v3548
        %v3550 = vpop.f32.mrf.mxu0
        %v3551 = vadd.f32 %v3462, %v3550
        %3552 = vmatmul.bf16.gmra.mxu0 %v1671
        %v3553 = vpop.f32.mrf.mxu0
        %v3554 = vadd.f32 %v3465, %v3553
        %v3555 = vpop.f32.mrf.mxu0
        %v3556 = vadd.f32 %v3467, %v3555
        %3557 = vmatmul.bf16.gmra.mxu0 %v1679
        %v3558 = vpop.f32.mrf.mxu0
        %v3559 = vadd.f32 %v3470, %v3558
        %v3560 = vpop.f32.mrf.mxu0
        %v3561 = vadd.f32 %v3472, %v3560
        %3562 = vmatmul.bf16.gmra.mxu0 %v1687
        %v3563 = vpop.f32.mrf.mxu0
        %v3564 = vadd.f32 %v3475, %v3563
        %v3565 = vpop.f32.mrf.mxu0
        %v3566 = vadd.f32 %v3477, %v3565
        %3567 = vmatmul.bf16.gmra.mxu0 %v1695
        %v3568 = vpop.f32.mrf.mxu0
        %v3569 = vadd.f32 %v3480, %v3568
        %v3570 = vpop.f32.mrf.mxu0
        %v3571 = vadd.f32 %v3482, %v3570
        %3572 = vmatmul.bf16.gmra.mxu0 %v1703
        %v3573 = vpop.f32.mrf.mxu0
        %v3574 = vadd.f32 %v3485, %v3573
        %v3575 = vpop.f32.mrf.mxu0
        %v3576 = vadd.f32 %v3487, %v3575
        %3577 = vmatmul.bf16.gmra.mxu0 %v1711
        %v3578 = vpop.f32.mrf.mxu0
        %v3579 = vadd.f32 %v3490, %v3578
        %v3580 = vpop.f32.mrf.mxu0
        %v3581 = vadd.f32 %v3492, %v3580
        %3582 = vmatmul.bf16.gmra.mxu0 %v1719
        %v3583 = vpop.f32.mrf.mxu0
        %v3584 = vadd.f32 %v3495, %v3583
        %v3585 = vpop.f32.mrf.mxu0
        %v3586 = vadd.f32 %v3497, %v3585
        %3587 = vmatmul.bf16.gmra.mxu0 %v1727
        %v3588 = vpop.f32.mrf.mxu0
        %v3589 = vadd.f32 %v3500, %v3588
        %v3590 = vpop.f32.mrf.mxu0
        %v3591 = vadd.f32 %v3502, %v3590
        %3592 = vmatmul.bf16.gmra.mxu0 %v1735
        %v3593 = vpop.f32.mrf.mxu0
        %v3594 = vadd.f32 %v3505, %v3593
        %v3595 = vpop.f32.mrf.mxu0
        %v3596 = vadd.f32 %v3507, %v3595
        %3597 = vmatmul.bf16.gmra.mxu0 %v1743
        %v3598 = vpop.f32.mrf.mxu0
        %v3599 = vadd.f32 %v3510, %v3598
        %v3600 = vpop.f32.mrf.mxu0
        %v3601 = vadd.f32 %v3512, %v3600
        %3602 = vmatmul.bf16.gmra.mxu0 %v1751
        %v3603 = vpop.f32.mrf.mxu0
        %v3604 = vadd.f32 %v3515, %v3603
        %v3605 = vpop.f32.mrf.mxu0
        %v3606 = vadd.f32 %v3517, %v3605
        %3607 = vdwg.mxu0
        %3608 = vmatpush.bf16.msra.mxu0 %v2839
        %3609 = vmatpush.bf16.msra.mxu0 %v2835
        %3610 = vmatpush.bf16.msra.mxu0 %v2831
        %3611 = vmatpush.bf16.msra.mxu0 %v2827
        %3612 = vmatpush.bf16.msra.mxu0 %v2823
        %3613 = vmatpush.bf16.msra.mxu0 %v2819
        %3614 = vmatpush.bf16.msra.mxu0 %v2815
        %3615 = vmatpush.bf16.msra.mxu0 %v2811
        %3616 = vmatmul.bf16.gmra.mxu0 %v1632
        %v3617 = vpop.f32.mrf.mxu0
        %v3618 = vadd.f32 %v3529, %v3617
        %v3619 = vpop.f32.mrf.mxu0
        %v3620 = vadd.f32 %v3531, %v3619
        %3621 = vmatmul.bf16.gmra.mxu0 %v1640
        %v3622 = vpop.f32.mrf.mxu0
        %v3623 = vadd.f32 %v3534, %v3622
        %v3624 = vpop.f32.mrf.mxu0
        %v3625 = vadd.f32 %v3536, %v3624
        %3626 = vmatmul.bf16.gmra.mxu0 %v1648
        %v3627 = vpop.f32.mrf.mxu0
        %v3628 = vadd.f32 %v3539, %v3627
        %v3629 = vpop.f32.mrf.mxu0
        %v3630 = vadd.f32 %v3541, %v3629
        %3631 = vmatmul.bf16.gmra.mxu0 %v1656
        %v3632 = vpop.f32.mrf.mxu0
        %v3633 = vadd.f32 %v3544, %v3632
        %v3634 = vpop.f32.mrf.mxu0
        %v3635 = vadd.f32 %v3546, %v3634
        %3636 = vmatmul.bf16.gmra.mxu0 %v1664
        %v3637 = vpop.f32.mrf.mxu0
        %v3638 = vadd.f32 %v3549, %v3637
        %v3639 = vpop.f32.mrf.mxu0
        %v3640 = vadd.f32 %v3551, %v3639
        %3641 = vmatmul.bf16.gmra.mxu0 %v1672
        %v3642 = vpop.f32.mrf.mxu0
        %v3643 = vadd.f32 %v3554, %v3642
        %v3644 = vpop.f32.mrf.mxu0
        %v3645 = vadd.f32 %v3556, %v3644
        %3646 = vmatmul.bf16.gmra.mxu0 %v1680
        %v3647 = vpop.f32.mrf.mxu0
        %v3648 = vadd.f32 %v3559, %v3647
        %v3649 = vpop.f32.mrf.mxu0
        %v3650 = vadd.f32 %v3561, %v3649
        %3651 = vmatmul.bf16.gmra.mxu0 %v1688
        %v3652 = vpop.f32.mrf.mxu0
        %v3653 = vadd.f32 %v3564, %v3652
        %v3654 = vpop.f32.mrf.mxu0
        %v3655 = vadd.f32 %v3566, %v3654
        %3656 = vmatmul.bf16.gmra.mxu0 %v1696
        %v3657 = vpop.f32.mrf.mxu0
        %v3658 = vadd.f32 %v3569, %v3657
        %v3659 = vpop.f32.mrf.mxu0
        %v3660 = vadd.f32 %v3571, %v3659
        %3661 = vmatmul.bf16.gmra.mxu0 %v1704
        %v3662 = vpop.f32.mrf.mxu0
        %v3663 = vadd.f32 %v3574, %v3662
        %v3664 = vpop.f32.mrf.mxu0
        %v3665 = vadd.f32 %v3576, %v3664
        %3666 = vmatmul.bf16.gmra.mxu0 %v1712
        %v3667 = vpop.f32.mrf.mxu0
        %v3668 = vadd.f32 %v3579, %v3667
        %v3669 = vpop.f32.mrf.mxu0
        %v3670 = vadd.f32 %v3581, %v3669
        %3671 = vmatmul.bf16.gmra.mxu0 %v1720
        %v3672 = vpop.f32.mrf.mxu0
        %v3673 = vadd.f32 %v3584, %v3672
        %v3674 = vpop.f32.mrf.mxu0
        %v3675 = vadd.f32 %v3586, %v3674
        %3676 = vmatmul.bf16.gmra.mxu0 %v1728
        %v3677 = vpop.f32.mrf.mxu0
        %v3678 = vadd.f32 %v3589, %v3677
        %v3679 = vpop.f32.mrf.mxu0
        %v3680 = vadd.f32 %v3591, %v3679
        %3681 = vmatmul.bf16.gmra.mxu0 %v1736
        %v3682 = vpop.f32.mrf.mxu0
        %v3683 = vadd.f32 %v3594, %v3682
        %v3684 = vpop.f32.mrf.mxu0
        %v3685 = vadd.f32 %v3596, %v3684
        %3686 = vmatmul.bf16.gmra.mxu0 %v1744
        %v3687 = vpop.f32.mrf.mxu0
        %v3688 = vadd.f32 %v3599, %v3687
        %v3689 = vpop.f32.mrf.mxu0
        %v3690 = vadd.f32 %v3601, %v3689
        %3691 = vmatmul.bf16.gmra.mxu0 %v1752
        %v3692 = vpop.f32.mrf.mxu0
        %v3693 = vadd.f32 %v3604, %v3692
        %v3694 = vpop.f32.mrf.mxu0
        %v3695 = vadd.f32 %v3606, %v3694
        %3696 = vdwg.mxu0
        %3697 = vmatpush.bf16.msra.mxu0 %v2871
        %3698 = vmatpush.bf16.msra.mxu0 %v2867
        %3699 = vmatpush.bf16.msra.mxu0 %v2863
        %3700 = vmatpush.bf16.msra.mxu0 %v2859
        %3701 = vmatpush.bf16.msra.mxu0 %v2855
        %3702 = vmatpush.bf16.msra.mxu0 %v2851
        %3703 = vmatpush.bf16.msra.mxu0 %v2847
        %3704 = vmatpush.bf16.msra.mxu0 %v2843
        %3705 = vmatmul.bf16.gmra.mxu0 %v1633
        %v3706 = vpop.f32.mrf.mxu0
        %v3707 = vadd.f32 %v3618, %v3706
        %v3708 = vpop.f32.mrf.mxu0
        %v3709 = vadd.f32 %v3620, %v3708
        %3710 = vmatmul.bf16.gmra.mxu0 %v1641
        %v3711 = vpop.f32.mrf.mxu0
        %v3712 = vadd.f32 %v3623, %v3711
        %v3713 = vpop.f32.mrf.mxu0
        %v3714 = vadd.f32 %v3625, %v3713
        %3715 = vmatmul.bf16.gmra.mxu0 %v1649
        %v3716 = vpop.f32.mrf.mxu0
        %v3717 = vadd.f32 %v3628, %v3716
        %v3718 = vpop.f32.mrf.mxu0
        %v3719 = vadd.f32 %v3630, %v3718
        %3720 = vmatmul.bf16.gmra.mxu0 %v1657
        %v3721 = vpop.f32.mrf.mxu0
        %v3722 = vadd.f32 %v3633, %v3721
        %v3723 = vpop.f32.mrf.mxu0
        %v3724 = vadd.f32 %v3635, %v3723
        %3725 = vmatmul.bf16.gmra.mxu0 %v1665
        %v3726 = vpop.f32.mrf.mxu0
        %v3727 = vadd.f32 %v3638, %v3726
        %v3728 = vpop.f32.mrf.mxu0
        %v3729 = vadd.f32 %v3640, %v3728
        %3730 = vmatmul.bf16.gmra.mxu0 %v1673
        %v3731 = vpop.f32.mrf.mxu0
        %v3732 = vadd.f32 %v3643, %v3731
        %v3733 = vpop.f32.mrf.mxu0
        %v3734 = vadd.f32 %v3645, %v3733
        %3735 = vmatmul.bf16.gmra.mxu0 %v1681
        %v3736 = vpop.f32.mrf.mxu0
        %v3737 = vadd.f32 %v3648, %v3736
        %v3738 = vpop.f32.mrf.mxu0
        %v3739 = vadd.f32 %v3650, %v3738
        %3740 = vmatmul.bf16.gmra.mxu0 %v1689
        %v3741 = vpop.f32.mrf.mxu0
        %v3742 = vadd.f32 %v3653, %v3741
        %v3743 = vpop.f32.mrf.mxu0
        %v3744 = vadd.f32 %v3655, %v3743
        %3745 = vmatmul.bf16.gmra.mxu0 %v1697
        %v3746 = vpop.f32.mrf.mxu0
        %v3747 = vadd.f32 %v3658, %v3746
        %v3748 = vpop.f32.mrf.mxu0
        %v3749 = vadd.f32 %v3660, %v3748
        %3750 = vmatmul.bf16.gmra.mxu0 %v1705
        %v3751 = vpop.f32.mrf.mxu0
        %v3752 = vadd.f32 %v3663, %v3751
        %v3753 = vpop.f32.mrf.mxu0
        %v3754 = vadd.f32 %v3665, %v3753
        %3755 = vmatmul.bf16.gmra.mxu0 %v1713
        %v3756 = vpop.f32.mrf.mxu0
        %v3757 = vadd.f32 %v3668, %v3756
        %v3758 = vpop.f32.mrf.mxu0
        %v3759 = vadd.f32 %v3670, %v3758
        %3760 = vmatmul.bf16.gmra.mxu0 %v1721
        %v3761 = vpop.f32.mrf.mxu0
        %v3762 = vadd.f32 %v3673, %v3761
        %v3763 = vpop.f32.mrf.mxu0
        %v3764 = vadd.f32 %v3675, %v3763
        %3765 = vmatmul.bf16.gmra.mxu0 %v1729
        %v3766 = vpop.f32.mrf.mxu0
        %v3767 = vadd.f32 %v3678, %v3766
        %v3768 = vpop.f32.mrf.mxu0
        %v3769 = vadd.f32 %v3680, %v3768
        %3770 = vmatmul.bf16.gmra.mxu0 %v1737
        %v3771 = vpop.f32.mrf.mxu0
        %v3772 = vadd.f32 %v3683, %v3771
        %v3773 = vpop.f32.mrf.mxu0
        %v3774 = vadd.f32 %v3685, %v3773
        %3775 = vmatmul.bf16.gmra.mxu0 %v1745
        %v3776 = vpop.f32.mrf.mxu0
        %v3777 = vadd.f32 %v3688, %v3776
        %v3778 = vpop.f32.mrf.mxu0
        %v3779 = vadd.f32 %v3690, %v3778
        %3780 = vmatmul.bf16.gmra.mxu0 %v1753
        %v3781 = vpop.f32.mrf.mxu0
        %v3782 = vadd.f32 %v3693, %v3781
        %v3783 = vpop.f32.mrf.mxu0
        %v3784 = vadd.f32 %v3695, %v3783
        %3785 = vdwg.mxu0
        %3786 = vmatpush.bf16.msra.mxu0 %v2903
        %3787 = vmatpush.bf16.msra.mxu0 %v2899
        %3788 = vmatpush.bf16.msra.mxu0 %v2895
        %3789 = vmatpush.bf16.msra.mxu0 %v2891
        %3790 = vmatpush.bf16.msra.mxu0 %v2887
        %3791 = vmatpush.bf16.msra.mxu0 %v2883
        %3792 = vmatpush.bf16.msra.mxu0 %v2879
        %3793 = vmatpush.bf16.msra.mxu0 %v2875
        %3794 = vmatmul.bf16.gmra.mxu0 %v1634
        %v3795 = vpop.f32.mrf.mxu0
        %v3796 = vadd.f32 %v3707, %v3795
        %v3797 = vpop.f32.mrf.mxu0
        %v3798 = vadd.f32 %v3709, %v3797
        %3799 = vmatmul.bf16.gmra.mxu0 %v1642
        %v3800 = vpop.f32.mrf.mxu0
        %v3801 = vadd.f32 %v3712, %v3800
        %v3802 = vpop.f32.mrf.mxu0
        %v3803 = vadd.f32 %v3714, %v3802
        %3804 = vmatmul.bf16.gmra.mxu0 %v1650
        %v3805 = vpop.f32.mrf.mxu0
        %v3806 = vadd.f32 %v3717, %v3805
        %v3807 = vpop.f32.mrf.mxu0
        %v3808 = vadd.f32 %v3719, %v3807
        %3809 = vmatmul.bf16.gmra.mxu0 %v1658
        %v3810 = vpop.f32.mrf.mxu0
        %v3811 = vadd.f32 %v3722, %v3810
        %v3812 = vpop.f32.mrf.mxu0
        %v3813 = vadd.f32 %v3724, %v3812
        %3814 = vmatmul.bf16.gmra.mxu0 %v1666
        %v3815 = vpop.f32.mrf.mxu0
        %v3816 = vadd.f32 %v3727, %v3815
        %v3817 = vpop.f32.mrf.mxu0
        %v3818 = vadd.f32 %v3729, %v3817
        %3819 = vmatmul.bf16.gmra.mxu0 %v1674
        %v3820 = vpop.f32.mrf.mxu0
        %v3821 = vadd.f32 %v3732, %v3820
        %v3822 = vpop.f32.mrf.mxu0
        %v3823 = vadd.f32 %v3734, %v3822
        %3824 = vmatmul.bf16.gmra.mxu0 %v1682
        %v3825 = vpop.f32.mrf.mxu0
        %v3826 = vadd.f32 %v3737, %v3825
        %v3827 = vpop.f32.mrf.mxu0
        %v3828 = vadd.f32 %v3739, %v3827
        %3829 = vmatmul.bf16.gmra.mxu0 %v1690
        %v3830 = vpop.f32.mrf.mxu0
        %v3831 = vadd.f32 %v3742, %v3830
        %v3832 = vpop.f32.mrf.mxu0
        %v3833 = vadd.f32 %v3744, %v3832
        %3834 = vmatmul.bf16.gmra.mxu0 %v1698
        %v3835 = vpop.f32.mrf.mxu0
        %v3836 = vadd.f32 %v3747, %v3835
        %v3837 = vpop.f32.mrf.mxu0
        %v3838 = vadd.f32 %v3749, %v3837
        %3839 = vmatmul.bf16.gmra.mxu0 %v1706
        %v3840 = vpop.f32.mrf.mxu0
        %v3841 = vadd.f32 %v3752, %v3840
        %v3842 = vpop.f32.mrf.mxu0
        %v3843 = vadd.f32 %v3754, %v3842
        %3844 = vmatmul.bf16.gmra.mxu0 %v1714
        %v3845 = vpop.f32.mrf.mxu0
        %v3846 = vadd.f32 %v3757, %v3845
        %v3847 = vpop.f32.mrf.mxu0
        %v3848 = vadd.f32 %v3759, %v3847
        %3849 = vmatmul.bf16.gmra.mxu0 %v1722
        %v3850 = vpop.f32.mrf.mxu0
        %v3851 = vadd.f32 %v3762, %v3850
        %v3852 = vpop.f32.mrf.mxu0
        %v3853 = vadd.f32 %v3764, %v3852
        %3854 = vmatmul.bf16.gmra.mxu0 %v1730
        %v3855 = vpop.f32.mrf.mxu0
        %v3856 = vadd.f32 %v3767, %v3855
        %v3857 = vpop.f32.mrf.mxu0
        %v3858 = vadd.f32 %v3769, %v3857
        %3859 = vmatmul.bf16.gmra.mxu0 %v1738
        %v3860 = vpop.f32.mrf.mxu0
        %v3861 = vadd.f32 %v3772, %v3860
        %v3862 = vpop.f32.mrf.mxu0
        %v3863 = vadd.f32 %v3774, %v3862
        %3864 = vmatmul.bf16.gmra.mxu0 %v1746
        %v3865 = vpop.f32.mrf.mxu0
        %v3866 = vadd.f32 %v3777, %v3865
        %v3867 = vpop.f32.mrf.mxu0
        %v3868 = vadd.f32 %v3779, %v3867
        %3869 = vmatmul.bf16.gmra.mxu0 %v1754
        %v3870 = vpop.f32.mrf.mxu0
        %v3871 = vadd.f32 %v3782, %v3870
        %v3872 = vpop.f32.mrf.mxu0
        %v3873 = vadd.f32 %v3784, %v3872
        %3874 = vdwg.mxu0
        %3875 = vmatpush.bf16.msra.mxu0 %v2680
        %3876 = vmatpush.bf16.msra.mxu0 %v2676
        %3877 = vmatpush.bf16.msra.mxu0 %v2672
        %3878 = vmatpush.bf16.msra.mxu0 %v2668
        %3879 = vmatpush.bf16.msra.mxu0 %v2664
        %3880 = vmatpush.bf16.msra.mxu0 %v2660
        %3881 = vmatpush.bf16.msra.mxu0 %v2656
        %3882 = vmatpush.bf16.msra.mxu0 %v2652
        %3883 = vmatmul.bf16.gmra.mxu0 %v1627
        %v3884 = vpop.f32.mrf.mxu0
        %v3885 = vadd.f32 %v1236, %v3884
        %v3886 = vpop.f32.mrf.mxu0
        %v3887 = vadd.f32 %v1236, %v3886
        %3888 = vmatmul.bf16.gmra.mxu0 %v1635
        %v3889 = vpop.f32.mrf.mxu0
        %v3890 = vadd.f32 %v1236, %v3889
        %v3891 = vpop.f32.mrf.mxu0
        %v3892 = vadd.f32 %v1236, %v3891
        %3893 = vmatmul.bf16.gmra.mxu0 %v1643
        %v3894 = vpop.f32.mrf.mxu0
        %v3895 = vadd.f32 %v1236, %v3894
        %v3896 = vpop.f32.mrf.mxu0
        %v3897 = vadd.f32 %v1236, %v3896
        %3898 = vmatmul.bf16.gmra.mxu0 %v1651
        %v3899 = vpop.f32.mrf.mxu0
        %v3900 = vadd.f32 %v1236, %v3899
        %v3901 = vpop.f32.mrf.mxu0
        %v3902 = vadd.f32 %v1236, %v3901
        %3903 = vmatmul.bf16.gmra.mxu0 %v1659
        %v3904 = vpop.f32.mrf.mxu0
        %v3905 = vadd.f32 %v1236, %v3904
        %v3906 = vpop.f32.mrf.mxu0
        %v3907 = vadd.f32 %v1236, %v3906
        %3908 = vmatmul.bf16.gmra.mxu0 %v1667
        %v3909 = vpop.f32.mrf.mxu0
        %v3910 = vadd.f32 %v1236, %v3909
        %v3911 = vpop.f32.mrf.mxu0
        %v3912 = vadd.f32 %v1236, %v3911
        %3913 = vmatmul.bf16.gmra.mxu0 %v1675
        %v3914 = vpop.f32.mrf.mxu0
        %v3915 = vadd.f32 %v1236, %v3914
        %v3916 = vpop.f32.mrf.mxu0
        %v3917 = vadd.f32 %v1236, %v3916
        %3918 = vmatmul.bf16.gmra.mxu0 %v1683
        %v3919 = vpop.f32.mrf.mxu0
        %v3920 = vadd.f32 %v1236, %v3919
        %v3921 = vpop.f32.mrf.mxu0
        %v3922 = vadd.f32 %v1236, %v3921
        %3923 = vmatmul.bf16.gmra.mxu0 %v1691
        %v3924 = vpop.f32.mrf.mxu0
        %v3925 = vadd.f32 %v1236, %v3924
        %v3926 = vpop.f32.mrf.mxu0
        %v3927 = vadd.f32 %v1236, %v3926
        %3928 = vmatmul.bf16.gmra.mxu0 %v1699
        %v3929 = vpop.f32.mrf.mxu0
        %v3930 = vadd.f32 %v1236, %v3929
        %v3931 = vpop.f32.mrf.mxu0
        %v3932 = vadd.f32 %v1236, %v3931
        %3933 = vmatmul.bf16.gmra.mxu0 %v1707
        %v3934 = vpop.f32.mrf.mxu0
        %v3935 = vadd.f32 %v1236, %v3934
        %v3936 = vpop.f32.mrf.mxu0
        %v3937 = vadd.f32 %v1236, %v3936
        %3938 = vmatmul.bf16.gmra.mxu0 %v1715
        %v3939 = vpop.f32.mrf.mxu0
        %v3940 = vadd.f32 %v1236, %v3939
        %v3941 = vpop.f32.mrf.mxu0
        %v3942 = vadd.f32 %v1236, %v3941
        %3943 = vmatmul.bf16.gmra.mxu0 %v1723
        %v3944 = vpop.f32.mrf.mxu0
        %v3945 = vadd.f32 %v1236, %v3944
        %v3946 = vpop.f32.mrf.mxu0
        %v3947 = vadd.f32 %v1236, %v3946
        %3948 = vmatmul.bf16.gmra.mxu0 %v1731
        %v3949 = vpop.f32.mrf.mxu0
        %v3950 = vadd.f32 %v1236, %v3949
        %v3951 = vpop.f32.mrf.mxu0
        %v3952 = vadd.f32 %v1236, %v3951
        %3953 = vmatmul.bf16.gmra.mxu0 %v1739
        %v3954 = vpop.f32.mrf.mxu0
        %v3955 = vadd.f32 %v1236, %v3954
        %v3956 = vpop.f32.mrf.mxu0
        %v3957 = vadd.f32 %v1236, %v3956
        %3958 = vmatmul.bf16.gmra.mxu0 %v1747
        %v3959 = vpop.f32.mrf.mxu0
        %v3960 = vadd.f32 %v1236, %v3959
        %v3961 = vpop.f32.mrf.mxu0
        %v3962 = vadd.f32 %v1236, %v3961
        %3963 = vdwg.mxu0
        %3964 = vmatpush.bf16.msra.mxu0 %v2712
        %3965 = vmatpush.bf16.msra.mxu0 %v2708
        %3966 = vmatpush.bf16.msra.mxu0 %v2704
        %3967 = vmatpush.bf16.msra.mxu0 %v2700
        %3968 = vmatpush.bf16.msra.mxu0 %v2696
        %3969 = vmatpush.bf16.msra.mxu0 %v2692
        %3970 = vmatpush.bf16.msra.mxu0 %v2688
        %3971 = vmatpush.bf16.msra.mxu0 %v2684
        %3972 = vmatmul.bf16.gmra.mxu0 %v1628
        %v3973 = vpop.f32.mrf.mxu0
        %v3974 = vadd.f32 %v3885, %v3973
        %v3975 = vpop.f32.mrf.mxu0
        %v3976 = vadd.f32 %v3887, %v3975
        %3977 = vmatmul.bf16.gmra.mxu0 %v1636
        %v3978 = vpop.f32.mrf.mxu0
        %v3979 = vadd.f32 %v3890, %v3978
        %v3980 = vpop.f32.mrf.mxu0
        %v3981 = vadd.f32 %v3892, %v3980
        %3982 = vmatmul.bf16.gmra.mxu0 %v1644
        %v3983 = vpop.f32.mrf.mxu0
        %v3984 = vadd.f32 %v3895, %v3983
        %v3985 = vpop.f32.mrf.mxu0
        %v3986 = vadd.f32 %v3897, %v3985
        %3987 = vmatmul.bf16.gmra.mxu0 %v1652
        %v3988 = vpop.f32.mrf.mxu0
        %v3989 = vadd.f32 %v3900, %v3988
        %v3990 = vpop.f32.mrf.mxu0
        %v3991 = vadd.f32 %v3902, %v3990
        %3992 = vmatmul.bf16.gmra.mxu0 %v1660
        %v3993 = vpop.f32.mrf.mxu0
        %v3994 = vadd.f32 %v3905, %v3993
        %v3995 = vpop.f32.mrf.mxu0
        %v3996 = vadd.f32 %v3907, %v3995
        %3997 = vmatmul.bf16.gmra.mxu0 %v1668
        %v3998 = vpop.f32.mrf.mxu0
        %v3999 = vadd.f32 %v3910, %v3998
        %v4000 = vpop.f32.mrf.mxu0
        %v4001 = vadd.f32 %v3912, %v4000
        %4002 = vmatmul.bf16.gmra.mxu0 %v1676
        %v4003 = vpop.f32.mrf.mxu0
        %v4004 = vadd.f32 %v3915, %v4003
        %v4005 = vpop.f32.mrf.mxu0
        %v4006 = vadd.f32 %v3917, %v4005
        %4007 = vmatmul.bf16.gmra.mxu0 %v1684
        %v4008 = vpop.f32.mrf.mxu0
        %v4009 = vadd.f32 %v3920, %v4008
        %v4010 = vpop.f32.mrf.mxu0
        %v4011 = vadd.f32 %v3922, %v4010
        %4012 = vmatmul.bf16.gmra.mxu0 %v1692
        %v4013 = vpop.f32.mrf.mxu0
        %v4014 = vadd.f32 %v3925, %v4013
        %v4015 = vpop.f32.mrf.mxu0
        %v4016 = vadd.f32 %v3927, %v4015
        %4017 = vmatmul.bf16.gmra.mxu0 %v1700
        %v4018 = vpop.f32.mrf.mxu0
        %v4019 = vadd.f32 %v3930, %v4018
        %v4020 = vpop.f32.mrf.mxu0
        %v4021 = vadd.f32 %v3932, %v4020
        %4022 = vmatmul.bf16.gmra.mxu0 %v1708
        %v4023 = vpop.f32.mrf.mxu0
        %v4024 = vadd.f32 %v3935, %v4023
        %v4025 = vpop.f32.mrf.mxu0
        %v4026 = vadd.f32 %v3937, %v4025
        %4027 = vmatmul.bf16.gmra.mxu0 %v1716
        %v4028 = vpop.f32.mrf.mxu0
        %v4029 = vadd.f32 %v3940, %v4028
        %v4030 = vpop.f32.mrf.mxu0
        %v4031 = vadd.f32 %v3942, %v4030
        %4032 = vmatmul.bf16.gmra.mxu0 %v1724
        %v4033 = vpop.f32.mrf.mxu0
        %v4034 = vadd.f32 %v3945, %v4033
        %v4035 = vpop.f32.mrf.mxu0
        %v4036 = vadd.f32 %v3947, %v4035
        %4037 = vmatmul.bf16.gmra.mxu0 %v1732
        %v4038 = vpop.f32.mrf.mxu0
        %v4039 = vadd.f32 %v3950, %v4038
        %v4040 = vpop.f32.mrf.mxu0
        %v4041 = vadd.f32 %v3952, %v4040
        %4042 = vmatmul.bf16.gmra.mxu0 %v1740
        %v4043 = vpop.f32.mrf.mxu0
        %v4044 = vadd.f32 %v3955, %v4043
        %v4045 = vpop.f32.mrf.mxu0
        %v4046 = vadd.f32 %v3957, %v4045
        %4047 = vmatmul.bf16.gmra.mxu0 %v1748
        %v4048 = vpop.f32.mrf.mxu0
        %v4049 = vadd.f32 %v3960, %v4048
        %v4050 = vpop.f32.mrf.mxu0
        %v4051 = vadd.f32 %v3962, %v4050
        %4052 = vdwg.mxu0
        %4053 = vmatpush.bf16.msra.mxu0 %v2744
        %4054 = vmatpush.bf16.msra.mxu0 %v2740
        %4055 = vmatpush.bf16.msra.mxu0 %v2736
        %4056 = vmatpush.bf16.msra.mxu0 %v2732
        %4057 = vmatpush.bf16.msra.mxu0 %v2728
        %4058 = vmatpush.bf16.msra.mxu0 %v2724
        %4059 = vmatpush.bf16.msra.mxu0 %v2720
        %4060 = vmatpush.bf16.msra.mxu0 %v2716
        %4061 = vmatmul.bf16.gmra.mxu0 %v1629
        %v4062 = vpop.f32.mrf.mxu0
        %v4063 = vadd.f32 %v3974, %v4062
        %v4064 = vpop.f32.mrf.mxu0
        %v4065 = vadd.f32 %v3976, %v4064
        %4066 = vmatmul.bf16.gmra.mxu0 %v1637
        %v4067 = vpop.f32.mrf.mxu0
        %v4068 = vadd.f32 %v3979, %v4067
        %v4069 = vpop.f32.mrf.mxu0
        %v4070 = vadd.f32 %v3981, %v4069
        %4071 = vmatmul.bf16.gmra.mxu0 %v1645
        %v4072 = vpop.f32.mrf.mxu0
        %v4073 = vadd.f32 %v3984, %v4072
        %v4074 = vpop.f32.mrf.mxu0
        %v4075 = vadd.f32 %v3986, %v4074
        %4076 = vmatmul.bf16.gmra.mxu0 %v1653
        %v4077 = vpop.f32.mrf.mxu0
        %v4078 = vadd.f32 %v3989, %v4077
        %v4079 = vpop.f32.mrf.mxu0
        %v4080 = vadd.f32 %v3991, %v4079
        %4081 = vmatmul.bf16.gmra.mxu0 %v1661
        %v4082 = vpop.f32.mrf.mxu0
        %v4083 = vadd.f32 %v3994, %v4082
        %v4084 = vpop.f32.mrf.mxu0
        %v4085 = vadd.f32 %v3996, %v4084
        %4086 = vmatmul.bf16.gmra.mxu0 %v1669
        %v4087 = vpop.f32.mrf.mxu0
        %v4088 = vadd.f32 %v3999, %v4087
        %v4089 = vpop.f32.mrf.mxu0
        %v4090 = vadd.f32 %v4001, %v4089
        %4091 = vmatmul.bf16.gmra.mxu0 %v1677
        %v4092 = vpop.f32.mrf.mxu0
        %v4093 = vadd.f32 %v4004, %v4092
        %v4094 = vpop.f32.mrf.mxu0
        %v4095 = vadd.f32 %v4006, %v4094
        %4096 = vmatmul.bf16.gmra.mxu0 %v1685
        %v4097 = vpop.f32.mrf.mxu0
        %v4098 = vadd.f32 %v4009, %v4097
        %v4099 = vpop.f32.mrf.mxu0
        %v4100 = vadd.f32 %v4011, %v4099
        %4101 = vmatmul.bf16.gmra.mxu0 %v1693
        %v4102 = vpop.f32.mrf.mxu0
        %v4103 = vadd.f32 %v4014, %v4102
        %v4104 = vpop.f32.mrf.mxu0
        %v4105 = vadd.f32 %v4016, %v4104
        %4106 = vmatmul.bf16.gmra.mxu0 %v1701
        %v4107 = vpop.f32.mrf.mxu0
        %v4108 = vadd.f32 %v4019, %v4107
        %v4109 = vpop.f32.mrf.mxu0
        %v4110 = vadd.f32 %v4021, %v4109
        %4111 = vmatmul.bf16.gmra.mxu0 %v1709
        %v4112 = vpop.f32.mrf.mxu0
        %v4113 = vadd.f32 %v4024, %v4112
        %v4114 = vpop.f32.mrf.mxu0
        %v4115 = vadd.f32 %v4026, %v4114
        %4116 = vmatmul.bf16.gmra.mxu0 %v1717
        %v4117 = vpop.f32.mrf.mxu0
        %v4118 = vadd.f32 %v4029, %v4117
        %v4119 = vpop.f32.mrf.mxu0
        %v4120 = vadd.f32 %v4031, %v4119
        %4121 = vmatmul.bf16.gmra.mxu0 %v1725
        %v4122 = vpop.f32.mrf.mxu0
        %v4123 = vadd.f32 %v4034, %v4122
        %v4124 = vpop.f32.mrf.mxu0
        %v4125 = vadd.f32 %v4036, %v4124
        %4126 = vmatmul.bf16.gmra.mxu0 %v1733
        %v4127 = vpop.f32.mrf.mxu0
        %v4128 = vadd.f32 %v4039, %v4127
        %v4129 = vpop.f32.mrf.mxu0
        %v4130 = vadd.f32 %v4041, %v4129
        %4131 = vmatmul.bf16.gmra.mxu0 %v1741
        %v4132 = vpop.f32.mrf.mxu0
        %v4133 = vadd.f32 %v4044, %v4132
        %v4134 = vpop.f32.mrf.mxu0
        %v4135 = vadd.f32 %v4046, %v4134
        %4136 = vmatmul.bf16.gmra.mxu0 %v1749
        %v4137 = vpop.f32.mrf.mxu0
        %v4138 = vadd.f32 %v4049, %v4137
        %v4139 = vpop.f32.mrf.mxu0
        %v4140 = vadd.f32 %v4051, %v4139
        %4141 = vdwg.mxu0
        %4142 = vmatpush.bf16.msra.mxu0 %v2776
        %4143 = vmatpush.bf16.msra.mxu0 %v2772
        %4144 = vmatpush.bf16.msra.mxu0 %v2768
        %4145 = vmatpush.bf16.msra.mxu0 %v2764
        %4146 = vmatpush.bf16.msra.mxu0 %v2760
        %4147 = vmatpush.bf16.msra.mxu0 %v2756
        %4148 = vmatpush.bf16.msra.mxu0 %v2752
        %4149 = vmatpush.bf16.msra.mxu0 %v2748
        %4150 = vmatmul.bf16.gmra.mxu0 %v1630
        %v4151 = vpop.f32.mrf.mxu0
        %v4152 = vadd.f32 %v4063, %v4151
        %v4153 = vpop.f32.mrf.mxu0
        %v4154 = vadd.f32 %v4065, %v4153
        %4155 = vmatmul.bf16.gmra.mxu0 %v1638
        %v4156 = vpop.f32.mrf.mxu0
        %v4157 = vadd.f32 %v4068, %v4156
        %v4158 = vpop.f32.mrf.mxu0
        %v4159 = vadd.f32 %v4070, %v4158
        %4160 = vmatmul.bf16.gmra.mxu0 %v1646
        %v4161 = vpop.f32.mrf.mxu0
        %v4162 = vadd.f32 %v4073, %v4161
        %v4163 = vpop.f32.mrf.mxu0
        %v4164 = vadd.f32 %v4075, %v4163
        %4165 = vmatmul.bf16.gmra.mxu0 %v1654
        %v4166 = vpop.f32.mrf.mxu0
        %v4167 = vadd.f32 %v4078, %v4166
        %v4168 = vpop.f32.mrf.mxu0
        %v4169 = vadd.f32 %v4080, %v4168
        %4170 = vmatmul.bf16.gmra.mxu0 %v1662
        %v4171 = vpop.f32.mrf.mxu0
        %v4172 = vadd.f32 %v4083, %v4171
        %v4173 = vpop.f32.mrf.mxu0
        %v4174 = vadd.f32 %v4085, %v4173
        %4175 = vmatmul.bf16.gmra.mxu0 %v1670
        %v4176 = vpop.f32.mrf.mxu0
        %v4177 = vadd.f32 %v4088, %v4176
        %v4178 = vpop.f32.mrf.mxu0
        %v4179 = vadd.f32 %v4090, %v4178
        %4180 = vmatmul.bf16.gmra.mxu0 %v1678
        %v4181 = vpop.f32.mrf.mxu0
        %v4182 = vadd.f32 %v4093, %v4181
        %v4183 = vpop.f32.mrf.mxu0
        %v4184 = vadd.f32 %v4095, %v4183
        %4185 = vmatmul.bf16.gmra.mxu0 %v1686
        %v4186 = vpop.f32.mrf.mxu0
        %v4187 = vadd.f32 %v4098, %v4186
        %v4188 = vpop.f32.mrf.mxu0
        %v4189 = vadd.f32 %v4100, %v4188
        %4190 = vmatmul.bf16.gmra.mxu0 %v1694
        %v4191 = vpop.f32.mrf.mxu0
        %v4192 = vadd.f32 %v4103, %v4191
        %v4193 = vpop.f32.mrf.mxu0
        %v4194 = vadd.f32 %v4105, %v4193
        %4195 = vmatmul.bf16.gmra.mxu0 %v1702
        %v4196 = vpop.f32.mrf.mxu0
        %v4197 = vadd.f32 %v4108, %v4196
        %v4198 = vpop.f32.mrf.mxu0
        %v4199 = vadd.f32 %v4110, %v4198
        %4200 = vmatmul.bf16.gmra.mxu0 %v1710
        %v4201 = vpop.f32.mrf.mxu0
        %v4202 = vadd.f32 %v4113, %v4201
        %v4203 = vpop.f32.mrf.mxu0
        %v4204 = vadd.f32 %v4115, %v4203
        %4205 = vmatmul.bf16.gmra.mxu0 %v1718
        %v4206 = vpop.f32.mrf.mxu0
        %v4207 = vadd.f32 %v4118, %v4206
        %v4208 = vpop.f32.mrf.mxu0
        %v4209 = vadd.f32 %v4120, %v4208
        %4210 = vmatmul.bf16.gmra.mxu0 %v1726
        %v4211 = vpop.f32.mrf.mxu0
        %v4212 = vadd.f32 %v4123, %v4211
        %v4213 = vpop.f32.mrf.mxu0
        %v4214 = vadd.f32 %v4125, %v4213
        %4215 = vmatmul.bf16.gmra.mxu0 %v1734
        %v4216 = vpop.f32.mrf.mxu0
        %v4217 = vadd.f32 %v4128, %v4216
        %v4218 = vpop.f32.mrf.mxu0
        %v4219 = vadd.f32 %v4130, %v4218
        %4220 = vmatmul.bf16.gmra.mxu0 %v1742
        %v4221 = vpop.f32.mrf.mxu0
        %v4222 = vadd.f32 %v4133, %v4221
        %v4223 = vpop.f32.mrf.mxu0
        %v4224 = vadd.f32 %v4135, %v4223
        %4225 = vmatmul.bf16.gmra.mxu0 %v1750
        %v4226 = vpop.f32.mrf.mxu0
        %v4227 = vadd.f32 %v4138, %v4226
        %v4228 = vpop.f32.mrf.mxu0
        %v4229 = vadd.f32 %v4140, %v4228
        %4230 = vdwg.mxu0
        %4231 = vmatpush.bf16.msra.mxu0 %v2808
        %4232 = vmatpush.bf16.msra.mxu0 %v2804
        %4233 = vmatpush.bf16.msra.mxu0 %v2800
        %4234 = vmatpush.bf16.msra.mxu0 %v2796
        %4235 = vmatpush.bf16.msra.mxu0 %v2792
        %4236 = vmatpush.bf16.msra.mxu0 %v2788
        %4237 = vmatpush.bf16.msra.mxu0 %v2784
        %4238 = vmatpush.bf16.msra.mxu0 %v2780
        %4239 = vmatmul.bf16.gmra.mxu0 %v1631
        %v4240 = vpop.f32.mrf.mxu0
        %v4241 = vadd.f32 %v4152, %v4240
        %v4242 = vpop.f32.mrf.mxu0
        %v4243 = vadd.f32 %v4154, %v4242
        %4244 = vmatmul.bf16.gmra.mxu0 %v1639
        %v4245 = vpop.f32.mrf.mxu0
        %v4246 = vadd.f32 %v4157, %v4245
        %v4247 = vpop.f32.mrf.mxu0
        %v4248 = vadd.f32 %v4159, %v4247
        %4249 = vmatmul.bf16.gmra.mxu0 %v1647
        %v4250 = vpop.f32.mrf.mxu0
        %v4251 = vadd.f32 %v4162, %v4250
        %v4252 = vpop.f32.mrf.mxu0
        %v4253 = vadd.f32 %v4164, %v4252
        %4254 = vmatmul.bf16.gmra.mxu0 %v1655
        %v4255 = vpop.f32.mrf.mxu0
        %v4256 = vadd.f32 %v4167, %v4255
        %v4257 = vpop.f32.mrf.mxu0
        %v4258 = vadd.f32 %v4169, %v4257
        %4259 = vmatmul.bf16.gmra.mxu0 %v1663
        %v4260 = vpop.f32.mrf.mxu0
        %v4261 = vadd.f32 %v4172, %v4260
        %v4262 = vpop.f32.mrf.mxu0
        %v4263 = vadd.f32 %v4174, %v4262
        %4264 = vmatmul.bf16.gmra.mxu0 %v1671
        %v4265 = vpop.f32.mrf.mxu0
        %v4266 = vadd.f32 %v4177, %v4265
        %v4267 = vpop.f32.mrf.mxu0
        %v4268 = vadd.f32 %v4179, %v4267
        %4269 = vmatmul.bf16.gmra.mxu0 %v1679
        %v4270 = vpop.f32.mrf.mxu0
        %v4271 = vadd.f32 %v4182, %v4270
        %v4272 = vpop.f32.mrf.mxu0
        %v4273 = vadd.f32 %v4184, %v4272
        %4274 = vmatmul.bf16.gmra.mxu0 %v1687
        %v4275 = vpop.f32.mrf.mxu0
        %v4276 = vadd.f32 %v4187, %v4275
        %v4277 = vpop.f32.mrf.mxu0
        %v4278 = vadd.f32 %v4189, %v4277
        %4279 = vmatmul.bf16.gmra.mxu0 %v1695
        %v4280 = vpop.f32.mrf.mxu0
        %v4281 = vadd.f32 %v4192, %v4280
        %v4282 = vpop.f32.mrf.mxu0
        %v4283 = vadd.f32 %v4194, %v4282
        %4284 = vmatmul.bf16.gmra.mxu0 %v1703
        %v4285 = vpop.f32.mrf.mxu0
        %v4286 = vadd.f32 %v4197, %v4285
        %v4287 = vpop.f32.mrf.mxu0
        %v4288 = vadd.f32 %v4199, %v4287
        %4289 = vmatmul.bf16.gmra.mxu0 %v1711
        %v4290 = vpop.f32.mrf.mxu0
        %v4291 = vadd.f32 %v4202, %v4290
        %v4292 = vpop.f32.mrf.mxu0
        %v4293 = vadd.f32 %v4204, %v4292
        %4294 = vmatmul.bf16.gmra.mxu0 %v1719
        %v4295 = vpop.f32.mrf.mxu0
        %v4296 = vadd.f32 %v4207, %v4295
        %v4297 = vpop.f32.mrf.mxu0
        %v4298 = vadd.f32 %v4209, %v4297
        %4299 = vmatmul.bf16.gmra.mxu0 %v1727
        %v4300 = vpop.f32.mrf.mxu0
        %v4301 = vadd.f32 %v4212, %v4300
        %v4302 = vpop.f32.mrf.mxu0
        %v4303 = vadd.f32 %v4214, %v4302
        %4304 = vmatmul.bf16.gmra.mxu0 %v1735
        %v4305 = vpop.f32.mrf.mxu0
        %v4306 = vadd.f32 %v4217, %v4305
        %v4307 = vpop.f32.mrf.mxu0
        %v4308 = vadd.f32 %v4219, %v4307
        %4309 = vmatmul.bf16.gmra.mxu0 %v1743
        %v4310 = vpop.f32.mrf.mxu0
        %v4311 = vadd.f32 %v4222, %v4310
        %v4312 = vpop.f32.mrf.mxu0
        %v4313 = vadd.f32 %v4224, %v4312
        %4314 = vmatmul.bf16.gmra.mxu0 %v1751
        %v4315 = vpop.f32.mrf.mxu0
        %v4316 = vadd.f32 %v4227, %v4315
        %v4317 = vpop.f32.mrf.mxu0
        %v4318 = vadd.f32 %v4229, %v4317
        %4319 = vdwg.mxu0
        %4320 = vmatpush.bf16.msra.mxu0 %v2840
        %4321 = vmatpush.bf16.msra.mxu0 %v2836
        %4322 = vmatpush.bf16.msra.mxu0 %v2832
        %4323 = vmatpush.bf16.msra.mxu0 %v2828
        %4324 = vmatpush.bf16.msra.mxu0 %v2824
        %4325 = vmatpush.bf16.msra.mxu0 %v2820
        %4326 = vmatpush.bf16.msra.mxu0 %v2816
        %4327 = vmatpush.bf16.msra.mxu0 %v2812
        %4328 = vmatmul.bf16.gmra.mxu0 %v1632
        %v4329 = vpop.f32.mrf.mxu0
        %v4330 = vadd.f32 %v4241, %v4329
        %v4331 = vpop.f32.mrf.mxu0
        %v4332 = vadd.f32 %v4243, %v4331
        %4333 = vmatmul.bf16.gmra.mxu0 %v1640
        %v4334 = vpop.f32.mrf.mxu0
        %v4335 = vadd.f32 %v4246, %v4334
        %v4336 = vpop.f32.mrf.mxu0
        %v4337 = vadd.f32 %v4248, %v4336
        %4338 = vmatmul.bf16.gmra.mxu0 %v1648
        %v4339 = vpop.f32.mrf.mxu0
        %v4340 = vadd.f32 %v4251, %v4339
        %v4341 = vpop.f32.mrf.mxu0
        %v4342 = vadd.f32 %v4253, %v4341
        %4343 = vmatmul.bf16.gmra.mxu0 %v1656
        %v4344 = vpop.f32.mrf.mxu0
        %v4345 = vadd.f32 %v4256, %v4344
        %v4346 = vpop.f32.mrf.mxu0
        %v4347 = vadd.f32 %v4258, %v4346
        %4348 = vmatmul.bf16.gmra.mxu0 %v1664
        %v4349 = vpop.f32.mrf.mxu0
        %v4350 = vadd.f32 %v4261, %v4349
        %v4351 = vpop.f32.mrf.mxu0
        %v4352 = vadd.f32 %v4263, %v4351
        %4353 = vmatmul.bf16.gmra.mxu0 %v1672
        %v4354 = vpop.f32.mrf.mxu0
        %v4355 = vadd.f32 %v4266, %v4354
        %v4356 = vpop.f32.mrf.mxu0
        %v4357 = vadd.f32 %v4268, %v4356
        %4358 = vmatmul.bf16.gmra.mxu0 %v1680
        %v4359 = vpop.f32.mrf.mxu0
        %v4360 = vadd.f32 %v4271, %v4359
        %v4361 = vpop.f32.mrf.mxu0
        %v4362 = vadd.f32 %v4273, %v4361
        %4363 = vmatmul.bf16.gmra.mxu0 %v1688
        %v4364 = vpop.f32.mrf.mxu0
        %v4365 = vadd.f32 %v4276, %v4364
        %v4366 = vpop.f32.mrf.mxu0
        %v4367 = vadd.f32 %v4278, %v4366
        %4368 = vmatmul.bf16.gmra.mxu0 %v1696
        %v4369 = vpop.f32.mrf.mxu0
        %v4370 = vadd.f32 %v4281, %v4369
        %v4371 = vpop.f32.mrf.mxu0
        %v4372 = vadd.f32 %v4283, %v4371
        %4373 = vmatmul.bf16.gmra.mxu0 %v1704
        %v4374 = vpop.f32.mrf.mxu0
        %v4375 = vadd.f32 %v4286, %v4374
        %v4376 = vpop.f32.mrf.mxu0
        %v4377 = vadd.f32 %v4288, %v4376
        %4378 = vmatmul.bf16.gmra.mxu0 %v1712
        %v4379 = vpop.f32.mrf.mxu0
        %v4380 = vadd.f32 %v4291, %v4379
        %v4381 = vpop.f32.mrf.mxu0
        %v4382 = vadd.f32 %v4293, %v4381
        %4383 = vmatmul.bf16.gmra.mxu0 %v1720
        %v4384 = vpop.f32.mrf.mxu0
        %v4385 = vadd.f32 %v4296, %v4384
        %v4386 = vpop.f32.mrf.mxu0
        %v4387 = vadd.f32 %v4298, %v4386
        %4388 = vmatmul.bf16.gmra.mxu0 %v1728
        %v4389 = vpop.f32.mrf.mxu0
        %v4390 = vadd.f32 %v4301, %v4389
        %v4391 = vpop.f32.mrf.mxu0
        %v4392 = vadd.f32 %v4303, %v4391
        %4393 = vmatmul.bf16.gmra.mxu0 %v1736
        %v4394 = vpop.f32.mrf.mxu0
        %v4395 = vadd.f32 %v4306, %v4394
        %v4396 = vpop.f32.mrf.mxu0
        %v4397 = vadd.f32 %v4308, %v4396
        %4398 = vmatmul.bf16.gmra.mxu0 %v1744
        %v4399 = vpop.f32.mrf.mxu0
        %v4400 = vadd.f32 %v4311, %v4399
        %v4401 = vpop.f32.mrf.mxu0
        %v4402 = vadd.f32 %v4313, %v4401
        %4403 = vmatmul.bf16.gmra.mxu0 %v1752
        %v4404 = vpop.f32.mrf.mxu0
        %v4405 = vadd.f32 %v4316, %v4404
        %v4406 = vpop.f32.mrf.mxu0
        %v4407 = vadd.f32 %v4318, %v4406
        %4408 = vdwg.mxu0
        %4409 = vmatpush.bf16.msra.mxu0 %v2872
        %4410 = vmatpush.bf16.msra.mxu0 %v2868
        %4411 = vmatpush.bf16.msra.mxu0 %v2864
        %4412 = vmatpush.bf16.msra.mxu0 %v2860
        %4413 = vmatpush.bf16.msra.mxu0 %v2856
        %4414 = vmatpush.bf16.msra.mxu0 %v2852
        %4415 = vmatpush.bf16.msra.mxu0 %v2848
        %4416 = vmatpush.bf16.msra.mxu0 %v2844
        %4417 = vmatmul.bf16.gmra.mxu0 %v1633
        %v4418 = vpop.f32.mrf.mxu0
        %v4419 = vadd.f32 %v4330, %v4418
        %v4420 = vpop.f32.mrf.mxu0
        %v4421 = vadd.f32 %v4332, %v4420
        %4422 = vmatmul.bf16.gmra.mxu0 %v1641
        %v4423 = vpop.f32.mrf.mxu0
        %v4424 = vadd.f32 %v4335, %v4423
        %v4425 = vpop.f32.mrf.mxu0
        %v4426 = vadd.f32 %v4337, %v4425
        %4427 = vmatmul.bf16.gmra.mxu0 %v1649
        %v4428 = vpop.f32.mrf.mxu0
        %v4429 = vadd.f32 %v4340, %v4428
        %v4430 = vpop.f32.mrf.mxu0
        %v4431 = vadd.f32 %v4342, %v4430
        %4432 = vmatmul.bf16.gmra.mxu0 %v1657
        %v4433 = vpop.f32.mrf.mxu0
        %v4434 = vadd.f32 %v4345, %v4433
        %v4435 = vpop.f32.mrf.mxu0
        %v4436 = vadd.f32 %v4347, %v4435
        %4437 = vmatmul.bf16.gmra.mxu0 %v1665
        %v4438 = vpop.f32.mrf.mxu0
        %v4439 = vadd.f32 %v4350, %v4438
        %v4440 = vpop.f32.mrf.mxu0
        %v4441 = vadd.f32 %v4352, %v4440
        %4442 = vmatmul.bf16.gmra.mxu0 %v1673
        %v4443 = vpop.f32.mrf.mxu0
        %v4444 = vadd.f32 %v4355, %v4443
        %v4445 = vpop.f32.mrf.mxu0
        %v4446 = vadd.f32 %v4357, %v4445
        %4447 = vmatmul.bf16.gmra.mxu0 %v1681
        %v4448 = vpop.f32.mrf.mxu0
        %v4449 = vadd.f32 %v4360, %v4448
        %v4450 = vpop.f32.mrf.mxu0
        %v4451 = vadd.f32 %v4362, %v4450
        %4452 = vmatmul.bf16.gmra.mxu0 %v1689
        %v4453 = vpop.f32.mrf.mxu0
        %v4454 = vadd.f32 %v4365, %v4453
        %v4455 = vpop.f32.mrf.mxu0
        %v4456 = vadd.f32 %v4367, %v4455
        %4457 = vmatmul.bf16.gmra.mxu0 %v1697
        %v4458 = vpop.f32.mrf.mxu0
        %v4459 = vadd.f32 %v4370, %v4458
        %v4460 = vpop.f32.mrf.mxu0
        %v4461 = vadd.f32 %v4372, %v4460
        %4462 = vmatmul.bf16.gmra.mxu0 %v1705
        %v4463 = vpop.f32.mrf.mxu0
        %v4464 = vadd.f32 %v4375, %v4463
        %v4465 = vpop.f32.mrf.mxu0
        %v4466 = vadd.f32 %v4377, %v4465
        %4467 = vmatmul.bf16.gmra.mxu0 %v1713
        %v4468 = vpop.f32.mrf.mxu0
        %v4469 = vadd.f32 %v4380, %v4468
        %v4470 = vpop.f32.mrf.mxu0
        %v4471 = vadd.f32 %v4382, %v4470
        %4472 = vmatmul.bf16.gmra.mxu0 %v1721
        %v4473 = vpop.f32.mrf.mxu0
        %v4474 = vadd.f32 %v4385, %v4473
        %v4475 = vpop.f32.mrf.mxu0
        %v4476 = vadd.f32 %v4387, %v4475
        %4477 = vmatmul.bf16.gmra.mxu0 %v1729
        %v4478 = vpop.f32.mrf.mxu0
        %v4479 = vadd.f32 %v4390, %v4478
        %v4480 = vpop.f32.mrf.mxu0
        %v4481 = vadd.f32 %v4392, %v4480
        %4482 = vmatmul.bf16.gmra.mxu0 %v1737
        %v4483 = vpop.f32.mrf.mxu0
        %v4484 = vadd.f32 %v4395, %v4483
        %v4485 = vpop.f32.mrf.mxu0
        %v4486 = vadd.f32 %v4397, %v4485
        %4487 = vmatmul.bf16.gmra.mxu0 %v1745
        %v4488 = vpop.f32.mrf.mxu0
        %v4489 = vadd.f32 %v4400, %v4488
        %v4490 = vpop.f32.mrf.mxu0
        %v4491 = vadd.f32 %v4402, %v4490
        %4492 = vmatmul.bf16.gmra.mxu0 %v1753
        %v4493 = vpop.f32.mrf.mxu0
        %v4494 = vadd.f32 %v4405, %v4493
        %v4495 = vpop.f32.mrf.mxu0
        %v4496 = vadd.f32 %v4407, %v4495
        %4497 = vdwg.mxu0
        %4498 = vmatpush.bf16.msra.mxu0 %v2904
        %4499 = vmatpush.bf16.msra.mxu0 %v2900
        %4500 = vmatpush.bf16.msra.mxu0 %v2896
        %4501 = vmatpush.bf16.msra.mxu0 %v2892
        %4502 = vmatpush.bf16.msra.mxu0 %v2888
        %4503 = vmatpush.bf16.msra.mxu0 %v2884
        %4504 = vmatpush.bf16.msra.mxu0 %v2880
        %4505 = vmatpush.bf16.msra.mxu0 %v2876
        %4506 = vmatmul.bf16.gmra.mxu0 %v1634
        %v4507 = vpop.f32.mrf.mxu0
        %v4508 = vadd.f32 %v4419, %v4507
        %v4509 = vpop.f32.mrf.mxu0
        %v4510 = vadd.f32 %v4421, %v4509
        %4511 = vmatmul.bf16.gmra.mxu0 %v1642
        %v4512 = vpop.f32.mrf.mxu0
        %v4513 = vadd.f32 %v4424, %v4512
        %v4514 = vpop.f32.mrf.mxu0
        %v4515 = vadd.f32 %v4426, %v4514
        %4516 = vmatmul.bf16.gmra.mxu0 %v1650
        %v4517 = vpop.f32.mrf.mxu0
        %v4518 = vadd.f32 %v4429, %v4517
        %v4519 = vpop.f32.mrf.mxu0
        %v4520 = vadd.f32 %v4431, %v4519
        %4521 = vmatmul.bf16.gmra.mxu0 %v1658
        %v4522 = vpop.f32.mrf.mxu0
        %v4523 = vadd.f32 %v4434, %v4522
        %v4524 = vpop.f32.mrf.mxu0
        %v4525 = vadd.f32 %v4436, %v4524
        %4526 = vmatmul.bf16.gmra.mxu0 %v1666
        %v4527 = vpop.f32.mrf.mxu0
        %v4528 = vadd.f32 %v4439, %v4527
        %v4529 = vpop.f32.mrf.mxu0
        %v4530 = vadd.f32 %v4441, %v4529
        %4531 = vmatmul.bf16.gmra.mxu0 %v1674
        %v4532 = vpop.f32.mrf.mxu0
        %v4533 = vadd.f32 %v4444, %v4532
        %v4534 = vpop.f32.mrf.mxu0
        %v4535 = vadd.f32 %v4446, %v4534
        %4536 = vmatmul.bf16.gmra.mxu0 %v1682
        %v4537 = vpop.f32.mrf.mxu0
        %v4538 = vadd.f32 %v4449, %v4537
        %v4539 = vpop.f32.mrf.mxu0
        %v4540 = vadd.f32 %v4451, %v4539
        %4541 = vmatmul.bf16.gmra.mxu0 %v1690
        %v4542 = vpop.f32.mrf.mxu0
        %v4543 = vadd.f32 %v4454, %v4542
        %v4544 = vpop.f32.mrf.mxu0
        %v4545 = vadd.f32 %v4456, %v4544
        %4546 = vmatmul.bf16.gmra.mxu0 %v1698
        %v4547 = vpop.f32.mrf.mxu0
        %v4548 = vadd.f32 %v4459, %v4547
        %v4549 = vpop.f32.mrf.mxu0
        %v4550 = vadd.f32 %v4461, %v4549
        %4551 = vmatmul.bf16.gmra.mxu0 %v1706
        %v4552 = vpop.f32.mrf.mxu0
        %v4553 = vadd.f32 %v4464, %v4552
        %v4554 = vpop.f32.mrf.mxu0
        %v4555 = vadd.f32 %v4466, %v4554
        %4556 = vmatmul.bf16.gmra.mxu0 %v1714
        %v4557 = vpop.f32.mrf.mxu0
        %v4558 = vadd.f32 %v4469, %v4557
        %v4559 = vpop.f32.mrf.mxu0
        %v4560 = vadd.f32 %v4471, %v4559
        %4561 = vmatmul.bf16.gmra.mxu0 %v1722
        %v4562 = vpop.f32.mrf.mxu0
        %v4563 = vadd.f32 %v4474, %v4562
        %v4564 = vpop.f32.mrf.mxu0
        %v4565 = vadd.f32 %v4476, %v4564
        %4566 = vmatmul.bf16.gmra.mxu0 %v1730
        %v4567 = vpop.f32.mrf.mxu0
        %v4568 = vadd.f32 %v4479, %v4567
        %v4569 = vpop.f32.mrf.mxu0
        %v4570 = vadd.f32 %v4481, %v4569
        %4571 = vmatmul.bf16.gmra.mxu0 %v1738
        %v4572 = vpop.f32.mrf.mxu0
        %v4573 = vadd.f32 %v4484, %v4572
        %v4574 = vpop.f32.mrf.mxu0
        %v4575 = vadd.f32 %v4486, %v4574
        %4576 = vmatmul.bf16.gmra.mxu0 %v1746
        %v4577 = vpop.f32.mrf.mxu0
        %v4578 = vadd.f32 %v4489, %v4577
        %v4579 = vpop.f32.mrf.mxu0
        %v4580 = vadd.f32 %v4491, %v4579
        %4581 = vmatmul.bf16.gmra.mxu0 %v1754
        %v4582 = vpop.f32.mrf.mxu0
        %v4583 = vadd.f32 %v4494, %v4582
        %v4584 = vpop.f32.mrf.mxu0
        %v4585 = vadd.f32 %v4496, %v4584
        %4586 = vdwg.mxu0
        %4587 = vmatpush.bf16.msra.mxu0 %v2681
        %4588 = vmatpush.bf16.msra.mxu0 %v2677
        %4589 = vmatpush.bf16.msra.mxu0 %v2673
        %4590 = vmatpush.bf16.msra.mxu0 %v2669
        %4591 = vmatpush.bf16.msra.mxu0 %v2665
        %4592 = vmatpush.bf16.msra.mxu0 %v2661
        %4593 = vmatpush.bf16.msra.mxu0 %v2657
        %4594 = vmatpush.bf16.msra.mxu0 %v2653
        %4595 = vmatmul.bf16.gmra.mxu0 %v1627
        %v4596 = vpop.f32.mrf.mxu0
        %v4597 = vadd.f32 %v1237, %v4596
        %v4598 = vpop.f32.mrf.mxu0
        %v4599 = vadd.f32 %v1237, %v4598
        %4600 = vmatmul.bf16.gmra.mxu0 %v1635
        %v4601 = vpop.f32.mrf.mxu0
        %v4602 = vadd.f32 %v1237, %v4601
        %v4603 = vpop.f32.mrf.mxu0
        %v4604 = vadd.f32 %v1237, %v4603
        %4605 = vmatmul.bf16.gmra.mxu0 %v1643
        %v4606 = vpop.f32.mrf.mxu0
        %v4607 = vadd.f32 %v1237, %v4606
        %v4608 = vpop.f32.mrf.mxu0
        %v4609 = vadd.f32 %v1237, %v4608
        %4610 = vmatmul.bf16.gmra.mxu0 %v1651
        %v4611 = vpop.f32.mrf.mxu0
        %v4612 = vadd.f32 %v1237, %v4611
        %v4613 = vpop.f32.mrf.mxu0
        %v4614 = vadd.f32 %v1237, %v4613
        %4615 = vmatmul.bf16.gmra.mxu0 %v1659
        %v4616 = vpop.f32.mrf.mxu0
        %v4617 = vadd.f32 %v1237, %v4616
        %v4618 = vpop.f32.mrf.mxu0
        %v4619 = vadd.f32 %v1237, %v4618
        %4620 = vmatmul.bf16.gmra.mxu0 %v1667
        %v4621 = vpop.f32.mrf.mxu0
        %v4622 = vadd.f32 %v1237, %v4621
        %v4623 = vpop.f32.mrf.mxu0
        %v4624 = vadd.f32 %v1237, %v4623
        %4625 = vmatmul.bf16.gmra.mxu0 %v1675
        %v4626 = vpop.f32.mrf.mxu0
        %v4627 = vadd.f32 %v1237, %v4626
        %v4628 = vpop.f32.mrf.mxu0
        %v4629 = vadd.f32 %v1237, %v4628
        %4630 = vmatmul.bf16.gmra.mxu0 %v1683
        %v4631 = vpop.f32.mrf.mxu0
        %v4632 = vadd.f32 %v1237, %v4631
        %v4633 = vpop.f32.mrf.mxu0
        %v4634 = vadd.f32 %v1237, %v4633
        %4635 = vmatmul.bf16.gmra.mxu0 %v1691
        %v4636 = vpop.f32.mrf.mxu0
        %v4637 = vadd.f32 %v1237, %v4636
        %v4638 = vpop.f32.mrf.mxu0
        %v4639 = vadd.f32 %v1237, %v4638
        %4640 = vmatmul.bf16.gmra.mxu0 %v1699
        %v4641 = vpop.f32.mrf.mxu0
        %v4642 = vadd.f32 %v1237, %v4641
        %v4643 = vpop.f32.mrf.mxu0
        %v4644 = vadd.f32 %v1237, %v4643
        %4645 = vmatmul.bf16.gmra.mxu0 %v1707
        %v4646 = vpop.f32.mrf.mxu0
        %v4647 = vadd.f32 %v1237, %v4646
        %v4648 = vpop.f32.mrf.mxu0
        %v4649 = vadd.f32 %v1237, %v4648
        %4650 = vmatmul.bf16.gmra.mxu0 %v1715
        %v4651 = vpop.f32.mrf.mxu0
        %v4652 = vadd.f32 %v1237, %v4651
        %v4653 = vpop.f32.mrf.mxu0
        %v4654 = vadd.f32 %v1237, %v4653
        %4655 = vmatmul.bf16.gmra.mxu0 %v1723
        %v4656 = vpop.f32.mrf.mxu0
        %v4657 = vadd.f32 %v1237, %v4656
        %v4658 = vpop.f32.mrf.mxu0
        %v4659 = vadd.f32 %v1237, %v4658
        %4660 = vmatmul.bf16.gmra.mxu0 %v1731
        %v4661 = vpop.f32.mrf.mxu0
        %v4662 = vadd.f32 %v1237, %v4661
        %v4663 = vpop.f32.mrf.mxu0
        %v4664 = vadd.f32 %v1237, %v4663
        %4665 = vmatmul.bf16.gmra.mxu0 %v1739
        %v4666 = vpop.f32.mrf.mxu0
        %v4667 = vadd.f32 %v1237, %v4666
        %v4668 = vpop.f32.mrf.mxu0
        %v4669 = vadd.f32 %v1237, %v4668
        %4670 = vmatmul.bf16.gmra.mxu0 %v1747
        %v4671 = vpop.f32.mrf.mxu0
        %v4672 = vadd.f32 %v1237, %v4671
        %v4673 = vpop.f32.mrf.mxu0
        %v4674 = vadd.f32 %v1237, %v4673
        %4675 = vdwg.mxu0
        %4676 = vmatpush.bf16.msra.mxu0 %v2713
        %4677 = vmatpush.bf16.msra.mxu0 %v2709
        %4678 = vmatpush.bf16.msra.mxu0 %v2705
        %4679 = vmatpush.bf16.msra.mxu0 %v2701
        %4680 = vmatpush.bf16.msra.mxu0 %v2697
        %4681 = vmatpush.bf16.msra.mxu0 %v2693
        %4682 = vmatpush.bf16.msra.mxu0 %v2689
        %4683 = vmatpush.bf16.msra.mxu0 %v2685
        %4684 = vmatmul.bf16.gmra.mxu0 %v1628
        %v4685 = vpop.f32.mrf.mxu0
        %v4686 = vadd.f32 %v4597, %v4685
        %v4687 = vpop.f32.mrf.mxu0
        %v4688 = vadd.f32 %v4599, %v4687
        %4689 = vmatmul.bf16.gmra.mxu0 %v1636
        %v4690 = vpop.f32.mrf.mxu0
        %v4691 = vadd.f32 %v4602, %v4690
        %v4692 = vpop.f32.mrf.mxu0
        %v4693 = vadd.f32 %v4604, %v4692
        %4694 = vmatmul.bf16.gmra.mxu0 %v1644
        %v4695 = vpop.f32.mrf.mxu0
        %v4696 = vadd.f32 %v4607, %v4695
        %v4697 = vpop.f32.mrf.mxu0
        %v4698 = vadd.f32 %v4609, %v4697
        %4699 = vmatmul.bf16.gmra.mxu0 %v1652
        %v4700 = vpop.f32.mrf.mxu0
        %v4701 = vadd.f32 %v4612, %v4700
        %v4702 = vpop.f32.mrf.mxu0
        %v4703 = vadd.f32 %v4614, %v4702
        %4704 = vmatmul.bf16.gmra.mxu0 %v1660
        %v4705 = vpop.f32.mrf.mxu0
        %v4706 = vadd.f32 %v4617, %v4705
        %v4707 = vpop.f32.mrf.mxu0
        %v4708 = vadd.f32 %v4619, %v4707
        %4709 = vmatmul.bf16.gmra.mxu0 %v1668
        %v4710 = vpop.f32.mrf.mxu0
        %v4711 = vadd.f32 %v4622, %v4710
        %v4712 = vpop.f32.mrf.mxu0
        %v4713 = vadd.f32 %v4624, %v4712
        %4714 = vmatmul.bf16.gmra.mxu0 %v1676
        %v4715 = vpop.f32.mrf.mxu0
        %v4716 = vadd.f32 %v4627, %v4715
        %v4717 = vpop.f32.mrf.mxu0
        %v4718 = vadd.f32 %v4629, %v4717
        %4719 = vmatmul.bf16.gmra.mxu0 %v1684
        %v4720 = vpop.f32.mrf.mxu0
        %v4721 = vadd.f32 %v4632, %v4720
        %v4722 = vpop.f32.mrf.mxu0
        %v4723 = vadd.f32 %v4634, %v4722
        %4724 = vmatmul.bf16.gmra.mxu0 %v1692
        %v4725 = vpop.f32.mrf.mxu0
        %v4726 = vadd.f32 %v4637, %v4725
        %v4727 = vpop.f32.mrf.mxu0
        %v4728 = vadd.f32 %v4639, %v4727
        %4729 = vmatmul.bf16.gmra.mxu0 %v1700
        %v4730 = vpop.f32.mrf.mxu0
        %v4731 = vadd.f32 %v4642, %v4730
        %v4732 = vpop.f32.mrf.mxu0
        %v4733 = vadd.f32 %v4644, %v4732
        %4734 = vmatmul.bf16.gmra.mxu0 %v1708
        %v4735 = vpop.f32.mrf.mxu0
        %v4736 = vadd.f32 %v4647, %v4735
        %v4737 = vpop.f32.mrf.mxu0
        %v4738 = vadd.f32 %v4649, %v4737
        %4739 = vmatmul.bf16.gmra.mxu0 %v1716
        %v4740 = vpop.f32.mrf.mxu0
        %v4741 = vadd.f32 %v4652, %v4740
        %v4742 = vpop.f32.mrf.mxu0
        %v4743 = vadd.f32 %v4654, %v4742
        %4744 = vmatmul.bf16.gmra.mxu0 %v1724
        %v4745 = vpop.f32.mrf.mxu0
        %v4746 = vadd.f32 %v4657, %v4745
        %v4747 = vpop.f32.mrf.mxu0
        %v4748 = vadd.f32 %v4659, %v4747
        %4749 = vmatmul.bf16.gmra.mxu0 %v1732
        %v4750 = vpop.f32.mrf.mxu0
        %v4751 = vadd.f32 %v4662, %v4750
        %v4752 = vpop.f32.mrf.mxu0
        %v4753 = vadd.f32 %v4664, %v4752
        %4754 = vmatmul.bf16.gmra.mxu0 %v1740
        %v4755 = vpop.f32.mrf.mxu0
        %v4756 = vadd.f32 %v4667, %v4755
        %v4757 = vpop.f32.mrf.mxu0
        %v4758 = vadd.f32 %v4669, %v4757
        %4759 = vmatmul.bf16.gmra.mxu0 %v1748
        %v4760 = vpop.f32.mrf.mxu0
        %v4761 = vadd.f32 %v4672, %v4760
        %v4762 = vpop.f32.mrf.mxu0
        %v4763 = vadd.f32 %v4674, %v4762
        %4764 = vdwg.mxu0
        %4765 = vmatpush.bf16.msra.mxu0 %v2745
        %4766 = vmatpush.bf16.msra.mxu0 %v2741
        %4767 = vmatpush.bf16.msra.mxu0 %v2737
        %4768 = vmatpush.bf16.msra.mxu0 %v2733
        %4769 = vmatpush.bf16.msra.mxu0 %v2729
        %4770 = vmatpush.bf16.msra.mxu0 %v2725
        %4771 = vmatpush.bf16.msra.mxu0 %v2721
        %4772 = vmatpush.bf16.msra.mxu0 %v2717
        %4773 = vmatmul.bf16.gmra.mxu0 %v1629
        %v4774 = vpop.f32.mrf.mxu0
        %v4775 = vadd.f32 %v4686, %v4774
        %v4776 = vpop.f32.mrf.mxu0
        %v4777 = vadd.f32 %v4688, %v4776
        %4778 = vmatmul.bf16.gmra.mxu0 %v1637
        %v4779 = vpop.f32.mrf.mxu0
        %v4780 = vadd.f32 %v4691, %v4779
        %v4781 = vpop.f32.mrf.mxu0
        %v4782 = vadd.f32 %v4693, %v4781
        %4783 = vmatmul.bf16.gmra.mxu0 %v1645
        %v4784 = vpop.f32.mrf.mxu0
        %v4785 = vadd.f32 %v4696, %v4784
        %v4786 = vpop.f32.mrf.mxu0
        %v4787 = vadd.f32 %v4698, %v4786
        %4788 = vmatmul.bf16.gmra.mxu0 %v1653
        %v4789 = vpop.f32.mrf.mxu0
        %v4790 = vadd.f32 %v4701, %v4789
        %v4791 = vpop.f32.mrf.mxu0
        %v4792 = vadd.f32 %v4703, %v4791
        %4793 = vmatmul.bf16.gmra.mxu0 %v1661
        %v4794 = vpop.f32.mrf.mxu0
        %v4795 = vadd.f32 %v4706, %v4794
        %v4796 = vpop.f32.mrf.mxu0
        %v4797 = vadd.f32 %v4708, %v4796
        %4798 = vmatmul.bf16.gmra.mxu0 %v1669
        %v4799 = vpop.f32.mrf.mxu0
        %v4800 = vadd.f32 %v4711, %v4799
        %v4801 = vpop.f32.mrf.mxu0
        %v4802 = vadd.f32 %v4713, %v4801
        %4803 = vmatmul.bf16.gmra.mxu0 %v1677
        %v4804 = vpop.f32.mrf.mxu0
        %v4805 = vadd.f32 %v4716, %v4804
        %v4806 = vpop.f32.mrf.mxu0
        %v4807 = vadd.f32 %v4718, %v4806
        %4808 = vmatmul.bf16.gmra.mxu0 %v1685
        %v4809 = vpop.f32.mrf.mxu0
        %v4810 = vadd.f32 %v4721, %v4809
        %v4811 = vpop.f32.mrf.mxu0
        %v4812 = vadd.f32 %v4723, %v4811
        %4813 = vmatmul.bf16.gmra.mxu0 %v1693
        %v4814 = vpop.f32.mrf.mxu0
        %v4815 = vadd.f32 %v4726, %v4814
        %v4816 = vpop.f32.mrf.mxu0
        %v4817 = vadd.f32 %v4728, %v4816
        %4818 = vmatmul.bf16.gmra.mxu0 %v1701
        %v4819 = vpop.f32.mrf.mxu0
        %v4820 = vadd.f32 %v4731, %v4819
        %v4821 = vpop.f32.mrf.mxu0
        %v4822 = vadd.f32 %v4733, %v4821
        %4823 = vmatmul.bf16.gmra.mxu0 %v1709
        %v4824 = vpop.f32.mrf.mxu0
        %v4825 = vadd.f32 %v4736, %v4824
        %v4826 = vpop.f32.mrf.mxu0
        %v4827 = vadd.f32 %v4738, %v4826
        %4828 = vmatmul.bf16.gmra.mxu0 %v1717
        %v4829 = vpop.f32.mrf.mxu0
        %v4830 = vadd.f32 %v4741, %v4829
        %v4831 = vpop.f32.mrf.mxu0
        %v4832 = vadd.f32 %v4743, %v4831
        %4833 = vmatmul.bf16.gmra.mxu0 %v1725
        %v4834 = vpop.f32.mrf.mxu0
        %v4835 = vadd.f32 %v4746, %v4834
        %v4836 = vpop.f32.mrf.mxu0
        %v4837 = vadd.f32 %v4748, %v4836
        %4838 = vmatmul.bf16.gmra.mxu0 %v1733
        %v4839 = vpop.f32.mrf.mxu0
        %v4840 = vadd.f32 %v4751, %v4839
        %v4841 = vpop.f32.mrf.mxu0
        %v4842 = vadd.f32 %v4753, %v4841
        %4843 = vmatmul.bf16.gmra.mxu0 %v1741
        %v4844 = vpop.f32.mrf.mxu0
        %v4845 = vadd.f32 %v4756, %v4844
        %v4846 = vpop.f32.mrf.mxu0
        %v4847 = vadd.f32 %v4758, %v4846
        %4848 = vmatmul.bf16.gmra.mxu0 %v1749
        %v4849 = vpop.f32.mrf.mxu0
        %v4850 = vadd.f32 %v4761, %v4849
        %v4851 = vpop.f32.mrf.mxu0
        %v4852 = vadd.f32 %v4763, %v4851
        %4853 = vdwg.mxu0
        %4854 = vmatpush.bf16.msra.mxu0 %v2777
        %4855 = vmatpush.bf16.msra.mxu0 %v2773
        %4856 = vmatpush.bf16.msra.mxu0 %v2769
        %4857 = vmatpush.bf16.msra.mxu0 %v2765
        %4858 = vmatpush.bf16.msra.mxu0 %v2761
        %4859 = vmatpush.bf16.msra.mxu0 %v2757
        %4860 = vmatpush.bf16.msra.mxu0 %v2753
        %4861 = vmatpush.bf16.msra.mxu0 %v2749
        %4862 = vmatmul.bf16.gmra.mxu0 %v1630
        %v4863 = vpop.f32.mrf.mxu0
        %v4864 = vadd.f32 %v4775, %v4863
        %v4865 = vpop.f32.mrf.mxu0
        %v4866 = vadd.f32 %v4777, %v4865
        %4867 = vmatmul.bf16.gmra.mxu0 %v1638
        %v4868 = vpop.f32.mrf.mxu0
        %v4869 = vadd.f32 %v4780, %v4868
        %v4870 = vpop.f32.mrf.mxu0
        %v4871 = vadd.f32 %v4782, %v4870
        %4872 = vmatmul.bf16.gmra.mxu0 %v1646
        %v4873 = vpop.f32.mrf.mxu0
        %v4874 = vadd.f32 %v4785, %v4873
        %v4875 = vpop.f32.mrf.mxu0
        %v4876 = vadd.f32 %v4787, %v4875
        %4877 = vmatmul.bf16.gmra.mxu0 %v1654
        %v4878 = vpop.f32.mrf.mxu0
        %v4879 = vadd.f32 %v4790, %v4878
        %v4880 = vpop.f32.mrf.mxu0
        %v4881 = vadd.f32 %v4792, %v4880
        %4882 = vmatmul.bf16.gmra.mxu0 %v1662
        %v4883 = vpop.f32.mrf.mxu0
        %v4884 = vadd.f32 %v4795, %v4883
        %v4885 = vpop.f32.mrf.mxu0
        %v4886 = vadd.f32 %v4797, %v4885
        %4887 = vmatmul.bf16.gmra.mxu0 %v1670
        %v4888 = vpop.f32.mrf.mxu0
        %v4889 = vadd.f32 %v4800, %v4888
        %v4890 = vpop.f32.mrf.mxu0
        %v4891 = vadd.f32 %v4802, %v4890
        %4892 = vmatmul.bf16.gmra.mxu0 %v1678
        %v4893 = vpop.f32.mrf.mxu0
        %v4894 = vadd.f32 %v4805, %v4893
        %v4895 = vpop.f32.mrf.mxu0
        %v4896 = vadd.f32 %v4807, %v4895
        %4897 = vmatmul.bf16.gmra.mxu0 %v1686
        %v4898 = vpop.f32.mrf.mxu0
        %v4899 = vadd.f32 %v4810, %v4898
        %v4900 = vpop.f32.mrf.mxu0
        %v4901 = vadd.f32 %v4812, %v4900
        %4902 = vmatmul.bf16.gmra.mxu0 %v1694
        %v4903 = vpop.f32.mrf.mxu0
        %v4904 = vadd.f32 %v4815, %v4903
        %v4905 = vpop.f32.mrf.mxu0
        %v4906 = vadd.f32 %v4817, %v4905
        %4907 = vmatmul.bf16.gmra.mxu0 %v1702
        %v4908 = vpop.f32.mrf.mxu0
        %v4909 = vadd.f32 %v4820, %v4908
        %v4910 = vpop.f32.mrf.mxu0
        %v4911 = vadd.f32 %v4822, %v4910
        %4912 = vmatmul.bf16.gmra.mxu0 %v1710
        %v4913 = vpop.f32.mrf.mxu0
        %v4914 = vadd.f32 %v4825, %v4913
        %v4915 = vpop.f32.mrf.mxu0
        %v4916 = vadd.f32 %v4827, %v4915
        %4917 = vmatmul.bf16.gmra.mxu0 %v1718
        %v4918 = vpop.f32.mrf.mxu0
        %v4919 = vadd.f32 %v4830, %v4918
        %v4920 = vpop.f32.mrf.mxu0
        %v4921 = vadd.f32 %v4832, %v4920
        %4922 = vmatmul.bf16.gmra.mxu0 %v1726
        %v4923 = vpop.f32.mrf.mxu0
        %v4924 = vadd.f32 %v4835, %v4923
        %v4925 = vpop.f32.mrf.mxu0
        %v4926 = vadd.f32 %v4837, %v4925
        %4927 = vmatmul.bf16.gmra.mxu0 %v1734
        %v4928 = vpop.f32.mrf.mxu0
        %v4929 = vadd.f32 %v4840, %v4928
        %v4930 = vpop.f32.mrf.mxu0
        %v4931 = vadd.f32 %v4842, %v4930
        %4932 = vmatmul.bf16.gmra.mxu0 %v1742
        %v4933 = vpop.f32.mrf.mxu0
        %v4934 = vadd.f32 %v4845, %v4933
        %v4935 = vpop.f32.mrf.mxu0
        %v4936 = vadd.f32 %v4847, %v4935
        %4937 = vmatmul.bf16.gmra.mxu0 %v1750
        %v4938 = vpop.f32.mrf.mxu0
        %v4939 = vadd.f32 %v4850, %v4938
        %v4940 = vpop.f32.mrf.mxu0
        %v4941 = vadd.f32 %v4852, %v4940
        %4942 = vdwg.mxu0
        %4943 = vmatpush.bf16.msra.mxu0 %v2809
        %4944 = vmatpush.bf16.msra.mxu0 %v2805
        %4945 = vmatpush.bf16.msra.mxu0 %v2801
        %4946 = vmatpush.bf16.msra.mxu0 %v2797
        %4947 = vmatpush.bf16.msra.mxu0 %v2793
        %4948 = vmatpush.bf16.msra.mxu0 %v2789
        %4949 = vmatpush.bf16.msra.mxu0 %v2785
        %4950 = vmatpush.bf16.msra.mxu0 %v2781
        %4951 = vmatmul.bf16.gmra.mxu0 %v1631
        %v4952 = vpop.f32.mrf.mxu0
        %v4953 = vadd.f32 %v4864, %v4952
        %v4954 = vpop.f32.mrf.mxu0
        %v4955 = vadd.f32 %v4866, %v4954
        %4956 = vmatmul.bf16.gmra.mxu0 %v1639
        %v4957 = vpop.f32.mrf.mxu0
        %v4958 = vadd.f32 %v4869, %v4957
        %v4959 = vpop.f32.mrf.mxu0
        %v4960 = vadd.f32 %v4871, %v4959
        %4961 = vmatmul.bf16.gmra.mxu0 %v1647
        %v4962 = vpop.f32.mrf.mxu0
        %v4963 = vadd.f32 %v4874, %v4962
        %v4964 = vpop.f32.mrf.mxu0
        %v4965 = vadd.f32 %v4876, %v4964
        %4966 = vmatmul.bf16.gmra.mxu0 %v1655
        %v4967 = vpop.f32.mrf.mxu0
        %v4968 = vadd.f32 %v4879, %v4967
        %v4969 = vpop.f32.mrf.mxu0
        %v4970 = vadd.f32 %v4881, %v4969
        %4971 = vmatmul.bf16.gmra.mxu0 %v1663
        %v4972 = vpop.f32.mrf.mxu0
        %v4973 = vadd.f32 %v4884, %v4972
        %v4974 = vpop.f32.mrf.mxu0
        %v4975 = vadd.f32 %v4886, %v4974
        %4976 = vmatmul.bf16.gmra.mxu0 %v1671
        %v4977 = vpop.f32.mrf.mxu0
        %v4978 = vadd.f32 %v4889, %v4977
        %v4979 = vpop.f32.mrf.mxu0
        %v4980 = vadd.f32 %v4891, %v4979
        %4981 = vmatmul.bf16.gmra.mxu0 %v1679
        %v4982 = vpop.f32.mrf.mxu0
        %v4983 = vadd.f32 %v4894, %v4982
        %v4984 = vpop.f32.mrf.mxu0
        %v4985 = vadd.f32 %v4896, %v4984
        %4986 = vmatmul.bf16.gmra.mxu0 %v1687
        %v4987 = vpop.f32.mrf.mxu0
        %v4988 = vadd.f32 %v4899, %v4987
        %v4989 = vpop.f32.mrf.mxu0
        %v4990 = vadd.f32 %v4901, %v4989
        %4991 = vmatmul.bf16.gmra.mxu0 %v1695
        %v4992 = vpop.f32.mrf.mxu0
        %v4993 = vadd.f32 %v4904, %v4992
        %v4994 = vpop.f32.mrf.mxu0
        %v4995 = vadd.f32 %v4906, %v4994
        %4996 = vmatmul.bf16.gmra.mxu0 %v1703
        %v4997 = vpop.f32.mrf.mxu0
        %v4998 = vadd.f32 %v4909, %v4997
        %v4999 = vpop.f32.mrf.mxu0
        %v5000 = vadd.f32 %v4911, %v4999
        %5001 = vmatmul.bf16.gmra.mxu0 %v1711
        %v5002 = vpop.f32.mrf.mxu0
        %v5003 = vadd.f32 %v4914, %v5002
        %v5004 = vpop.f32.mrf.mxu0
        %v5005 = vadd.f32 %v4916, %v5004
        %5006 = vmatmul.bf16.gmra.mxu0 %v1719
        %v5007 = vpop.f32.mrf.mxu0
        %v5008 = vadd.f32 %v4919, %v5007
        %v5009 = vpop.f32.mrf.mxu0
        %v5010 = vadd.f32 %v4921, %v5009
        %5011 = vmatmul.bf16.gmra.mxu0 %v1727
        %v5012 = vpop.f32.mrf.mxu0
        %v5013 = vadd.f32 %v4924, %v5012
        %v5014 = vpop.f32.mrf.mxu0
        %v5015 = vadd.f32 %v4926, %v5014
        %5016 = vmatmul.bf16.gmra.mxu0 %v1735
        %v5017 = vpop.f32.mrf.mxu0
        %v5018 = vadd.f32 %v4929, %v5017
        %v5019 = vpop.f32.mrf.mxu0
        %v5020 = vadd.f32 %v4931, %v5019
        %5021 = vmatmul.bf16.gmra.mxu0 %v1743
        %v5022 = vpop.f32.mrf.mxu0
        %v5023 = vadd.f32 %v4934, %v5022
        %v5024 = vpop.f32.mrf.mxu0
        %v5025 = vadd.f32 %v4936, %v5024
        %5026 = vmatmul.bf16.gmra.mxu0 %v1751
        %v5027 = vpop.f32.mrf.mxu0
        %v5028 = vadd.f32 %v4939, %v5027
        %v5029 = vpop.f32.mrf.mxu0
        %v5030 = vadd.f32 %v4941, %v5029
        %5031 = vdwg.mxu0
        %5032 = vmatpush.bf16.msra.mxu0 %v2841
        %5033 = vmatpush.bf16.msra.mxu0 %v2837
        %5034 = vmatpush.bf16.msra.mxu0 %v2833
        %5035 = vmatpush.bf16.msra.mxu0 %v2829
        %5036 = vmatpush.bf16.msra.mxu0 %v2825
        %5037 = vmatpush.bf16.msra.mxu0 %v2821
        %5038 = vmatpush.bf16.msra.mxu0 %v2817
        %5039 = vmatpush.bf16.msra.mxu0 %v2813
        %5040 = vmatmul.bf16.gmra.mxu0 %v1632
        %v5041 = vpop.f32.mrf.mxu0
        %v5042 = vadd.f32 %v4953, %v5041
        %v5043 = vpop.f32.mrf.mxu0
        %v5044 = vadd.f32 %v4955, %v5043
        %5045 = vmatmul.bf16.gmra.mxu0 %v1640
        %v5046 = vpop.f32.mrf.mxu0
        %v5047 = vadd.f32 %v4958, %v5046
        %v5048 = vpop.f32.mrf.mxu0
        %v5049 = vadd.f32 %v4960, %v5048
        %5050 = vmatmul.bf16.gmra.mxu0 %v1648
        %v5051 = vpop.f32.mrf.mxu0
        %v5052 = vadd.f32 %v4963, %v5051
        %v5053 = vpop.f32.mrf.mxu0
        %v5054 = vadd.f32 %v4965, %v5053
        %5055 = vmatmul.bf16.gmra.mxu0 %v1656
        %v5056 = vpop.f32.mrf.mxu0
        %v5057 = vadd.f32 %v4968, %v5056
        %v5058 = vpop.f32.mrf.mxu0
        %v5059 = vadd.f32 %v4970, %v5058
        %5060 = vmatmul.bf16.gmra.mxu0 %v1664
        %v5061 = vpop.f32.mrf.mxu0
        %v5062 = vadd.f32 %v4973, %v5061
        %v5063 = vpop.f32.mrf.mxu0
        %v5064 = vadd.f32 %v4975, %v5063
        %5065 = vmatmul.bf16.gmra.mxu0 %v1672
        %v5066 = vpop.f32.mrf.mxu0
        %v5067 = vadd.f32 %v4978, %v5066
        %v5068 = vpop.f32.mrf.mxu0
        %v5069 = vadd.f32 %v4980, %v5068
        %5070 = vmatmul.bf16.gmra.mxu0 %v1680
        %v5071 = vpop.f32.mrf.mxu0
        %v5072 = vadd.f32 %v4983, %v5071
        %v5073 = vpop.f32.mrf.mxu0
        %v5074 = vadd.f32 %v4985, %v5073
        %5075 = vmatmul.bf16.gmra.mxu0 %v1688
        %v5076 = vpop.f32.mrf.mxu0
        %v5077 = vadd.f32 %v4988, %v5076
        %v5078 = vpop.f32.mrf.mxu0
        %v5079 = vadd.f32 %v4990, %v5078
        %5080 = vmatmul.bf16.gmra.mxu0 %v1696
        %v5081 = vpop.f32.mrf.mxu0
        %v5082 = vadd.f32 %v4993, %v5081
        %v5083 = vpop.f32.mrf.mxu0
        %v5084 = vadd.f32 %v4995, %v5083
        %5085 = vmatmul.bf16.gmra.mxu0 %v1704
        %v5086 = vpop.f32.mrf.mxu0
        %v5087 = vadd.f32 %v4998, %v5086
        %v5088 = vpop.f32.mrf.mxu0
        %v5089 = vadd.f32 %v5000, %v5088
        %5090 = vmatmul.bf16.gmra.mxu0 %v1712
        %v5091 = vpop.f32.mrf.mxu0
        %v5092 = vadd.f32 %v5003, %v5091
        %v5093 = vpop.f32.mrf.mxu0
        %v5094 = vadd.f32 %v5005, %v5093
        %5095 = vmatmul.bf16.gmra.mxu0 %v1720
        %v5096 = vpop.f32.mrf.mxu0
        %v5097 = vadd.f32 %v5008, %v5096
        %v5098 = vpop.f32.mrf.mxu0
        %v5099 = vadd.f32 %v5010, %v5098
        %5100 = vmatmul.bf16.gmra.mxu0 %v1728
        %v5101 = vpop.f32.mrf.mxu0
        %v5102 = vadd.f32 %v5013, %v5101
        %v5103 = vpop.f32.mrf.mxu0
        %v5104 = vadd.f32 %v5015, %v5103
        %5105 = vmatmul.bf16.gmra.mxu0 %v1736
        %v5106 = vpop.f32.mrf.mxu0
        %v5107 = vadd.f32 %v5018, %v5106
        %v5108 = vpop.f32.mrf.mxu0
        %v5109 = vadd.f32 %v5020, %v5108
        %5110 = vmatmul.bf16.gmra.mxu0 %v1744
        %v5111 = vpop.f32.mrf.mxu0
        %v5112 = vadd.f32 %v5023, %v5111
        %v5113 = vpop.f32.mrf.mxu0
        %v5114 = vadd.f32 %v5025, %v5113
        %5115 = vmatmul.bf16.gmra.mxu0 %v1752
        %v5116 = vpop.f32.mrf.mxu0
        %v5117 = vadd.f32 %v5028, %v5116
        %v5118 = vpop.f32.mrf.mxu0
        %v5119 = vadd.f32 %v5030, %v5118
        %5120 = vdwg.mxu0
        %5121 = vmatpush.bf16.msra.mxu0 %v2873
        %5122 = vmatpush.bf16.msra.mxu0 %v2869
        %5123 = vmatpush.bf16.msra.mxu0 %v2865
        %5124 = vmatpush.bf16.msra.mxu0 %v2861
        %5125 = vmatpush.bf16.msra.mxu0 %v2857
        %5126 = vmatpush.bf16.msra.mxu0 %v2853
        %5127 = vmatpush.bf16.msra.mxu0 %v2849
        %5128 = vmatpush.bf16.msra.mxu0 %v2845
        %5129 = vmatmul.bf16.gmra.mxu0 %v1633
        %v5130 = vpop.f32.mrf.mxu0
        %v5131 = vadd.f32 %v5042, %v5130
        %v5132 = vpop.f32.mrf.mxu0
        %v5133 = vadd.f32 %v5044, %v5132
        %5134 = vmatmul.bf16.gmra.mxu0 %v1641
        %v5135 = vpop.f32.mrf.mxu0
        %v5136 = vadd.f32 %v5047, %v5135
        %v5137 = vpop.f32.mrf.mxu0
        %v5138 = vadd.f32 %v5049, %v5137
        %5139 = vmatmul.bf16.gmra.mxu0 %v1649
        %v5140 = vpop.f32.mrf.mxu0
        %v5141 = vadd.f32 %v5052, %v5140
        %v5142 = vpop.f32.mrf.mxu0
        %v5143 = vadd.f32 %v5054, %v5142
        %5144 = vmatmul.bf16.gmra.mxu0 %v1657
        %v5145 = vpop.f32.mrf.mxu0
        %v5146 = vadd.f32 %v5057, %v5145
        %v5147 = vpop.f32.mrf.mxu0
        %v5148 = vadd.f32 %v5059, %v5147
        %5149 = vmatmul.bf16.gmra.mxu0 %v1665
        %v5150 = vpop.f32.mrf.mxu0
        %v5151 = vadd.f32 %v5062, %v5150
        %v5152 = vpop.f32.mrf.mxu0
        %v5153 = vadd.f32 %v5064, %v5152
        %5154 = vmatmul.bf16.gmra.mxu0 %v1673
        %v5155 = vpop.f32.mrf.mxu0
        %v5156 = vadd.f32 %v5067, %v5155
        %v5157 = vpop.f32.mrf.mxu0
        %v5158 = vadd.f32 %v5069, %v5157
        %5159 = vmatmul.bf16.gmra.mxu0 %v1681
        %v5160 = vpop.f32.mrf.mxu0
        %v5161 = vadd.f32 %v5072, %v5160
        %v5162 = vpop.f32.mrf.mxu0
        %v5163 = vadd.f32 %v5074, %v5162
        %5164 = vmatmul.bf16.gmra.mxu0 %v1689
        %v5165 = vpop.f32.mrf.mxu0
        %v5166 = vadd.f32 %v5077, %v5165
        %v5167 = vpop.f32.mrf.mxu0
        %v5168 = vadd.f32 %v5079, %v5167
        %5169 = vmatmul.bf16.gmra.mxu0 %v1697
        %v5170 = vpop.f32.mrf.mxu0
        %v5171 = vadd.f32 %v5082, %v5170
        %v5172 = vpop.f32.mrf.mxu0
        %v5173 = vadd.f32 %v5084, %v5172
        %5174 = vmatmul.bf16.gmra.mxu0 %v1705
        %v5175 = vpop.f32.mrf.mxu0
        %v5176 = vadd.f32 %v5087, %v5175
        %v5177 = vpop.f32.mrf.mxu0
        %v5178 = vadd.f32 %v5089, %v5177
        %5179 = vmatmul.bf16.gmra.mxu0 %v1713
        %v5180 = vpop.f32.mrf.mxu0
        %v5181 = vadd.f32 %v5092, %v5180
        %v5182 = vpop.f32.mrf.mxu0
        %v5183 = vadd.f32 %v5094, %v5182
        %5184 = vmatmul.bf16.gmra.mxu0 %v1721
        %v5185 = vpop.f32.mrf.mxu0
        %v5186 = vadd.f32 %v5097, %v5185
        %v5187 = vpop.f32.mrf.mxu0
        %v5188 = vadd.f32 %v5099, %v5187
        %5189 = vmatmul.bf16.gmra.mxu0 %v1729
        %v5190 = vpop.f32.mrf.mxu0
        %v5191 = vadd.f32 %v5102, %v5190
        %v5192 = vpop.f32.mrf.mxu0
        %v5193 = vadd.f32 %v5104, %v5192
        %5194 = vmatmul.bf16.gmra.mxu0 %v1737
        %v5195 = vpop.f32.mrf.mxu0
        %v5196 = vadd.f32 %v5107, %v5195
        %v5197 = vpop.f32.mrf.mxu0
        %v5198 = vadd.f32 %v5109, %v5197
        %5199 = vmatmul.bf16.gmra.mxu0 %v1745
        %v5200 = vpop.f32.mrf.mxu0
        %v5201 = vadd.f32 %v5112, %v5200
        %v5202 = vpop.f32.mrf.mxu0
        %v5203 = vadd.f32 %v5114, %v5202
        %5204 = vmatmul.bf16.gmra.mxu0 %v1753
        %v5205 = vpop.f32.mrf.mxu0
        %v5206 = vadd.f32 %v5117, %v5205
        %v5207 = vpop.f32.mrf.mxu0
        %v5208 = vadd.f32 %v5119, %v5207
        %5209 = vdwg.mxu0
        %5210 = vmatpush.bf16.msra.mxu0 %v2905
        %5211 = vmatpush.bf16.msra.mxu0 %v2901
        %5212 = vmatpush.bf16.msra.mxu0 %v2897
        %5213 = vmatpush.bf16.msra.mxu0 %v2893
        %5214 = vmatpush.bf16.msra.mxu0 %v2889
        %5215 = vmatpush.bf16.msra.mxu0 %v2885
        %5216 = vmatpush.bf16.msra.mxu0 %v2881
        %5217 = vmatpush.bf16.msra.mxu0 %v2877
        %5218 = vmatmul.bf16.gmra.mxu0 %v1634
        %v5219 = vpop.f32.mrf.mxu0
        %v5220 = vadd.f32 %v5131, %v5219
        %v5221 = vpop.f32.mrf.mxu0
        %v5222 = vadd.f32 %v5133, %v5221
        %5223 = vmatmul.bf16.gmra.mxu0 %v1642
        %v5224 = vpop.f32.mrf.mxu0
        %v5225 = vadd.f32 %v5136, %v5224
        %v5226 = vpop.f32.mrf.mxu0
        %v5227 = vadd.f32 %v5138, %v5226
        %5228 = vmatmul.bf16.gmra.mxu0 %v1650
        %v5229 = vpop.f32.mrf.mxu0
        %v5230 = vadd.f32 %v5141, %v5229
        %v5231 = vpop.f32.mrf.mxu0
        %v5232 = vadd.f32 %v5143, %v5231
        %5233 = vmatmul.bf16.gmra.mxu0 %v1658
        %v5234 = vpop.f32.mrf.mxu0
        %v5235 = vadd.f32 %v5146, %v5234
        %v5236 = vpop.f32.mrf.mxu0
        %v5237 = vadd.f32 %v5148, %v5236
        %5238 = vmatmul.bf16.gmra.mxu0 %v1666
        %v5239 = vpop.f32.mrf.mxu0
        %v5240 = vadd.f32 %v5151, %v5239
        %v5241 = vpop.f32.mrf.mxu0
        %v5242 = vadd.f32 %v5153, %v5241
        %5243 = vmatmul.bf16.gmra.mxu0 %v1674
        %v5244 = vpop.f32.mrf.mxu0
        %v5245 = vadd.f32 %v5156, %v5244
        %v5246 = vpop.f32.mrf.mxu0
        %v5247 = vadd.f32 %v5158, %v5246
        %5248 = vmatmul.bf16.gmra.mxu0 %v1682
        %v5249 = vpop.f32.mrf.mxu0
        %v5250 = vadd.f32 %v5161, %v5249
        %v5251 = vpop.f32.mrf.mxu0
        %v5252 = vadd.f32 %v5163, %v5251
        %5253 = vmatmul.bf16.gmra.mxu0 %v1690
        %v5254 = vpop.f32.mrf.mxu0
        %v5255 = vadd.f32 %v5166, %v5254
        %v5256 = vpop.f32.mrf.mxu0
        %v5257 = vadd.f32 %v5168, %v5256
        %5258 = vmatmul.bf16.gmra.mxu0 %v1698
        %v5259 = vpop.f32.mrf.mxu0
        %v5260 = vadd.f32 %v5171, %v5259
        %v5261 = vpop.f32.mrf.mxu0
        %v5262 = vadd.f32 %v5173, %v5261
        %5263 = vmatmul.bf16.gmra.mxu0 %v1706
        %v5264 = vpop.f32.mrf.mxu0
        %v5265 = vadd.f32 %v5176, %v5264
        %v5266 = vpop.f32.mrf.mxu0
        %v5267 = vadd.f32 %v5178, %v5266
        %5268 = vmatmul.bf16.gmra.mxu0 %v1714
        %v5269 = vpop.f32.mrf.mxu0
        %v5270 = vadd.f32 %v5181, %v5269
        %v5271 = vpop.f32.mrf.mxu0
        %v5272 = vadd.f32 %v5183, %v5271
        %5273 = vmatmul.bf16.gmra.mxu0 %v1722
        %v5274 = vpop.f32.mrf.mxu0
        %v5275 = vadd.f32 %v5186, %v5274
        %v5276 = vpop.f32.mrf.mxu0
        %v5277 = vadd.f32 %v5188, %v5276
        %5278 = vmatmul.bf16.gmra.mxu0 %v1730
        %v5279 = vpop.f32.mrf.mxu0
        %v5280 = vadd.f32 %v5191, %v5279
        %v5281 = vpop.f32.mrf.mxu0
        %v5282 = vadd.f32 %v5193, %v5281
        %5283 = vmatmul.bf16.gmra.mxu0 %v1738
        %v5284 = vpop.f32.mrf.mxu0
        %v5285 = vadd.f32 %v5196, %v5284
        %v5286 = vpop.f32.mrf.mxu0
        %v5287 = vadd.f32 %v5198, %v5286
        %5288 = vmatmul.bf16.gmra.mxu0 %v1746
        %v5289 = vpop.f32.mrf.mxu0
        %v5290 = vadd.f32 %v5201, %v5289
        %v5291 = vpop.f32.mrf.mxu0
        %v5292 = vadd.f32 %v5203, %v5291
        %5293 = vmatmul.bf16.gmra.mxu0 %v1754
        %v5294 = vpop.f32.mrf.mxu0
        %v5295 = vadd.f32 %v5206, %v5294
        %v5296 = vpop.f32.mrf.mxu0
        %v5297 = vadd.f32 %v5208, %v5296
        %5298 = vdwg.mxu0
        %5299 = vmatpush.bf16.msra.mxu0 %v2682
        %5300 = vmatpush.bf16.msra.mxu0 %v2678
        %5301 = vmatpush.bf16.msra.mxu0 %v2674
        %5302 = vmatpush.bf16.msra.mxu0 %v2670
        %5303 = vmatpush.bf16.msra.mxu0 %v2666
        %5304 = vmatpush.bf16.msra.mxu0 %v2662
        %5305 = vmatpush.bf16.msra.mxu0 %v2658
        %5306 = vmatpush.bf16.msra.mxu0 %v2654
        %5307 = vmatmul.bf16.gmra.mxu0 %v1627
        %v5308 = vpop.f32.mrf.mxu0
        %v5309 = vadd.f32 %v1238, %v5308
        %v5310 = vpop.f32.mrf.mxu0
        %v5311 = vadd.f32 %v1238, %v5310
        %5312 = vmatmul.bf16.gmra.mxu0 %v1635
        %v5313 = vpop.f32.mrf.mxu0
        %v5314 = vadd.f32 %v1238, %v5313
        %v5315 = vpop.f32.mrf.mxu0
        %v5316 = vadd.f32 %v1238, %v5315
        %5317 = vmatmul.bf16.gmra.mxu0 %v1643
        %v5318 = vpop.f32.mrf.mxu0
        %v5319 = vadd.f32 %v1238, %v5318
        %v5320 = vpop.f32.mrf.mxu0
        %v5321 = vadd.f32 %v1238, %v5320
        %5322 = vmatmul.bf16.gmra.mxu0 %v1651
        %v5323 = vpop.f32.mrf.mxu0
        %v5324 = vadd.f32 %v1238, %v5323
        %v5325 = vpop.f32.mrf.mxu0
        %v5326 = vadd.f32 %v1238, %v5325
        %5327 = vmatmul.bf16.gmra.mxu0 %v1659
        %v5328 = vpop.f32.mrf.mxu0
        %v5329 = vadd.f32 %v1238, %v5328
        %v5330 = vpop.f32.mrf.mxu0
        %v5331 = vadd.f32 %v1238, %v5330
        %5332 = vmatmul.bf16.gmra.mxu0 %v1667
        %v5333 = vpop.f32.mrf.mxu0
        %v5334 = vadd.f32 %v1238, %v5333
        %v5335 = vpop.f32.mrf.mxu0
        %v5336 = vadd.f32 %v1238, %v5335
        %5337 = vmatmul.bf16.gmra.mxu0 %v1675
        %v5338 = vpop.f32.mrf.mxu0
        %v5339 = vadd.f32 %v1238, %v5338
        %v5340 = vpop.f32.mrf.mxu0
        %v5341 = vadd.f32 %v1238, %v5340
        %5342 = vmatmul.bf16.gmra.mxu0 %v1683
        %v5343 = vpop.f32.mrf.mxu0
        %v5344 = vadd.f32 %v1238, %v5343
        %v5345 = vpop.f32.mrf.mxu0
        %v5346 = vadd.f32 %v1238, %v5345
        %5347 = vmatmul.bf16.gmra.mxu0 %v1691
        %v5348 = vpop.f32.mrf.mxu0
        %v5349 = vadd.f32 %v1238, %v5348
        %v5350 = vpop.f32.mrf.mxu0
        %v5351 = vadd.f32 %v1238, %v5350
        %5352 = vmatmul.bf16.gmra.mxu0 %v1699
        %v5353 = vpop.f32.mrf.mxu0
        %v5354 = vadd.f32 %v1238, %v5353
        %v5355 = vpop.f32.mrf.mxu0
        %v5356 = vadd.f32 %v1238, %v5355
        %5357 = vmatmul.bf16.gmra.mxu0 %v1707
        %v5358 = vpop.f32.mrf.mxu0
        %v5359 = vadd.f32 %v1238, %v5358
        %v5360 = vpop.f32.mrf.mxu0
        %v5361 = vadd.f32 %v1238, %v5360
        %5362 = vmatmul.bf16.gmra.mxu0 %v1715
        %v5363 = vpop.f32.mrf.mxu0
        %v5364 = vadd.f32 %v1238, %v5363
        %v5365 = vpop.f32.mrf.mxu0
        %v5366 = vadd.f32 %v1238, %v5365
        %5367 = vmatmul.bf16.gmra.mxu0 %v1723
        %v5368 = vpop.f32.mrf.mxu0
        %v5369 = vadd.f32 %v1238, %v5368
        %v5370 = vpop.f32.mrf.mxu0
        %v5371 = vadd.f32 %v1238, %v5370
        %5372 = vmatmul.bf16.gmra.mxu0 %v1731
        %v5373 = vpop.f32.mrf.mxu0
        %v5374 = vadd.f32 %v1238, %v5373
        %v5375 = vpop.f32.mrf.mxu0
        %v5376 = vadd.f32 %v1238, %v5375
        %5377 = vmatmul.bf16.gmra.mxu0 %v1739
        %v5378 = vpop.f32.mrf.mxu0
        %v5379 = vadd.f32 %v1238, %v5378
        %v5380 = vpop.f32.mrf.mxu0
        %v5381 = vadd.f32 %v1238, %v5380
        %5382 = vmatmul.bf16.gmra.mxu0 %v1747
        %v5383 = vpop.f32.mrf.mxu0
        %v5384 = vadd.f32 %v1238, %v5383
        %v5385 = vpop.f32.mrf.mxu0
        %v5386 = vadd.f32 %v1238, %v5385
        %5387 = vdwg.mxu0
        %5388 = vmatpush.bf16.msra.mxu0 %v2714
        %5389 = vmatpush.bf16.msra.mxu0 %v2710
        %5390 = vmatpush.bf16.msra.mxu0 %v2706
        %5391 = vmatpush.bf16.msra.mxu0 %v2702
        %5392 = vmatpush.bf16.msra.mxu0 %v2698
        %5393 = vmatpush.bf16.msra.mxu0 %v2694
        %5394 = vmatpush.bf16.msra.mxu0 %v2690
        %5395 = vmatpush.bf16.msra.mxu0 %v2686
        %5396 = vmatmul.bf16.gmra.mxu0 %v1628
        %v5397 = vpop.f32.mrf.mxu0
        %v5398 = vadd.f32 %v5309, %v5397
        %v5399 = vpop.f32.mrf.mxu0
        %v5400 = vadd.f32 %v5311, %v5399
        %5401 = vmatmul.bf16.gmra.mxu0 %v1636
        %v5402 = vpop.f32.mrf.mxu0
        %v5403 = vadd.f32 %v5314, %v5402
        %v5404 = vpop.f32.mrf.mxu0
        %v5405 = vadd.f32 %v5316, %v5404
        %5406 = vmatmul.bf16.gmra.mxu0 %v1644
        %v5407 = vpop.f32.mrf.mxu0
        %v5408 = vadd.f32 %v5319, %v5407
        %v5409 = vpop.f32.mrf.mxu0
        %v5410 = vadd.f32 %v5321, %v5409
        %5411 = vmatmul.bf16.gmra.mxu0 %v1652
        %v5412 = vpop.f32.mrf.mxu0
        %v5413 = vadd.f32 %v5324, %v5412
        %v5414 = vpop.f32.mrf.mxu0
        %v5415 = vadd.f32 %v5326, %v5414
        %5416 = vmatmul.bf16.gmra.mxu0 %v1660
        %v5417 = vpop.f32.mrf.mxu0
        %v5418 = vadd.f32 %v5329, %v5417
        %v5419 = vpop.f32.mrf.mxu0
        %v5420 = vadd.f32 %v5331, %v5419
        %5421 = vmatmul.bf16.gmra.mxu0 %v1668
        %v5422 = vpop.f32.mrf.mxu0
        %v5423 = vadd.f32 %v5334, %v5422
        %v5424 = vpop.f32.mrf.mxu0
        %v5425 = vadd.f32 %v5336, %v5424
        %5426 = vmatmul.bf16.gmra.mxu0 %v1676
        %v5427 = vpop.f32.mrf.mxu0
        %v5428 = vadd.f32 %v5339, %v5427
        %v5429 = vpop.f32.mrf.mxu0
        %v5430 = vadd.f32 %v5341, %v5429
        %5431 = vmatmul.bf16.gmra.mxu0 %v1684
        %v5432 = vpop.f32.mrf.mxu0
        %v5433 = vadd.f32 %v5344, %v5432
        %v5434 = vpop.f32.mrf.mxu0
        %v5435 = vadd.f32 %v5346, %v5434
        %5436 = vmatmul.bf16.gmra.mxu0 %v1692
        %v5437 = vpop.f32.mrf.mxu0
        %v5438 = vadd.f32 %v5349, %v5437
        %v5439 = vpop.f32.mrf.mxu0
        %v5440 = vadd.f32 %v5351, %v5439
        %5441 = vmatmul.bf16.gmra.mxu0 %v1700
        %v5442 = vpop.f32.mrf.mxu0
        %v5443 = vadd.f32 %v5354, %v5442
        %v5444 = vpop.f32.mrf.mxu0
        %v5445 = vadd.f32 %v5356, %v5444
        %5446 = vmatmul.bf16.gmra.mxu0 %v1708
        %v5447 = vpop.f32.mrf.mxu0
        %v5448 = vadd.f32 %v5359, %v5447
        %v5449 = vpop.f32.mrf.mxu0
        %v5450 = vadd.f32 %v5361, %v5449
        %5451 = vmatmul.bf16.gmra.mxu0 %v1716
        %v5452 = vpop.f32.mrf.mxu0
        %v5453 = vadd.f32 %v5364, %v5452
        %v5454 = vpop.f32.mrf.mxu0
        %v5455 = vadd.f32 %v5366, %v5454
        %5456 = vmatmul.bf16.gmra.mxu0 %v1724
        %v5457 = vpop.f32.mrf.mxu0
        %v5458 = vadd.f32 %v5369, %v5457
        %v5459 = vpop.f32.mrf.mxu0
        %v5460 = vadd.f32 %v5371, %v5459
        %5461 = vmatmul.bf16.gmra.mxu0 %v1732
        %v5462 = vpop.f32.mrf.mxu0
        %v5463 = vadd.f32 %v5374, %v5462
        %v5464 = vpop.f32.mrf.mxu0
        %v5465 = vadd.f32 %v5376, %v5464
        %5466 = vmatmul.bf16.gmra.mxu0 %v1740
        %v5467 = vpop.f32.mrf.mxu0
        %v5468 = vadd.f32 %v5379, %v5467
        %v5469 = vpop.f32.mrf.mxu0
        %v5470 = vadd.f32 %v5381, %v5469
        %5471 = vmatmul.bf16.gmra.mxu0 %v1748
        %v5472 = vpop.f32.mrf.mxu0
        %v5473 = vadd.f32 %v5384, %v5472
        %v5474 = vpop.f32.mrf.mxu0
        %v5475 = vadd.f32 %v5386, %v5474
        %5476 = vdwg.mxu0
        %5477 = vmatpush.bf16.msra.mxu0 %v2746
        %5478 = vmatpush.bf16.msra.mxu0 %v2742
        %5479 = vmatpush.bf16.msra.mxu0 %v2738
        %5480 = vmatpush.bf16.msra.mxu0 %v2734
        %5481 = vmatpush.bf16.msra.mxu0 %v2730
        %5482 = vmatpush.bf16.msra.mxu0 %v2726
        %5483 = vmatpush.bf16.msra.mxu0 %v2722
        %5484 = vmatpush.bf16.msra.mxu0 %v2718
        %5485 = vmatmul.bf16.gmra.mxu0 %v1629
        %v5486 = vpop.f32.mrf.mxu0
        %v5487 = vadd.f32 %v5398, %v5486
        %v5488 = vpop.f32.mrf.mxu0
        %v5489 = vadd.f32 %v5400, %v5488
        %5490 = vmatmul.bf16.gmra.mxu0 %v1637
        %v5491 = vpop.f32.mrf.mxu0
        %v5492 = vadd.f32 %v5403, %v5491
        %v5493 = vpop.f32.mrf.mxu0
        %v5494 = vadd.f32 %v5405, %v5493
        %5495 = vmatmul.bf16.gmra.mxu0 %v1645
        %v5496 = vpop.f32.mrf.mxu0
        %v5497 = vadd.f32 %v5408, %v5496
        %v5498 = vpop.f32.mrf.mxu0
        %v5499 = vadd.f32 %v5410, %v5498
        %5500 = vmatmul.bf16.gmra.mxu0 %v1653
        %v5501 = vpop.f32.mrf.mxu0
        %v5502 = vadd.f32 %v5413, %v5501
        %v5503 = vpop.f32.mrf.mxu0
        %v5504 = vadd.f32 %v5415, %v5503
        %5505 = vmatmul.bf16.gmra.mxu0 %v1661
        %v5506 = vpop.f32.mrf.mxu0
        %v5507 = vadd.f32 %v5418, %v5506
        %v5508 = vpop.f32.mrf.mxu0
        %v5509 = vadd.f32 %v5420, %v5508
        %5510 = vmatmul.bf16.gmra.mxu0 %v1669
        %v5511 = vpop.f32.mrf.mxu0
        %v5512 = vadd.f32 %v5423, %v5511
        %v5513 = vpop.f32.mrf.mxu0
        %v5514 = vadd.f32 %v5425, %v5513
        %5515 = vmatmul.bf16.gmra.mxu0 %v1677
        %v5516 = vpop.f32.mrf.mxu0
        %v5517 = vadd.f32 %v5428, %v5516
        %v5518 = vpop.f32.mrf.mxu0
        %v5519 = vadd.f32 %v5430, %v5518
        %5520 = vmatmul.bf16.gmra.mxu0 %v1685
        %v5521 = vpop.f32.mrf.mxu0
        %v5522 = vadd.f32 %v5433, %v5521
        %v5523 = vpop.f32.mrf.mxu0
        %v5524 = vadd.f32 %v5435, %v5523
        %5525 = vmatmul.bf16.gmra.mxu0 %v1693
        %v5526 = vpop.f32.mrf.mxu0
        %v5527 = vadd.f32 %v5438, %v5526
        %v5528 = vpop.f32.mrf.mxu0
        %v5529 = vadd.f32 %v5440, %v5528
        %5530 = vmatmul.bf16.gmra.mxu0 %v1701
        %v5531 = vpop.f32.mrf.mxu0
        %v5532 = vadd.f32 %v5443, %v5531
        %v5533 = vpop.f32.mrf.mxu0
        %v5534 = vadd.f32 %v5445, %v5533
        %5535 = vmatmul.bf16.gmra.mxu0 %v1709
        %v5536 = vpop.f32.mrf.mxu0
        %v5537 = vadd.f32 %v5448, %v5536
        %v5538 = vpop.f32.mrf.mxu0
        %v5539 = vadd.f32 %v5450, %v5538
        %5540 = vmatmul.bf16.gmra.mxu0 %v1717
        %v5541 = vpop.f32.mrf.mxu0
        %v5542 = vadd.f32 %v5453, %v5541
        %v5543 = vpop.f32.mrf.mxu0
        %v5544 = vadd.f32 %v5455, %v5543
        %5545 = vmatmul.bf16.gmra.mxu0 %v1725
        %v5546 = vpop.f32.mrf.mxu0
        %v5547 = vadd.f32 %v5458, %v5546
        %v5548 = vpop.f32.mrf.mxu0
        %v5549 = vadd.f32 %v5460, %v5548
        %5550 = vmatmul.bf16.gmra.mxu0 %v1733
        %v5551 = vpop.f32.mrf.mxu0
        %v5552 = vadd.f32 %v5463, %v5551
        %v5553 = vpop.f32.mrf.mxu0
        %v5554 = vadd.f32 %v5465, %v5553
        %5555 = vmatmul.bf16.gmra.mxu0 %v1741
        %v5556 = vpop.f32.mrf.mxu0
        %v5557 = vadd.f32 %v5468, %v5556
        %v5558 = vpop.f32.mrf.mxu0
        %v5559 = vadd.f32 %v5470, %v5558
        %5560 = vmatmul.bf16.gmra.mxu0 %v1749
        %v5561 = vpop.f32.mrf.mxu0
        %v5562 = vadd.f32 %v5473, %v5561
        %v5563 = vpop.f32.mrf.mxu0
        %v5564 = vadd.f32 %v5475, %v5563
        %5565 = vdwg.mxu0
        %5566 = vmatpush.bf16.msra.mxu0 %v2778
        %5567 = vmatpush.bf16.msra.mxu0 %v2774
        %5568 = vmatpush.bf16.msra.mxu0 %v2770
        %5569 = vmatpush.bf16.msra.mxu0 %v2766
        %5570 = vmatpush.bf16.msra.mxu0 %v2762
        %5571 = vmatpush.bf16.msra.mxu0 %v2758
        %5572 = vmatpush.bf16.msra.mxu0 %v2754
        %5573 = vmatpush.bf16.msra.mxu0 %v2750
        %5574 = vmatmul.bf16.gmra.mxu0 %v1630
        %v5575 = vpop.f32.mrf.mxu0
        %v5576 = vadd.f32 %v5487, %v5575
        %v5577 = vpop.f32.mrf.mxu0
        %v5578 = vadd.f32 %v5489, %v5577
        %5579 = vmatmul.bf16.gmra.mxu0 %v1638
        %v5580 = vpop.f32.mrf.mxu0
        %v5581 = vadd.f32 %v5492, %v5580
        %v5582 = vpop.f32.mrf.mxu0
        %v5583 = vadd.f32 %v5494, %v5582
        %5584 = vmatmul.bf16.gmra.mxu0 %v1646
        %v5585 = vpop.f32.mrf.mxu0
        %v5586 = vadd.f32 %v5497, %v5585
        %v5587 = vpop.f32.mrf.mxu0
        %v5588 = vadd.f32 %v5499, %v5587
        %5589 = vmatmul.bf16.gmra.mxu0 %v1654
        %v5590 = vpop.f32.mrf.mxu0
        %v5591 = vadd.f32 %v5502, %v5590
        %v5592 = vpop.f32.mrf.mxu0
        %v5593 = vadd.f32 %v5504, %v5592
        %5594 = vmatmul.bf16.gmra.mxu0 %v1662
        %v5595 = vpop.f32.mrf.mxu0
        %v5596 = vadd.f32 %v5507, %v5595
        %v5597 = vpop.f32.mrf.mxu0
        %v5598 = vadd.f32 %v5509, %v5597
        %5599 = vmatmul.bf16.gmra.mxu0 %v1670
        %v5600 = vpop.f32.mrf.mxu0
        %v5601 = vadd.f32 %v5512, %v5600
        %v5602 = vpop.f32.mrf.mxu0
        %v5603 = vadd.f32 %v5514, %v5602
        %5604 = vmatmul.bf16.gmra.mxu0 %v1678
        %v5605 = vpop.f32.mrf.mxu0
        %v5606 = vadd.f32 %v5517, %v5605
        %v5607 = vpop.f32.mrf.mxu0
        %v5608 = vadd.f32 %v5519, %v5607
        %5609 = vmatmul.bf16.gmra.mxu0 %v1686
        %v5610 = vpop.f32.mrf.mxu0
        %v5611 = vadd.f32 %v5522, %v5610
        %v5612 = vpop.f32.mrf.mxu0
        %v5613 = vadd.f32 %v5524, %v5612
        %5614 = vmatmul.bf16.gmra.mxu0 %v1694
        %v5615 = vpop.f32.mrf.mxu0
        %v5616 = vadd.f32 %v5527, %v5615
        %v5617 = vpop.f32.mrf.mxu0
        %v5618 = vadd.f32 %v5529, %v5617
        %5619 = vmatmul.bf16.gmra.mxu0 %v1702
        %v5620 = vpop.f32.mrf.mxu0
        %v5621 = vadd.f32 %v5532, %v5620
        %v5622 = vpop.f32.mrf.mxu0
        %v5623 = vadd.f32 %v5534, %v5622
        %5624 = vmatmul.bf16.gmra.mxu0 %v1710
        %v5625 = vpop.f32.mrf.mxu0
        %v5626 = vadd.f32 %v5537, %v5625
        %v5627 = vpop.f32.mrf.mxu0
        %v5628 = vadd.f32 %v5539, %v5627
        %5629 = vmatmul.bf16.gmra.mxu0 %v1718
        %v5630 = vpop.f32.mrf.mxu0
        %v5631 = vadd.f32 %v5542, %v5630
        %v5632 = vpop.f32.mrf.mxu0
        %v5633 = vadd.f32 %v5544, %v5632
        %5634 = vmatmul.bf16.gmra.mxu0 %v1726
        %v5635 = vpop.f32.mrf.mxu0
        %v5636 = vadd.f32 %v5547, %v5635
        %v5637 = vpop.f32.mrf.mxu0
        %v5638 = vadd.f32 %v5549, %v5637
        %5639 = vmatmul.bf16.gmra.mxu0 %v1734
        %v5640 = vpop.f32.mrf.mxu0
        %v5641 = vadd.f32 %v5552, %v5640
        %v5642 = vpop.f32.mrf.mxu0
        %v5643 = vadd.f32 %v5554, %v5642
        %5644 = vmatmul.bf16.gmra.mxu0 %v1742
        %v5645 = vpop.f32.mrf.mxu0
        %v5646 = vadd.f32 %v5557, %v5645
        %v5647 = vpop.f32.mrf.mxu0
        %v5648 = vadd.f32 %v5559, %v5647
        %5649 = vmatmul.bf16.gmra.mxu0 %v1750
        %v5650 = vpop.f32.mrf.mxu0
        %v5651 = vadd.f32 %v5562, %v5650
        %v5652 = vpop.f32.mrf.mxu0
        %v5653 = vadd.f32 %v5564, %v5652
        %5654 = vdwg.mxu0
        %5655 = vmatpush.bf16.msra.mxu0 %v2810
        %5656 = vmatpush.bf16.msra.mxu0 %v2806
        %5657 = vmatpush.bf16.msra.mxu0 %v2802
        %5658 = vmatpush.bf16.msra.mxu0 %v2798
        %5659 = vmatpush.bf16.msra.mxu0 %v2794
        %5660 = vmatpush.bf16.msra.mxu0 %v2790
        %5661 = vmatpush.bf16.msra.mxu0 %v2786
        %5662 = vmatpush.bf16.msra.mxu0 %v2782
        %5663 = vmatmul.bf16.gmra.mxu0 %v1631
        %v5664 = vpop.f32.mrf.mxu0
        %v5665 = vadd.f32 %v5576, %v5664
        %v5666 = vpop.f32.mrf.mxu0
        %v5667 = vadd.f32 %v5578, %v5666
        %5668 = vmatmul.bf16.gmra.mxu0 %v1639
        %v5669 = vpop.f32.mrf.mxu0
        %v5670 = vadd.f32 %v5581, %v5669
        %v5671 = vpop.f32.mrf.mxu0
        %v5672 = vadd.f32 %v5583, %v5671
        %5673 = vmatmul.bf16.gmra.mxu0 %v1647
        %v5674 = vpop.f32.mrf.mxu0
        %v5675 = vadd.f32 %v5586, %v5674
        %v5676 = vpop.f32.mrf.mxu0
        %v5677 = vadd.f32 %v5588, %v5676
        %5678 = vmatmul.bf16.gmra.mxu0 %v1655
        %v5679 = vpop.f32.mrf.mxu0
        %v5680 = vadd.f32 %v5591, %v5679
        %v5681 = vpop.f32.mrf.mxu0
        %v5682 = vadd.f32 %v5593, %v5681
        %5683 = vmatmul.bf16.gmra.mxu0 %v1663
        %v5684 = vpop.f32.mrf.mxu0
        %v5685 = vadd.f32 %v5596, %v5684
        %v5686 = vpop.f32.mrf.mxu0
        %v5687 = vadd.f32 %v5598, %v5686
        %5688 = vmatmul.bf16.gmra.mxu0 %v1671
        %v5689 = vpop.f32.mrf.mxu0
        %v5690 = vadd.f32 %v5601, %v5689
        %v5691 = vpop.f32.mrf.mxu0
        %v5692 = vadd.f32 %v5603, %v5691
        %5693 = vmatmul.bf16.gmra.mxu0 %v1679
        %v5694 = vpop.f32.mrf.mxu0
        %v5695 = vadd.f32 %v5606, %v5694
        %v5696 = vpop.f32.mrf.mxu0
        %v5697 = vadd.f32 %v5608, %v5696
        %5698 = vmatmul.bf16.gmra.mxu0 %v1687
        %v5699 = vpop.f32.mrf.mxu0
        %v5700 = vadd.f32 %v5611, %v5699
        %v5701 = vpop.f32.mrf.mxu0
        %v5702 = vadd.f32 %v5613, %v5701
        %5703 = vmatmul.bf16.gmra.mxu0 %v1695
        %v5704 = vpop.f32.mrf.mxu0
        %v5705 = vadd.f32 %v5616, %v5704
        %v5706 = vpop.f32.mrf.mxu0
        %v5707 = vadd.f32 %v5618, %v5706
        %5708 = vmatmul.bf16.gmra.mxu0 %v1703
        %v5709 = vpop.f32.mrf.mxu0
        %v5710 = vadd.f32 %v5621, %v5709
        %v5711 = vpop.f32.mrf.mxu0
        %v5712 = vadd.f32 %v5623, %v5711
        %5713 = vmatmul.bf16.gmra.mxu0 %v1711
        %v5714 = vpop.f32.mrf.mxu0
        %v5715 = vadd.f32 %v5626, %v5714
        %v5716 = vpop.f32.mrf.mxu0
        %v5717 = vadd.f32 %v5628, %v5716
        %5718 = vmatmul.bf16.gmra.mxu0 %v1719
        %v5719 = vpop.f32.mrf.mxu0
        %v5720 = vadd.f32 %v5631, %v5719
        %v5721 = vpop.f32.mrf.mxu0
        %v5722 = vadd.f32 %v5633, %v5721
        %5723 = vmatmul.bf16.gmra.mxu0 %v1727
        %v5724 = vpop.f32.mrf.mxu0
        %v5725 = vadd.f32 %v5636, %v5724
        %v5726 = vpop.f32.mrf.mxu0
        %v5727 = vadd.f32 %v5638, %v5726
        %5728 = vmatmul.bf16.gmra.mxu0 %v1735
        %v5729 = vpop.f32.mrf.mxu0
        %v5730 = vadd.f32 %v5641, %v5729
        %v5731 = vpop.f32.mrf.mxu0
        %v5732 = vadd.f32 %v5643, %v5731
        %5733 = vmatmul.bf16.gmra.mxu0 %v1743
        %v5734 = vpop.f32.mrf.mxu0
        %v5735 = vadd.f32 %v5646, %v5734
        %v5736 = vpop.f32.mrf.mxu0
        %v5737 = vadd.f32 %v5648, %v5736
        %5738 = vmatmul.bf16.gmra.mxu0 %v1751
        %v5739 = vpop.f32.mrf.mxu0
        %v5740 = vadd.f32 %v5651, %v5739
        %v5741 = vpop.f32.mrf.mxu0
        %v5742 = vadd.f32 %v5653, %v5741
        %5743 = vdwg.mxu0
        %5744 = vmatpush.bf16.msra.mxu0 %v2842
        %5745 = vmatpush.bf16.msra.mxu0 %v2838
        %5746 = vmatpush.bf16.msra.mxu0 %v2834
        %5747 = vmatpush.bf16.msra.mxu0 %v2830
        %5748 = vmatpush.bf16.msra.mxu0 %v2826
        %5749 = vmatpush.bf16.msra.mxu0 %v2822
        %5750 = vmatpush.bf16.msra.mxu0 %v2818
        %5751 = vmatpush.bf16.msra.mxu0 %v2814
        %5752 = vmatmul.bf16.gmra.mxu0 %v1632
        %v5753 = vpop.f32.mrf.mxu0
        %v5754 = vadd.f32 %v5665, %v5753
        %v5755 = vpop.f32.mrf.mxu0
        %v5756 = vadd.f32 %v5667, %v5755
        %5757 = vmatmul.bf16.gmra.mxu0 %v1640
        %v5758 = vpop.f32.mrf.mxu0
        %v5759 = vadd.f32 %v5670, %v5758
        %v5760 = vpop.f32.mrf.mxu0
        %v5761 = vadd.f32 %v5672, %v5760
        %5762 = vmatmul.bf16.gmra.mxu0 %v1648
        %v5763 = vpop.f32.mrf.mxu0
        %v5764 = vadd.f32 %v5675, %v5763
        %v5765 = vpop.f32.mrf.mxu0
        %v5766 = vadd.f32 %v5677, %v5765
        %5767 = vmatmul.bf16.gmra.mxu0 %v1656
        %v5768 = vpop.f32.mrf.mxu0
        %v5769 = vadd.f32 %v5680, %v5768
        %v5770 = vpop.f32.mrf.mxu0
        %v5771 = vadd.f32 %v5682, %v5770
        %5772 = vmatmul.bf16.gmra.mxu0 %v1664
        %v5773 = vpop.f32.mrf.mxu0
        %v5774 = vadd.f32 %v5685, %v5773
        %v5775 = vpop.f32.mrf.mxu0
        %v5776 = vadd.f32 %v5687, %v5775
        %5777 = vmatmul.bf16.gmra.mxu0 %v1672
        %v5778 = vpop.f32.mrf.mxu0
        %v5779 = vadd.f32 %v5690, %v5778
        %v5780 = vpop.f32.mrf.mxu0
        %v5781 = vadd.f32 %v5692, %v5780
        %5782 = vmatmul.bf16.gmra.mxu0 %v1680
        %v5783 = vpop.f32.mrf.mxu0
        %v5784 = vadd.f32 %v5695, %v5783
        %v5785 = vpop.f32.mrf.mxu0
        %v5786 = vadd.f32 %v5697, %v5785
        %5787 = vmatmul.bf16.gmra.mxu0 %v1688
        %v5788 = vpop.f32.mrf.mxu0
        %v5789 = vadd.f32 %v5700, %v5788
        %v5790 = vpop.f32.mrf.mxu0
        %v5791 = vadd.f32 %v5702, %v5790
        %5792 = vmatmul.bf16.gmra.mxu0 %v1696
        %v5793 = vpop.f32.mrf.mxu0
        %v5794 = vadd.f32 %v5705, %v5793
        %v5795 = vpop.f32.mrf.mxu0
        %v5796 = vadd.f32 %v5707, %v5795
        %5797 = vmatmul.bf16.gmra.mxu0 %v1704
        %v5798 = vpop.f32.mrf.mxu0
        %v5799 = vadd.f32 %v5710, %v5798
        %v5800 = vpop.f32.mrf.mxu0
        %v5801 = vadd.f32 %v5712, %v5800
        %5802 = vmatmul.bf16.gmra.mxu0 %v1712
        %v5803 = vpop.f32.mrf.mxu0
        %v5804 = vadd.f32 %v5715, %v5803
        %v5805 = vpop.f32.mrf.mxu0
        %v5806 = vadd.f32 %v5717, %v5805
        %5807 = vmatmul.bf16.gmra.mxu0 %v1720
        %v5808 = vpop.f32.mrf.mxu0
        %v5809 = vadd.f32 %v5720, %v5808
        %v5810 = vpop.f32.mrf.mxu0
        %v5811 = vadd.f32 %v5722, %v5810
        %5812 = vmatmul.bf16.gmra.mxu0 %v1728
        %v5813 = vpop.f32.mrf.mxu0
        %v5814 = vadd.f32 %v5725, %v5813
        %v5815 = vpop.f32.mrf.mxu0
        %v5816 = vadd.f32 %v5727, %v5815
        %5817 = vmatmul.bf16.gmra.mxu0 %v1736
        %v5818 = vpop.f32.mrf.mxu0
        %v5819 = vadd.f32 %v5730, %v5818
        %v5820 = vpop.f32.mrf.mxu0
        %v5821 = vadd.f32 %v5732, %v5820
        %5822 = vmatmul.bf16.gmra.mxu0 %v1744
        %v5823 = vpop.f32.mrf.mxu0
        %v5824 = vadd.f32 %v5735, %v5823
        %v5825 = vpop.f32.mrf.mxu0
        %v5826 = vadd.f32 %v5737, %v5825
        %5827 = vmatmul.bf16.gmra.mxu0 %v1752
        %v5828 = vpop.f32.mrf.mxu0
        %v5829 = vadd.f32 %v5740, %v5828
        %v5830 = vpop.f32.mrf.mxu0
        %v5831 = vadd.f32 %v5742, %v5830
        %5832 = vdwg.mxu0
        %5833 = vmatpush.bf16.msra.mxu0 %v2874
        %5834 = vmatpush.bf16.msra.mxu0 %v2870
        %5835 = vmatpush.bf16.msra.mxu0 %v2866
        %5836 = vmatpush.bf16.msra.mxu0 %v2862
        %5837 = vmatpush.bf16.msra.mxu0 %v2858
        %5838 = vmatpush.bf16.msra.mxu0 %v2854
        %5839 = vmatpush.bf16.msra.mxu0 %v2850
        %5840 = vmatpush.bf16.msra.mxu0 %v2846
        %5841 = vmatmul.bf16.gmra.mxu0 %v1633
        %v5842 = vpop.f32.mrf.mxu0
        %v5843 = vadd.f32 %v5754, %v5842
        %v5844 = vpop.f32.mrf.mxu0
        %v5845 = vadd.f32 %v5756, %v5844
        %5846 = vmatmul.bf16.gmra.mxu0 %v1641
        %v5847 = vpop.f32.mrf.mxu0
        %v5848 = vadd.f32 %v5759, %v5847
        %v5849 = vpop.f32.mrf.mxu0
        %v5850 = vadd.f32 %v5761, %v5849
        %5851 = vmatmul.bf16.gmra.mxu0 %v1649
        %v5852 = vpop.f32.mrf.mxu0
        %v5853 = vadd.f32 %v5764, %v5852
        %v5854 = vpop.f32.mrf.mxu0
        %v5855 = vadd.f32 %v5766, %v5854
        %5856 = vmatmul.bf16.gmra.mxu0 %v1657
        %v5857 = vpop.f32.mrf.mxu0
        %v5858 = vadd.f32 %v5769, %v5857
        %v5859 = vpop.f32.mrf.mxu0
        %v5860 = vadd.f32 %v5771, %v5859
        %5861 = vmatmul.bf16.gmra.mxu0 %v1665
        %v5862 = vpop.f32.mrf.mxu0
        %v5863 = vadd.f32 %v5774, %v5862
        %v5864 = vpop.f32.mrf.mxu0
        %v5865 = vadd.f32 %v5776, %v5864
        %5866 = vmatmul.bf16.gmra.mxu0 %v1673
        %v5867 = vpop.f32.mrf.mxu0
        %v5868 = vadd.f32 %v5779, %v5867
        %v5869 = vpop.f32.mrf.mxu0
        %v5870 = vadd.f32 %v5781, %v5869
        %5871 = vmatmul.bf16.gmra.mxu0 %v1681
        %v5872 = vpop.f32.mrf.mxu0
        %v5873 = vadd.f32 %v5784, %v5872
        %v5874 = vpop.f32.mrf.mxu0
        %v5875 = vadd.f32 %v5786, %v5874
        %5876 = vmatmul.bf16.gmra.mxu0 %v1689
        %v5877 = vpop.f32.mrf.mxu0
        %v5878 = vadd.f32 %v5789, %v5877
        %v5879 = vpop.f32.mrf.mxu0
        %v5880 = vadd.f32 %v5791, %v5879
        %5881 = vmatmul.bf16.gmra.mxu0 %v1697
        %v5882 = vpop.f32.mrf.mxu0
        %v5883 = vadd.f32 %v5794, %v5882
        %v5884 = vpop.f32.mrf.mxu0
        %v5885 = vadd.f32 %v5796, %v5884
        %5886 = vmatmul.bf16.gmra.mxu0 %v1705
        %v5887 = vpop.f32.mrf.mxu0
        %v5888 = vadd.f32 %v5799, %v5887
        %v5889 = vpop.f32.mrf.mxu0
        %v5890 = vadd.f32 %v5801, %v5889
        %5891 = vmatmul.bf16.gmra.mxu0 %v1713
        %v5892 = vpop.f32.mrf.mxu0
        %v5893 = vadd.f32 %v5804, %v5892
        %v5894 = vpop.f32.mrf.mxu0
        %v5895 = vadd.f32 %v5806, %v5894
        %5896 = vmatmul.bf16.gmra.mxu0 %v1721
        %v5897 = vpop.f32.mrf.mxu0
        %v5898 = vadd.f32 %v5809, %v5897
        %v5899 = vpop.f32.mrf.mxu0
        %v5900 = vadd.f32 %v5811, %v5899
        %5901 = vmatmul.bf16.gmra.mxu0 %v1729
        %v5902 = vpop.f32.mrf.mxu0
        %v5903 = vadd.f32 %v5814, %v5902
        %v5904 = vpop.f32.mrf.mxu0
        %v5905 = vadd.f32 %v5816, %v5904
        %5906 = vmatmul.bf16.gmra.mxu0 %v1737
        %v5907 = vpop.f32.mrf.mxu0
        %v5908 = vadd.f32 %v5819, %v5907
        %v5909 = vpop.f32.mrf.mxu0
        %v5910 = vadd.f32 %v5821, %v5909
        %5911 = vmatmul.bf16.gmra.mxu0 %v1745
        %v5912 = vpop.f32.mrf.mxu0
        %v5913 = vadd.f32 %v5824, %v5912
        %v5914 = vpop.f32.mrf.mxu0
        %v5915 = vadd.f32 %v5826, %v5914
        %5916 = vmatmul.bf16.gmra.mxu0 %v1753
        %v5917 = vpop.f32.mrf.mxu0
        %v5918 = vadd.f32 %v5829, %v5917
        %v5919 = vpop.f32.mrf.mxu0
        %v5920 = vadd.f32 %v5831, %v5919
        %5921 = vdwg.mxu0
        %5922 = vmatpush.bf16.msra.mxu0 %v2906
        %5923 = vmatpush.bf16.msra.mxu0 %v2902
        %5924 = vmatpush.bf16.msra.mxu0 %v2898
        %5925 = vmatpush.bf16.msra.mxu0 %v2894
        %5926 = vmatpush.bf16.msra.mxu0 %v2890
        %5927 = vmatpush.bf16.msra.mxu0 %v2886
        %5928 = vmatpush.bf16.msra.mxu0 %v2882
        %5929 = vmatpush.bf16.msra.mxu0 %v2878
        %5930 = vmatmul.bf16.gmra.mxu0 %v1634
        %v5931 = vpop.f32.mrf.mxu0
        %v5932 = vadd.f32 %v5843, %v5931
        %v5933 = vpop.f32.mrf.mxu0
        %v5934 = vadd.f32 %v5845, %v5933
        %5935 = vmatmul.bf16.gmra.mxu0 %v1642
        %v5936 = vpop.f32.mrf.mxu0
        %v5937 = vadd.f32 %v5848, %v5936
        %v5938 = vpop.f32.mrf.mxu0
        %v5939 = vadd.f32 %v5850, %v5938
        %5940 = vmatmul.bf16.gmra.mxu0 %v1650
        %v5941 = vpop.f32.mrf.mxu0
        %v5942 = vadd.f32 %v5853, %v5941
        %v5943 = vpop.f32.mrf.mxu0
        %v5944 = vadd.f32 %v5855, %v5943
        %5945 = vmatmul.bf16.gmra.mxu0 %v1658
        %v5946 = vpop.f32.mrf.mxu0
        %v5947 = vadd.f32 %v5858, %v5946
        %v5948 = vpop.f32.mrf.mxu0
        %v5949 = vadd.f32 %v5860, %v5948
        %5950 = vmatmul.bf16.gmra.mxu0 %v1666
        %v5951 = vpop.f32.mrf.mxu0
        %v5952 = vadd.f32 %v5863, %v5951
        %v5953 = vpop.f32.mrf.mxu0
        %v5954 = vadd.f32 %v5865, %v5953
        %5955 = vmatmul.bf16.gmra.mxu0 %v1674
        %v5956 = vpop.f32.mrf.mxu0
        %v5957 = vadd.f32 %v5868, %v5956
        %v5958 = vpop.f32.mrf.mxu0
        %v5959 = vadd.f32 %v5870, %v5958
        %5960 = vmatmul.bf16.gmra.mxu0 %v1682
        %v5961 = vpop.f32.mrf.mxu0
        %v5962 = vadd.f32 %v5873, %v5961
        %v5963 = vpop.f32.mrf.mxu0
        %v5964 = vadd.f32 %v5875, %v5963
        %5965 = vmatmul.bf16.gmra.mxu0 %v1690
        %v5966 = vpop.f32.mrf.mxu0
        %v5967 = vadd.f32 %v5878, %v5966
        %v5968 = vpop.f32.mrf.mxu0
        %v5969 = vadd.f32 %v5880, %v5968
        %5970 = vmatmul.bf16.gmra.mxu0 %v1698
        %v5971 = vpop.f32.mrf.mxu0
        %v5972 = vadd.f32 %v5883, %v5971
        %v5973 = vpop.f32.mrf.mxu0
        %v5974 = vadd.f32 %v5885, %v5973
        %5975 = vmatmul.bf16.gmra.mxu0 %v1706
        %v5976 = vpop.f32.mrf.mxu0
        %v5977 = vadd.f32 %v5888, %v5976
        %v5978 = vpop.f32.mrf.mxu0
        %v5979 = vadd.f32 %v5890, %v5978
        %5980 = vmatmul.bf16.gmra.mxu0 %v1714
        %v5981 = vpop.f32.mrf.mxu0
        %v5982 = vadd.f32 %v5893, %v5981
        %v5983 = vpop.f32.mrf.mxu0
        %v5984 = vadd.f32 %v5895, %v5983
        %5985 = vmatmul.bf16.gmra.mxu0 %v1722
        %v5986 = vpop.f32.mrf.mxu0
        %v5987 = vadd.f32 %v5898, %v5986
        %v5988 = vpop.f32.mrf.mxu0
        %v5989 = vadd.f32 %v5900, %v5988
        %5990 = vmatmul.bf16.gmra.mxu0 %v1730
        %v5991 = vpop.f32.mrf.mxu0
        %v5992 = vadd.f32 %v5903, %v5991
        %v5993 = vpop.f32.mrf.mxu0
        %v5994 = vadd.f32 %v5905, %v5993
        %5995 = vmatmul.bf16.gmra.mxu0 %v1738
        %v5996 = vpop.f32.mrf.mxu0
        %v5997 = vadd.f32 %v5908, %v5996
        %v5998 = vpop.f32.mrf.mxu0
        %v5999 = vadd.f32 %v5910, %v5998
        %6000 = vmatmul.bf16.gmra.mxu0 %v1746
        %v6001 = vpop.f32.mrf.mxu0
        %v6002 = vadd.f32 %v5913, %v6001
        %v6003 = vpop.f32.mrf.mxu0
        %v6004 = vadd.f32 %v5915, %v6003
        %6005 = vmatmul.bf16.gmra.mxu0 %v1754
        %v6006 = vpop.f32.mrf.mxu0
        %v6007 = vadd.f32 %v5918, %v6006
        %v6008 = vpop.f32.mrf.mxu0
        %v6009 = vadd.f32 %v5920, %v6008
        %6010 = vdwg.mxu0
        %v6011 = vmul.f32 %v3796, 0.2
        %v6012 = vmul.f32 %v4508, 0.2
        %v6013 = vmul.f32 %v5220, 0.2
        %v6014 = vmul.f32 %v5932, 0.2
        %v6015 = vmul.f32 %v3798, 0.2
        %v6016 = vmul.f32 %v4510, 0.2
        %v6017 = vmul.f32 %v5222, 0.2
        %v6018 = vmul.f32 %v5934, 0.2
        %v6019 = vmul.f32 %v3801, 0.2
        %v6020 = vmul.f32 %v4513, 0.2
        %v6021 = vmul.f32 %v5225, 0.2
        %v6022 = vmul.f32 %v5937, 0.2
        %v6023 = vmul.f32 %v3803, 0.2
        %v6024 = vmul.f32 %v4515, 0.2
        %v6025 = vmul.f32 %v5227, 0.2
        %v6026 = vmul.f32 %v5939, 0.2
        %v6027 = vmul.f32 %v3806, 0.2
        %v6028 = vmul.f32 %v4518, 0.2
        %v6029 = vmul.f32 %v5230, 0.2
        %v6030 = vmul.f32 %v5942, 0.2
        %v6031 = vmul.f32 %v3808, 0.2
        %v6032 = vmul.f32 %v4520, 0.2
        %v6033 = vmul.f32 %v5232, 0.2
        %v6034 = vmul.f32 %v5944, 0.2
        %v6035 = vmul.f32 %v3811, 0.2
        %v6036 = vmul.f32 %v4523, 0.2
        %v6037 = vmul.f32 %v5235, 0.2
        %v6038 = vmul.f32 %v5947, 0.2
        %v6039 = vmul.f32 %v3813, 0.2
        %v6040 = vmul.f32 %v4525, 0.2
        %v6041 = vmul.f32 %v5237, 0.2
        %v6042 = vmul.f32 %v5949, 0.2
        %v6043 = vmul.f32 %v3816, 0.2
        %v6044 = vmul.f32 %v4528, 0.2
        %v6045 = vmul.f32 %v5240, 0.2
        %v6046 = vmul.f32 %v5952, 0.2
        %v6047 = vmul.f32 %v3818, 0.2
        %v6048 = vmul.f32 %v4530, 0.2
        %v6049 = vmul.f32 %v5242, 0.2
        %v6050 = vmul.f32 %v5954, 0.2
        %v6051 = vmul.f32 %v3821, 0.2
        %v6052 = vmul.f32 %v4533, 0.2
        %v6053 = vmul.f32 %v5245, 0.2
        %v6054 = vmul.f32 %v5957, 0.2
        %v6055 = vmul.f32 %v3823, 0.2
        %v6056 = vmul.f32 %v4535, 0.2
        %v6057 = vmul.f32 %v5247, 0.2
        %v6058 = vmul.f32 %v5959, 0.2
        %v6059 = vmul.f32 %v3826, 0.2
        %v6060 = vmul.f32 %v4538, 0.2
        %v6061 = vmul.f32 %v5250, 0.2
        %v6062 = vmul.f32 %v5962, 0.2
        %v6063 = vmul.f32 %v3828, 0.2
        %v6064 = vmul.f32 %v4540, 0.2
        %v6065 = vmul.f32 %v5252, 0.2
        %v6066 = vmul.f32 %v5964, 0.2
        %v6067 = vmul.f32 %v3831, 0.2
        %v6068 = vmul.f32 %v4543, 0.2
        %v6069 = vmul.f32 %v5255, 0.2
        %v6070 = vmul.f32 %v5967, 0.2
        %v6071 = vmul.f32 %v3833, 0.2
        %v6072 = vmul.f32 %v4545, 0.2
        %v6073 = vmul.f32 %v5257, 0.2
        %v6074 = vmul.f32 %v5969, 0.2
        %v6075 = vmul.f32 %v3836, 0.2
        %v6076 = vmul.f32 %v4548, 0.2
        %v6077 = vmul.f32 %v5260, 0.2
        %v6078 = vmul.f32 %v5972, 0.2
        %v6079 = vmul.f32 %v3838, 0.2
        %v6080 = vmul.f32 %v4550, 0.2
        %v6081 = vmul.f32 %v5262, 0.2
        %v6082 = vmul.f32 %v5974, 0.2
        %v6083 = vmul.f32 %v3841, 0.2
        %v6084 = vmul.f32 %v4553, 0.2
        %v6085 = vmul.f32 %v5265, 0.2
        %v6086 = vmul.f32 %v5977, 0.2
        %v6087 = vmul.f32 %v3843, 0.2
        %v6088 = vmul.f32 %v4555, 0.2
        %v6089 = vmul.f32 %v5267, 0.2
        %v6090 = vmul.f32 %v5979, 0.2
        %v6091 = vmul.f32 %v3846, 0.2
        %v6092 = vmul.f32 %v4558, 0.2
        %v6093 = vmul.f32 %v5270, 0.2
        %v6094 = vmul.f32 %v5982, 0.2
        %v6095 = vmul.f32 %v3848, 0.2
        %v6096 = vmul.f32 %v4560, 0.2
        %v6097 = vmul.f32 %v5272, 0.2
        %v6098 = vmul.f32 %v5984, 0.2
        %v6099 = vmul.f32 %v3851, 0.2
        %v6100 = vmul.f32 %v4563, 0.2
        %v6101 = vmul.f32 %v5275, 0.2
        %v6102 = vmul.f32 %v5987, 0.2
        %v6103 = vmul.f32 %v3853, 0.2
        %v6104 = vmul.f32 %v4565, 0.2
        %v6105 = vmul.f32 %v5277, 0.2
        %v6106 = vmul.f32 %v5989, 0.2
        %v6107 = vmul.f32 %v3856, 0.2
        %v6108 = vmul.f32 %v4568, 0.2
        %v6109 = vmul.f32 %v5280, 0.2
        %v6110 = vmul.f32 %v5992, 0.2
        %v6111 = vmul.f32 %v3858, 0.2
        %v6112 = vmul.f32 %v4570, 0.2
        %v6113 = vmul.f32 %v5282, 0.2
        %v6114 = vmul.f32 %v5994, 0.2
        %v6115 = vmul.f32 %v3861, 0.2
        %v6116 = vmul.f32 %v4573, 0.2
        %v6117 = vmul.f32 %v5285, 0.2
        %v6118 = vmul.f32 %v5997, 0.2
        %v6119 = vmul.f32 %v3863, 0.2
        %v6120 = vmul.f32 %v4575, 0.2
        %v6121 = vmul.f32 %v5287, 0.2
        %v6122 = vmul.f32 %v5999, 0.2
        %v6123 = vmul.f32 %v3866, 0.2
        %v6124 = vmul.f32 %v4578, 0.2
        %v6125 = vmul.f32 %v5290, 0.2
        %v6126 = vmul.f32 %v6002, 0.2
        %v6127 = vmul.f32 %v3868, 0.2
        %v6128 = vmul.f32 %v4580, 0.2
        %v6129 = vmul.f32 %v5292, 0.2
        %v6130 = vmul.f32 %v6004, 0.2
        %v6131 = vmul.f32 %v3871, 0.2
        %v6132 = vmul.f32 %v4583, 0.2
        %v6133 = vmul.f32 %v5295, 0.2
        %v6134 = vmul.f32 %v6007, 0.2
        %v6135 = vmul.f32 %v3873, 0.2
        %v6136 = vmul.f32 %v4585, 0.2
        %v6137 = vmul.f32 %v5297, 0.2
        %v6138 = vmul.f32 %v6009, 0.2
        %v6139 = vmax.f32 %v3796, %v6011
        %v6140 = vmax.f32 %v4508, %v6012
        %v6141 = vmax.f32 %v5220, %v6013
        %v6142 = vmax.f32 %v5932, %v6014
        %v6143 = vmax.f32 %v3798, %v6015
        %v6144 = vmax.f32 %v4510, %v6016
        %v6145 = vmax.f32 %v5222, %v6017
        %v6146 = vmax.f32 %v5934, %v6018
        %v6147 = vmax.f32 %v3801, %v6019
        %v6148 = vmax.f32 %v4513, %v6020
        %v6149 = vmax.f32 %v5225, %v6021
        %v6150 = vmax.f32 %v5937, %v6022
        %v6151 = vmax.f32 %v3803, %v6023
        %v6152 = vmax.f32 %v4515, %v6024
        %v6153 = vmax.f32 %v5227, %v6025
        %v6154 = vmax.f32 %v5939, %v6026
        %v6155 = vmax.f32 %v3806, %v6027
        %v6156 = vmax.f32 %v4518, %v6028
        %v6157 = vmax.f32 %v5230, %v6029
        %v6158 = vmax.f32 %v5942, %v6030
        %v6159 = vmax.f32 %v3808, %v6031
        %v6160 = vmax.f32 %v4520, %v6032
        %v6161 = vmax.f32 %v5232, %v6033
        %v6162 = vmax.f32 %v5944, %v6034
        %v6163 = vmax.f32 %v3811, %v6035
        %v6164 = vmax.f32 %v4523, %v6036
        %v6165 = vmax.f32 %v5235, %v6037
        %v6166 = vmax.f32 %v5947, %v6038
        %v6167 = vmax.f32 %v3813, %v6039
        %v6168 = vmax.f32 %v4525, %v6040
        %v6169 = vmax.f32 %v5237, %v6041
        %v6170 = vmax.f32 %v5949, %v6042
        %v6171 = vmax.f32 %v3816, %v6043
        %v6172 = vmax.f32 %v4528, %v6044
        %v6173 = vmax.f32 %v5240, %v6045
        %v6174 = vmax.f32 %v5952, %v6046
        %v6175 = vmax.f32 %v3818, %v6047
        %v6176 = vmax.f32 %v4530, %v6048
        %v6177 = vmax.f32 %v5242, %v6049
        %v6178 = vmax.f32 %v5954, %v6050
        %v6179 = vmax.f32 %v3821, %v6051
        %v6180 = vmax.f32 %v4533, %v6052
        %v6181 = vmax.f32 %v5245, %v6053
        %v6182 = vmax.f32 %v5957, %v6054
        %v6183 = vmax.f32 %v3823, %v6055
        %v6184 = vmax.f32 %v4535, %v6056
        %v6185 = vmax.f32 %v5247, %v6057
        %v6186 = vmax.f32 %v5959, %v6058
        %v6187 = vmax.f32 %v3826, %v6059
        %v6188 = vmax.f32 %v4538, %v6060
        %v6189 = vmax.f32 %v5250, %v6061
        %v6190 = vmax.f32 %v5962, %v6062
        %v6191 = vmax.f32 %v3828, %v6063
        %v6192 = vmax.f32 %v4540, %v6064
        %v6193 = vmax.f32 %v5252, %v6065
        %v6194 = vmax.f32 %v5964, %v6066
        %v6195 = vmax.f32 %v3831, %v6067
        %v6196 = vmax.f32 %v4543, %v6068
        %v6197 = vmax.f32 %v5255, %v6069
        %v6198 = vmax.f32 %v5967, %v6070
        %v6199 = vmax.f32 %v3833, %v6071
        %v6200 = vmax.f32 %v4545, %v6072
        %v6201 = vmax.f32 %v5257, %v6073
        %v6202 = vmax.f32 %v5969, %v6074
        %v6203 = vmax.f32 %v3836, %v6075
        %v6204 = vmax.f32 %v4548, %v6076
        %v6205 = vmax.f32 %v5260, %v6077
        %v6206 = vmax.f32 %v5972, %v6078
        %v6207 = vmax.f32 %v3838, %v6079
        %v6208 = vmax.f32 %v4550, %v6080
        %v6209 = vmax.f32 %v5262, %v6081
        %v6210 = vmax.f32 %v5974, %v6082
        %v6211 = vmax.f32 %v3841, %v6083
        %v6212 = vmax.f32 %v4553, %v6084
        %v6213 = vmax.f32 %v5265, %v6085
        %v6214 = vmax.f32 %v5977, %v6086
        %v6215 = vmax.f32 %v3843, %v6087
        %v6216 = vmax.f32 %v4555, %v6088
        %v6217 = vmax.f32 %v5267, %v6089
        %v6218 = vmax.f32 %v5979, %v6090
        %v6219 = vmax.f32 %v3846, %v6091
        %v6220 = vmax.f32 %v4558, %v6092
        %v6221 = vmax.f32 %v5270, %v6093
        %v6222 = vmax.f32 %v5982, %v6094
        %v6223 = vmax.f32 %v3848, %v6095
        %v6224 = vmax.f32 %v4560, %v6096
        %v6225 = vmax.f32 %v5272, %v6097
        %v6226 = vmax.f32 %v5984, %v6098
        %v6227 = vmax.f32 %v3851, %v6099
        %v6228 = vmax.f32 %v4563, %v6100
        %v6229 = vmax.f32 %v5275, %v6101
        %v6230 = vmax.f32 %v5987, %v6102
        %v6231 = vmax.f32 %v3853, %v6103
        %v6232 = vmax.f32 %v4565, %v6104
        %v6233 = vmax.f32 %v5277, %v6105
        %v6234 = vmax.f32 %v5989, %v6106
        %v6235 = vmax.f32 %v3856, %v6107
        %v6236 = vmax.f32 %v4568, %v6108
        %v6237 = vmax.f32 %v5280, %v6109
        %v6238 = vmax.f32 %v5992, %v6110
        %v6239 = vmax.f32 %v3858, %v6111
        %v6240 = vmax.f32 %v4570, %v6112
        %v6241 = vmax.f32 %v5282, %v6113
        %v6242 = vmax.f32 %v5994, %v6114
        %v6243 = vmax.f32 %v3861, %v6115
        %v6244 = vmax.f32 %v4573, %v6116
        %v6245 = vmax.f32 %v5285, %v6117
        %v6246 = vmax.f32 %v5997, %v6118
        %v6247 = vmax.f32 %v3863, %v6119
        %v6248 = vmax.f32 %v4575, %v6120
        %v6249 = vmax.f32 %v5287, %v6121
        %v6250 = vmax.f32 %v5999, %v6122
        %v6251 = vmax.f32 %v3866, %v6123
        %v6252 = vmax.f32 %v4578, %v6124
        %v6253 = vmax.f32 %v5290, %v6125
        %v6254 = vmax.f32 %v6002, %v6126
        %v6255 = vmax.f32 %v3868, %v6127
        %v6256 = vmax.f32 %v4580, %v6128
        %v6257 = vmax.f32 %v5292, %v6129
        %v6258 = vmax.f32 %v6004, %v6130
        %v6259 = vmax.f32 %v3871, %v6131
        %v6260 = vmax.f32 %v4583, %v6132
        %v6261 = vmax.f32 %v5295, %v6133
        %v6262 = vmax.f32 %v6007, %v6134
        %v6263 = vmax.f32 %v3873, %v6135
        %v6264 = vmax.f32 %v4585, %v6136
        %v6265 = vmax.f32 %v5297, %v6137
        %v6266 = vmax.f32 %v6009, %v6138
        %v6267 = vpack.c.bf16 %v6143, %v6139
        %v6268 = vpack.c.bf16 %v6144, %v6140
        %v6269 = vpack.c.bf16 %v6145, %v6141
        %v6270 = vpack.c.bf16 %v6146, %v6142
        %v6271 = vpack.c.bf16 %v6151, %v6147
        %v6272 = vpack.c.bf16 %v6152, %v6148
        %v6273 = vpack.c.bf16 %v6153, %v6149
        %v6274 = vpack.c.bf16 %v6154, %v6150
        %v6275 = vpack.c.bf16 %v6159, %v6155
        %v6276 = vpack.c.bf16 %v6160, %v6156
        %v6277 = vpack.c.bf16 %v6161, %v6157
        %v6278 = vpack.c.bf16 %v6162, %v6158
        %v6279 = vpack.c.bf16 %v6167, %v6163
        %v6280 = vpack.c.bf16 %v6168, %v6164
        %v6281 = vpack.c.bf16 %v6169, %v6165
        %v6282 = vpack.c.bf16 %v6170, %v6166
        %v6283 = vpack.c.bf16 %v6175, %v6171
        %v6284 = vpack.c.bf16 %v6176, %v6172
        %v6285 = vpack.c.bf16 %v6177, %v6173
        %v6286 = vpack.c.bf16 %v6178, %v6174
        %v6287 = vpack.c.bf16 %v6183, %v6179
        %v6288 = vpack.c.bf16 %v6184, %v6180
        %v6289 = vpack.c.bf16 %v6185, %v6181
        %v6290 = vpack.c.bf16 %v6186, %v6182
        %v6291 = vpack.c.bf16 %v6191, %v6187
        %v6292 = vpack.c.bf16 %v6192, %v6188
        %v6293 = vpack.c.bf16 %v6193, %v6189
        %v6294 = vpack.c.bf16 %v6194, %v6190
        %v6295 = vpack.c.bf16 %v6199, %v6195
        %v6296 = vpack.c.bf16 %v6200, %v6196
        %v6297 = vpack.c.bf16 %v6201, %v6197
        %v6298 = vpack.c.bf16 %v6202, %v6198
        %v6299 = vpack.c.bf16 %v6207, %v6203
        %v6300 = vpack.c.bf16 %v6208, %v6204
        %v6301 = vpack.c.bf16 %v6209, %v6205
        %v6302 = vpack.c.bf16 %v6210, %v6206
        %v6303 = vpack.c.bf16 %v6215, %v6211
        %v6304 = vpack.c.bf16 %v6216, %v6212
        %v6305 = vpack.c.bf16 %v6217, %v6213
        %v6306 = vpack.c.bf16 %v6218, %v6214
        %v6307 = vpack.c.bf16 %v6223, %v6219
        %v6308 = vpack.c.bf16 %v6224, %v6220
        %v6309 = vpack.c.bf16 %v6225, %v6221
        %v6310 = vpack.c.bf16 %v6226, %v6222
        %v6311 = vpack.c.bf16 %v6231, %v6227
        %v6312 = vpack.c.bf16 %v6232, %v6228
        %v6313 = vpack.c.bf16 %v6233, %v6229
        %v6314 = vpack.c.bf16 %v6234, %v6230
        %v6315 = vpack.c.bf16 %v6239, %v6235
        %v6316 = vpack.c.bf16 %v6240, %v6236
        %v6317 = vpack.c.bf16 %v6241, %v6237
        %v6318 = vpack.c.bf16 %v6242, %v6238
        %v6319 = vpack.c.bf16 %v6247, %v6243
        %v6320 = vpack.c.bf16 %v6248, %v6244
        %v6321 = vpack.c.bf16 %v6249, %v6245
        %v6322 = vpack.c.bf16 %v6250, %v6246
        %v6323 = vpack.c.bf16 %v6255, %v6251
        %v6324 = vpack.c.bf16 %v6256, %v6252
        %v6325 = vpack.c.bf16 %v6257, %v6253
        %v6326 = vpack.c.bf16 %v6258, %v6254
        %v6327 = vpack.c.bf16 %v6263, %v6259
        %v6328 = vpack.c.bf16 %v6264, %v6260
        %v6329 = vpack.c.bf16 %v6265, %v6261
        %v6330 = vpack.c.bf16 %v6266, %v6262
        %v6331 = vld [vmem:[#allocation10] sm:$0xff]
        %v6332 = vld [vmem:[#allocation10 + $0x8] sm:$0xff]
        %v6333 = vld [vmem:[#allocation10 + $0x10] sm:$0xff]
        %v6334 = vld [vmem:[#allocation10 + $0x18] sm:$0xff]
        %v6335 = vld [vmem:[#allocation10 + $0x20] sm:$0xff]
        %v6336 = vld [vmem:[#allocation10 + $0x28] sm:$0xff]
        %v6337 = vld [vmem:[#allocation10 + $0x30] sm:$0xff]
        %v6338 = vld [vmem:[#allocation10 + $0x38] sm:$0xff]
        %v6339 = vld [vmem:[#allocation10 + $0x40] sm:$0xff]
        %v6340 = vld [vmem:[#allocation10 + $0x48] sm:$0xff]
        %v6341 = vld [vmem:[#allocation10 + $0x50] sm:$0xff]
        %v6342 = vld [vmem:[#allocation10 + $0x58] sm:$0xff]
        %v6343 = vld [vmem:[#allocation10 + $0x60] sm:$0xff]
        %v6344 = vld [vmem:[#allocation10 + $0x68] sm:$0xff]
        %v6345 = vld [vmem:[#allocation10 + $0x70] sm:$0xff]
        %v6346 = vld [vmem:[#allocation10 + $0x78] sm:$0xff]
        %v6347 = vld [vmem:[#allocation10 + $0x80] sm:$0xff]
        %v6348 = vld [vmem:[#allocation10 + $0x88] sm:$0xff]
        %v6349 = vld [vmem:[#allocation10 + $0x90] sm:$0xff]
        %v6350 = vld [vmem:[#allocation10 + $0x98] sm:$0xff]
        %v6351 = vld [vmem:[#allocation10 + $0xa0] sm:$0xff]
        %v6352 = vld [vmem:[#allocation10 + $0xa8] sm:$0xff]
        %v6353 = vld [vmem:[#allocation10 + $0xb0] sm:$0xff]
        %v6354 = vld [vmem:[#allocation10 + $0xb8] sm:$0xff]
        %v6355 = vld [vmem:[#allocation10 + $0xc0] sm:$0xff]
        %v6356 = vld [vmem:[#allocation10 + $0xc8] sm:$0xff]
        %v6357 = vld [vmem:[#allocation10 + $0xd0] sm:$0xff]
        %v6358 = vld [vmem:[#allocation10 + $0xd8] sm:$0xff]
        %v6359 = vld [vmem:[#allocation10 + $0xe0] sm:$0xff]
        %v6360 = vld [vmem:[#allocation10 + $0xe8] sm:$0xff]
        %v6361 = vld [vmem:[#allocation10 + $0xf0] sm:$0xff]
        %v6362 = vld [vmem:[#allocation10 + $0xf8] sm:$0xff]
        %v6363 = vld [vmem:[#allocation10 + $0x100] sm:$0xff]
        %v6364 = vld [vmem:[#allocation10 + $0x108] sm:$0xff]
        %v6365 = vld [vmem:[#allocation10 + $0x110] sm:$0xff]
        %v6366 = vld [vmem:[#allocation10 + $0x118] sm:$0xff]
        %v6367 = vld [vmem:[#allocation10 + $0x120] sm:$0xff]
        %v6368 = vld [vmem:[#allocation10 + $0x128] sm:$0xff]
        %v6369 = vld [vmem:[#allocation10 + $0x130] sm:$0xff]
        %v6370 = vld [vmem:[#allocation10 + $0x138] sm:$0xff]
        %v6371 = vld [vmem:[#allocation10 + $0x140] sm:$0xff]
        %v6372 = vld [vmem:[#allocation10 + $0x148] sm:$0xff]
        %v6373 = vld [vmem:[#allocation10 + $0x150] sm:$0xff]
        %v6374 = vld [vmem:[#allocation10 + $0x158] sm:$0xff]
        %v6375 = vld [vmem:[#allocation10 + $0x160] sm:$0xff]
        %v6376 = vld [vmem:[#allocation10 + $0x168] sm:$0xff]
        %v6377 = vld [vmem:[#allocation10 + $0x170] sm:$0xff]
        %v6378 = vld [vmem:[#allocation10 + $0x178] sm:$0xff]
        %v6379 = vld [vmem:[#allocation10 + $0x180] sm:$0xff]
        %v6380 = vld [vmem:[#allocation10 + $0x188] sm:$0xff]
        %v6381 = vld [vmem:[#allocation10 + $0x190] sm:$0xff]
        %v6382 = vld [vmem:[#allocation10 + $0x198] sm:$0xff]
        %v6383 = vld [vmem:[#allocation10 + $0x1a0] sm:$0xff]
        %v6384 = vld [vmem:[#allocation10 + $0x1a8] sm:$0xff]
        %v6385 = vld [vmem:[#allocation10 + $0x1b0] sm:$0xff]
        %v6386 = vld [vmem:[#allocation10 + $0x1b8] sm:$0xff]
        %v6387 = vld [vmem:[#allocation10 + $0x1c0] sm:$0xff]
        %v6388 = vld [vmem:[#allocation10 + $0x1c8] sm:$0xff]
        %v6389 = vld [vmem:[#allocation10 + $0x1d0] sm:$0xff]
        %v6390 = vld [vmem:[#allocation10 + $0x1d8] sm:$0xff]
        %v6391 = vld [vmem:[#allocation10 + $0x1e0] sm:$0xff]
        %v6392 = vld [vmem:[#allocation10 + $0x1e8] sm:$0xff]
        %v6393 = vld [vmem:[#allocation10 + $0x1f0] sm:$0xff]
        %v6394 = vld [vmem:[#allocation10 + $0x1f8] sm:$0xff]
        %v6395 = vld [vmem:[#allocation12] sm:$0x3]
        %v6397 = vperm.slane %v6395, 0
        %v6398 = vperm.slane %v6395, 1
        %v6465 = vunpack.c.l.b16 %v6331
        %v6466 = vunpack.c.h.b16 %v6331
        %v6467 = vunpack.c.l.b16 %v6332
        %v6468 = vunpack.c.h.b16 %v6332
        %v6469 = vunpack.c.l.b16 %v6333
        %v6470 = vunpack.c.h.b16 %v6333
        %v6471 = vunpack.c.l.b16 %v6334
        %v6472 = vunpack.c.h.b16 %v6334
        %v6473 = vunpack.c.l.b16 %v6335
        %v6474 = vunpack.c.h.b16 %v6335
        %v6475 = vunpack.c.l.b16 %v6336
        %v6476 = vunpack.c.h.b16 %v6336
        %v6477 = vunpack.c.l.b16 %v6337
        %v6478 = vunpack.c.h.b16 %v6337
        %v6479 = vunpack.c.l.b16 %v6338
        %v6480 = vunpack.c.h.b16 %v6338
        %v6481 = vunpack.c.l.b16 %v6339
        %v6482 = vunpack.c.h.b16 %v6339
        %v6483 = vunpack.c.l.b16 %v6340
        %v6484 = vunpack.c.h.b16 %v6340
        %v6485 = vunpack.c.l.b16 %v6341
        %v6486 = vunpack.c.h.b16 %v6341
        %v6487 = vunpack.c.l.b16 %v6342
        %v6488 = vunpack.c.h.b16 %v6342
        %v6489 = vunpack.c.l.b16 %v6343
        %v6490 = vunpack.c.h.b16 %v6343
        %v6491 = vunpack.c.l.b16 %v6344
        %v6492 = vunpack.c.h.b16 %v6344
        %v6493 = vunpack.c.l.b16 %v6345
        %v6494 = vunpack.c.h.b16 %v6345
        %v6495 = vunpack.c.l.b16 %v6346
        %v6496 = vunpack.c.h.b16 %v6346
        %v6497 = vunpack.c.l.b16 %v6347
        %v6498 = vunpack.c.h.b16 %v6347
        %v6499 = vunpack.c.l.b16 %v6348
        %v6500 = vunpack.c.h.b16 %v6348
        %v6501 = vunpack.c.l.b16 %v6349
        %v6502 = vunpack.c.h.b16 %v6349
        %v6503 = vunpack.c.l.b16 %v6350
        %v6504 = vunpack.c.h.b16 %v6350
        %v6505 = vunpack.c.l.b16 %v6351
        %v6506 = vunpack.c.h.b16 %v6351
        %v6507 = vunpack.c.l.b16 %v6352
        %v6508 = vunpack.c.h.b16 %v6352
        %v6509 = vunpack.c.l.b16 %v6353
        %v6510 = vunpack.c.h.b16 %v6353
        %v6511 = vunpack.c.l.b16 %v6354
        %v6512 = vunpack.c.h.b16 %v6354
        %v6513 = vunpack.c.l.b16 %v6355
        %v6514 = vunpack.c.h.b16 %v6355
        %v6515 = vunpack.c.l.b16 %v6356
        %v6516 = vunpack.c.h.b16 %v6356
        %v6517 = vunpack.c.l.b16 %v6357
        %v6518 = vunpack.c.h.b16 %v6357
        %v6519 = vunpack.c.l.b16 %v6358
        %v6520 = vunpack.c.h.b16 %v6358
        %v6521 = vunpack.c.l.b16 %v6359
        %v6522 = vunpack.c.h.b16 %v6359
        %v6523 = vunpack.c.l.b16 %v6360
        %v6524 = vunpack.c.h.b16 %v6360
        %v6525 = vunpack.c.l.b16 %v6361
        %v6526 = vunpack.c.h.b16 %v6361
        %v6527 = vunpack.c.l.b16 %v6362
        %v6528 = vunpack.c.h.b16 %v6362
        %v6529 = vunpack.c.l.b16 %v6363
        %v6530 = vunpack.c.h.b16 %v6363
        %v6531 = vunpack.c.l.b16 %v6364
        %v6532 = vunpack.c.h.b16 %v6364
        %v6533 = vunpack.c.l.b16 %v6365
        %v6534 = vunpack.c.h.b16 %v6365
        %v6535 = vunpack.c.l.b16 %v6366
        %v6536 = vunpack.c.h.b16 %v6366
        %v6537 = vunpack.c.l.b16 %v6367
        %v6538 = vunpack.c.h.b16 %v6367
        %v6539 = vunpack.c.l.b16 %v6368
        %v6540 = vunpack.c.h.b16 %v6368
        %v6541 = vunpack.c.l.b16 %v6369
        %v6542 = vunpack.c.h.b16 %v6369
        %v6543 = vunpack.c.l.b16 %v6370
        %v6544 = vunpack.c.h.b16 %v6370
        %v6545 = vunpack.c.l.b16 %v6371
        %v6546 = vunpack.c.h.b16 %v6371
        %v6547 = vunpack.c.l.b16 %v6372
        %v6548 = vunpack.c.h.b16 %v6372
        %v6549 = vunpack.c.l.b16 %v6373
        %v6550 = vunpack.c.h.b16 %v6373
        %v6551 = vunpack.c.l.b16 %v6374
        %v6552 = vunpack.c.h.b16 %v6374
        %v6553 = vunpack.c.l.b16 %v6375
        %v6554 = vunpack.c.h.b16 %v6375
        %v6555 = vunpack.c.l.b16 %v6376
        %v6556 = vunpack.c.h.b16 %v6376
        %v6557 = vunpack.c.l.b16 %v6377
        %v6558 = vunpack.c.h.b16 %v6377
        %v6559 = vunpack.c.l.b16 %v6378
        %v6560 = vunpack.c.h.b16 %v6378
        %v6561 = vunpack.c.l.b16 %v6379
        %v6562 = vunpack.c.h.b16 %v6379
        %v6563 = vunpack.c.l.b16 %v6380
        %v6564 = vunpack.c.h.b16 %v6380
        %v6565 = vunpack.c.l.b16 %v6381
        %v6566 = vunpack.c.h.b16 %v6381
        %v6567 = vunpack.c.l.b16 %v6382
        %v6568 = vunpack.c.h.b16 %v6382
        %v6569 = vunpack.c.l.b16 %v6383
        %v6570 = vunpack.c.h.b16 %v6383
        %v6571 = vunpack.c.l.b16 %v6384
        %v6572 = vunpack.c.h.b16 %v6384
        %v6573 = vunpack.c.l.b16 %v6385
        %v6574 = vunpack.c.h.b16 %v6385
        %v6575 = vunpack.c.l.b16 %v6386
        %v6576 = vunpack.c.h.b16 %v6386
        %v6577 = vunpack.c.l.b16 %v6387
        %v6578 = vunpack.c.h.b16 %v6387
        %v6579 = vunpack.c.l.b16 %v6388
        %v6580 = vunpack.c.h.b16 %v6388
        %v6581 = vunpack.c.l.b16 %v6389
        %v6582 = vunpack.c.h.b16 %v6389
        %v6583 = vunpack.c.l.b16 %v6390
        %v6584 = vunpack.c.h.b16 %v6390
        %v6585 = vunpack.c.l.b16 %v6391
        %v6586 = vunpack.c.h.b16 %v6391
        %v6587 = vunpack.c.l.b16 %v6392
        %v6588 = vunpack.c.h.b16 %v6392
        %v6589 = vunpack.c.l.b16 %v6393
        %v6590 = vunpack.c.h.b16 %v6393
        %v6591 = vunpack.c.l.b16 %v6394
        %v6592 = vunpack.c.h.b16 %v6394
        %v6593 = vpack.c.b16 %v6467, %v6465
        %v6594 = vpack.c.b16 %v6468, %v6466
        %v6595 = vpack.c.b16 %v6471, %v6469
        %v6596 = vpack.c.b16 %v6472, %v6470
        %v6597 = vpack.c.b16 %v6475, %v6473
        %v6598 = vpack.c.b16 %v6476, %v6474
        %v6599 = vpack.c.b16 %v6479, %v6477
        %v6600 = vpack.c.b16 %v6480, %v6478
        %v6601 = vpack.c.b16 %v6483, %v6481
        %v6602 = vpack.c.b16 %v6484, %v6482
        %v6603 = vpack.c.b16 %v6487, %v6485
        %v6604 = vpack.c.b16 %v6488, %v6486
        %v6605 = vpack.c.b16 %v6491, %v6489
        %v6606 = vpack.c.b16 %v6492, %v6490
        %v6607 = vpack.c.b16 %v6495, %v6493
        %v6608 = vpack.c.b16 %v6496, %v6494
        %v6609 = vpack.c.b16 %v6499, %v6497
        %v6610 = vpack.c.b16 %v6500, %v6498
        %v6611 = vpack.c.b16 %v6503, %v6501
        %v6612 = vpack.c.b16 %v6504, %v6502
        %v6613 = vpack.c.b16 %v6507, %v6505
        %v6614 = vpack.c.b16 %v6508, %v6506
        %v6615 = vpack.c.b16 %v6511, %v6509
        %v6616 = vpack.c.b16 %v6512, %v6510
        %v6617 = vpack.c.b16 %v6515, %v6513
        %v6618 = vpack.c.b16 %v6516, %v6514
        %v6619 = vpack.c.b16 %v6519, %v6517
        %v6620 = vpack.c.b16 %v6520, %v6518
        %v6621 = vpack.c.b16 %v6523, %v6521
        %v6622 = vpack.c.b16 %v6524, %v6522
        %v6623 = vpack.c.b16 %v6527, %v6525
        %v6624 = vpack.c.b16 %v6528, %v6526
        %v6625 = vpack.c.b16 %v6531, %v6529
        %v6626 = vpack.c.b16 %v6532, %v6530
        %v6627 = vpack.c.b16 %v6535, %v6533
        %v6628 = vpack.c.b16 %v6536, %v6534
        %v6629 = vpack.c.b16 %v6539, %v6537
        %v6630 = vpack.c.b16 %v6540, %v6538
        %v6631 = vpack.c.b16 %v6543, %v6541
        %v6632 = vpack.c.b16 %v6544, %v6542
        %v6633 = vpack.c.b16 %v6547, %v6545
        %v6634 = vpack.c.b16 %v6548, %v6546
        %v6635 = vpack.c.b16 %v6551, %v6549
        %v6636 = vpack.c.b16 %v6552, %v6550
        %v6637 = vpack.c.b16 %v6555, %v6553
        %v6638 = vpack.c.b16 %v6556, %v6554
        %v6639 = vpack.c.b16 %v6559, %v6557
        %v6640 = vpack.c.b16 %v6560, %v6558
        %v6641 = vpack.c.b16 %v6563, %v6561
        %v6642 = vpack.c.b16 %v6564, %v6562
        %v6643 = vpack.c.b16 %v6567, %v6565
        %v6644 = vpack.c.b16 %v6568, %v6566
        %v6645 = vpack.c.b16 %v6571, %v6569
        %v6646 = vpack.c.b16 %v6572, %v6570
        %v6647 = vpack.c.b16 %v6575, %v6573
        %v6648 = vpack.c.b16 %v6576, %v6574
        %v6649 = vpack.c.b16 %v6579, %v6577
        %v6650 = vpack.c.b16 %v6580, %v6578
        %v6651 = vpack.c.b16 %v6583, %v6581
        %v6652 = vpack.c.b16 %v6584, %v6582
        %v6653 = vpack.c.b16 %v6587, %v6585
        %v6654 = vpack.c.b16 %v6588, %v6586
        %v6655 = vpack.c.b16 %v6591, %v6589
        %v6656 = vpack.c.b16 %v6592, %v6590
        %6721 = vmatpush.bf16.msra.mxu0 %v6607
        %6722 = vmatpush.bf16.msra.mxu0 %v6605
        %6723 = vmatpush.bf16.msra.mxu0 %v6603
        %6724 = vmatpush.bf16.msra.mxu0 %v6601
        %6725 = vmatpush.bf16.msra.mxu0 %v6599
        %6726 = vmatpush.bf16.msra.mxu0 %v6597
        %6727 = vmatpush.bf16.msra.mxu0 %v6595
        %6728 = vmatpush.bf16.msra.mxu0 %v6593
        %6729 = vmatmul.bf16.gmra.mxu0 %v6267
        %v6730 = vpop.f32.mrf.mxu0
        %v6731 = vadd.f32 %v6397, %v6730
        %v6732 = vpop.f32.mrf.mxu0
        %v6733 = vadd.f32 %v6397, %v6732
        %6734 = vmatmul.bf16.gmra.mxu0 %v6271
        %v6735 = vpop.f32.mrf.mxu0
        %v6736 = vadd.f32 %v6397, %v6735
        %v6737 = vpop.f32.mrf.mxu0
        %v6738 = vadd.f32 %v6397, %v6737
        %6739 = vmatmul.bf16.gmra.mxu0 %v6275
        %v6740 = vpop.f32.mrf.mxu0
        %v6741 = vadd.f32 %v6397, %v6740
        %v6742 = vpop.f32.mrf.mxu0
        %v6743 = vadd.f32 %v6397, %v6742
        %6744 = vmatmul.bf16.gmra.mxu0 %v6279
        %v6745 = vpop.f32.mrf.mxu0
        %v6746 = vadd.f32 %v6397, %v6745
        %v6747 = vpop.f32.mrf.mxu0
        %v6748 = vadd.f32 %v6397, %v6747
        %6749 = vmatmul.bf16.gmra.mxu0 %v6283
        %v6750 = vpop.f32.mrf.mxu0
        %v6751 = vadd.f32 %v6397, %v6750
        %v6752 = vpop.f32.mrf.mxu0
        %v6753 = vadd.f32 %v6397, %v6752
        %6754 = vmatmul.bf16.gmra.mxu0 %v6287
        %v6755 = vpop.f32.mrf.mxu0
        %v6756 = vadd.f32 %v6397, %v6755
        %v6757 = vpop.f32.mrf.mxu0
        %v6758 = vadd.f32 %v6397, %v6757
        %6759 = vmatmul.bf16.gmra.mxu0 %v6291
        %v6760 = vpop.f32.mrf.mxu0
        %v6761 = vadd.f32 %v6397, %v6760
        %v6762 = vpop.f32.mrf.mxu0
        %v6763 = vadd.f32 %v6397, %v6762
        %6764 = vmatmul.bf16.gmra.mxu0 %v6295
        %v6765 = vpop.f32.mrf.mxu0
        %v6766 = vadd.f32 %v6397, %v6765
        %v6767 = vpop.f32.mrf.mxu0
        %v6768 = vadd.f32 %v6397, %v6767
        %6769 = vmatmul.bf16.gmra.mxu0 %v6299
        %v6770 = vpop.f32.mrf.mxu0
        %v6771 = vadd.f32 %v6397, %v6770
        %v6772 = vpop.f32.mrf.mxu0
        %v6773 = vadd.f32 %v6397, %v6772
        %6774 = vmatmul.bf16.gmra.mxu0 %v6303
        %v6775 = vpop.f32.mrf.mxu0
        %v6776 = vadd.f32 %v6397, %v6775
        %v6777 = vpop.f32.mrf.mxu0
        %v6778 = vadd.f32 %v6397, %v6777
        %6779 = vmatmul.bf16.gmra.mxu0 %v6307
        %v6780 = vpop.f32.mrf.mxu0
        %v6781 = vadd.f32 %v6397, %v6780
        %v6782 = vpop.f32.mrf.mxu0
        %v6783 = vadd.f32 %v6397, %v6782
        %6784 = vmatmul.bf16.gmra.mxu0 %v6311
        %v6785 = vpop.f32.mrf.mxu0
        %v6786 = vadd.f32 %v6397, %v6785
        %v6787 = vpop.f32.mrf.mxu0
        %v6788 = vadd.f32 %v6397, %v6787
        %6789 = vmatmul.bf16.gmra.mxu0 %v6315
        %v6790 = vpop.f32.mrf.mxu0
        %v6791 = vadd.f32 %v6397, %v6790
        %v6792 = vpop.f32.mrf.mxu0
        %v6793 = vadd.f32 %v6397, %v6792
        %6794 = vmatmul.bf16.gmra.mxu0 %v6319
        %v6795 = vpop.f32.mrf.mxu0
        %v6796 = vadd.f32 %v6397, %v6795
        %v6797 = vpop.f32.mrf.mxu0
        %v6798 = vadd.f32 %v6397, %v6797
        %6799 = vmatmul.bf16.gmra.mxu0 %v6323
        %v6800 = vpop.f32.mrf.mxu0
        %v6801 = vadd.f32 %v6397, %v6800
        %v6802 = vpop.f32.mrf.mxu0
        %v6803 = vadd.f32 %v6397, %v6802
        %6804 = vmatmul.bf16.gmra.mxu0 %v6327
        %v6805 = vpop.f32.mrf.mxu0
        %v6806 = vadd.f32 %v6397, %v6805
        %v6807 = vpop.f32.mrf.mxu0
        %v6808 = vadd.f32 %v6397, %v6807
        %6809 = vdwg.mxu0
        %6810 = vmatpush.bf16.msra.mxu0 %v6623
        %6811 = vmatpush.bf16.msra.mxu0 %v6621
        %6812 = vmatpush.bf16.msra.mxu0 %v6619
        %6813 = vmatpush.bf16.msra.mxu0 %v6617
        %6814 = vmatpush.bf16.msra.mxu0 %v6615
        %6815 = vmatpush.bf16.msra.mxu0 %v6613
        %6816 = vmatpush.bf16.msra.mxu0 %v6611
        %6817 = vmatpush.bf16.msra.mxu0 %v6609
        %6818 = vmatmul.bf16.gmra.mxu0 %v6268
        %v6819 = vpop.f32.mrf.mxu0
        %v6820 = vadd.f32 %v6731, %v6819
        %v6821 = vpop.f32.mrf.mxu0
        %v6822 = vadd.f32 %v6733, %v6821
        %6823 = vmatmul.bf16.gmra.mxu0 %v6272
        %v6824 = vpop.f32.mrf.mxu0
        %v6825 = vadd.f32 %v6736, %v6824
        %v6826 = vpop.f32.mrf.mxu0
        %v6827 = vadd.f32 %v6738, %v6826
        %6828 = vmatmul.bf16.gmra.mxu0 %v6276
        %v6829 = vpop.f32.mrf.mxu0
        %v6830 = vadd.f32 %v6741, %v6829
        %v6831 = vpop.f32.mrf.mxu0
        %v6832 = vadd.f32 %v6743, %v6831
        %6833 = vmatmul.bf16.gmra.mxu0 %v6280
        %v6834 = vpop.f32.mrf.mxu0
        %v6835 = vadd.f32 %v6746, %v6834
        %v6836 = vpop.f32.mrf.mxu0
        %v6837 = vadd.f32 %v6748, %v6836
        %6838 = vmatmul.bf16.gmra.mxu0 %v6284
        %v6839 = vpop.f32.mrf.mxu0
        %v6840 = vadd.f32 %v6751, %v6839
        %v6841 = vpop.f32.mrf.mxu0
        %v6842 = vadd.f32 %v6753, %v6841
        %6843 = vmatmul.bf16.gmra.mxu0 %v6288
        %v6844 = vpop.f32.mrf.mxu0
        %v6845 = vadd.f32 %v6756, %v6844
        %v6846 = vpop.f32.mrf.mxu0
        %v6847 = vadd.f32 %v6758, %v6846
        %6848 = vmatmul.bf16.gmra.mxu0 %v6292
        %v6849 = vpop.f32.mrf.mxu0
        %v6850 = vadd.f32 %v6761, %v6849
        %v6851 = vpop.f32.mrf.mxu0
        %v6852 = vadd.f32 %v6763, %v6851
        %6853 = vmatmul.bf16.gmra.mxu0 %v6296
        %v6854 = vpop.f32.mrf.mxu0
        %v6855 = vadd.f32 %v6766, %v6854
        %v6856 = vpop.f32.mrf.mxu0
        %v6857 = vadd.f32 %v6768, %v6856
        %6858 = vmatmul.bf16.gmra.mxu0 %v6300
        %v6859 = vpop.f32.mrf.mxu0
        %v6860 = vadd.f32 %v6771, %v6859
        %v6861 = vpop.f32.mrf.mxu0
        %v6862 = vadd.f32 %v6773, %v6861
        %6863 = vmatmul.bf16.gmra.mxu0 %v6304
        %v6864 = vpop.f32.mrf.mxu0
        %v6865 = vadd.f32 %v6776, %v6864
        %v6866 = vpop.f32.mrf.mxu0
        %v6867 = vadd.f32 %v6778, %v6866
        %6868 = vmatmul.bf16.gmra.mxu0 %v6308
        %v6869 = vpop.f32.mrf.mxu0
        %v6870 = vadd.f32 %v6781, %v6869
        %v6871 = vpop.f32.mrf.mxu0
        %v6872 = vadd.f32 %v6783, %v6871
        %6873 = vmatmul.bf16.gmra.mxu0 %v6312
        %v6874 = vpop.f32.mrf.mxu0
        %v6875 = vadd.f32 %v6786, %v6874
        %v6876 = vpop.f32.mrf.mxu0
        %v6877 = vadd.f32 %v6788, %v6876
        %6878 = vmatmul.bf16.gmra.mxu0 %v6316
        %v6879 = vpop.f32.mrf.mxu0
        %v6880 = vadd.f32 %v6791, %v6879
        %v6881 = vpop.f32.mrf.mxu0
        %v6882 = vadd.f32 %v6793, %v6881
        %6883 = vmatmul.bf16.gmra.mxu0 %v6320
        %v6884 = vpop.f32.mrf.mxu0
        %v6885 = vadd.f32 %v6796, %v6884
        %v6886 = vpop.f32.mrf.mxu0
        %v6887 = vadd.f32 %v6798, %v6886
        %6888 = vmatmul.bf16.gmra.mxu0 %v6324
        %v6889 = vpop.f32.mrf.mxu0
        %v6890 = vadd.f32 %v6801, %v6889
        %v6891 = vpop.f32.mrf.mxu0
        %v6892 = vadd.f32 %v6803, %v6891
        %6893 = vmatmul.bf16.gmra.mxu0 %v6328
        %v6894 = vpop.f32.mrf.mxu0
        %v6895 = vadd.f32 %v6806, %v6894
        %v6896 = vpop.f32.mrf.mxu0
        %v6897 = vadd.f32 %v6808, %v6896
        %6898 = vdwg.mxu0
        %6899 = vmatpush.bf16.msra.mxu0 %v6639
        %6900 = vmatpush.bf16.msra.mxu0 %v6637
        %6901 = vmatpush.bf16.msra.mxu0 %v6635
        %6902 = vmatpush.bf16.msra.mxu0 %v6633
        %6903 = vmatpush.bf16.msra.mxu0 %v6631
        %6904 = vmatpush.bf16.msra.mxu0 %v6629
        %6905 = vmatpush.bf16.msra.mxu0 %v6627
        %6906 = vmatpush.bf16.msra.mxu0 %v6625
        %6907 = vmatmul.bf16.gmra.mxu0 %v6269
        %v6908 = vpop.f32.mrf.mxu0
        %v6909 = vadd.f32 %v6820, %v6908
        %v6910 = vpop.f32.mrf.mxu0
        %v6911 = vadd.f32 %v6822, %v6910
        %6912 = vmatmul.bf16.gmra.mxu0 %v6273
        %v6913 = vpop.f32.mrf.mxu0
        %v6914 = vadd.f32 %v6825, %v6913
        %v6915 = vpop.f32.mrf.mxu0
        %v6916 = vadd.f32 %v6827, %v6915
        %6917 = vmatmul.bf16.gmra.mxu0 %v6277
        %v6918 = vpop.f32.mrf.mxu0
        %v6919 = vadd.f32 %v6830, %v6918
        %v6920 = vpop.f32.mrf.mxu0
        %v6921 = vadd.f32 %v6832, %v6920
        %6922 = vmatmul.bf16.gmra.mxu0 %v6281
        %v6923 = vpop.f32.mrf.mxu0
        %v6924 = vadd.f32 %v6835, %v6923
        %v6925 = vpop.f32.mrf.mxu0
        %v6926 = vadd.f32 %v6837, %v6925
        %6927 = vmatmul.bf16.gmra.mxu0 %v6285
        %v6928 = vpop.f32.mrf.mxu0
        %v6929 = vadd.f32 %v6840, %v6928
        %v6930 = vpop.f32.mrf.mxu0
        %v6931 = vadd.f32 %v6842, %v6930
        %6932 = vmatmul.bf16.gmra.mxu0 %v6289
        %v6933 = vpop.f32.mrf.mxu0
        %v6934 = vadd.f32 %v6845, %v6933
        %v6935 = vpop.f32.mrf.mxu0
        %v6936 = vadd.f32 %v6847, %v6935
        %6937 = vmatmul.bf16.gmra.mxu0 %v6293
        %v6938 = vpop.f32.mrf.mxu0
        %v6939 = vadd.f32 %v6850, %v6938
        %v6940 = vpop.f32.mrf.mxu0
        %v6941 = vadd.f32 %v6852, %v6940
        %6942 = vmatmul.bf16.gmra.mxu0 %v6297
        %v6943 = vpop.f32.mrf.mxu0
        %v6944 = vadd.f32 %v6855, %v6943
        %v6945 = vpop.f32.mrf.mxu0
        %v6946 = vadd.f32 %v6857, %v6945
        %6947 = vmatmul.bf16.gmra.mxu0 %v6301
        %v6948 = vpop.f32.mrf.mxu0
        %v6949 = vadd.f32 %v6860, %v6948
        %v6950 = vpop.f32.mrf.mxu0
        %v6951 = vadd.f32 %v6862, %v6950
        %6952 = vmatmul.bf16.gmra.mxu0 %v6305
        %v6953 = vpop.f32.mrf.mxu0
        %v6954 = vadd.f32 %v6865, %v6953
        %v6955 = vpop.f32.mrf.mxu0
        %v6956 = vadd.f32 %v6867, %v6955
        %6957 = vmatmul.bf16.gmra.mxu0 %v6309
        %v6958 = vpop.f32.mrf.mxu0
        %v6959 = vadd.f32 %v6870, %v6958
        %v6960 = vpop.f32.mrf.mxu0
        %v6961 = vadd.f32 %v6872, %v6960
        %6962 = vmatmul.bf16.gmra.mxu0 %v6313
        %v6963 = vpop.f32.mrf.mxu0
        %v6964 = vadd.f32 %v6875, %v6963
        %v6965 = vpop.f32.mrf.mxu0
        %v6966 = vadd.f32 %v6877, %v6965
        %6967 = vmatmul.bf16.gmra.mxu0 %v6317
        %v6968 = vpop.f32.mrf.mxu0
        %v6969 = vadd.f32 %v6880, %v6968
        %v6970 = vpop.f32.mrf.mxu0
        %v6971 = vadd.f32 %v6882, %v6970
        %6972 = vmatmul.bf16.gmra.mxu0 %v6321
        %v6973 = vpop.f32.mrf.mxu0
        %v6974 = vadd.f32 %v6885, %v6973
        %v6975 = vpop.f32.mrf.mxu0
        %v6976 = vadd.f32 %v6887, %v6975
        %6977 = vmatmul.bf16.gmra.mxu0 %v6325
        %v6978 = vpop.f32.mrf.mxu0
        %v6979 = vadd.f32 %v6890, %v6978
        %v6980 = vpop.f32.mrf.mxu0
        %v6981 = vadd.f32 %v6892, %v6980
        %6982 = vmatmul.bf16.gmra.mxu0 %v6329
        %v6983 = vpop.f32.mrf.mxu0
        %v6984 = vadd.f32 %v6895, %v6983
        %v6985 = vpop.f32.mrf.mxu0
        %v6986 = vadd.f32 %v6897, %v6985
        %6987 = vdwg.mxu0
        %6988 = vmatpush.bf16.msra.mxu0 %v6655
        %6989 = vmatpush.bf16.msra.mxu0 %v6653
        %6990 = vmatpush.bf16.msra.mxu0 %v6651
        %6991 = vmatpush.bf16.msra.mxu0 %v6649
        %6992 = vmatpush.bf16.msra.mxu0 %v6647
        %6993 = vmatpush.bf16.msra.mxu0 %v6645
        %6994 = vmatpush.bf16.msra.mxu0 %v6643
        %6995 = vmatpush.bf16.msra.mxu0 %v6641
        %6996 = vmatmul.bf16.gmra.mxu0 %v6270
        %v6997 = vpop.f32.mrf.mxu0
        %v6998 = vadd.f32 %v6909, %v6997
        %v6999 = vpop.f32.mrf.mxu0
        %v7000 = vadd.f32 %v6911, %v6999
        %7001 = vmatmul.bf16.gmra.mxu0 %v6274
        %v7002 = vpop.f32.mrf.mxu0
        %v7003 = vadd.f32 %v6914, %v7002
        %v7004 = vpop.f32.mrf.mxu0
        %v7005 = vadd.f32 %v6916, %v7004
        %7006 = vmatmul.bf16.gmra.mxu0 %v6278
        %v7007 = vpop.f32.mrf.mxu0
        %v7008 = vadd.f32 %v6919, %v7007
        %v7009 = vpop.f32.mrf.mxu0
        %v7010 = vadd.f32 %v6921, %v7009
        %7011 = vmatmul.bf16.gmra.mxu0 %v6282
        %v7012 = vpop.f32.mrf.mxu0
        %v7013 = vadd.f32 %v6924, %v7012
        %v7014 = vpop.f32.mrf.mxu0
        %v7015 = vadd.f32 %v6926, %v7014
        %7016 = vmatmul.bf16.gmra.mxu0 %v6286
        %v7017 = vpop.f32.mrf.mxu0
        %v7018 = vadd.f32 %v6929, %v7017
        %v7019 = vpop.f32.mrf.mxu0
        %v7020 = vadd.f32 %v6931, %v7019
        %7021 = vmatmul.bf16.gmra.mxu0 %v6290
        %v7022 = vpop.f32.mrf.mxu0
        %v7023 = vadd.f32 %v6934, %v7022
        %v7024 = vpop.f32.mrf.mxu0
        %v7025 = vadd.f32 %v6936, %v7024
        %7026 = vmatmul.bf16.gmra.mxu0 %v6294
        %v7027 = vpop.f32.mrf.mxu0
        %v7028 = vadd.f32 %v6939, %v7027
        %v7029 = vpop.f32.mrf.mxu0
        %v7030 = vadd.f32 %v6941, %v7029
        %7031 = vmatmul.bf16.gmra.mxu0 %v6298
        %v7032 = vpop.f32.mrf.mxu0
        %v7033 = vadd.f32 %v6944, %v7032
        %v7034 = vpop.f32.mrf.mxu0
        %v7035 = vadd.f32 %v6946, %v7034
        %7036 = vmatmul.bf16.gmra.mxu0 %v6302
        %v7037 = vpop.f32.mrf.mxu0
        %v7038 = vadd.f32 %v6949, %v7037
        %v7039 = vpop.f32.mrf.mxu0
        %v7040 = vadd.f32 %v6951, %v7039
        %7041 = vmatmul.bf16.gmra.mxu0 %v6306
        %v7042 = vpop.f32.mrf.mxu0
        %v7043 = vadd.f32 %v6954, %v7042
        %v7044 = vpop.f32.mrf.mxu0
        %v7045 = vadd.f32 %v6956, %v7044
        %7046 = vmatmul.bf16.gmra.mxu0 %v6310
        %v7047 = vpop.f32.mrf.mxu0
        %v7048 = vadd.f32 %v6959, %v7047
        %v7049 = vpop.f32.mrf.mxu0
        %v7050 = vadd.f32 %v6961, %v7049
        %7051 = vmatmul.bf16.gmra.mxu0 %v6314
        %v7052 = vpop.f32.mrf.mxu0
        %v7053 = vadd.f32 %v6964, %v7052
        %v7054 = vpop.f32.mrf.mxu0
        %v7055 = vadd.f32 %v6966, %v7054
        %7056 = vmatmul.bf16.gmra.mxu0 %v6318
        %v7057 = vpop.f32.mrf.mxu0
        %v7058 = vadd.f32 %v6969, %v7057
        %v7059 = vpop.f32.mrf.mxu0
        %v7060 = vadd.f32 %v6971, %v7059
        %7061 = vmatmul.bf16.gmra.mxu0 %v6322
        %v7062 = vpop.f32.mrf.mxu0
        %v7063 = vadd.f32 %v6974, %v7062
        %v7064 = vpop.f32.mrf.mxu0
        %v7065 = vadd.f32 %v6976, %v7064
        %7066 = vmatmul.bf16.gmra.mxu0 %v6326
        %v7067 = vpop.f32.mrf.mxu0
        %v7068 = vadd.f32 %v6979, %v7067
        %v7069 = vpop.f32.mrf.mxu0
        %v7070 = vadd.f32 %v6981, %v7069
        %7071 = vmatmul.bf16.gmra.mxu0 %v6330
        %v7072 = vpop.f32.mrf.mxu0
        %v7073 = vadd.f32 %v6984, %v7072
        %v7074 = vpop.f32.mrf.mxu0
        %v7075 = vadd.f32 %v6986, %v7074
        %7076 = vdwg.mxu0
        %7077 = vmatpush.bf16.msra.mxu0 %v6608
        %7078 = vmatpush.bf16.msra.mxu0 %v6606
        %7079 = vmatpush.bf16.msra.mxu0 %v6604
        %7080 = vmatpush.bf16.msra.mxu0 %v6602
        %7081 = vmatpush.bf16.msra.mxu0 %v6600
        %7082 = vmatpush.bf16.msra.mxu0 %v6598
        %7083 = vmatpush.bf16.msra.mxu0 %v6596
        %7084 = vmatpush.bf16.msra.mxu0 %v6594
        %7085 = vmatmul.bf16.gmra.mxu0 %v6267
        %v7086 = vpop.f32.mrf.mxu0
        %v7087 = vadd.f32 %v6398, %v7086
        %v7088 = vpop.f32.mrf.mxu0
        %v7089 = vadd.f32 %v6398, %v7088
        %7090 = vmatmul.bf16.gmra.mxu0 %v6271
        %v7091 = vpop.f32.mrf.mxu0
        %v7092 = vadd.f32 %v6398, %v7091
        %v7093 = vpop.f32.mrf.mxu0
        %v7094 = vadd.f32 %v6398, %v7093
        %7095 = vmatmul.bf16.gmra.mxu0 %v6275
        %v7096 = vpop.f32.mrf.mxu0
        %v7097 = vadd.f32 %v6398, %v7096
        %v7098 = vpop.f32.mrf.mxu0
        %v7099 = vadd.f32 %v6398, %v7098
        %7100 = vmatmul.bf16.gmra.mxu0 %v6279
        %v7101 = vpop.f32.mrf.mxu0
        %v7102 = vadd.f32 %v6398, %v7101
        %v7103 = vpop.f32.mrf.mxu0
        %v7104 = vadd.f32 %v6398, %v7103
        %7105 = vmatmul.bf16.gmra.mxu0 %v6283
        %v7106 = vpop.f32.mrf.mxu0
        %v7107 = vadd.f32 %v6398, %v7106
        %v7108 = vpop.f32.mrf.mxu0
        %v7109 = vadd.f32 %v6398, %v7108
        %7110 = vmatmul.bf16.gmra.mxu0 %v6287
        %v7111 = vpop.f32.mrf.mxu0
        %v7112 = vadd.f32 %v6398, %v7111
        %v7113 = vpop.f32.mrf.mxu0
        %v7114 = vadd.f32 %v6398, %v7113
        %7115 = vmatmul.bf16.gmra.mxu0 %v6291
        %v7116 = vpop.f32.mrf.mxu0
        %v7117 = vadd.f32 %v6398, %v7116
        %v7118 = vpop.f32.mrf.mxu0
        %v7119 = vadd.f32 %v6398, %v7118
        %7120 = vmatmul.bf16.gmra.mxu0 %v6295
        %v7121 = vpop.f32.mrf.mxu0
        %v7122 = vadd.f32 %v6398, %v7121
        %v7123 = vpop.f32.mrf.mxu0
        %v7124 = vadd.f32 %v6398, %v7123
        %7125 = vmatmul.bf16.gmra.mxu0 %v6299
        %v7126 = vpop.f32.mrf.mxu0
        %v7127 = vadd.f32 %v6398, %v7126
        %v7128 = vpop.f32.mrf.mxu0
        %v7129 = vadd.f32 %v6398, %v7128
        %7130 = vmatmul.bf16.gmra.mxu0 %v6303
        %v7131 = vpop.f32.mrf.mxu0
        %v7132 = vadd.f32 %v6398, %v7131
        %v7133 = vpop.f32.mrf.mxu0
        %v7134 = vadd.f32 %v6398, %v7133
        %7135 = vmatmul.bf16.gmra.mxu0 %v6307
        %v7136 = vpop.f32.mrf.mxu0
        %v7137 = vadd.f32 %v6398, %v7136
        %v7138 = vpop.f32.mrf.mxu0
        %v7139 = vadd.f32 %v6398, %v7138
        %7140 = vmatmul.bf16.gmra.mxu0 %v6311
        %v7141 = vpop.f32.mrf.mxu0
        %v7142 = vadd.f32 %v6398, %v7141
        %v7143 = vpop.f32.mrf.mxu0
        %v7144 = vadd.f32 %v6398, %v7143
        %7145 = vmatmul.bf16.gmra.mxu0 %v6315
        %v7146 = vpop.f32.mrf.mxu0
        %v7147 = vadd.f32 %v6398, %v7146
        %v7148 = vpop.f32.mrf.mxu0
        %v7149 = vadd.f32 %v6398, %v7148
        %7150 = vmatmul.bf16.gmra.mxu0 %v6319
        %v7151 = vpop.f32.mrf.mxu0
        %v7152 = vadd.f32 %v6398, %v7151
        %v7153 = vpop.f32.mrf.mxu0
        %v7154 = vadd.f32 %v6398, %v7153
        %7155 = vmatmul.bf16.gmra.mxu0 %v6323
        %v7156 = vpop.f32.mrf.mxu0
        %v7157 = vadd.f32 %v6398, %v7156
        %v7158 = vpop.f32.mrf.mxu0
        %v7159 = vadd.f32 %v6398, %v7158
        %7160 = vmatmul.bf16.gmra.mxu0 %v6327
        %v7161 = vpop.f32.mrf.mxu0
        %v7162 = vadd.f32 %v6398, %v7161
        %v7163 = vpop.f32.mrf.mxu0
        %v7164 = vadd.f32 %v6398, %v7163
        %7165 = vdwg.mxu0
        %7166 = vmatpush.bf16.msra.mxu0 %v6624
        %7167 = vmatpush.bf16.msra.mxu0 %v6622
        %7168 = vmatpush.bf16.msra.mxu0 %v6620
        %7169 = vmatpush.bf16.msra.mxu0 %v6618
        %7170 = vmatpush.bf16.msra.mxu0 %v6616
        %7171 = vmatpush.bf16.msra.mxu0 %v6614
        %7172 = vmatpush.bf16.msra.mxu0 %v6612
        %7173 = vmatpush.bf16.msra.mxu0 %v6610
        %7174 = vmatmul.bf16.gmra.mxu0 %v6268
        %v7175 = vpop.f32.mrf.mxu0
        %v7176 = vadd.f32 %v7087, %v7175
        %v7177 = vpop.f32.mrf.mxu0
        %v7178 = vadd.f32 %v7089, %v7177
        %7179 = vmatmul.bf16.gmra.mxu0 %v6272
        %v7180 = vpop.f32.mrf.mxu0
        %v7181 = vadd.f32 %v7092, %v7180
        %v7182 = vpop.f32.mrf.mxu0
        %v7183 = vadd.f32 %v7094, %v7182
        %7184 = vmatmul.bf16.gmra.mxu0 %v6276
        %v7185 = vpop.f32.mrf.mxu0
        %v7186 = vadd.f32 %v7097, %v7185
        %v7187 = vpop.f32.mrf.mxu0
        %v7188 = vadd.f32 %v7099, %v7187
        %7189 = vmatmul.bf16.gmra.mxu0 %v6280
        %v7190 = vpop.f32.mrf.mxu0
        %v7191 = vadd.f32 %v7102, %v7190
        %v7192 = vpop.f32.mrf.mxu0
        %v7193 = vadd.f32 %v7104, %v7192
        %7194 = vmatmul.bf16.gmra.mxu0 %v6284
        %v7195 = vpop.f32.mrf.mxu0
        %v7196 = vadd.f32 %v7107, %v7195
        %v7197 = vpop.f32.mrf.mxu0
        %v7198 = vadd.f32 %v7109, %v7197
        %7199 = vmatmul.bf16.gmra.mxu0 %v6288
        %v7200 = vpop.f32.mrf.mxu0
        %v7201 = vadd.f32 %v7112, %v7200
        %v7202 = vpop.f32.mrf.mxu0
        %v7203 = vadd.f32 %v7114, %v7202
        %7204 = vmatmul.bf16.gmra.mxu0 %v6292
        %v7205 = vpop.f32.mrf.mxu0
        %v7206 = vadd.f32 %v7117, %v7205
        %v7207 = vpop.f32.mrf.mxu0
        %v7208 = vadd.f32 %v7119, %v7207
        %7209 = vmatmul.bf16.gmra.mxu0 %v6296
        %v7210 = vpop.f32.mrf.mxu0
        %v7211 = vadd.f32 %v7122, %v7210
        %v7212 = vpop.f32.mrf.mxu0
        %v7213 = vadd.f32 %v7124, %v7212
        %7214 = vmatmul.bf16.gmra.mxu0 %v6300
        %v7215 = vpop.f32.mrf.mxu0
        %v7216 = vadd.f32 %v7127, %v7215
        %v7217 = vpop.f32.mrf.mxu0
        %v7218 = vadd.f32 %v7129, %v7217
        %7219 = vmatmul.bf16.gmra.mxu0 %v6304
        %v7220 = vpop.f32.mrf.mxu0
        %v7221 = vadd.f32 %v7132, %v7220
        %v7222 = vpop.f32.mrf.mxu0
        %v7223 = vadd.f32 %v7134, %v7222
        %7224 = vmatmul.bf16.gmra.mxu0 %v6308
        %v7225 = vpop.f32.mrf.mxu0
        %v7226 = vadd.f32 %v7137, %v7225
        %v7227 = vpop.f32.mrf.mxu0
        %v7228 = vadd.f32 %v7139, %v7227
        %7229 = vmatmul.bf16.gmra.mxu0 %v6312
        %v7230 = vpop.f32.mrf.mxu0
        %v7231 = vadd.f32 %v7142, %v7230
        %v7232 = vpop.f32.mrf.mxu0
        %v7233 = vadd.f32 %v7144, %v7232
        %7234 = vmatmul.bf16.gmra.mxu0 %v6316
        %v7235 = vpop.f32.mrf.mxu0
        %v7236 = vadd.f32 %v7147, %v7235
        %v7237 = vpop.f32.mrf.mxu0
        %v7238 = vadd.f32 %v7149, %v7237
        %7239 = vmatmul.bf16.gmra.mxu0 %v6320
        %v7240 = vpop.f32.mrf.mxu0
        %v7241 = vadd.f32 %v7152, %v7240
        %v7242 = vpop.f32.mrf.mxu0
        %v7243 = vadd.f32 %v7154, %v7242
        %7244 = vmatmul.bf16.gmra.mxu0 %v6324
        %v7245 = vpop.f32.mrf.mxu0
        %v7246 = vadd.f32 %v7157, %v7245
        %v7247 = vpop.f32.mrf.mxu0
        %v7248 = vadd.f32 %v7159, %v7247
        %7249 = vmatmul.bf16.gmra.mxu0 %v6328
        %v7250 = vpop.f32.mrf.mxu0
        %v7251 = vadd.f32 %v7162, %v7250
        %v7252 = vpop.f32.mrf.mxu0
        %v7253 = vadd.f32 %v7164, %v7252
        %7254 = vdwg.mxu0
        %7255 = vmatpush.bf16.msra.mxu0 %v6640
        %7256 = vmatpush.bf16.msra.mxu0 %v6638
        %7257 = vmatpush.bf16.msra.mxu0 %v6636
        %7258 = vmatpush.bf16.msra.mxu0 %v6634
        %7259 = vmatpush.bf16.msra.mxu0 %v6632
        %7260 = vmatpush.bf16.msra.mxu0 %v6630
        %7261 = vmatpush.bf16.msra.mxu0 %v6628
        %7262 = vmatpush.bf16.msra.mxu0 %v6626
        %7263 = vmatmul.bf16.gmra.mxu0 %v6269
        %v7264 = vpop.f32.mrf.mxu0
        %v7265 = vadd.f32 %v7176, %v7264
        %v7266 = vpop.f32.mrf.mxu0
        %v7267 = vadd.f32 %v7178, %v7266
        %7268 = vmatmul.bf16.gmra.mxu0 %v6273
        %v7269 = vpop.f32.mrf.mxu0
        %v7270 = vadd.f32 %v7181, %v7269
        %v7271 = vpop.f32.mrf.mxu0
        %v7272 = vadd.f32 %v7183, %v7271
        %7273 = vmatmul.bf16.gmra.mxu0 %v6277
        %v7274 = vpop.f32.mrf.mxu0
        %v7275 = vadd.f32 %v7186, %v7274
        %v7276 = vpop.f32.mrf.mxu0
        %v7277 = vadd.f32 %v7188, %v7276
        %7278 = vmatmul.bf16.gmra.mxu0 %v6281
        %v7279 = vpop.f32.mrf.mxu0
        %v7280 = vadd.f32 %v7191, %v7279
        %v7281 = vpop.f32.mrf.mxu0
        %v7282 = vadd.f32 %v7193, %v7281
        %7283 = vmatmul.bf16.gmra.mxu0 %v6285
        %v7284 = vpop.f32.mrf.mxu0
        %v7285 = vadd.f32 %v7196, %v7284
        %v7286 = vpop.f32.mrf.mxu0
        %v7287 = vadd.f32 %v7198, %v7286
        %7288 = vmatmul.bf16.gmra.mxu0 %v6289
        %v7289 = vpop.f32.mrf.mxu0
        %v7290 = vadd.f32 %v7201, %v7289
        %v7291 = vpop.f32.mrf.mxu0
        %v7292 = vadd.f32 %v7203, %v7291
        %7293 = vmatmul.bf16.gmra.mxu0 %v6293
        %v7294 = vpop.f32.mrf.mxu0
        %v7295 = vadd.f32 %v7206, %v7294
        %v7296 = vpop.f32.mrf.mxu0
        %v7297 = vadd.f32 %v7208, %v7296
        %7298 = vmatmul.bf16.gmra.mxu0 %v6297
        %v7299 = vpop.f32.mrf.mxu0
        %v7300 = vadd.f32 %v7211, %v7299
        %v7301 = vpop.f32.mrf.mxu0
        %v7302 = vadd.f32 %v7213, %v7301
        %7303 = vmatmul.bf16.gmra.mxu0 %v6301
        %v7304 = vpop.f32.mrf.mxu0
        %v7305 = vadd.f32 %v7216, %v7304
        %v7306 = vpop.f32.mrf.mxu0
        %v7307 = vadd.f32 %v7218, %v7306
        %7308 = vmatmul.bf16.gmra.mxu0 %v6305
        %v7309 = vpop.f32.mrf.mxu0
        %v7310 = vadd.f32 %v7221, %v7309
        %v7311 = vpop.f32.mrf.mxu0
        %v7312 = vadd.f32 %v7223, %v7311
        %7313 = vmatmul.bf16.gmra.mxu0 %v6309
        %v7314 = vpop.f32.mrf.mxu0
        %v7315 = vadd.f32 %v7226, %v7314
        %v7316 = vpop.f32.mrf.mxu0
        %v7317 = vadd.f32 %v7228, %v7316
        %7318 = vmatmul.bf16.gmra.mxu0 %v6313
        %v7319 = vpop.f32.mrf.mxu0
        %v7320 = vadd.f32 %v7231, %v7319
        %v7321 = vpop.f32.mrf.mxu0
        %v7322 = vadd.f32 %v7233, %v7321
        %7323 = vmatmul.bf16.gmra.mxu0 %v6317
        %v7324 = vpop.f32.mrf.mxu0
        %v7325 = vadd.f32 %v7236, %v7324
        %v7326 = vpop.f32.mrf.mxu0
        %v7327 = vadd.f32 %v7238, %v7326
        %7328 = vmatmul.bf16.gmra.mxu0 %v6321
        %v7329 = vpop.f32.mrf.mxu0
        %v7330 = vadd.f32 %v7241, %v7329
        %v7331 = vpop.f32.mrf.mxu0
        %v7332 = vadd.f32 %v7243, %v7331
        %7333 = vmatmul.bf16.gmra.mxu0 %v6325
        %v7334 = vpop.f32.mrf.mxu0
        %v7335 = vadd.f32 %v7246, %v7334
        %v7336 = vpop.f32.mrf.mxu0
        %v7337 = vadd.f32 %v7248, %v7336
        %7338 = vmatmul.bf16.gmra.mxu0 %v6329
        %v7339 = vpop.f32.mrf.mxu0
        %v7340 = vadd.f32 %v7251, %v7339
        %v7341 = vpop.f32.mrf.mxu0
        %v7342 = vadd.f32 %v7253, %v7341
        %7343 = vdwg.mxu0
        %7344 = vmatpush.bf16.msra.mxu0 %v6656
        %7345 = vmatpush.bf16.msra.mxu0 %v6654
        %7346 = vmatpush.bf16.msra.mxu0 %v6652
        %7347 = vmatpush.bf16.msra.mxu0 %v6650
        %7348 = vmatpush.bf16.msra.mxu0 %v6648
        %7349 = vmatpush.bf16.msra.mxu0 %v6646
        %7350 = vmatpush.bf16.msra.mxu0 %v6644
        %7351 = vmatpush.bf16.msra.mxu0 %v6642
        %7352 = vmatmul.bf16.gmra.mxu0 %v6270
        %v7353 = vpop.f32.mrf.mxu0
        %v7354 = vadd.f32 %v7265, %v7353
        %v7355 = vpop.f32.mrf.mxu0
        %v7356 = vadd.f32 %v7267, %v7355
        %7357 = vmatmul.bf16.gmra.mxu0 %v6274
        %v7358 = vpop.f32.mrf.mxu0
        %v7359 = vadd.f32 %v7270, %v7358
        %v7360 = vpop.f32.mrf.mxu0
        %v7361 = vadd.f32 %v7272, %v7360
        %7362 = vmatmul.bf16.gmra.mxu0 %v6278
        %v7363 = vpop.f32.mrf.mxu0
        %v7364 = vadd.f32 %v7275, %v7363
        %v7365 = vpop.f32.mrf.mxu0
        %v7366 = vadd.f32 %v7277, %v7365
        %7367 = vmatmul.bf16.gmra.mxu0 %v6282
        %v7368 = vpop.f32.mrf.mxu0
        %v7369 = vadd.f32 %v7280, %v7368
        %v7370 = vpop.f32.mrf.mxu0
        %v7371 = vadd.f32 %v7282, %v7370
        %7372 = vmatmul.bf16.gmra.mxu0 %v6286
        %v7373 = vpop.f32.mrf.mxu0
        %v7374 = vadd.f32 %v7285, %v7373
        %v7375 = vpop.f32.mrf.mxu0
        %v7376 = vadd.f32 %v7287, %v7375
        %7377 = vmatmul.bf16.gmra.mxu0 %v6290
        %v7378 = vpop.f32.mrf.mxu0
        %v7379 = vadd.f32 %v7290, %v7378
        %v7380 = vpop.f32.mrf.mxu0
        %v7381 = vadd.f32 %v7292, %v7380
        %7382 = vmatmul.bf16.gmra.mxu0 %v6294
        %v7383 = vpop.f32.mrf.mxu0
        %v7384 = vadd.f32 %v7295, %v7383
        %v7385 = vpop.f32.mrf.mxu0
        %v7386 = vadd.f32 %v7297, %v7385
        %7387 = vmatmul.bf16.gmra.mxu0 %v6298
        %v7388 = vpop.f32.mrf.mxu0
        %v7389 = vadd.f32 %v7300, %v7388
        %v7390 = vpop.f32.mrf.mxu0
        %v7391 = vadd.f32 %v7302, %v7390
        %7392 = vmatmul.bf16.gmra.mxu0 %v6302
        %v7393 = vpop.f32.mrf.mxu0
        %v7394 = vadd.f32 %v7305, %v7393
        %v7395 = vpop.f32.mrf.mxu0
        %v7396 = vadd.f32 %v7307, %v7395
        %7397 = vmatmul.bf16.gmra.mxu0 %v6306
        %v7398 = vpop.f32.mrf.mxu0
        %v7399 = vadd.f32 %v7310, %v7398
        %v7400 = vpop.f32.mrf.mxu0
        %v7401 = vadd.f32 %v7312, %v7400
        %7402 = vmatmul.bf16.gmra.mxu0 %v6310
        %v7403 = vpop.f32.mrf.mxu0
        %v7404 = vadd.f32 %v7315, %v7403
        %v7405 = vpop.f32.mrf.mxu0
        %v7406 = vadd.f32 %v7317, %v7405
        %7407 = vmatmul.bf16.gmra.mxu0 %v6314
        %v7408 = vpop.f32.mrf.mxu0
        %v7409 = vadd.f32 %v7320, %v7408
        %v7410 = vpop.f32.mrf.mxu0
        %v7411 = vadd.f32 %v7322, %v7410
        %7412 = vmatmul.bf16.gmra.mxu0 %v6318
        %v7413 = vpop.f32.mrf.mxu0
        %v7414 = vadd.f32 %v7325, %v7413
        %v7415 = vpop.f32.mrf.mxu0
        %v7416 = vadd.f32 %v7327, %v7415
        %7417 = vmatmul.bf16.gmra.mxu0 %v6322
        %v7418 = vpop.f32.mrf.mxu0
        %v7419 = vadd.f32 %v7330, %v7418
        %v7420 = vpop.f32.mrf.mxu0
        %v7421 = vadd.f32 %v7332, %v7420
        %7422 = vmatmul.bf16.gmra.mxu0 %v6326
        %v7423 = vpop.f32.mrf.mxu0
        %v7424 = vadd.f32 %v7335, %v7423
        %v7425 = vpop.f32.mrf.mxu0
        %v7426 = vadd.f32 %v7337, %v7425
        %7427 = vmatmul.bf16.gmra.mxu0 %v6330
        %v7428 = vpop.f32.mrf.mxu0
        %v7429 = vadd.f32 %v7340, %v7428
        %v7430 = vpop.f32.mrf.mxu0
        %v7431 = vadd.f32 %v7342, %v7430
        %7432 = vdwg.mxu0
        %v7433 = vmul.f32 %v6998, 0.2
        %v7434 = vmul.f32 %v7354, 0.2
        %v7435 = vmul.f32 %v7000, 0.2
        %v7436 = vmul.f32 %v7356, 0.2
        %v7437 = vmul.f32 %v7003, 0.2
        %v7438 = vmul.f32 %v7359, 0.2
        %v7439 = vmul.f32 %v7005, 0.2
        %v7440 = vmul.f32 %v7361, 0.2
        %v7441 = vmul.f32 %v7008, 0.2
        %v7442 = vmul.f32 %v7364, 0.2
        %v7443 = vmul.f32 %v7010, 0.2
        %v7444 = vmul.f32 %v7366, 0.2
        %v7445 = vmul.f32 %v7013, 0.2
        %v7446 = vmul.f32 %v7369, 0.2
        %v7447 = vmul.f32 %v7015, 0.2
        %v7448 = vmul.f32 %v7371, 0.2
        %v7449 = vmul.f32 %v7018, 0.2
        %v7450 = vmul.f32 %v7374, 0.2
        %v7451 = vmul.f32 %v7020, 0.2
        %v7452 = vmul.f32 %v7376, 0.2
        %v7453 = vmul.f32 %v7023, 0.2
        %v7454 = vmul.f32 %v7379, 0.2
        %v7455 = vmul.f32 %v7025, 0.2
        %v7456 = vmul.f32 %v7381, 0.2
        %v7457 = vmul.f32 %v7028, 0.2
        %v7458 = vmul.f32 %v7384, 0.2
        %v7459 = vmul.f32 %v7030, 0.2
        %v7460 = vmul.f32 %v7386, 0.2
        %v7461 = vmul.f32 %v7033, 0.2
        %v7462 = vmul.f32 %v7389, 0.2
        %v7463 = vmul.f32 %v7035, 0.2
        %v7464 = vmul.f32 %v7391, 0.2
        %v7465 = vmul.f32 %v7038, 0.2
        %v7466 = vmul.f32 %v7394, 0.2
        %v7467 = vmul.f32 %v7040, 0.2
        %v7468 = vmul.f32 %v7396, 0.2
        %v7469 = vmul.f32 %v7043, 0.2
        %v7470 = vmul.f32 %v7399, 0.2
        %v7471 = vmul.f32 %v7045, 0.2
        %v7472 = vmul.f32 %v7401, 0.2
        %v7473 = vmul.f32 %v7048, 0.2
        %v7474 = vmul.f32 %v7404, 0.2
        %v7475 = vmul.f32 %v7050, 0.2
        %v7476 = vmul.f32 %v7406, 0.2
        %v7477 = vmul.f32 %v7053, 0.2
        %v7478 = vmul.f32 %v7409, 0.2
        %v7479 = vmul.f32 %v7055, 0.2
        %v7480 = vmul.f32 %v7411, 0.2
        %v7481 = vmul.f32 %v7058, 0.2
        %v7482 = vmul.f32 %v7414, 0.2
        %v7483 = vmul.f32 %v7060, 0.2
        %v7484 = vmul.f32 %v7416, 0.2
        %v7485 = vmul.f32 %v7063, 0.2
        %v7486 = vmul.f32 %v7419, 0.2
        %v7487 = vmul.f32 %v7065, 0.2
        %v7488 = vmul.f32 %v7421, 0.2
        %v7489 = vmul.f32 %v7068, 0.2
        %v7490 = vmul.f32 %v7424, 0.2
        %v7491 = vmul.f32 %v7070, 0.2
        %v7492 = vmul.f32 %v7426, 0.2
        %v7493 = vmul.f32 %v7073, 0.2
        %v7494 = vmul.f32 %v7429, 0.2
        %v7495 = vmul.f32 %v7075, 0.2
        %v7496 = vmul.f32 %v7431, 0.2
        %v7497 = vmax.f32 %v6998, %v7433
        %v7498 = vmax.f32 %v7354, %v7434
        %v7499 = vmax.f32 %v7000, %v7435
        %v7500 = vmax.f32 %v7356, %v7436
        %v7501 = vmax.f32 %v7003, %v7437
        %v7502 = vmax.f32 %v7359, %v7438
        %v7503 = vmax.f32 %v7005, %v7439
        %v7504 = vmax.f32 %v7361, %v7440
        %v7505 = vmax.f32 %v7008, %v7441
        %v7506 = vmax.f32 %v7364, %v7442
        %v7507 = vmax.f32 %v7010, %v7443
        %v7508 = vmax.f32 %v7366, %v7444
        %v7509 = vmax.f32 %v7013, %v7445
        %v7510 = vmax.f32 %v7369, %v7446
        %v7511 = vmax.f32 %v7015, %v7447
        %v7512 = vmax.f32 %v7371, %v7448
        %v7513 = vmax.f32 %v7018, %v7449
        %v7514 = vmax.f32 %v7374, %v7450
        %v7515 = vmax.f32 %v7020, %v7451
        %v7516 = vmax.f32 %v7376, %v7452
        %v7517 = vmax.f32 %v7023, %v7453
        %v7518 = vmax.f32 %v7379, %v7454
        %v7519 = vmax.f32 %v7025, %v7455
        %v7520 = vmax.f32 %v7381, %v7456
        %v7521 = vmax.f32 %v7028, %v7457
        %v7522 = vmax.f32 %v7384, %v7458
        %v7523 = vmax.f32 %v7030, %v7459
        %v7524 = vmax.f32 %v7386, %v7460
        %v7525 = vmax.f32 %v7033, %v7461
        %v7526 = vmax.f32 %v7389, %v7462
        %v7527 = vmax.f32 %v7035, %v7463
        %v7528 = vmax.f32 %v7391, %v7464
        %v7529 = vmax.f32 %v7038, %v7465
        %v7530 = vmax.f32 %v7394, %v7466
        %v7531 = vmax.f32 %v7040, %v7467
        %v7532 = vmax.f32 %v7396, %v7468
        %v7533 = vmax.f32 %v7043, %v7469
        %v7534 = vmax.f32 %v7399, %v7470
        %v7535 = vmax.f32 %v7045, %v7471
        %v7536 = vmax.f32 %v7401, %v7472
        %v7537 = vmax.f32 %v7048, %v7473
        %v7538 = vmax.f32 %v7404, %v7474
        %v7539 = vmax.f32 %v7050, %v7475
        %v7540 = vmax.f32 %v7406, %v7476
        %v7541 = vmax.f32 %v7053, %v7477
        %v7542 = vmax.f32 %v7409, %v7478
        %v7543 = vmax.f32 %v7055, %v7479
        %v7544 = vmax.f32 %v7411, %v7480
        %v7545 = vmax.f32 %v7058, %v7481
        %v7546 = vmax.f32 %v7414, %v7482
        %v7547 = vmax.f32 %v7060, %v7483
        %v7548 = vmax.f32 %v7416, %v7484
        %v7549 = vmax.f32 %v7063, %v7485
        %v7550 = vmax.f32 %v7419, %v7486
        %v7551 = vmax.f32 %v7065, %v7487
        %v7552 = vmax.f32 %v7421, %v7488
        %v7553 = vmax.f32 %v7068, %v7489
        %v7554 = vmax.f32 %v7424, %v7490
        %v7555 = vmax.f32 %v7070, %v7491
        %v7556 = vmax.f32 %v7426, %v7492
        %v7557 = vmax.f32 %v7073, %v7493
        %v7558 = vmax.f32 %v7429, %v7494
        %v7559 = vmax.f32 %v7075, %v7495
        %v7560 = vmax.f32 %v7431, %v7496
        %v7561 = vpack.c.bf16 %v7499, %v7497
        %v7562 = vpack.c.bf16 %v7500, %v7498
        %v7563 = vpack.c.bf16 %v7503, %v7501
        %v7564 = vpack.c.bf16 %v7504, %v7502
        %v7565 = vpack.c.bf16 %v7507, %v7505
        %v7566 = vpack.c.bf16 %v7508, %v7506
        %v7567 = vpack.c.bf16 %v7511, %v7509
        %v7568 = vpack.c.bf16 %v7512, %v7510
        %v7569 = vpack.c.bf16 %v7515, %v7513
        %v7570 = vpack.c.bf16 %v7516, %v7514
        %v7571 = vpack.c.bf16 %v7519, %v7517
        %v7572 = vpack.c.bf16 %v7520, %v7518
        %v7573 = vpack.c.bf16 %v7523, %v7521
        %v7574 = vpack.c.bf16 %v7524, %v7522
        %v7575 = vpack.c.bf16 %v7527, %v7525
        %v7576 = vpack.c.bf16 %v7528, %v7526
        %v7577 = vpack.c.bf16 %v7531, %v7529
        %v7578 = vpack.c.bf16 %v7532, %v7530
        %v7579 = vpack.c.bf16 %v7535, %v7533
        %v7580 = vpack.c.bf16 %v7536, %v7534
        %v7581 = vpack.c.bf16 %v7539, %v7537
        %v7582 = vpack.c.bf16 %v7540, %v7538
        %v7583 = vpack.c.bf16 %v7543, %v7541
        %v7584 = vpack.c.bf16 %v7544, %v7542
        %v7585 = vpack.c.bf16 %v7547, %v7545
        %v7586 = vpack.c.bf16 %v7548, %v7546
        %v7587 = vpack.c.bf16 %v7551, %v7549
        %v7588 = vpack.c.bf16 %v7552, %v7550
        %v7589 = vpack.c.bf16 %v7555, %v7553
        %v7590 = vpack.c.bf16 %v7556, %v7554
        %v7591 = vpack.c.bf16 %v7559, %v7557
        %v7592 = vpack.c.bf16 %v7560, %v7558
        %v7593 = vld [vmem:[#allocation13] sm:$0xf]
        %v7594 = vld [vmem:[#allocation13 + $0x4] sm:$0xf]
        %v7595 = vld [vmem:[#allocation13 + $0x8] sm:$0xf]
        %v7596 = vld [vmem:[#allocation13 + $0xc] sm:$0xf]
        %v7597 = vld [vmem:[#allocation13 + $0x10] sm:$0xf]
        %v7598 = vld [vmem:[#allocation13 + $0x14] sm:$0xf]
        %v7599 = vld [vmem:[#allocation13 + $0x18] sm:$0xf]
        %v7600 = vld [vmem:[#allocation13 + $0x1c] sm:$0xf]
        %v7601 = vld [vmem:[#allocation13 + $0x20] sm:$0xf]
        %v7602 = vld [vmem:[#allocation13 + $0x24] sm:$0xf]
        %v7603 = vld [vmem:[#allocation13 + $0x28] sm:$0xf]
        %v7604 = vld [vmem:[#allocation13 + $0x2c] sm:$0xf]
        %v7605 = vld [vmem:[#allocation13 + $0x30] sm:$0xf]
        %v7606 = vld [vmem:[#allocation13 + $0x34] sm:$0xf]
        %v7607 = vld [vmem:[#allocation13 + $0x38] sm:$0xf]
        %v7608 = vld [vmem:[#allocation13 + $0x3c] sm:$0xf]
        %v7609 = vld [vmem:[#allocation13 + $0x40] sm:$0xf]
        %v7610 = vld [vmem:[#allocation13 + $0x44] sm:$0xf]
        %v7611 = vld [vmem:[#allocation13 + $0x48] sm:$0xf]
        %v7612 = vld [vmem:[#allocation13 + $0x4c] sm:$0xf]
        %v7613 = vld [vmem:[#allocation13 + $0x50] sm:$0xf]
        %v7614 = vld [vmem:[#allocation13 + $0x54] sm:$0xf]
        %v7615 = vld [vmem:[#allocation13 + $0x58] sm:$0xf]
        %v7616 = vld [vmem:[#allocation13 + $0x5c] sm:$0xf]
        %v7617 = vld [vmem:[#allocation13 + $0x60] sm:$0xf]
        %v7618 = vld [vmem:[#allocation13 + $0x64] sm:$0xf]
        %v7619 = vld [vmem:[#allocation13 + $0x68] sm:$0xf]
        %v7620 = vld [vmem:[#allocation13 + $0x6c] sm:$0xf]
        %v7621 = vld [vmem:[#allocation13 + $0x70] sm:$0xf]
        %v7622 = vld [vmem:[#allocation13 + $0x74] sm:$0xf]
        %v7623 = vld [vmem:[#allocation13 + $0x78] sm:$0xf]
        %v7624 = vld [vmem:[#allocation13 + $0x7c] sm:$0xf]
        %v7625 = vld [vmem:[#allocation15] sm:$0x1]
        %v7627 = vperm.slane %v7625, 0
        %v7661 = vunpack.c.l.b16 %v7593
        %v7662 = vunpack.c.l.b16 %v7594
        %v7663 = vunpack.c.l.b16 %v7595
        %v7664 = vunpack.c.l.b16 %v7596
        %v7665 = vunpack.c.l.b16 %v7597
        %v7666 = vunpack.c.l.b16 %v7598
        %v7667 = vunpack.c.l.b16 %v7599
        %v7668 = vunpack.c.l.b16 %v7600
        %v7669 = vunpack.c.l.b16 %v7601
        %v7670 = vunpack.c.l.b16 %v7602
        %v7671 = vunpack.c.l.b16 %v7603
        %v7672 = vunpack.c.l.b16 %v7604
        %v7673 = vunpack.c.l.b16 %v7605
        %v7674 = vunpack.c.l.b16 %v7606
        %v7675 = vunpack.c.l.b16 %v7607
        %v7676 = vunpack.c.l.b16 %v7608
        %v7677 = vunpack.c.l.b16 %v7609
        %v7678 = vunpack.c.l.b16 %v7610
        %v7679 = vunpack.c.l.b16 %v7611
        %v7680 = vunpack.c.l.b16 %v7612
        %v7681 = vunpack.c.l.b16 %v7613
        %v7682 = vunpack.c.l.b16 %v7614
        %v7683 = vunpack.c.l.b16 %v7615
        %v7684 = vunpack.c.l.b16 %v7616
        %v7685 = vunpack.c.l.b16 %v7617
        %v7686 = vunpack.c.l.b16 %v7618
        %v7687 = vunpack.c.l.b16 %v7619
        %v7688 = vunpack.c.l.b16 %v7620
        %v7689 = vunpack.c.l.b16 %v7621
        %v7690 = vunpack.c.l.b16 %v7622
        %v7691 = vunpack.c.l.b16 %v7623
        %v7692 = vunpack.c.l.b16 %v7624
        %v7693 = vpack.c.b16 %v7662, %v7661
        %v7694 = vpack.c.b16 %v7664, %v7663
        %v7695 = vpack.c.b16 %v7666, %v7665
        %v7696 = vpack.c.b16 %v7668, %v7667
        %v7697 = vpack.c.b16 %v7670, %v7669
        %v7698 = vpack.c.b16 %v7672, %v7671
        %v7699 = vpack.c.b16 %v7674, %v7673
        %v7700 = vpack.c.b16 %v7676, %v7675
        %v7701 = vpack.c.b16 %v7678, %v7677
        %v7702 = vpack.c.b16 %v7680, %v7679
        %v7703 = vpack.c.b16 %v7682, %v7681
        %v7704 = vpack.c.b16 %v7684, %v7683
        %v7705 = vpack.c.b16 %v7686, %v7685
        %v7706 = vpack.c.b16 %v7688, %v7687
        %v7707 = vpack.c.b16 %v7690, %v7689
        %v7708 = vpack.c.b16 %v7692, %v7691
        %7725 = vmatpush.bf16.msra.mxu0 %v7700
        %7726 = vmatpush.bf16.msra.mxu0 %v7699
        %7727 = vmatpush.bf16.msra.mxu0 %v7698
        %7728 = vmatpush.bf16.msra.mxu0 %v7697
        %7729 = vmatpush.bf16.msra.mxu0 %v7696
        %7730 = vmatpush.bf16.msra.mxu0 %v7695
        %7731 = vmatpush.bf16.msra.mxu0 %v7694
        %7732 = vmatpush.bf16.msra.mxu0 %v7693
        %7733 = vmatmul.bf16.gmra.mxu0 %v7561
        %v7734 = vpop.f32.mrf.mxu0
        %v7735 = vadd.f32 %v7627, %v7734
        %v7736 = vpop.f32.mrf.mxu0
        %v7737 = vadd.f32 %v7627, %v7736
        %7738 = vmatmul.bf16.gmra.mxu0 %v7563
        %v7739 = vpop.f32.mrf.mxu0
        %v7740 = vadd.f32 %v7627, %v7739
        %v7741 = vpop.f32.mrf.mxu0
        %v7742 = vadd.f32 %v7627, %v7741
        %7743 = vmatmul.bf16.gmra.mxu0 %v7565
        %v7744 = vpop.f32.mrf.mxu0
        %v7745 = vadd.f32 %v7627, %v7744
        %v7746 = vpop.f32.mrf.mxu0
        %v7747 = vadd.f32 %v7627, %v7746
        %7748 = vmatmul.bf16.gmra.mxu0 %v7567
        %v7749 = vpop.f32.mrf.mxu0
        %v7750 = vadd.f32 %v7627, %v7749
        %v7751 = vpop.f32.mrf.mxu0
        %v7752 = vadd.f32 %v7627, %v7751
        %7753 = vmatmul.bf16.gmra.mxu0 %v7569
        %v7754 = vpop.f32.mrf.mxu0
        %v7755 = vadd.f32 %v7627, %v7754
        %v7756 = vpop.f32.mrf.mxu0
        %v7757 = vadd.f32 %v7627, %v7756
        %7758 = vmatmul.bf16.gmra.mxu0 %v7571
        %v7759 = vpop.f32.mrf.mxu0
        %v7760 = vadd.f32 %v7627, %v7759
        %v7761 = vpop.f32.mrf.mxu0
        %v7762 = vadd.f32 %v7627, %v7761
        %7763 = vmatmul.bf16.gmra.mxu0 %v7573
        %v7764 = vpop.f32.mrf.mxu0
        %v7765 = vadd.f32 %v7627, %v7764
        %v7766 = vpop.f32.mrf.mxu0
        %v7767 = vadd.f32 %v7627, %v7766
        %7768 = vmatmul.bf16.gmra.mxu0 %v7575
        %v7769 = vpop.f32.mrf.mxu0
        %v7770 = vadd.f32 %v7627, %v7769
        %v7771 = vpop.f32.mrf.mxu0
        %v7772 = vadd.f32 %v7627, %v7771
        %7773 = vmatmul.bf16.gmra.mxu0 %v7577
        %v7774 = vpop.f32.mrf.mxu0
        %v7775 = vadd.f32 %v7627, %v7774
        %v7776 = vpop.f32.mrf.mxu0
        %v7777 = vadd.f32 %v7627, %v7776
        %7778 = vmatmul.bf16.gmra.mxu0 %v7579
        %v7779 = vpop.f32.mrf.mxu0
        %v7780 = vadd.f32 %v7627, %v7779
        %v7781 = vpop.f32.mrf.mxu0
        %v7782 = vadd.f32 %v7627, %v7781
        %7783 = vmatmul.bf16.gmra.mxu0 %v7581
        %v7784 = vpop.f32.mrf.mxu0
        %v7785 = vadd.f32 %v7627, %v7784
        %v7786 = vpop.f32.mrf.mxu0
        %v7787 = vadd.f32 %v7627, %v7786
        %7788 = vmatmul.bf16.gmra.mxu0 %v7583
        %v7789 = vpop.f32.mrf.mxu0
        %v7790 = vadd.f32 %v7627, %v7789
        %v7791 = vpop.f32.mrf.mxu0
        %v7792 = vadd.f32 %v7627, %v7791
        %7793 = vmatmul.bf16.gmra.mxu0 %v7585
        %v7794 = vpop.f32.mrf.mxu0
        %v7795 = vadd.f32 %v7627, %v7794
        %v7796 = vpop.f32.mrf.mxu0
        %v7797 = vadd.f32 %v7627, %v7796
        %7798 = vmatmul.bf16.gmra.mxu0 %v7587
        %v7799 = vpop.f32.mrf.mxu0
        %v7800 = vadd.f32 %v7627, %v7799
        %v7801 = vpop.f32.mrf.mxu0
        %v7802 = vadd.f32 %v7627, %v7801
        %7803 = vmatmul.bf16.gmra.mxu0 %v7589
        %v7804 = vpop.f32.mrf.mxu0
        %v7805 = vadd.f32 %v7627, %v7804
        %v7806 = vpop.f32.mrf.mxu0
        %v7807 = vadd.f32 %v7627, %v7806
        %7808 = vmatmul.bf16.gmra.mxu0 %v7591
        %v7809 = vpop.f32.mrf.mxu0
        %v7810 = vadd.f32 %v7627, %v7809
        %v7811 = vpop.f32.mrf.mxu0
        %v7812 = vadd.f32 %v7627, %v7811
        %7813 = vdwg.mxu0
        %7814 = vmatpush.bf16.msra.mxu0 %v7708
        %7815 = vmatpush.bf16.msra.mxu0 %v7707
        %7816 = vmatpush.bf16.msra.mxu0 %v7706
        %7817 = vmatpush.bf16.msra.mxu0 %v7705
        %7818 = vmatpush.bf16.msra.mxu0 %v7704
        %7819 = vmatpush.bf16.msra.mxu0 %v7703
        %7820 = vmatpush.bf16.msra.mxu0 %v7702
        %7821 = vmatpush.bf16.msra.mxu0 %v7701
        %7822 = vmatmul.bf16.gmra.mxu0 %v7562
        %v7823 = vpop.f32.mrf.mxu0
        %v7824 = vadd.f32 %v7735, %v7823
        %v7825 = vpop.f32.mrf.mxu0
        %v7826 = vadd.f32 %v7737, %v7825
        %7827 = vmatmul.bf16.gmra.mxu0 %v7564
        %v7828 = vpop.f32.mrf.mxu0
        %v7829 = vadd.f32 %v7740, %v7828
        %v7830 = vpop.f32.mrf.mxu0
        %v7831 = vadd.f32 %v7742, %v7830
        %7832 = vmatmul.bf16.gmra.mxu0 %v7566
        %v7833 = vpop.f32.mrf.mxu0
        %v7834 = vadd.f32 %v7745, %v7833
        %v7835 = vpop.f32.mrf.mxu0
        %v7836 = vadd.f32 %v7747, %v7835
        %7837 = vmatmul.bf16.gmra.mxu0 %v7568
        %v7838 = vpop.f32.mrf.mxu0
        %v7839 = vadd.f32 %v7750, %v7838
        %v7840 = vpop.f32.mrf.mxu0
        %v7841 = vadd.f32 %v7752, %v7840
        %7842 = vmatmul.bf16.gmra.mxu0 %v7570
        %v7843 = vpop.f32.mrf.mxu0
        %v7844 = vadd.f32 %v7755, %v7843
        %v7845 = vpop.f32.mrf.mxu0
        %v7846 = vadd.f32 %v7757, %v7845
        %7847 = vmatmul.bf16.gmra.mxu0 %v7572
        %v7848 = vpop.f32.mrf.mxu0
        %v7849 = vadd.f32 %v7760, %v7848
        %v7850 = vpop.f32.mrf.mxu0
        %v7851 = vadd.f32 %v7762, %v7850
        %7852 = vmatmul.bf16.gmra.mxu0 %v7574
        %v7853 = vpop.f32.mrf.mxu0
        %v7854 = vadd.f32 %v7765, %v7853
        %v7855 = vpop.f32.mrf.mxu0
        %v7856 = vadd.f32 %v7767, %v7855
        %7857 = vmatmul.bf16.gmra.mxu0 %v7576
        %v7858 = vpop.f32.mrf.mxu0
        %v7859 = vadd.f32 %v7770, %v7858
        %v7860 = vpop.f32.mrf.mxu0
        %v7861 = vadd.f32 %v7772, %v7860
        %7862 = vmatmul.bf16.gmra.mxu0 %v7578
        %v7863 = vpop.f32.mrf.mxu0
        %v7864 = vadd.f32 %v7775, %v7863
        %v7865 = vpop.f32.mrf.mxu0
        %v7866 = vadd.f32 %v7777, %v7865
        %7867 = vmatmul.bf16.gmra.mxu0 %v7580
        %v7868 = vpop.f32.mrf.mxu0
        %v7869 = vadd.f32 %v7780, %v7868
        %v7870 = vpop.f32.mrf.mxu0
        %v7871 = vadd.f32 %v7782, %v7870
        %7872 = vmatmul.bf16.gmra.mxu0 %v7582
        %v7873 = vpop.f32.mrf.mxu0
        %v7874 = vadd.f32 %v7785, %v7873
        %v7875 = vpop.f32.mrf.mxu0
        %v7876 = vadd.f32 %v7787, %v7875
        %7877 = vmatmul.bf16.gmra.mxu0 %v7584
        %v7878 = vpop.f32.mrf.mxu0
        %v7879 = vadd.f32 %v7790, %v7878
        %v7880 = vpop.f32.mrf.mxu0
        %v7881 = vadd.f32 %v7792, %v7880
        %7882 = vmatmul.bf16.gmra.mxu0 %v7586
        %v7883 = vpop.f32.mrf.mxu0
        %v7884 = vadd.f32 %v7795, %v7883
        %v7885 = vpop.f32.mrf.mxu0
        %v7886 = vadd.f32 %v7797, %v7885
        %7887 = vmatmul.bf16.gmra.mxu0 %v7588
        %v7888 = vpop.f32.mrf.mxu0
        %v7889 = vadd.f32 %v7800, %v7888
        %v7890 = vpop.f32.mrf.mxu0
        %v7891 = vadd.f32 %v7802, %v7890
        %7892 = vmatmul.bf16.gmra.mxu0 %v7590
        %v7893 = vpop.f32.mrf.mxu0
        %v7894 = vadd.f32 %v7805, %v7893
        %v7895 = vpop.f32.mrf.mxu0
        %v7896 = vadd.f32 %v7807, %v7895
        %7897 = vmatmul.bf16.gmra.mxu0 %v7592
        %v7898 = vpop.f32.mrf.mxu0
        %v7899 = vadd.f32 %v7810, %v7898
        %v7900 = vpop.f32.mrf.mxu0
        %v7901 = vadd.f32 %v7812, %v7900
        %7902 = vdwg.mxu0
        %v7903 = vmul.f32 %v7824, 0.2
        %v7904 = vmul.f32 %v7826, 0.2
        %v7905 = vmul.f32 %v7829, 0.2
        %v7906 = vmul.f32 %v7831, 0.2
        %v7907 = vmul.f32 %v7834, 0.2
        %v7908 = vmul.f32 %v7836, 0.2
        %v7909 = vmul.f32 %v7839, 0.2
        %v7910 = vmul.f32 %v7841, 0.2
        %v7911 = vmul.f32 %v7844, 0.2
        %v7912 = vmul.f32 %v7846, 0.2
        %v7913 = vmul.f32 %v7849, 0.2
        %v7914 = vmul.f32 %v7851, 0.2
        %v7915 = vmul.f32 %v7854, 0.2
        %v7916 = vmul.f32 %v7856, 0.2
        %v7917 = vmul.f32 %v7859, 0.2
        %v7918 = vmul.f32 %v7861, 0.2
        %v7919 = vmul.f32 %v7864, 0.2
        %v7920 = vmul.f32 %v7866, 0.2
        %v7921 = vmul.f32 %v7869, 0.2
        %v7922 = vmul.f32 %v7871, 0.2
        %v7923 = vmul.f32 %v7874, 0.2
        %v7924 = vmul.f32 %v7876, 0.2
        %v7925 = vmul.f32 %v7879, 0.2
        %v7926 = vmul.f32 %v7881, 0.2
        %v7927 = vmul.f32 %v7884, 0.2
        %v7928 = vmul.f32 %v7886, 0.2
        %v7929 = vmul.f32 %v7889, 0.2
        %v7930 = vmul.f32 %v7891, 0.2
        %v7931 = vmul.f32 %v7894, 0.2
        %v7932 = vmul.f32 %v7896, 0.2
        %v7933 = vmul.f32 %v7899, 0.2
        %v7934 = vmul.f32 %v7901, 0.2
        %v7935 = vmax.f32 %v7824, %v7903
        %v7936 = vmax.f32 %v7826, %v7904
        %v7937 = vmax.f32 %v7829, %v7905
        %v7938 = vmax.f32 %v7831, %v7906
        %v7939 = vmax.f32 %v7834, %v7907
        %v7940 = vmax.f32 %v7836, %v7908
        %v7941 = vmax.f32 %v7839, %v7909
        %v7942 = vmax.f32 %v7841, %v7910
        %v7943 = vmax.f32 %v7844, %v7911
        %v7944 = vmax.f32 %v7846, %v7912
        %v7945 = vmax.f32 %v7849, %v7913
        %v7946 = vmax.f32 %v7851, %v7914
        %v7947 = vmax.f32 %v7854, %v7915
        %v7948 = vmax.f32 %v7856, %v7916
        %v7949 = vmax.f32 %v7859, %v7917
        %v7950 = vmax.f32 %v7861, %v7918
        %v7951 = vmax.f32 %v7864, %v7919
        %v7952 = vmax.f32 %v7866, %v7920
        %v7953 = vmax.f32 %v7869, %v7921
        %v7954 = vmax.f32 %v7871, %v7922
        %v7955 = vmax.f32 %v7874, %v7923
        %v7956 = vmax.f32 %v7876, %v7924
        %v7957 = vmax.f32 %v7879, %v7925
        %v7958 = vmax.f32 %v7881, %v7926
        %v7959 = vmax.f32 %v7884, %v7927
        %v7960 = vmax.f32 %v7886, %v7928
        %v7961 = vmax.f32 %v7889, %v7929
        %v7962 = vmax.f32 %v7891, %v7930
        %v7963 = vmax.f32 %v7894, %v7931
        %v7964 = vmax.f32 %v7896, %v7932
        %v7965 = vmax.f32 %v7899, %v7933
        %v7966 = vmax.f32 %v7901, %v7934
        %v7967 = vpack.c.bf16 %v7936, %v7935
        %v7968 = vpack.c.bf16 %v7938, %v7937
        %v7969 = vpack.c.bf16 %v7940, %v7939
        %v7970 = vpack.c.bf16 %v7942, %v7941
        %v7971 = vpack.c.bf16 %v7944, %v7943
        %v7972 = vpack.c.bf16 %v7946, %v7945
        %v7973 = vpack.c.bf16 %v7948, %v7947
        %v7974 = vpack.c.bf16 %v7950, %v7949
        %v7975 = vpack.c.bf16 %v7952, %v7951
        %v7976 = vpack.c.bf16 %v7954, %v7953
        %v7977 = vpack.c.bf16 %v7956, %v7955
        %v7978 = vpack.c.bf16 %v7958, %v7957
        %v7979 = vpack.c.bf16 %v7960, %v7959
        %v7980 = vpack.c.bf16 %v7962, %v7961
        %v7981 = vpack.c.bf16 %v7964, %v7963
        %v7982 = vpack.c.bf16 %v7966, %v7965
        %v7983 = vld [vmem:[#allocation16] sm:$0xf]
        %v7984 = vld [vmem:[#allocation16 + $0x4] sm:$0xf]
        %v7985 = vld [vmem:[#allocation16 + $0x8] sm:$0xf]
        %v7986 = vld [vmem:[#allocation16 + $0xc] sm:$0xf]
        %v7987 = vld [vmem:[#allocation16 + $0x10] sm:$0xf]
        %v7988 = vld [vmem:[#allocation16 + $0x14] sm:$0xf]
        %v7989 = vld [vmem:[#allocation16 + $0x18] sm:$0xf]
        %v7990 = vld [vmem:[#allocation16 + $0x1c] sm:$0xf]
        %v7991 = vld [vmem:[#allocation16 + $0x20] sm:$0xf]
        %v7992 = vld [vmem:[#allocation16 + $0x24] sm:$0xf]
        %v7993 = vld [vmem:[#allocation16 + $0x28] sm:$0xf]
        %v7994 = vld [vmem:[#allocation16 + $0x2c] sm:$0xf]
        %v7995 = vld [vmem:[#allocation16 + $0x30] sm:$0xf]
        %v7996 = vld [vmem:[#allocation16 + $0x34] sm:$0xf]
        %v7997 = vld [vmem:[#allocation16 + $0x38] sm:$0xf]
        %v7998 = vld [vmem:[#allocation16 + $0x3c] sm:$0xf]
        %v7999 = vld [vmem:[#allocation18] sm:$0x1]
        %v8001 = vperm.slane %v7999, 0
        %v8019 = vunpack.c.l.b16 %v7983
        %v8020 = vunpack.c.l.b16 %v7984
        %v8021 = vunpack.c.l.b16 %v7985
        %v8022 = vunpack.c.l.b16 %v7986
        %v8023 = vunpack.c.l.b16 %v7987
        %v8024 = vunpack.c.l.b16 %v7988
        %v8025 = vunpack.c.l.b16 %v7989
        %v8026 = vunpack.c.l.b16 %v7990
        %v8027 = vunpack.c.l.b16 %v7991
        %v8028 = vunpack.c.l.b16 %v7992
        %v8029 = vunpack.c.l.b16 %v7993
        %v8030 = vunpack.c.l.b16 %v7994
        %v8031 = vunpack.c.l.b16 %v7995
        %v8032 = vunpack.c.l.b16 %v7996
        %v8033 = vunpack.c.l.b16 %v7997
        %v8034 = vunpack.c.l.b16 %v7998
        %v8035 = vpack.c.b16 %v8020, %v8019
        %v8036 = vpack.c.b16 %v8022, %v8021
        %v8037 = vpack.c.b16 %v8024, %v8023
        %v8038 = vpack.c.b16 %v8026, %v8025
        %v8039 = vpack.c.b16 %v8028, %v8027
        %v8040 = vpack.c.b16 %v8030, %v8029
        %v8041 = vpack.c.b16 %v8032, %v8031
        %v8042 = vpack.c.b16 %v8034, %v8033
        %8051 = vmatpush.bf16.msra.mxu0 %v8042
        %8052 = vmatpush.bf16.msra.mxu0 %v8041
        %8053 = vmatpush.bf16.msra.mxu0 %v8040
        %8054 = vmatpush.bf16.msra.mxu0 %v8039
        %8055 = vmatpush.bf16.msra.mxu0 %v8038
        %8056 = vmatpush.bf16.msra.mxu0 %v8037
        %8057 = vmatpush.bf16.msra.mxu0 %v8036
        %8058 = vmatpush.bf16.msra.mxu0 %v8035
        %8059 = vmatmul.bf16.gmra.mxu0 %v7967
        %v8060 = vpop.f32.mrf.mxu0
        %v8061 = vadd.f32 %v8001, %v8060
        %v8062 = vpop.f32.mrf.mxu0
        %v8063 = vadd.f32 %v8001, %v8062
        %8064 = vmatmul.bf16.gmra.mxu0 %v7968
        %v8065 = vpop.f32.mrf.mxu0
        %v8066 = vadd.f32 %v8001, %v8065
        %v8067 = vpop.f32.mrf.mxu0
        %v8068 = vadd.f32 %v8001, %v8067
        %8069 = vmatmul.bf16.gmra.mxu0 %v7969
        %v8070 = vpop.f32.mrf.mxu0
        %v8071 = vadd.f32 %v8001, %v8070
        %v8072 = vpop.f32.mrf.mxu0
        %v8073 = vadd.f32 %v8001, %v8072
        %8074 = vmatmul.bf16.gmra.mxu0 %v7970
        %v8075 = vpop.f32.mrf.mxu0
        %v8076 = vadd.f32 %v8001, %v8075
        %v8077 = vpop.f32.mrf.mxu0
        %v8078 = vadd.f32 %v8001, %v8077
        %8079 = vmatmul.bf16.gmra.mxu0 %v7971
        %v8080 = vpop.f32.mrf.mxu0
        %v8081 = vadd.f32 %v8001, %v8080
        %v8082 = vpop.f32.mrf.mxu0
        %v8083 = vadd.f32 %v8001, %v8082
        %8084 = vmatmul.bf16.gmra.mxu0 %v7972
        %v8085 = vpop.f32.mrf.mxu0
        %v8086 = vadd.f32 %v8001, %v8085
        %v8087 = vpop.f32.mrf.mxu0
        %v8088 = vadd.f32 %v8001, %v8087
        %8089 = vmatmul.bf16.gmra.mxu0 %v7973
        %v8090 = vpop.f32.mrf.mxu0
        %v8091 = vadd.f32 %v8001, %v8090
        %v8092 = vpop.f32.mrf.mxu0
        %v8093 = vadd.f32 %v8001, %v8092
        %8094 = vmatmul.bf16.gmra.mxu0 %v7974
        %v8095 = vpop.f32.mrf.mxu0
        %v8096 = vadd.f32 %v8001, %v8095
        %v8097 = vpop.f32.mrf.mxu0
        %v8098 = vadd.f32 %v8001, %v8097
        %8099 = vmatmul.bf16.gmra.mxu0 %v7975
        %v8100 = vpop.f32.mrf.mxu0
        %v8101 = vadd.f32 %v8001, %v8100
        %v8102 = vpop.f32.mrf.mxu0
        %v8103 = vadd.f32 %v8001, %v8102
        %8104 = vmatmul.bf16.gmra.mxu0 %v7976
        %v8105 = vpop.f32.mrf.mxu0
        %v8106 = vadd.f32 %v8001, %v8105
        %v8107 = vpop.f32.mrf.mxu0
        %v8108 = vadd.f32 %v8001, %v8107
        %8109 = vmatmul.bf16.gmra.mxu0 %v7977
        %v8110 = vpop.f32.mrf.mxu0
        %v8111 = vadd.f32 %v8001, %v8110
        %v8112 = vpop.f32.mrf.mxu0
        %v8113 = vadd.f32 %v8001, %v8112
        %8114 = vmatmul.bf16.gmra.mxu0 %v7978
        %v8115 = vpop.f32.mrf.mxu0
        %v8116 = vadd.f32 %v8001, %v8115
        %v8117 = vpop.f32.mrf.mxu0
        %v8118 = vadd.f32 %v8001, %v8117
        %8119 = vmatmul.bf16.gmra.mxu0 %v7979
        %v8120 = vpop.f32.mrf.mxu0
        %v8121 = vadd.f32 %v8001, %v8120
        %v8122 = vpop.f32.mrf.mxu0
        %v8123 = vadd.f32 %v8001, %v8122
        %8124 = vmatmul.bf16.gmra.mxu0 %v7980
        %v8125 = vpop.f32.mrf.mxu0
        %v8126 = vadd.f32 %v8001, %v8125
        %v8127 = vpop.f32.mrf.mxu0
        %v8128 = vadd.f32 %v8001, %v8127
        %8129 = vmatmul.bf16.gmra.mxu0 %v7981
        %v8130 = vpop.f32.mrf.mxu0
        %v8131 = vadd.f32 %v8001, %v8130
        %v8132 = vpop.f32.mrf.mxu0
        %v8133 = vadd.f32 %v8001, %v8132
        %8134 = vmatmul.bf16.gmra.mxu0 %v7982
        %v8135 = vpop.f32.mrf.mxu0
        %v8136 = vadd.f32 %v8001, %v8135
        %v8137 = vpop.f32.mrf.mxu0
        %v8138 = vadd.f32 %v8001, %v8137
        %8139 = vdwg.mxu0
        %v8140 = vmul.f32 %v8061, 0.2
        %v8141 = vmul.f32 %v8063, 0.2
        %v8142 = vmul.f32 %v8066, 0.2
        %v8143 = vmul.f32 %v8068, 0.2
        %v8144 = vmul.f32 %v8071, 0.2
        %v8145 = vmul.f32 %v8073, 0.2
        %v8146 = vmul.f32 %v8076, 0.2
        %v8147 = vmul.f32 %v8078, 0.2
        %v8148 = vmul.f32 %v8081, 0.2
        %v8149 = vmul.f32 %v8083, 0.2
        %v8150 = vmul.f32 %v8086, 0.2
        %v8151 = vmul.f32 %v8088, 0.2
        %v8152 = vmul.f32 %v8091, 0.2
        %v8153 = vmul.f32 %v8093, 0.2
        %v8154 = vmul.f32 %v8096, 0.2
        %v8155 = vmul.f32 %v8098, 0.2
        %v8156 = vmul.f32 %v8101, 0.2
        %v8157 = vmul.f32 %v8103, 0.2
        %v8158 = vmul.f32 %v8106, 0.2
        %v8159 = vmul.f32 %v8108, 0.2
        %v8160 = vmul.f32 %v8111, 0.2
        %v8161 = vmul.f32 %v8113, 0.2
        %v8162 = vmul.f32 %v8116, 0.2
        %v8163 = vmul.f32 %v8118, 0.2
        %v8164 = vmul.f32 %v8121, 0.2
        %v8165 = vmul.f32 %v8123, 0.2
        %v8166 = vmul.f32 %v8126, 0.2
        %v8167 = vmul.f32 %v8128, 0.2
        %v8168 = vmul.f32 %v8131, 0.2
        %v8169 = vmul.f32 %v8133, 0.2
        %v8170 = vmul.f32 %v8136, 0.2
        %v8171 = vmul.f32 %v8138, 0.2
        %v8172 = vmax.f32 %v8061, %v8140
        %v8173 = vmax.f32 %v8063, %v8141
        %v8174 = vmax.f32 %v8066, %v8142
        %v8175 = vmax.f32 %v8068, %v8143
        %v8176 = vmax.f32 %v8071, %v8144
        %v8177 = vmax.f32 %v8073, %v8145
        %v8178 = vmax.f32 %v8076, %v8146
        %v8179 = vmax.f32 %v8078, %v8147
        %v8180 = vmax.f32 %v8081, %v8148
        %v8181 = vmax.f32 %v8083, %v8149
        %v8182 = vmax.f32 %v8086, %v8150
        %v8183 = vmax.f32 %v8088, %v8151
        %v8184 = vmax.f32 %v8091, %v8152
        %v8185 = vmax.f32 %v8093, %v8153
        %v8186 = vmax.f32 %v8096, %v8154
        %v8187 = vmax.f32 %v8098, %v8155
        %v8188 = vmax.f32 %v8101, %v8156
        %v8189 = vmax.f32 %v8103, %v8157
        %v8190 = vmax.f32 %v8106, %v8158
        %v8191 = vmax.f32 %v8108, %v8159
        %v8192 = vmax.f32 %v8111, %v8160
        %v8193 = vmax.f32 %v8113, %v8161
        %v8194 = vmax.f32 %v8116, %v8162
        %v8195 = vmax.f32 %v8118, %v8163
        %v8196 = vmax.f32 %v8121, %v8164
        %v8197 = vmax.f32 %v8123, %v8165
        %v8198 = vmax.f32 %v8126, %v8166
        %v8199 = vmax.f32 %v8128, %v8167
        %v8200 = vmax.f32 %v8131, %v8168
        %v8201 = vmax.f32 %v8133, %v8169
        %v8202 = vmax.f32 %v8136, %v8170
        %v8203 = vmax.f32 %v8138, %v8171
        %v8204 = vpack.c.bf16 %v8172, %v8172
        %v8205 = vpack.c.bf16 %v8173, %v8173
        %v8206 = vpack.c.bf16 %v8174, %v8174
        %v8207 = vpack.c.bf16 %v8175, %v8175
        %v8208 = vpack.c.bf16 %v8176, %v8176
        %v8209 = vpack.c.bf16 %v8177, %v8177
        %v8210 = vpack.c.bf16 %v8178, %v8178
        %v8211 = vpack.c.bf16 %v8179, %v8179
        %v8212 = vpack.c.bf16 %v8180, %v8180
        %v8213 = vpack.c.bf16 %v8181, %v8181
        %v8214 = vpack.c.bf16 %v8182, %v8182
        %v8215 = vpack.c.bf16 %v8183, %v8183
        %v8216 = vpack.c.bf16 %v8184, %v8184
        %v8217 = vpack.c.bf16 %v8185, %v8185
        %v8218 = vpack.c.bf16 %v8186, %v8186
        %v8219 = vpack.c.bf16 %v8187, %v8187
        %v8220 = vpack.c.bf16 %v8188, %v8188
        %v8221 = vpack.c.bf16 %v8189, %v8189
        %v8222 = vpack.c.bf16 %v8190, %v8190
        %v8223 = vpack.c.bf16 %v8191, %v8191
        %v8224 = vpack.c.bf16 %v8192, %v8192
        %v8225 = vpack.c.bf16 %v8193, %v8193
        %v8226 = vpack.c.bf16 %v8194, %v8194
        %v8227 = vpack.c.bf16 %v8195, %v8195
        %v8228 = vpack.c.bf16 %v8196, %v8196
        %v8229 = vpack.c.bf16 %v8197, %v8197
        %v8230 = vpack.c.bf16 %v8198, %v8198
        %v8231 = vpack.c.bf16 %v8199, %v8199
        %v8232 = vpack.c.bf16 %v8200, %v8200
        %v8233 = vpack.c.bf16 %v8201, %v8201
        %v8234 = vpack.c.bf16 %v8202, %v8202
        %v8235 = vpack.c.bf16 %v8203, %v8203
        %v8236 = vld [vmem:[#allocation19] sm:$0xf]
        %v8237 = vld [vmem:[#allocation19 + $0x4] sm:$0xf]
        %v8238 = vld [vmem:[#allocation19 + $0x8] sm:$0xf]
        %v8239 = vld [vmem:[#allocation19 + $0xc] sm:$0xf]
        %v8240 = vld [vmem:[#allocation19 + $0x10] sm:$0xf]
        %v8241 = vld [vmem:[#allocation19 + $0x14] sm:$0xf]
        %v8242 = vld [vmem:[#allocation19 + $0x18] sm:$0xf]
        %v8243 = vld [vmem:[#allocation19 + $0x1c] sm:$0xf]
        %v8244 = vld [vmem:[#allocation19 + $0x20] sm:$0xf]
        %v8245 = vld [vmem:[#allocation19 + $0x24] sm:$0xf]
        %v8246 = vld [vmem:[#allocation19 + $0x28] sm:$0xf]
        %v8247 = vld [vmem:[#allocation19 + $0x2c] sm:$0xf]
        %v8248 = vld [vmem:[#allocation19 + $0x30] sm:$0xf]
        %v8249 = vld [vmem:[#allocation19 + $0x34] sm:$0xf]
        %v8250 = vld [vmem:[#allocation19 + $0x38] sm:$0xf]
        %v8251 = vld [vmem:[#allocation19 + $0x3c] sm:$0xf]
        %v8252 = vld [vmem:[#allocation21] sm:$0x1]
        %v8254 = vperm.slane %v8252, 0
        %v8288 = vunpack.c.l.b16 %v945
        %v8289 = vunpack.c.l.b16 %v946
        %v8290 = vunpack.c.l.b16 %v947
        %v8291 = vunpack.c.l.b16 %v948
        %v8292 = vunpack.c.l.b16 %v949
        %v8293 = vunpack.c.l.b16 %v950
        %v8294 = vunpack.c.l.b16 %v951
        %v8295 = vunpack.c.l.b16 %v952
        %v8296 = vunpack.c.l.b16 %v953
        %v8297 = vunpack.c.l.b16 %v954
        %v8298 = vunpack.c.l.b16 %v955
        %v8299 = vunpack.c.l.b16 %v956
        %v8300 = vunpack.c.l.b16 %v957
        %v8301 = vunpack.c.l.b16 %v958
        %v8302 = vunpack.c.l.b16 %v959
        %v8303 = vunpack.c.l.b16 %v960
        %v8304 = vunpack.c.l.b16 %v961
        %v8305 = vunpack.c.l.b16 %v962
        %v8306 = vunpack.c.l.b16 %v963
        %v8307 = vunpack.c.l.b16 %v964
        %v8308 = vunpack.c.l.b16 %v965
        %v8309 = vunpack.c.l.b16 %v966
        %v8310 = vunpack.c.l.b16 %v967
        %v8311 = vunpack.c.l.b16 %v968
        %v8312 = vunpack.c.l.b16 %v969
        %v8313 = vunpack.c.l.b16 %v970
        %v8314 = vunpack.c.l.b16 %v971
        %v8315 = vunpack.c.l.b16 %v972
        %v8316 = vunpack.c.l.b16 %v973
        %v8317 = vunpack.c.l.b16 %v974
        %v8318 = vunpack.c.l.b16 %v975
        %v8319 = vunpack.c.l.b16 %v976
        %v8320 = vpack.c.b16 %v8289, %v8288
        %v8321 = vpack.c.b16 %v8291, %v8290
        %v8322 = vpack.c.b16 %v8293, %v8292
        %v8323 = vpack.c.b16 %v8295, %v8294
        %v8324 = vpack.c.b16 %v8297, %v8296
        %v8325 = vpack.c.b16 %v8299, %v8298
        %v8326 = vpack.c.b16 %v8301, %v8300
        %v8327 = vpack.c.b16 %v8303, %v8302
        %v8328 = vpack.c.b16 %v8305, %v8304
        %v8329 = vpack.c.b16 %v8307, %v8306
        %v8330 = vpack.c.b16 %v8309, %v8308
        %v8331 = vpack.c.b16 %v8311, %v8310
        %v8332 = vpack.c.b16 %v8313, %v8312
        %v8333 = vpack.c.b16 %v8315, %v8314
        %v8334 = vpack.c.b16 %v8317, %v8316
        %v8335 = vpack.c.b16 %v8319, %v8318
        %v8368 = vunpack.c.l.b16 %v8236
        %v8369 = vunpack.c.l.b16 %v8237
        %v8370 = vunpack.c.l.b16 %v8238
        %v8371 = vunpack.c.l.b16 %v8239
        %v8372 = vunpack.c.l.b16 %v8240
        %v8373 = vunpack.c.l.b16 %v8241
        %v8374 = vunpack.c.l.b16 %v8242
        %v8375 = vunpack.c.l.b16 %v8243
        %v8376 = vunpack.c.l.b16 %v8244
        %v8377 = vunpack.c.l.b16 %v8245
        %v8378 = vunpack.c.l.b16 %v8246
        %v8379 = vunpack.c.l.b16 %v8247
        %v8380 = vunpack.c.l.b16 %v8248
        %v8381 = vunpack.c.l.b16 %v8249
        %v8382 = vunpack.c.l.b16 %v8250
        %v8383 = vunpack.c.l.b16 %v8251
        %v8384 = vpack.c.b16 %v8369, %v8368
        %v8385 = vpack.c.b16 %v8371, %v8370
        %v8386 = vpack.c.b16 %v8373, %v8372
        %v8387 = vpack.c.b16 %v8375, %v8374
        %v8388 = vpack.c.b16 %v8377, %v8376
        %v8389 = vpack.c.b16 %v8379, %v8378
        %v8390 = vpack.c.b16 %v8381, %v8380
        %v8391 = vpack.c.b16 %v8383, %v8382
        %8400 = vmatpush.bf16.msra.mxu0 %v8391
        %8401 = vmatpush.bf16.msra.mxu0 %v8390
        %8402 = vmatpush.bf16.msra.mxu0 %v8389
        %8403 = vmatpush.bf16.msra.mxu0 %v8388
        %8404 = vmatpush.bf16.msra.mxu0 %v8387
        %8405 = vmatpush.bf16.msra.mxu0 %v8386
        %8406 = vmatpush.bf16.msra.mxu0 %v8385
        %8407 = vmatpush.bf16.msra.mxu0 %v8384
        %8408 = vmatmul.bf16.gmra.mxu0 %v8320
        %v8409 = vpop.f32.mrf.mxu0
        %v8410 = vadd.f32 %v8254, %v8409
        %v8411 = vpop.f32.mrf.mxu0
        %v8412 = vadd.f32 %v8254, %v8411
        %8413 = vmatmul.bf16.gmra.mxu0 %v8321
        %v8414 = vpop.f32.mrf.mxu0
        %v8415 = vadd.f32 %v8254, %v8414
        %v8416 = vpop.f32.mrf.mxu0
        %v8417 = vadd.f32 %v8254, %v8416
        %8418 = vmatmul.bf16.gmra.mxu0 %v8322
        %v8419 = vpop.f32.mrf.mxu0
        %v8420 = vadd.f32 %v8254, %v8419
        %v8421 = vpop.f32.mrf.mxu0
        %v8422 = vadd.f32 %v8254, %v8421
        %8423 = vmatmul.bf16.gmra.mxu0 %v8323
        %v8424 = vpop.f32.mrf.mxu0
        %v8425 = vadd.f32 %v8254, %v8424
        %v8426 = vpop.f32.mrf.mxu0
        %v8427 = vadd.f32 %v8254, %v8426
        %8428 = vmatmul.bf16.gmra.mxu0 %v8324
        %v8429 = vpop.f32.mrf.mxu0
        %v8430 = vadd.f32 %v8254, %v8429
        %v8431 = vpop.f32.mrf.mxu0
        %v8432 = vadd.f32 %v8254, %v8431
        %8433 = vmatmul.bf16.gmra.mxu0 %v8325
        %v8434 = vpop.f32.mrf.mxu0
        %v8435 = vadd.f32 %v8254, %v8434
        %v8436 = vpop.f32.mrf.mxu0
        %v8437 = vadd.f32 %v8254, %v8436
        %8438 = vmatmul.bf16.gmra.mxu0 %v8326
        %v8439 = vpop.f32.mrf.mxu0
        %v8440 = vadd.f32 %v8254, %v8439
        %v8441 = vpop.f32.mrf.mxu0
        %v8442 = vadd.f32 %v8254, %v8441
        %8443 = vmatmul.bf16.gmra.mxu0 %v8327
        %v8444 = vpop.f32.mrf.mxu0
        %v8445 = vadd.f32 %v8254, %v8444
        %v8446 = vpop.f32.mrf.mxu0
        %v8447 = vadd.f32 %v8254, %v8446
        %8448 = vmatmul.bf16.gmra.mxu0 %v8328
        %v8449 = vpop.f32.mrf.mxu0
        %v8450 = vadd.f32 %v8254, %v8449
        %v8451 = vpop.f32.mrf.mxu0
        %v8452 = vadd.f32 %v8254, %v8451
        %8453 = vmatmul.bf16.gmra.mxu0 %v8329
        %v8454 = vpop.f32.mrf.mxu0
        %v8455 = vadd.f32 %v8254, %v8454
        %v8456 = vpop.f32.mrf.mxu0
        %v8457 = vadd.f32 %v8254, %v8456
        %8458 = vmatmul.bf16.gmra.mxu0 %v8330
        %v8459 = vpop.f32.mrf.mxu0
        %v8460 = vadd.f32 %v8254, %v8459
        %v8461 = vpop.f32.mrf.mxu0
        %v8462 = vadd.f32 %v8254, %v8461
        %8463 = vmatmul.bf16.gmra.mxu0 %v8331
        %v8464 = vpop.f32.mrf.mxu0
        %v8465 = vadd.f32 %v8254, %v8464
        %v8466 = vpop.f32.mrf.mxu0
        %v8467 = vadd.f32 %v8254, %v8466
        %8468 = vmatmul.bf16.gmra.mxu0 %v8332
        %v8469 = vpop.f32.mrf.mxu0
        %v8470 = vadd.f32 %v8254, %v8469
        %v8471 = vpop.f32.mrf.mxu0
        %v8472 = vadd.f32 %v8254, %v8471
        %8473 = vmatmul.bf16.gmra.mxu0 %v8333
        %v8474 = vpop.f32.mrf.mxu0
        %v8475 = vadd.f32 %v8254, %v8474
        %v8476 = vpop.f32.mrf.mxu0
        %v8477 = vadd.f32 %v8254, %v8476
        %8478 = vmatmul.bf16.gmra.mxu0 %v8334
        %v8479 = vpop.f32.mrf.mxu0
        %v8480 = vadd.f32 %v8254, %v8479
        %v8481 = vpop.f32.mrf.mxu0
        %v8482 = vadd.f32 %v8254, %v8481
        %8483 = vmatmul.bf16.gmra.mxu0 %v8335
        %v8484 = vpop.f32.mrf.mxu0
        %v8485 = vadd.f32 %v8254, %v8484
        %v8486 = vpop.f32.mrf.mxu0
        %v8487 = vadd.f32 %v8254, %v8486
        %8488 = vdwg.mxu0
        %v8489 = vmul.f32 %v8410, 0.2
        %v8490 = vmul.f32 %v8412, 0.2
        %v8491 = vmul.f32 %v8415, 0.2
        %v8492 = vmul.f32 %v8417, 0.2
        %v8493 = vmul.f32 %v8420, 0.2
        %v8494 = vmul.f32 %v8422, 0.2
        %v8495 = vmul.f32 %v8425, 0.2
        %v8496 = vmul.f32 %v8427, 0.2
        %v8497 = vmul.f32 %v8430, 0.2
        %v8498 = vmul.f32 %v8432, 0.2
        %v8499 = vmul.f32 %v8435, 0.2
        %v8500 = vmul.f32 %v8437, 0.2
        %v8501 = vmul.f32 %v8440, 0.2
        %v8502 = vmul.f32 %v8442, 0.2
        %v8503 = vmul.f32 %v8445, 0.2
        %v8504 = vmul.f32 %v8447, 0.2
        %v8505 = vmul.f32 %v8450, 0.2
        %v8506 = vmul.f32 %v8452, 0.2
        %v8507 = vmul.f32 %v8455, 0.2
        %v8508 = vmul.f32 %v8457, 0.2
        %v8509 = vmul.f32 %v8460, 0.2
        %v8510 = vmul.f32 %v8462, 0.2
        %v8511 = vmul.f32 %v8465, 0.2
        %v8512 = vmul.f32 %v8467, 0.2
        %v8513 = vmul.f32 %v8470, 0.2
        %v8514 = vmul.f32 %v8472, 0.2
        %v8515 = vmul.f32 %v8475, 0.2
        %v8516 = vmul.f32 %v8477, 0.2
        %v8517 = vmul.f32 %v8480, 0.2
        %v8518 = vmul.f32 %v8482, 0.2
        %v8519 = vmul.f32 %v8485, 0.2
        %v8520 = vmul.f32 %v8487, 0.2
        %v8521 = vmax.f32 %v8410, %v8489
        %v8522 = vmax.f32 %v8412, %v8490
        %v8523 = vmax.f32 %v8415, %v8491
        %v8524 = vmax.f32 %v8417, %v8492
        %v8525 = vmax.f32 %v8420, %v8493
        %v8526 = vmax.f32 %v8422, %v8494
        %v8527 = vmax.f32 %v8425, %v8495
        %v8528 = vmax.f32 %v8427, %v8496
        %v8529 = vmax.f32 %v8430, %v8497
        %v8530 = vmax.f32 %v8432, %v8498
        %v8531 = vmax.f32 %v8435, %v8499
        %v8532 = vmax.f32 %v8437, %v8500
        %v8533 = vmax.f32 %v8440, %v8501
        %v8534 = vmax.f32 %v8442, %v8502
        %v8535 = vmax.f32 %v8445, %v8503
        %v8536 = vmax.f32 %v8447, %v8504
        %v8537 = vmax.f32 %v8450, %v8505
        %v8538 = vmax.f32 %v8452, %v8506
        %v8539 = vmax.f32 %v8455, %v8507
        %v8540 = vmax.f32 %v8457, %v8508
        %v8541 = vmax.f32 %v8460, %v8509
        %v8542 = vmax.f32 %v8462, %v8510
        %v8543 = vmax.f32 %v8465, %v8511
        %v8544 = vmax.f32 %v8467, %v8512
        %v8545 = vmax.f32 %v8470, %v8513
        %v8546 = vmax.f32 %v8472, %v8514
        %v8547 = vmax.f32 %v8475, %v8515
        %v8548 = vmax.f32 %v8477, %v8516
        %v8549 = vmax.f32 %v8480, %v8517
        %v8550 = vmax.f32 %v8482, %v8518
        %v8551 = vmax.f32 %v8485, %v8519
        %v8552 = vmax.f32 %v8487, %v8520
        %v8553 = vpack.c.bf16 %v8522, %v8521
        %v8554 = vpack.c.bf16 %v8524, %v8523
        %v8555 = vpack.c.bf16 %v8526, %v8525
        %v8556 = vpack.c.bf16 %v8528, %v8527
        %v8557 = vpack.c.bf16 %v8530, %v8529
        %v8558 = vpack.c.bf16 %v8532, %v8531
        %v8559 = vpack.c.bf16 %v8534, %v8533
        %v8560 = vpack.c.bf16 %v8536, %v8535
        %v8561 = vpack.c.bf16 %v8538, %v8537
        %v8562 = vpack.c.bf16 %v8540, %v8539
        %v8563 = vpack.c.bf16 %v8542, %v8541
        %v8564 = vpack.c.bf16 %v8544, %v8543
        %v8565 = vpack.c.bf16 %v8546, %v8545
        %v8566 = vpack.c.bf16 %v8548, %v8547
        %v8567 = vpack.c.bf16 %v8550, %v8549
        %v8568 = vpack.c.bf16 %v8552, %v8551
        %v8569 = vld [vmem:[#allocation22] sm:$0xf]
        %v8570 = vld [vmem:[#allocation22 + $0x4] sm:$0xf]
        %v8571 = vld [vmem:[#allocation22 + $0x8] sm:$0xf]
        %v8572 = vld [vmem:[#allocation22 + $0xc] sm:$0xf]
        %v8573 = vld [vmem:[#allocation22 + $0x10] sm:$0xf]
        %v8574 = vld [vmem:[#allocation22 + $0x14] sm:$0xf]
        %v8575 = vld [vmem:[#allocation22 + $0x18] sm:$0xf]
        %v8576 = vld [vmem:[#allocation22 + $0x1c] sm:$0xf]
        %v8577 = vld [vmem:[#allocation22 + $0x20] sm:$0xf]
        %v8578 = vld [vmem:[#allocation22 + $0x24] sm:$0xf]
        %v8579 = vld [vmem:[#allocation22 + $0x28] sm:$0xf]
        %v8580 = vld [vmem:[#allocation22 + $0x2c] sm:$0xf]
        %v8581 = vld [vmem:[#allocation22 + $0x30] sm:$0xf]
        %v8582 = vld [vmem:[#allocation22 + $0x34] sm:$0xf]
        %v8583 = vld [vmem:[#allocation22 + $0x38] sm:$0xf]
        %v8584 = vld [vmem:[#allocation22 + $0x3c] sm:$0xf]
        %v8585 = vld [vmem:[%s13] sm:$0x1]
        %v8587 = vperm.slane %v8585, 0
        %v8605 = vunpack.c.l.b16 %v8569
        %v8606 = vunpack.c.l.b16 %v8570
        %v8607 = vunpack.c.l.b16 %v8571
        %v8608 = vunpack.c.l.b16 %v8572
        %v8609 = vunpack.c.l.b16 %v8573
        %v8610 = vunpack.c.l.b16 %v8574
        %v8611 = vunpack.c.l.b16 %v8575
        %v8612 = vunpack.c.l.b16 %v8576
        %v8613 = vunpack.c.l.b16 %v8577
        %v8614 = vunpack.c.l.b16 %v8578
        %v8615 = vunpack.c.l.b16 %v8579
        %v8616 = vunpack.c.l.b16 %v8580
        %v8617 = vunpack.c.l.b16 %v8581
        %v8618 = vunpack.c.l.b16 %v8582
        %v8619 = vunpack.c.l.b16 %v8583
        %v8620 = vunpack.c.l.b16 %v8584
        %v8621 = vpack.c.b16 %v8606, %v8605
        %v8622 = vpack.c.b16 %v8608, %v8607
        %v8623 = vpack.c.b16 %v8610, %v8609
        %v8624 = vpack.c.b16 %v8612, %v8611
        %v8625 = vpack.c.b16 %v8614, %v8613
        %v8626 = vpack.c.b16 %v8616, %v8615
        %v8627 = vpack.c.b16 %v8618, %v8617
        %v8628 = vpack.c.b16 %v8620, %v8619
        %8637 = vmatpush.bf16.msra.mxu0 %v8628
        %8638 = vmatpush.bf16.msra.mxu0 %v8627
        %8639 = vmatpush.bf16.msra.mxu0 %v8626
        %8640 = vmatpush.bf16.msra.mxu0 %v8625
        %8641 = vmatpush.bf16.msra.mxu0 %v8624
        %8642 = vmatpush.bf16.msra.mxu0 %v8623
        %8643 = vmatpush.bf16.msra.mxu0 %v8622
        %8644 = vmatpush.bf16.msra.mxu0 %v8621
        %8645 = vmatmul.bf16.gmra.mxu0 %v8553
        %v8646 = vpop.f32.mrf.mxu0
        %v8647 = vadd.f32 %v8587, %v8646
        %v8648 = vpop.f32.mrf.mxu0
        %v8649 = vadd.f32 %v8587, %v8648
        %8650 = vmatmul.bf16.gmra.mxu0 %v8554
        %v8651 = vpop.f32.mrf.mxu0
        %v8652 = vadd.f32 %v8587, %v8651
        %v8653 = vpop.f32.mrf.mxu0
        %v8654 = vadd.f32 %v8587, %v8653
        %8655 = vmatmul.bf16.gmra.mxu0 %v8555
        %v8656 = vpop.f32.mrf.mxu0
        %v8657 = vadd.f32 %v8587, %v8656
        %v8658 = vpop.f32.mrf.mxu0
        %v8659 = vadd.f32 %v8587, %v8658
        %8660 = vmatmul.bf16.gmra.mxu0 %v8556
        %v8661 = vpop.f32.mrf.mxu0
        %v8662 = vadd.f32 %v8587, %v8661
        %v8663 = vpop.f32.mrf.mxu0
        %v8664 = vadd.f32 %v8587, %v8663
        %8665 = vmatmul.bf16.gmra.mxu0 %v8557
        %v8666 = vpop.f32.mrf.mxu0
        %v8667 = vadd.f32 %v8587, %v8666
        %v8668 = vpop.f32.mrf.mxu0
        %v8669 = vadd.f32 %v8587, %v8668
        %8670 = vmatmul.bf16.gmra.mxu0 %v8558
        %v8671 = vpop.f32.mrf.mxu0
        %v8672 = vadd.f32 %v8587, %v8671
        %v8673 = vpop.f32.mrf.mxu0
        %v8674 = vadd.f32 %v8587, %v8673
        %8675 = vmatmul.bf16.gmra.mxu0 %v8559
        %v8676 = vpop.f32.mrf.mxu0
        %v8677 = vadd.f32 %v8587, %v8676
        %v8678 = vpop.f32.mrf.mxu0
        %v8679 = vadd.f32 %v8587, %v8678
        %8680 = vmatmul.bf16.gmra.mxu0 %v8560
        %v8681 = vpop.f32.mrf.mxu0
        %v8682 = vadd.f32 %v8587, %v8681
        %v8683 = vpop.f32.mrf.mxu0
        %v8684 = vadd.f32 %v8587, %v8683
        %8685 = vmatmul.bf16.gmra.mxu0 %v8561
        %v8686 = vpop.f32.mrf.mxu0
        %v8687 = vadd.f32 %v8587, %v8686
        %v8688 = vpop.f32.mrf.mxu0
        %v8689 = vadd.f32 %v8587, %v8688
        %8690 = vmatmul.bf16.gmra.mxu0 %v8562
        %v8691 = vpop.f32.mrf.mxu0
        %v8692 = vadd.f32 %v8587, %v8691
        %v8693 = vpop.f32.mrf.mxu0
        %v8694 = vadd.f32 %v8587, %v8693
        %8695 = vmatmul.bf16.gmra.mxu0 %v8563
        %v8696 = vpop.f32.mrf.mxu0
        %v8697 = vadd.f32 %v8587, %v8696
        %v8698 = vpop.f32.mrf.mxu0
        %v8699 = vadd.f32 %v8587, %v8698
        %8700 = vmatmul.bf16.gmra.mxu0 %v8564
        %v8701 = vpop.f32.mrf.mxu0
        %v8702 = vadd.f32 %v8587, %v8701
        %v8703 = vpop.f32.mrf.mxu0
        %v8704 = vadd.f32 %v8587, %v8703
        %8705 = vmatmul.bf16.gmra.mxu0 %v8565
        %v8706 = vpop.f32.mrf.mxu0
        %v8707 = vadd.f32 %v8587, %v8706
        %v8708 = vpop.f32.mrf.mxu0
        %v8709 = vadd.f32 %v8587, %v8708
        %8710 = vmatmul.bf16.gmra.mxu0 %v8566
        %v8711 = vpop.f32.mrf.mxu0
        %v8712 = vadd.f32 %v8587, %v8711
        %v8713 = vpop.f32.mrf.mxu0
        %v8714 = vadd.f32 %v8587, %v8713
        %8715 = vmatmul.bf16.gmra.mxu0 %v8567
        %v8716 = vpop.f32.mrf.mxu0
        %v8717 = vadd.f32 %v8587, %v8716
        %v8718 = vpop.f32.mrf.mxu0
        %v8719 = vadd.f32 %v8587, %v8718
        %8720 = vmatmul.bf16.gmra.mxu0 %v8568
        %v8721 = vpop.f32.mrf.mxu0
        %v8722 = vadd.f32 %v8587, %v8721
        %v8723 = vpop.f32.mrf.mxu0
        %v8724 = vadd.f32 %v8587, %v8723
        %8725 = vdwg.mxu0
        %v8726 = vmul.f32 %v8647, 0.2
        %v8727 = vmul.f32 %v8649, 0.2
        %v8728 = vmul.f32 %v8652, 0.2
        %v8729 = vmul.f32 %v8654, 0.2
        %v8730 = vmul.f32 %v8657, 0.2
        %v8731 = vmul.f32 %v8659, 0.2
        %v8732 = vmul.f32 %v8662, 0.2
        %v8733 = vmul.f32 %v8664, 0.2
        %v8734 = vmul.f32 %v8667, 0.2
        %v8735 = vmul.f32 %v8669, 0.2
        %v8736 = vmul.f32 %v8672, 0.2
        %v8737 = vmul.f32 %v8674, 0.2
        %v8738 = vmul.f32 %v8677, 0.2
        %v8739 = vmul.f32 %v8679, 0.2
        %v8740 = vmul.f32 %v8682, 0.2
        %v8741 = vmul.f32 %v8684, 0.2
        %v8742 = vmul.f32 %v8687, 0.2
        %v8743 = vmul.f32 %v8689, 0.2
        %v8744 = vmul.f32 %v8692, 0.2
        %v8745 = vmul.f32 %v8694, 0.2
        %v8746 = vmul.f32 %v8697, 0.2
        %v8747 = vmul.f32 %v8699, 0.2
        %v8748 = vmul.f32 %v8702, 0.2
        %v8749 = vmul.f32 %v8704, 0.2
        %v8750 = vmul.f32 %v8707, 0.2
        %v8751 = vmul.f32 %v8709, 0.2
        %v8752 = vmul.f32 %v8712, 0.2
        %v8753 = vmul.f32 %v8714, 0.2
        %v8754 = vmul.f32 %v8717, 0.2
        %v8755 = vmul.f32 %v8719, 0.2
        %v8756 = vmul.f32 %v8722, 0.2
        %v8757 = vmul.f32 %v8724, 0.2
        %v8758 = vmax.f32 %v8647, %v8726
        %v8759 = vmax.f32 %v8649, %v8727
        %v8760 = vmax.f32 %v8652, %v8728
        %v8761 = vmax.f32 %v8654, %v8729
        %v8762 = vmax.f32 %v8657, %v8730
        %v8763 = vmax.f32 %v8659, %v8731
        %v8764 = vmax.f32 %v8662, %v8732
        %v8765 = vmax.f32 %v8664, %v8733
        %v8766 = vmax.f32 %v8667, %v8734
        %v8767 = vmax.f32 %v8669, %v8735
        %v8768 = vmax.f32 %v8672, %v8736
        %v8769 = vmax.f32 %v8674, %v8737
        %v8770 = vmax.f32 %v8677, %v8738
        %v8771 = vmax.f32 %v8679, %v8739
        %v8772 = vmax.f32 %v8682, %v8740
        %v8773 = vmax.f32 %v8684, %v8741
        %v8774 = vmax.f32 %v8687, %v8742
        %v8775 = vmax.f32 %v8689, %v8743
        %v8776 = vmax.f32 %v8692, %v8744
        %v8777 = vmax.f32 %v8694, %v8745
        %v8778 = vmax.f32 %v8697, %v8746
        %v8779 = vmax.f32 %v8699, %v8747
        %v8780 = vmax.f32 %v8702, %v8748
        %v8781 = vmax.f32 %v8704, %v8749
        %v8782 = vmax.f32 %v8707, %v8750
        %v8783 = vmax.f32 %v8709, %v8751
        %v8784 = vmax.f32 %v8712, %v8752
        %v8785 = vmax.f32 %v8714, %v8753
        %v8786 = vmax.f32 %v8717, %v8754
        %v8787 = vmax.f32 %v8719, %v8755
        %v8788 = vmax.f32 %v8722, %v8756
        %v8789 = vmax.f32 %v8724, %v8757
        %v8790 = vpack.c.bf16 %v8758, %v8758
        %v8791 = vpack.c.bf16 %v8759, %v8759
        %v8792 = vpack.c.bf16 %v8760, %v8760
        %v8793 = vpack.c.bf16 %v8761, %v8761
        %v8794 = vpack.c.bf16 %v8762, %v8762
        %v8795 = vpack.c.bf16 %v8763, %v8763
        %v8796 = vpack.c.bf16 %v8764, %v8764
        %v8797 = vpack.c.bf16 %v8765, %v8765
        %v8798 = vpack.c.bf16 %v8766, %v8766
        %v8799 = vpack.c.bf16 %v8767, %v8767
        %v8800 = vpack.c.bf16 %v8768, %v8768
        %v8801 = vpack.c.bf16 %v8769, %v8769
        %v8802 = vpack.c.bf16 %v8770, %v8770
        %v8803 = vpack.c.bf16 %v8771, %v8771
        %v8804 = vpack.c.bf16 %v8772, %v8772
        %v8805 = vpack.c.bf16 %v8773, %v8773
        %v8806 = vpack.c.bf16 %v8774, %v8774
        %v8807 = vpack.c.bf16 %v8775, %v8775
        %v8808 = vpack.c.bf16 %v8776, %v8776
        %v8809 = vpack.c.bf16 %v8777, %v8777
        %v8810 = vpack.c.bf16 %v8778, %v8778
        %v8811 = vpack.c.bf16 %v8779, %v8779
        %v8812 = vpack.c.bf16 %v8780, %v8780
        %v8813 = vpack.c.bf16 %v8781, %v8781
        %v8814 = vpack.c.bf16 %v8782, %v8782
        %v8815 = vpack.c.bf16 %v8783, %v8783
        %v8816 = vpack.c.bf16 %v8784, %v8784
        %v8817 = vpack.c.bf16 %v8785, %v8785
        %v8818 = vpack.c.bf16 %v8786, %v8786
        %v8819 = vpack.c.bf16 %v8787, %v8787
        %v8820 = vpack.c.bf16 %v8788, %v8788
        %v8821 = vpack.c.bf16 %v8789, %v8789
        %8822 = vst [vmem:[#allocation2] sm:$0xf] %v8204
        %8823 = vst [vmem:[#allocation2 + $0x8] sm:$0xf] %v8205
        %8824 = vst [vmem:[#allocation2 + $0x10] sm:$0xf] %v8206
        %8825 = vst [vmem:[#allocation2 + $0x18] sm:$0xf] %v8207
        %8826 = vst [vmem:[#allocation2 + $0x20] sm:$0xf] %v8208
        %8827 = vst [vmem:[#allocation2 + $0x28] sm:$0xf] %v8209
        %8828 = vst [vmem:[#allocation2 + $0x30] sm:$0xf] %v8210
        %8829 = vst [vmem:[#allocation2 + $0x38] sm:$0xf] %v8211
        %8830 = vst [vmem:[#allocation2 + $0x40] sm:$0xf] %v8212
        %8831 = vst [vmem:[#allocation2 + $0x48] sm:$0xf] %v8213
        %8832 = vst [vmem:[#allocation2 + $0x50] sm:$0xf] %v8214
        %8833 = vst [vmem:[#allocation2 + $0x58] sm:$0xf] %v8215
        %8834 = vst [vmem:[#allocation2 + $0x60] sm:$0xf] %v8216
        %8835 = vst [vmem:[#allocation2 + $0x68] sm:$0xf] %v8217
        %8836 = vst [vmem:[#allocation2 + $0x70] sm:$0xf] %v8218
        %8837 = vst [vmem:[#allocation2 + $0x78] sm:$0xf] %v8219
        %8838 = vst [vmem:[#allocation2 + $0x80] sm:$0xf] %v8220
        %8839 = vst [vmem:[#allocation2 + $0x88] sm:$0xf] %v8221
        %8840 = vst [vmem:[#allocation2 + $0x90] sm:$0xf] %v8222
        %8841 = vst [vmem:[#allocation2 + $0x98] sm:$0xf] %v8223
        %8842 = vst [vmem:[#allocation2 + $0xa0] sm:$0xf] %v8224
        %8843 = vst [vmem:[#allocation2 + $0xa8] sm:$0xf] %v8225
        %8844 = vst [vmem:[#allocation2 + $0xb0] sm:$0xf] %v8226
        %8845 = vst [vmem:[#allocation2 + $0xb8] sm:$0xf] %v8227
        %8846 = vst [vmem:[#allocation2 + $0xc0] sm:$0xf] %v8228
        %8847 = vst [vmem:[#allocation2 + $0xc8] sm:$0xf] %v8229
        %8848 = vst [vmem:[#allocation2 + $0xd0] sm:$0xf] %v8230
        %8849 = vst [vmem:[#allocation2 + $0xd8] sm:$0xf] %v8231
        %8850 = vst [vmem:[#allocation2 + $0xe0] sm:$0xf] %v8232
        %8851 = vst [vmem:[#allocation2 + $0xe8] sm:$0xf] %v8233
        %8852 = vst [vmem:[#allocation2 + $0xf0] sm:$0xf] %v8234
        %8853 = vst [vmem:[#allocation2 + $0xf8] sm:$0xf] %v8235
        %8854 = vst [vmem:[#allocation2 + $0x4] sm:$0xf] %v8790
        %8855 = vst [vmem:[#allocation2 + $0xc] sm:$0xf] %v8791
        %8856 = vst [vmem:[#allocation2 + $0x14] sm:$0xf] %v8792
        %8857 = vst [vmem:[#allocation2 + $0x1c] sm:$0xf] %v8793
        %8858 = vst [vmem:[#allocation2 + $0x24] sm:$0xf] %v8794
        %8859 = vst [vmem:[#allocation2 + $0x2c] sm:$0xf] %v8795
        %8860 = vst [vmem:[#allocation2 + $0x34] sm:$0xf] %v8796
        %8861 = vst [vmem:[#allocation2 + $0x3c] sm:$0xf] %v8797
        %8862 = vst [vmem:[#allocation2 + $0x44] sm:$0xf] %v8798
        %8863 = vst [vmem:[#allocation2 + $0x4c] sm:$0xf] %v8799
        %8864 = vst [vmem:[#allocation2 + $0x54] sm:$0xf] %v8800
        %8865 = vst [vmem:[#allocation2 + $0x5c] sm:$0xf] %v8801
        %8866 = vst [vmem:[#allocation2 + $0x64] sm:$0xf] %v8802
        %8867 = vst [vmem:[#allocation2 + $0x6c] sm:$0xf] %v8803
        %8868 = vst [vmem:[#allocation2 + $0x74] sm:$0xf] %v8804
        %8869 = vst [vmem:[#allocation2 + $0x7c] sm:$0xf] %v8805
        %8870 = vst [vmem:[#allocation2 + $0x84] sm:$0xf] %v8806
        %8871 = vst [vmem:[#allocation2 + $0x8c] sm:$0xf] %v8807
        %8872 = vst [vmem:[#allocation2 + $0x94] sm:$0xf] %v8808
        %8873 = vst [vmem:[#allocation2 + $0x9c] sm:$0xf] %v8809
        %8874 = vst [vmem:[#allocation2 + $0xa4] sm:$0xf] %v8810
        %8875 = vst [vmem:[#allocation2 + $0xac] sm:$0xf] %v8811
        %8876 = vst [vmem:[#allocation2 + $0xb4] sm:$0xf] %v8812
        %8877 = vst [vmem:[#allocation2 + $0xbc] sm:$0xf] %v8813
        %8878 = vst [vmem:[#allocation2 + $0xc4] sm:$0xf] %v8814
        %8879 = vst [vmem:[#allocation2 + $0xcc] sm:$0xf] %v8815
        %8880 = vst [vmem:[#allocation2 + $0xd4] sm:$0xf] %v8816
        %8881 = vst [vmem:[#allocation2 + $0xdc] sm:$0xf] %v8817
        %8882 = vst [vmem:[#allocation2 + $0xe4] sm:$0xf] %v8818
        %8883 = vst [vmem:[#allocation2 + $0xec] sm:$0xf] %v8819
        %8884 = vst [vmem:[#allocation2 + $0xf4] sm:$0xf] %v8820
        %8885 = vst [vmem:[#allocation2 + $0xfc] sm:$0xf] %v8821
        %v8886 = vld [vmem:[#allocation2] sm:$0xff]
        %v8887 = vld [vmem:[#allocation2 + $0x8] sm:$0xff]
        %v8888 = vld [vmem:[#allocation2 + $0x10] sm:$0xff]
        %v8889 = vld [vmem:[#allocation2 + $0x18] sm:$0xff]
        %v8890 = vld [vmem:[#allocation2 + $0x20] sm:$0xff]
        %v8891 = vld [vmem:[#allocation2 + $0x28] sm:$0xff]
        %v8892 = vld [vmem:[#allocation2 + $0x30] sm:$0xff]
        %v8893 = vld [vmem:[#allocation2 + $0x38] sm:$0xff]
        %v8894 = vld [vmem:[#allocation2 + $0x40] sm:$0xff]
        %v8895 = vld [vmem:[#allocation2 + $0x48] sm:$0xff]
        %v8896 = vld [vmem:[#allocation2 + $0x50] sm:$0xff]
        %v8897 = vld [vmem:[#allocation2 + $0x58] sm:$0xff]
        %v8898 = vld [vmem:[#allocation2 + $0x60] sm:$0xff]
        %v8899 = vld [vmem:[#allocation2 + $0x68] sm:$0xff]
        %v8900 = vld [vmem:[#allocation2 + $0x70] sm:$0xff]
        %v8901 = vld [vmem:[#allocation2 + $0x78] sm:$0xff]
        %v8902 = vld [vmem:[#allocation2 + $0x80] sm:$0xff]
        %v8903 = vld [vmem:[#allocation2 + $0x88] sm:$0xff]
        %v8904 = vld [vmem:[#allocation2 + $0x90] sm:$0xff]
        %v8905 = vld [vmem:[#allocation2 + $0x98] sm:$0xff]
        %v8906 = vld [vmem:[#allocation2 + $0xa0] sm:$0xff]
        %v8907 = vld [vmem:[#allocation2 + $0xa8] sm:$0xff]
        %v8908 = vld [vmem:[#allocation2 + $0xb0] sm:$0xff]
        %v8909 = vld [vmem:[#allocation2 + $0xb8] sm:$0xff]
        %v8910 = vld [vmem:[#allocation2 + $0xc0] sm:$0xff]
        %v8911 = vld [vmem:[#allocation2 + $0xc8] sm:$0xff]
        %v8912 = vld [vmem:[#allocation2 + $0xd0] sm:$0xff]
        %v8913 = vld [vmem:[#allocation2 + $0xd8] sm:$0xff]
        %v8914 = vld [vmem:[#allocation2 + $0xe0] sm:$0xff]
        %v8915 = vld [vmem:[#allocation2 + $0xe8] sm:$0xff]
        %v8916 = vld [vmem:[#allocation2 + $0xf0] sm:$0xff]
        %v8917 = vld [vmem:[#allocation2 + $0xf8] sm:$0xff]
        %v8918 = vld [vmem:[#allocation24] sm:$0xff]
        %v8919 = vld [vmem:[#allocation24 + $0x8] sm:$0xff]
        %v8920 = vld [vmem:[#allocation24 + $0x10] sm:$0xff]
        %v8921 = vld [vmem:[#allocation24 + $0x18] sm:$0xff]
        %v8922 = vld [vmem:[#allocation24 + $0x20] sm:$0xff]
        %v8923 = vld [vmem:[#allocation24 + $0x28] sm:$0xff]
        %v8924 = vld [vmem:[#allocation24 + $0x30] sm:$0xff]
        %v8925 = vld [vmem:[#allocation24 + $0x38] sm:$0xff]
        %v8926 = vld [vmem:[#allocation24 + $0x40] sm:$0xff]
        %v8927 = vld [vmem:[#allocation24 + $0x48] sm:$0xff]
        %v8928 = vld [vmem:[#allocation24 + $0x50] sm:$0xff]
        %v8929 = vld [vmem:[#allocation24 + $0x58] sm:$0xff]
        %v8930 = vld [vmem:[#allocation24 + $0x60] sm:$0xff]
        %v8931 = vld [vmem:[#allocation24 + $0x68] sm:$0xff]
        %v8932 = vld [vmem:[#allocation24 + $0x70] sm:$0xff]
        %v8933 = vld [vmem:[#allocation24 + $0x78] sm:$0xff]
        %v8934 = vld [vmem:[#allocation24 + $0x80] sm:$0xff]
        %v8935 = vld [vmem:[#allocation24 + $0x88] sm:$0xff]
        %v8936 = vld [vmem:[#allocation24 + $0x90] sm:$0xff]
        %v8937 = vld [vmem:[#allocation24 + $0x98] sm:$0xff]
        %v8938 = vld [vmem:[#allocation24 + $0xa0] sm:$0xff]
        %v8939 = vld [vmem:[#allocation24 + $0xa8] sm:$0xff]
        %v8940 = vld [vmem:[#allocation24 + $0xb0] sm:$0xff]
        %v8941 = vld [vmem:[#allocation24 + $0xb8] sm:$0xff]
        %v8942 = vld [vmem:[#allocation24 + $0xc0] sm:$0xff]
        %v8943 = vld [vmem:[#allocation24 + $0xc8] sm:$0xff]
        %v8944 = vld [vmem:[#allocation24 + $0xd0] sm:$0xff]
        %v8945 = vld [vmem:[#allocation24 + $0xd8] sm:$0xff]
        %v8946 = vld [vmem:[#allocation24 + $0xe0] sm:$0xff]
        %v8947 = vld [vmem:[#allocation24 + $0xe8] sm:$0xff]
        %v8948 = vld [vmem:[#allocation24 + $0xf0] sm:$0xff]
        %v8949 = vld [vmem:[#allocation24 + $0xf8] sm:$0xff]
        %v8950 = vld [vmem:[#allocation24 + $0x100] sm:$0xff]
        %v8951 = vld [vmem:[#allocation24 + $0x108] sm:$0xff]
        %v8952 = vld [vmem:[#allocation24 + $0x110] sm:$0xff]
        %v8953 = vld [vmem:[#allocation24 + $0x118] sm:$0xff]
        %v8954 = vld [vmem:[#allocation24 + $0x120] sm:$0xff]
        %v8955 = vld [vmem:[#allocation24 + $0x128] sm:$0xff]
        %v8956 = vld [vmem:[#allocation24 + $0x130] sm:$0xff]
        %v8957 = vld [vmem:[#allocation24 + $0x138] sm:$0xff]
        %v8958 = vld [vmem:[#allocation24 + $0x140] sm:$0xff]
        %v8959 = vld [vmem:[#allocation24 + $0x148] sm:$0xff]
        %v8960 = vld [vmem:[#allocation24 + $0x150] sm:$0xff]
        %v8961 = vld [vmem:[#allocation24 + $0x158] sm:$0xff]
        %v8962 = vld [vmem:[#allocation24 + $0x160] sm:$0xff]
        %v8963 = vld [vmem:[#allocation24 + $0x168] sm:$0xff]
        %v8964 = vld [vmem:[#allocation24 + $0x170] sm:$0xff]
        %v8965 = vld [vmem:[#allocation24 + $0x178] sm:$0xff]
        %v8966 = vld [vmem:[#allocation24 + $0x180] sm:$0xff]
        %v8967 = vld [vmem:[#allocation24 + $0x188] sm:$0xff]
        %v8968 = vld [vmem:[#allocation24 + $0x190] sm:$0xff]
        %v8969 = vld [vmem:[#allocation24 + $0x198] sm:$0xff]
        %v8970 = vld [vmem:[#allocation24 + $0x1a0] sm:$0xff]
        %v8971 = vld [vmem:[#allocation24 + $0x1a8] sm:$0xff]
        %v8972 = vld [vmem:[#allocation24 + $0x1b0] sm:$0xff]
        %v8973 = vld [vmem:[#allocation24 + $0x1b8] sm:$0xff]
        %v8974 = vld [vmem:[#allocation24 + $0x1c0] sm:$0xff]
        %v8975 = vld [vmem:[#allocation24 + $0x1c8] sm:$0xff]
        %v8976 = vld [vmem:[#allocation24 + $0x1d0] sm:$0xff]
        %v8977 = vld [vmem:[#allocation24 + $0x1d8] sm:$0xff]
        %v8978 = vld [vmem:[#allocation24 + $0x1e0] sm:$0xff]
        %v8979 = vld [vmem:[#allocation24 + $0x1e8] sm:$0xff]
        %v8980 = vld [vmem:[#allocation24 + $0x1f0] sm:$0xff]
        %v8981 = vld [vmem:[#allocation24 + $0x1f8] sm:$0xff]
        %v8982 = vld [vmem:[%s15] sm:$0xf]
        %v8984 = vperm.slane %v8982, 0
        %v8985 = vperm.slane %v8982, 1
        %v8986 = vperm.slane %v8982, 2
        %v8987 = vperm.slane %v8982, 3
        %v9024 = vunpack.c.l.b16 %v8886
        %v9025 = vunpack.c.h.b16 %v8886
        %v9026 = vunpack.c.l.b16 %v8887
        %v9027 = vunpack.c.h.b16 %v8887
        %v9028 = vunpack.c.l.b16 %v8888
        %v9029 = vunpack.c.h.b16 %v8888
        %v9030 = vunpack.c.l.b16 %v8889
        %v9031 = vunpack.c.h.b16 %v8889
        %v9032 = vunpack.c.l.b16 %v8890
        %v9033 = vunpack.c.h.b16 %v8890
        %v9034 = vunpack.c.l.b16 %v8891
        %v9035 = vunpack.c.h.b16 %v8891
        %v9036 = vunpack.c.l.b16 %v8892
        %v9037 = vunpack.c.h.b16 %v8892
        %v9038 = vunpack.c.l.b16 %v8893
        %v9039 = vunpack.c.h.b16 %v8893
        %v9040 = vunpack.c.l.b16 %v8894
        %v9041 = vunpack.c.h.b16 %v8894
        %v9042 = vunpack.c.l.b16 %v8895
        %v9043 = vunpack.c.h.b16 %v8895
        %v9044 = vunpack.c.l.b16 %v8896
        %v9045 = vunpack.c.h.b16 %v8896
        %v9046 = vunpack.c.l.b16 %v8897
        %v9047 = vunpack.c.h.b16 %v8897
        %v9048 = vunpack.c.l.b16 %v8898
        %v9049 = vunpack.c.h.b16 %v8898
        %v9050 = vunpack.c.l.b16 %v8899
        %v9051 = vunpack.c.h.b16 %v8899
        %v9052 = vunpack.c.l.b16 %v8900
        %v9053 = vunpack.c.h.b16 %v8900
        %v9054 = vunpack.c.l.b16 %v8901
        %v9055 = vunpack.c.h.b16 %v8901
        %v9056 = vunpack.c.l.b16 %v8902
        %v9057 = vunpack.c.h.b16 %v8902
        %v9058 = vunpack.c.l.b16 %v8903
        %v9059 = vunpack.c.h.b16 %v8903
        %v9060 = vunpack.c.l.b16 %v8904
        %v9061 = vunpack.c.h.b16 %v8904
        %v9062 = vunpack.c.l.b16 %v8905
        %v9063 = vunpack.c.h.b16 %v8905
        %v9064 = vunpack.c.l.b16 %v8906
        %v9065 = vunpack.c.h.b16 %v8906
        %v9066 = vunpack.c.l.b16 %v8907
        %v9067 = vunpack.c.h.b16 %v8907
        %v9068 = vunpack.c.l.b16 %v8908
        %v9069 = vunpack.c.h.b16 %v8908
        %v9070 = vunpack.c.l.b16 %v8909
        %v9071 = vunpack.c.h.b16 %v8909
        %v9072 = vunpack.c.l.b16 %v8910
        %v9073 = vunpack.c.h.b16 %v8910
        %v9074 = vunpack.c.l.b16 %v8911
        %v9075 = vunpack.c.h.b16 %v8911
        %v9076 = vunpack.c.l.b16 %v8912
        %v9077 = vunpack.c.h.b16 %v8912
        %v9078 = vunpack.c.l.b16 %v8913
        %v9079 = vunpack.c.h.b16 %v8913
        %v9080 = vunpack.c.l.b16 %v8914
        %v9081 = vunpack.c.h.b16 %v8914
        %v9082 = vunpack.c.l.b16 %v8915
        %v9083 = vunpack.c.h.b16 %v8915
        %v9084 = vunpack.c.l.b16 %v8916
        %v9085 = vunpack.c.h.b16 %v8916
        %v9086 = vunpack.c.l.b16 %v8917
        %v9087 = vunpack.c.h.b16 %v8917
        %v9088 = vpack.c.b16 %v9026, %v9024
        %v9089 = vpack.c.b16 %v9027, %v9025
        %v9090 = vpack.c.b16 %v9030, %v9028
        %v9091 = vpack.c.b16 %v9031, %v9029
        %v9092 = vpack.c.b16 %v9034, %v9032
        %v9093 = vpack.c.b16 %v9035, %v9033
        %v9094 = vpack.c.b16 %v9038, %v9036
        %v9095 = vpack.c.b16 %v9039, %v9037
        %v9096 = vpack.c.b16 %v9042, %v9040
        %v9097 = vpack.c.b16 %v9043, %v9041
        %v9098 = vpack.c.b16 %v9046, %v9044
        %v9099 = vpack.c.b16 %v9047, %v9045
        %v9100 = vpack.c.b16 %v9050, %v9048
        %v9101 = vpack.c.b16 %v9051, %v9049
        %v9102 = vpack.c.b16 %v9054, %v9052
        %v9103 = vpack.c.b16 %v9055, %v9053
        %v9104 = vpack.c.b16 %v9058, %v9056
        %v9105 = vpack.c.b16 %v9059, %v9057
        %v9106 = vpack.c.b16 %v9062, %v9060
        %v9107 = vpack.c.b16 %v9063, %v9061
        %v9108 = vpack.c.b16 %v9066, %v9064
        %v9109 = vpack.c.b16 %v9067, %v9065
        %v9110 = vpack.c.b16 %v9070, %v9068
        %v9111 = vpack.c.b16 %v9071, %v9069
        %v9112 = vpack.c.b16 %v9074, %v9072
        %v9113 = vpack.c.b16 %v9075, %v9073
        %v9114 = vpack.c.b16 %v9078, %v9076
        %v9115 = vpack.c.b16 %v9079, %v9077
        %v9116 = vpack.c.b16 %v9082, %v9080
        %v9117 = vpack.c.b16 %v9083, %v9081
        %v9118 = vpack.c.b16 %v9086, %v9084
        %v9119 = vpack.c.b16 %v9087, %v9085
        %v9216 = vunpack.c.l.b16 %v8918
        %v9217 = vunpack.c.h.b16 %v8918
        %v9218 = vunpack.c.l.b16 %v8919
        %v9219 = vunpack.c.h.b16 %v8919
        %v9220 = vunpack.c.l.b16 %v8920
        %v9221 = vunpack.c.h.b16 %v8920
        %v9222 = vunpack.c.l.b16 %v8921
        %v9223 = vunpack.c.h.b16 %v8921
        %v9224 = vunpack.c.l.b16 %v8922
        %v9225 = vunpack.c.h.b16 %v8922
        %v9226 = vunpack.c.l.b16 %v8923
        %v9227 = vunpack.c.h.b16 %v8923
        %v9228 = vunpack.c.l.b16 %v8924
        %v9229 = vunpack.c.h.b16 %v8924
        %v9230 = vunpack.c.l.b16 %v8925
        %v9231 = vunpack.c.h.b16 %v8925
        %v9232 = vunpack.c.l.b16 %v8926
        %v9233 = vunpack.c.h.b16 %v8926
        %v9234 = vunpack.c.l.b16 %v8927
        %v9235 = vunpack.c.h.b16 %v8927
        %v9236 = vunpack.c.l.b16 %v8928
        %v9237 = vunpack.c.h.b16 %v8928
        %v9238 = vunpack.c.l.b16 %v8929
        %v9239 = vunpack.c.h.b16 %v8929
        %v9240 = vunpack.c.l.b16 %v8930
        %v9241 = vunpack.c.h.b16 %v8930
        %v9242 = vunpack.c.l.b16 %v8931
        %v9243 = vunpack.c.h.b16 %v8931
        %v9244 = vunpack.c.l.b16 %v8932
        %v9245 = vunpack.c.h.b16 %v8932
        %v9246 = vunpack.c.l.b16 %v8933
        %v9247 = vunpack.c.h.b16 %v8933
        %v9248 = vunpack.c.l.b16 %v8934
        %v9249 = vunpack.c.h.b16 %v8934
        %v9250 = vunpack.c.l.b16 %v8935
        %v9251 = vunpack.c.h.b16 %v8935
        %v9252 = vunpack.c.l.b16 %v8936
        %v9253 = vunpack.c.h.b16 %v8936
        %v9254 = vunpack.c.l.b16 %v8937
        %v9255 = vunpack.c.h.b16 %v8937
        %v9256 = vunpack.c.l.b16 %v8938
        %v9257 = vunpack.c.h.b16 %v8938
        %v9258 = vunpack.c.l.b16 %v8939
        %v9259 = vunpack.c.h.b16 %v8939
        %v9260 = vunpack.c.l.b16 %v8940
        %v9261 = vunpack.c.h.b16 %v8940
        %v9262 = vunpack.c.l.b16 %v8941
        %v9263 = vunpack.c.h.b16 %v8941
        %v9264 = vunpack.c.l.b16 %v8942
        %v9265 = vunpack.c.h.b16 %v8942
        %v9266 = vunpack.c.l.b16 %v8943
        %v9267 = vunpack.c.h.b16 %v8943
        %v9268 = vunpack.c.l.b16 %v8944
        %v9269 = vunpack.c.h.b16 %v8944
        %v9270 = vunpack.c.l.b16 %v8945
        %v9271 = vunpack.c.h.b16 %v8945
        %v9272 = vunpack.c.l.b16 %v8946
        %v9273 = vunpack.c.h.b16 %v8946
        %v9274 = vunpack.c.l.b16 %v8947
        %v9275 = vunpack.c.h.b16 %v8947
        %v9276 = vunpack.c.l.b16 %v8948
        %v9277 = vunpack.c.h.b16 %v8948
        %v9278 = vunpack.c.l.b16 %v8949
        %v9279 = vunpack.c.h.b16 %v8949
        %v9280 = vunpack.c.l.b16 %v8950
        %v9281 = vunpack.c.h.b16 %v8950
        %v9282 = vunpack.c.l.b16 %v8951
        %v9283 = vunpack.c.h.b16 %v8951
        %v9284 = vunpack.c.l.b16 %v8952
        %v9285 = vunpack.c.h.b16 %v8952
        %v9286 = vunpack.c.l.b16 %v8953
        %v9287 = vunpack.c.h.b16 %v8953
        %v9288 = vunpack.c.l.b16 %v8954
        %v9289 = vunpack.c.h.b16 %v8954
        %v9290 = vunpack.c.l.b16 %v8955
        %v9291 = vunpack.c.h.b16 %v8955
        %v9292 = vunpack.c.l.b16 %v8956
        %v9293 = vunpack.c.h.b16 %v8956
        %v9294 = vunpack.c.l.b16 %v8957
        %v9295 = vunpack.c.h.b16 %v8957
        %v9296 = vunpack.c.l.b16 %v8958
        %v9297 = vunpack.c.h.b16 %v8958
        %v9298 = vunpack.c.l.b16 %v8959
        %v9299 = vunpack.c.h.b16 %v8959
        %v9300 = vunpack.c.l.b16 %v8960
        %v9301 = vunpack.c.h.b16 %v8960
        %v9302 = vunpack.c.l.b16 %v8961
        %v9303 = vunpack.c.h.b16 %v8961
        %v9304 = vunpack.c.l.b16 %v8962
        %v9305 = vunpack.c.h.b16 %v8962
        %v9306 = vunpack.c.l.b16 %v8963
        %v9307 = vunpack.c.h.b16 %v8963
        %v9308 = vunpack.c.l.b16 %v8964
        %v9309 = vunpack.c.h.b16 %v8964
        %v9310 = vunpack.c.l.b16 %v8965
        %v9311 = vunpack.c.h.b16 %v8965
        %v9312 = vunpack.c.l.b16 %v8966
        %v9313 = vunpack.c.h.b16 %v8966
        %v9314 = vunpack.c.l.b16 %v8967
        %v9315 = vunpack.c.h.b16 %v8967
        %v9316 = vunpack.c.l.b16 %v8968
        %v9317 = vunpack.c.h.b16 %v8968
        %v9318 = vunpack.c.l.b16 %v8969
        %v9319 = vunpack.c.h.b16 %v8969
        %v9320 = vunpack.c.l.b16 %v8970
        %v9321 = vunpack.c.h.b16 %v8970
        %v9322 = vunpack.c.l.b16 %v8971
        %v9323 = vunpack.c.h.b16 %v8971
        %v9324 = vunpack.c.l.b16 %v8972
        %v9325 = vunpack.c.h.b16 %v8972
        %v9326 = vunpack.c.l.b16 %v8973
        %v9327 = vunpack.c.h.b16 %v8973
        %v9328 = vunpack.c.l.b16 %v8974
        %v9329 = vunpack.c.h.b16 %v8974
        %v9330 = vunpack.c.l.b16 %v8975
        %v9331 = vunpack.c.h.b16 %v8975
        %v9332 = vunpack.c.l.b16 %v8976
        %v9333 = vunpack.c.h.b16 %v8976
        %v9334 = vunpack.c.l.b16 %v8977
        %v9335 = vunpack.c.h.b16 %v8977
        %v9336 = vunpack.c.l.b16 %v8978
        %v9337 = vunpack.c.h.b16 %v8978
        %v9338 = vunpack.c.l.b16 %v8979
        %v9339 = vunpack.c.h.b16 %v8979
        %v9340 = vunpack.c.l.b16 %v8980
        %v9341 = vunpack.c.h.b16 %v8980
        %v9342 = vunpack.c.l.b16 %v8981
        %v9343 = vunpack.c.h.b16 %v8981
        %v9344 = vpack.c.b16 %v9220, %v9216
        %v9345 = vpack.c.b16 %v9221, %v9217
        %v9346 = vpack.c.b16 %v9222, %v9218
        %v9347 = vpack.c.b16 %v9223, %v9219
        %v9348 = vpack.c.b16 %v9228, %v9224
        %v9349 = vpack.c.b16 %v9229, %v9225
        %v9350 = vpack.c.b16 %v9230, %v9226
        %v9351 = vpack.c.b16 %v9231, %v9227
        %v9352 = vpack.c.b16 %v9236, %v9232
        %v9353 = vpack.c.b16 %v9237, %v9233
        %v9354 = vpack.c.b16 %v9238, %v9234
        %v9355 = vpack.c.b16 %v9239, %v9235
        %v9356 = vpack.c.b16 %v9244, %v9240
        %v9357 = vpack.c.b16 %v9245, %v9241
        %v9358 = vpack.c.b16 %v9246, %v9242
        %v9359 = vpack.c.b16 %v9247, %v9243
        %v9360 = vpack.c.b16 %v9252, %v9248
        %v9361 = vpack.c.b16 %v9253, %v9249
        %v9362 = vpack.c.b16 %v9254, %v9250
        %v9363 = vpack.c.b16 %v9255, %v9251
        %v9364 = vpack.c.b16 %v9260, %v9256
        %v9365 = vpack.c.b16 %v9261, %v9257
        %v9366 = vpack.c.b16 %v9262, %v9258
        %v9367 = vpack.c.b16 %v9263, %v9259
        %v9368 = vpack.c.b16 %v9268, %v9264
        %v9369 = vpack.c.b16 %v9269, %v9265
        %v9370 = vpack.c.b16 %v9270, %v9266
        %v9371 = vpack.c.b16 %v9271, %v9267
        %v9372 = vpack.c.b16 %v9276, %v9272
        %v9373 = vpack.c.b16 %v9277, %v9273
        %v9374 = vpack.c.b16 %v9278, %v9274
        %v9375 = vpack.c.b16 %v9279, %v9275
        %v9376 = vpack.c.b16 %v9284, %v9280
        %v9377 = vpack.c.b16 %v9285, %v9281
        %v9378 = vpack.c.b16 %v9286, %v9282
        %v9379 = vpack.c.b16 %v9287, %v9283
        %v9380 = vpack.c.b16 %v9292, %v9288
        %v9381 = vpack.c.b16 %v9293, %v9289
        %v9382 = vpack.c.b16 %v9294, %v9290
        %v9383 = vpack.c.b16 %v9295, %v9291
        %v9384 = vpack.c.b16 %v9300, %v9296
        %v9385 = vpack.c.b16 %v9301, %v9297
        %v9386 = vpack.c.b16 %v9302, %v9298
        %v9387 = vpack.c.b16 %v9303, %v9299
        %v9388 = vpack.c.b16 %v9308, %v9304
        %v9389 = vpack.c.b16 %v9309, %v9305
        %v9390 = vpack.c.b16 %v9310, %v9306
        %v9391 = vpack.c.b16 %v9311, %v9307
        %v9392 = vpack.c.b16 %v9316, %v9312
        %v9393 = vpack.c.b16 %v9317, %v9313
        %v9394 = vpack.c.b16 %v9318, %v9314
        %v9395 = vpack.c.b16 %v9319, %v9315
        %v9396 = vpack.c.b16 %v9324, %v9320
        %v9397 = vpack.c.b16 %v9325, %v9321
        %v9398 = vpack.c.b16 %v9326, %v9322
        %v9399 = vpack.c.b16 %v9327, %v9323
        %v9400 = vpack.c.b16 %v9332, %v9328
        %v9401 = vpack.c.b16 %v9333, %v9329
        %v9402 = vpack.c.b16 %v9334, %v9330
        %v9403 = vpack.c.b16 %v9335, %v9331
        %v9404 = vpack.c.b16 %v9340, %v9336
        %v9405 = vpack.c.b16 %v9341, %v9337
        %v9406 = vpack.c.b16 %v9342, %v9338
        %v9407 = vpack.c.b16 %v9343, %v9339
        %9472 = vmatpush.bf16.msra.mxu0 %v9372
        %9473 = vmatpush.bf16.msra.mxu0 %v9368
        %9474 = vmatpush.bf16.msra.mxu0 %v9364
        %9475 = vmatpush.bf16.msra.mxu0 %v9360
        %9476 = vmatpush.bf16.msra.mxu0 %v9356
        %9477 = vmatpush.bf16.msra.mxu0 %v9352
        %9478 = vmatpush.bf16.msra.mxu0 %v9348
        %9479 = vmatpush.bf16.msra.mxu0 %v9344
        %9480 = vmatmul.bf16.gmra.mxu0 %v9088
        %v9481 = vpop.f32.mrf.mxu0
        %v9482 = vadd.f32 %v8984, %v9481
        %v9483 = vpop.f32.mrf.mxu0
        %v9484 = vadd.f32 %v8984, %v9483
        %9485 = vmatmul.bf16.gmra.mxu0 %v9090
        %v9486 = vpop.f32.mrf.mxu0
        %v9487 = vadd.f32 %v8984, %v9486
        %v9488 = vpop.f32.mrf.mxu0
        %v9489 = vadd.f32 %v8984, %v9488
        %9490 = vmatmul.bf16.gmra.mxu0 %v9092
        %v9491 = vpop.f32.mrf.mxu0
        %v9492 = vadd.f32 %v8984, %v9491
        %v9493 = vpop.f32.mrf.mxu0
        %v9494 = vadd.f32 %v8984, %v9493
        %9495 = vmatmul.bf16.gmra.mxu0 %v9094
        %v9496 = vpop.f32.mrf.mxu0
        %v9497 = vadd.f32 %v8984, %v9496
        %v9498 = vpop.f32.mrf.mxu0
        %v9499 = vadd.f32 %v8984, %v9498
        %9500 = vmatmul.bf16.gmra.mxu0 %v9096
        %v9501 = vpop.f32.mrf.mxu0
        %v9502 = vadd.f32 %v8984, %v9501
        %v9503 = vpop.f32.mrf.mxu0
        %v9504 = vadd.f32 %v8984, %v9503
        %9505 = vmatmul.bf16.gmra.mxu0 %v9098
        %v9506 = vpop.f32.mrf.mxu0
        %v9507 = vadd.f32 %v8984, %v9506
        %v9508 = vpop.f32.mrf.mxu0
        %v9509 = vadd.f32 %v8984, %v9508
        %9510 = vmatmul.bf16.gmra.mxu0 %v9100
        %v9511 = vpop.f32.mrf.mxu0
        %v9512 = vadd.f32 %v8984, %v9511
        %v9513 = vpop.f32.mrf.mxu0
        %v9514 = vadd.f32 %v8984, %v9513
        %9515 = vmatmul.bf16.gmra.mxu0 %v9102
        %v9516 = vpop.f32.mrf.mxu0
        %v9517 = vadd.f32 %v8984, %v9516
        %v9518 = vpop.f32.mrf.mxu0
        %v9519 = vadd.f32 %v8984, %v9518
        %9520 = vmatmul.bf16.gmra.mxu0 %v9104
        %v9521 = vpop.f32.mrf.mxu0
        %v9522 = vadd.f32 %v8984, %v9521
        %v9523 = vpop.f32.mrf.mxu0
        %v9524 = vadd.f32 %v8984, %v9523
        %9525 = vmatmul.bf16.gmra.mxu0 %v9106
        %v9526 = vpop.f32.mrf.mxu0
        %v9527 = vadd.f32 %v8984, %v9526
        %v9528 = vpop.f32.mrf.mxu0
        %v9529 = vadd.f32 %v8984, %v9528
        %9530 = vmatmul.bf16.gmra.mxu0 %v9108
        %v9531 = vpop.f32.mrf.mxu0
        %v9532 = vadd.f32 %v8984, %v9531
        %v9533 = vpop.f32.mrf.mxu0
        %v9534 = vadd.f32 %v8984, %v9533
        %9535 = vmatmul.bf16.gmra.mxu0 %v9110
        %v9536 = vpop.f32.mrf.mxu0
        %v9537 = vadd.f32 %v8984, %v9536
        %v9538 = vpop.f32.mrf.mxu0
        %v9539 = vadd.f32 %v8984, %v9538
        %9540 = vmatmul.bf16.gmra.mxu0 %v9112
        %v9541 = vpop.f32.mrf.mxu0
        %v9542 = vadd.f32 %v8984, %v9541
        %v9543 = vpop.f32.mrf.mxu0
        %v9544 = vadd.f32 %v8984, %v9543
        %9545 = vmatmul.bf16.gmra.mxu0 %v9114
        %v9546 = vpop.f32.mrf.mxu0
        %v9547 = vadd.f32 %v8984, %v9546
        %v9548 = vpop.f32.mrf.mxu0
        %v9549 = vadd.f32 %v8984, %v9548
        %9550 = vmatmul.bf16.gmra.mxu0 %v9116
        %v9551 = vpop.f32.mrf.mxu0
        %v9552 = vadd.f32 %v8984, %v9551
        %v9553 = vpop.f32.mrf.mxu0
        %v9554 = vadd.f32 %v8984, %v9553
        %9555 = vmatmul.bf16.gmra.mxu0 %v9118
        %v9556 = vpop.f32.mrf.mxu0
        %v9557 = vadd.f32 %v8984, %v9556
        %v9558 = vpop.f32.mrf.mxu0
        %v9559 = vadd.f32 %v8984, %v9558
        %9560 = vdwg.mxu0
        %9561 = vmatpush.bf16.msra.mxu0 %v9404
        %9562 = vmatpush.bf16.msra.mxu0 %v9400
        %9563 = vmatpush.bf16.msra.mxu0 %v9396
        %9564 = vmatpush.bf16.msra.mxu0 %v9392
        %9565 = vmatpush.bf16.msra.mxu0 %v9388
        %9566 = vmatpush.bf16.msra.mxu0 %v9384
        %9567 = vmatpush.bf16.msra.mxu0 %v9380
        %9568 = vmatpush.bf16.msra.mxu0 %v9376
        %9569 = vmatmul.bf16.gmra.mxu0 %v9089
        %v9570 = vpop.f32.mrf.mxu0
        %v9571 = vadd.f32 %v9482, %v9570
        %v9572 = vpop.f32.mrf.mxu0
        %v9573 = vadd.f32 %v9484, %v9572
        %9574 = vmatmul.bf16.gmra.mxu0 %v9091
        %v9575 = vpop.f32.mrf.mxu0
        %v9576 = vadd.f32 %v9487, %v9575
        %v9577 = vpop.f32.mrf.mxu0
        %v9578 = vadd.f32 %v9489, %v9577
        %9579 = vmatmul.bf16.gmra.mxu0 %v9093
        %v9580 = vpop.f32.mrf.mxu0
        %v9581 = vadd.f32 %v9492, %v9580
        %v9582 = vpop.f32.mrf.mxu0
        %v9583 = vadd.f32 %v9494, %v9582
        %9584 = vmatmul.bf16.gmra.mxu0 %v9095
        %v9585 = vpop.f32.mrf.mxu0
        %v9586 = vadd.f32 %v9497, %v9585
        %v9587 = vpop.f32.mrf.mxu0
        %v9588 = vadd.f32 %v9499, %v9587
        %9589 = vmatmul.bf16.gmra.mxu0 %v9097
        %v9590 = vpop.f32.mrf.mxu0
        %v9591 = vadd.f32 %v9502, %v9590
        %v9592 = vpop.f32.mrf.mxu0
        %v9593 = vadd.f32 %v9504, %v9592
        %9594 = vmatmul.bf16.gmra.mxu0 %v9099
        %v9595 = vpop.f32.mrf.mxu0
        %v9596 = vadd.f32 %v9507, %v9595
        %v9597 = vpop.f32.mrf.mxu0
        %v9598 = vadd.f32 %v9509, %v9597
        %9599 = vmatmul.bf16.gmra.mxu0 %v9101
        %v9600 = vpop.f32.mrf.mxu0
        %v9601 = vadd.f32 %v9512, %v9600
        %v9602 = vpop.f32.mrf.mxu0
        %v9603 = vadd.f32 %v9514, %v9602
        %9604 = vmatmul.bf16.gmra.mxu0 %v9103
        %v9605 = vpop.f32.mrf.mxu0
        %v9606 = vadd.f32 %v9517, %v9605
        %v9607 = vpop.f32.mrf.mxu0
        %v9608 = vadd.f32 %v9519, %v9607
        %9609 = vmatmul.bf16.gmra.mxu0 %v9105
        %v9610 = vpop.f32.mrf.mxu0
        %v9611 = vadd.f32 %v9522, %v9610
        %v9612 = vpop.f32.mrf.mxu0
        %v9613 = vadd.f32 %v9524, %v9612
        %9614 = vmatmul.bf16.gmra.mxu0 %v9107
        %v9615 = vpop.f32.mrf.mxu0
        %v9616 = vadd.f32 %v9527, %v9615
        %v9617 = vpop.f32.mrf.mxu0
        %v9618 = vadd.f32 %v9529, %v9617
        %9619 = vmatmul.bf16.gmra.mxu0 %v9109
        %v9620 = vpop.f32.mrf.mxu0
        %v9621 = vadd.f32 %v9532, %v9620
        %v9622 = vpop.f32.mrf.mxu0
        %v9623 = vadd.f32 %v9534, %v9622
        %9624 = vmatmul.bf16.gmra.mxu0 %v9111
        %v9625 = vpop.f32.mrf.mxu0
        %v9626 = vadd.f32 %v9537, %v9625
        %v9627 = vpop.f32.mrf.mxu0
        %v9628 = vadd.f32 %v9539, %v9627
        %9629 = vmatmul.bf16.gmra.mxu0 %v9113
        %v9630 = vpop.f32.mrf.mxu0
        %v9631 = vadd.f32 %v9542, %v9630
        %v9632 = vpop.f32.mrf.mxu0
        %v9633 = vadd.f32 %v9544, %v9632
        %9634 = vmatmul.bf16.gmra.mxu0 %v9115
        %v9635 = vpop.f32.mrf.mxu0
        %v9636 = vadd.f32 %v9547, %v9635
        %v9637 = vpop.f32.mrf.mxu0
        %v9638 = vadd.f32 %v9549, %v9637
        %9639 = vmatmul.bf16.gmra.mxu0 %v9117
        %v9640 = vpop.f32.mrf.mxu0
        %v9641 = vadd.f32 %v9552, %v9640
        %v9642 = vpop.f32.mrf.mxu0
        %v9643 = vadd.f32 %v9554, %v9642
        %9644 = vmatmul.bf16.gmra.mxu0 %v9119
        %v9645 = vpop.f32.mrf.mxu0
        %v9646 = vadd.f32 %v9557, %v9645
        %v9647 = vpop.f32.mrf.mxu0
        %v9648 = vadd.f32 %v9559, %v9647
        %9649 = vdwg.mxu0
        %9650 = vmatpush.bf16.msra.mxu0 %v9373
        %9651 = vmatpush.bf16.msra.mxu0 %v9369
        %9652 = vmatpush.bf16.msra.mxu0 %v9365
        %9653 = vmatpush.bf16.msra.mxu0 %v9361
        %9654 = vmatpush.bf16.msra.mxu0 %v9357
        %9655 = vmatpush.bf16.msra.mxu0 %v9353
        %9656 = vmatpush.bf16.msra.mxu0 %v9349
        %9657 = vmatpush.bf16.msra.mxu0 %v9345
        %9658 = vmatmul.bf16.gmra.mxu0 %v9088
        %v9659 = vpop.f32.mrf.mxu0
        %v9660 = vadd.f32 %v8985, %v9659
        %v9661 = vpop.f32.mrf.mxu0
        %v9662 = vadd.f32 %v8985, %v9661
        %9663 = vmatmul.bf16.gmra.mxu0 %v9090
        %v9664 = vpop.f32.mrf.mxu0
        %v9665 = vadd.f32 %v8985, %v9664
        %v9666 = vpop.f32.mrf.mxu0
        %v9667 = vadd.f32 %v8985, %v9666
        %9668 = vmatmul.bf16.gmra.mxu0 %v9092
        %v9669 = vpop.f32.mrf.mxu0
        %v9670 = vadd.f32 %v8985, %v9669
        %v9671 = vpop.f32.mrf.mxu0
        %v9672 = vadd.f32 %v8985, %v9671
        %9673 = vmatmul.bf16.gmra.mxu0 %v9094
        %v9674 = vpop.f32.mrf.mxu0
        %v9675 = vadd.f32 %v8985, %v9674
        %v9676 = vpop.f32.mrf.mxu0
        %v9677 = vadd.f32 %v8985, %v9676
        %9678 = vmatmul.bf16.gmra.mxu0 %v9096
        %v9679 = vpop.f32.mrf.mxu0
        %v9680 = vadd.f32 %v8985, %v9679
        %v9681 = vpop.f32.mrf.mxu0
        %v9682 = vadd.f32 %v8985, %v9681
        %9683 = vmatmul.bf16.gmra.mxu0 %v9098
        %v9684 = vpop.f32.mrf.mxu0
        %v9685 = vadd.f32 %v8985, %v9684
        %v9686 = vpop.f32.mrf.mxu0
        %v9687 = vadd.f32 %v8985, %v9686
        %9688 = vmatmul.bf16.gmra.mxu0 %v9100
        %v9689 = vpop.f32.mrf.mxu0
        %v9690 = vadd.f32 %v8985, %v9689
        %v9691 = vpop.f32.mrf.mxu0
        %v9692 = vadd.f32 %v8985, %v9691
        %9693 = vmatmul.bf16.gmra.mxu0 %v9102
        %v9694 = vpop.f32.mrf.mxu0
        %v9695 = vadd.f32 %v8985, %v9694
        %v9696 = vpop.f32.mrf.mxu0
        %v9697 = vadd.f32 %v8985, %v9696
        %9698 = vmatmul.bf16.gmra.mxu0 %v9104
        %v9699 = vpop.f32.mrf.mxu0
        %v9700 = vadd.f32 %v8985, %v9699
        %v9701 = vpop.f32.mrf.mxu0
        %v9702 = vadd.f32 %v8985, %v9701
        %9703 = vmatmul.bf16.gmra.mxu0 %v9106
        %v9704 = vpop.f32.mrf.mxu0
        %v9705 = vadd.f32 %v8985, %v9704
        %v9706 = vpop.f32.mrf.mxu0
        %v9707 = vadd.f32 %v8985, %v9706
        %9708 = vmatmul.bf16.gmra.mxu0 %v9108
        %v9709 = vpop.f32.mrf.mxu0
        %v9710 = vadd.f32 %v8985, %v9709
        %v9711 = vpop.f32.mrf.mxu0
        %v9712 = vadd.f32 %v8985, %v9711
        %9713 = vmatmul.bf16.gmra.mxu0 %v9110
        %v9714 = vpop.f32.mrf.mxu0
        %v9715 = vadd.f32 %v8985, %v9714
        %v9716 = vpop.f32.mrf.mxu0
        %v9717 = vadd.f32 %v8985, %v9716
        %9718 = vmatmul.bf16.gmra.mxu0 %v9112
        %v9719 = vpop.f32.mrf.mxu0
        %v9720 = vadd.f32 %v8985, %v9719
        %v9721 = vpop.f32.mrf.mxu0
        %v9722 = vadd.f32 %v8985, %v9721
        %9723 = vmatmul.bf16.gmra.mxu0 %v9114
        %v9724 = vpop.f32.mrf.mxu0
        %v9725 = vadd.f32 %v8985, %v9724
        %v9726 = vpop.f32.mrf.mxu0
        %v9727 = vadd.f32 %v8985, %v9726
        %9728 = vmatmul.bf16.gmra.mxu0 %v9116
        %v9729 = vpop.f32.mrf.mxu0
        %v9730 = vadd.f32 %v8985, %v9729
        %v9731 = vpop.f32.mrf.mxu0
        %v9732 = vadd.f32 %v8985, %v9731
        %9733 = vmatmul.bf16.gmra.mxu0 %v9118
        %v9734 = vpop.f32.mrf.mxu0
        %v9735 = vadd.f32 %v8985, %v9734
        %v9736 = vpop.f32.mrf.mxu0
        %v9737 = vadd.f32 %v8985, %v9736
        %9738 = vdwg.mxu0
        %9739 = vmatpush.bf16.msra.mxu0 %v9405
        %9740 = vmatpush.bf16.msra.mxu0 %v9401
        %9741 = vmatpush.bf16.msra.mxu0 %v9397
        %9742 = vmatpush.bf16.msra.mxu0 %v9393
        %9743 = vmatpush.bf16.msra.mxu0 %v9389
        %9744 = vmatpush.bf16.msra.mxu0 %v9385
        %9745 = vmatpush.bf16.msra.mxu0 %v9381
        %9746 = vmatpush.bf16.msra.mxu0 %v9377
        %9747 = vmatmul.bf16.gmra.mxu0 %v9089
        %v9748 = vpop.f32.mrf.mxu0
        %v9749 = vadd.f32 %v9660, %v9748
        %v9750 = vpop.f32.mrf.mxu0
        %v9751 = vadd.f32 %v9662, %v9750
        %9752 = vmatmul.bf16.gmra.mxu0 %v9091
        %v9753 = vpop.f32.mrf.mxu0
        %v9754 = vadd.f32 %v9665, %v9753
        %v9755 = vpop.f32.mrf.mxu0
        %v9756 = vadd.f32 %v9667, %v9755
        %9757 = vmatmul.bf16.gmra.mxu0 %v9093
        %v9758 = vpop.f32.mrf.mxu0
        %v9759 = vadd.f32 %v9670, %v9758
        %v9760 = vpop.f32.mrf.mxu0
        %v9761 = vadd.f32 %v9672, %v9760
        %9762 = vmatmul.bf16.gmra.mxu0 %v9095
        %v9763 = vpop.f32.mrf.mxu0
        %v9764 = vadd.f32 %v9675, %v9763
        %v9765 = vpop.f32.mrf.mxu0
        %v9766 = vadd.f32 %v9677, %v9765
        %9767 = vmatmul.bf16.gmra.mxu0 %v9097
        %v9768 = vpop.f32.mrf.mxu0
        %v9769 = vadd.f32 %v9680, %v9768
        %v9770 = vpop.f32.mrf.mxu0
        %v9771 = vadd.f32 %v9682, %v9770
        %9772 = vmatmul.bf16.gmra.mxu0 %v9099
        %v9773 = vpop.f32.mrf.mxu0
        %v9774 = vadd.f32 %v9685, %v9773
        %v9775 = vpop.f32.mrf.mxu0
        %v9776 = vadd.f32 %v9687, %v9775
        %9777 = vmatmul.bf16.gmra.mxu0 %v9101
        %v9778 = vpop.f32.mrf.mxu0
        %v9779 = vadd.f32 %v9690, %v9778
        %v9780 = vpop.f32.mrf.mxu0
        %v9781 = vadd.f32 %v9692, %v9780
        %9782 = vmatmul.bf16.gmra.mxu0 %v9103
        %v9783 = vpop.f32.mrf.mxu0
        %v9784 = vadd.f32 %v9695, %v9783
        %v9785 = vpop.f32.mrf.mxu0
        %v9786 = vadd.f32 %v9697, %v9785
        %9787 = vmatmul.bf16.gmra.mxu0 %v9105
        %v9788 = vpop.f32.mrf.mxu0
        %v9789 = vadd.f32 %v9700, %v9788
        %v9790 = vpop.f32.mrf.mxu0
        %v9791 = vadd.f32 %v9702, %v9790
        %9792 = vmatmul.bf16.gmra.mxu0 %v9107
        %v9793 = vpop.f32.mrf.mxu0
        %v9794 = vadd.f32 %v9705, %v9793
        %v9795 = vpop.f32.mrf.mxu0
        %v9796 = vadd.f32 %v9707, %v9795
        %9797 = vmatmul.bf16.gmra.mxu0 %v9109
        %v9798 = vpop.f32.mrf.mxu0
        %v9799 = vadd.f32 %v9710, %v9798
        %v9800 = vpop.f32.mrf.mxu0
        %v9801 = vadd.f32 %v9712, %v9800
        %9802 = vmatmul.bf16.gmra.mxu0 %v9111
        %v9803 = vpop.f32.mrf.mxu0
        %v9804 = vadd.f32 %v9715, %v9803
        %v9805 = vpop.f32.mrf.mxu0
        %v9806 = vadd.f32 %v9717, %v9805
        %9807 = vmatmul.bf16.gmra.mxu0 %v9113
        %v9808 = vpop.f32.mrf.mxu0
        %v9809 = vadd.f32 %v9720, %v9808
        %v9810 = vpop.f32.mrf.mxu0
        %v9811 = vadd.f32 %v9722, %v9810
        %9812 = vmatmul.bf16.gmra.mxu0 %v9115
        %v9813 = vpop.f32.mrf.mxu0
        %v9814 = vadd.f32 %v9725, %v9813
        %v9815 = vpop.f32.mrf.mxu0
        %v9816 = vadd.f32 %v9727, %v9815
        %9817 = vmatmul.bf16.gmra.mxu0 %v9117
        %v9818 = vpop.f32.mrf.mxu0
        %v9819 = vadd.f32 %v9730, %v9818
        %v9820 = vpop.f32.mrf.mxu0
        %v9821 = vadd.f32 %v9732, %v9820
        %9822 = vmatmul.bf16.gmra.mxu0 %v9119
        %v9823 = vpop.f32.mrf.mxu0
        %v9824 = vadd.f32 %v9735, %v9823
        %v9825 = vpop.f32.mrf.mxu0
        %v9826 = vadd.f32 %v9737, %v9825
        %9827 = vdwg.mxu0
        %9828 = vmatpush.bf16.msra.mxu0 %v9374
        %9829 = vmatpush.bf16.msra.mxu0 %v9370
        %9830 = vmatpush.bf16.msra.mxu0 %v9366
        %9831 = vmatpush.bf16.msra.mxu0 %v9362
        %9832 = vmatpush.bf16.msra.mxu0 %v9358
        %9833 = vmatpush.bf16.msra.mxu0 %v9354
        %9834 = vmatpush.bf16.msra.mxu0 %v9350
        %9835 = vmatpush.bf16.msra.mxu0 %v9346
        %9836 = vmatmul.bf16.gmra.mxu0 %v9088
        %v9837 = vpop.f32.mrf.mxu0
        %v9838 = vadd.f32 %v8986, %v9837
        %v9839 = vpop.f32.mrf.mxu0
        %v9840 = vadd.f32 %v8986, %v9839
        %9841 = vmatmul.bf16.gmra.mxu0 %v9090
        %v9842 = vpop.f32.mrf.mxu0
        %v9843 = vadd.f32 %v8986, %v9842
        %v9844 = vpop.f32.mrf.mxu0
        %v9845 = vadd.f32 %v8986, %v9844
        %9846 = vmatmul.bf16.gmra.mxu0 %v9092
        %v9847 = vpop.f32.mrf.mxu0
        %v9848 = vadd.f32 %v8986, %v9847
        %v9849 = vpop.f32.mrf.mxu0
        %v9850 = vadd.f32 %v8986, %v9849
        %9851 = vmatmul.bf16.gmra.mxu0 %v9094
        %v9852 = vpop.f32.mrf.mxu0
        %v9853 = vadd.f32 %v8986, %v9852
        %v9854 = vpop.f32.mrf.mxu0
        %v9855 = vadd.f32 %v8986, %v9854
        %9856 = vmatmul.bf16.gmra.mxu0 %v9096
        %v9857 = vpop.f32.mrf.mxu0
        %v9858 = vadd.f32 %v8986, %v9857
        %v9859 = vpop.f32.mrf.mxu0
        %v9860 = vadd.f32 %v8986, %v9859
        %9861 = vmatmul.bf16.gmra.mxu0 %v9098
        %v9862 = vpop.f32.mrf.mxu0
        %v9863 = vadd.f32 %v8986, %v9862
        %v9864 = vpop.f32.mrf.mxu0
        %v9865 = vadd.f32 %v8986, %v9864
        %9866 = vmatmul.bf16.gmra.mxu0 %v9100
        %v9867 = vpop.f32.mrf.mxu0
        %v9868 = vadd.f32 %v8986, %v9867
        %v9869 = vpop.f32.mrf.mxu0
        %v9870 = vadd.f32 %v8986, %v9869
        %9871 = vmatmul.bf16.gmra.mxu0 %v9102
        %v9872 = vpop.f32.mrf.mxu0
        %v9873 = vadd.f32 %v8986, %v9872
        %v9874 = vpop.f32.mrf.mxu0
        %v9875 = vadd.f32 %v8986, %v9874
        %9876 = vmatmul.bf16.gmra.mxu0 %v9104
        %v9877 = vpop.f32.mrf.mxu0
        %v9878 = vadd.f32 %v8986, %v9877
        %v9879 = vpop.f32.mrf.mxu0
        %v9880 = vadd.f32 %v8986, %v9879
        %9881 = vmatmul.bf16.gmra.mxu0 %v9106
        %v9882 = vpop.f32.mrf.mxu0
        %v9883 = vadd.f32 %v8986, %v9882
        %v9884 = vpop.f32.mrf.mxu0
        %v9885 = vadd.f32 %v8986, %v9884
        %9886 = vmatmul.bf16.gmra.mxu0 %v9108
        %v9887 = vpop.f32.mrf.mxu0
        %v9888 = vadd.f32 %v8986, %v9887
        %v9889 = vpop.f32.mrf.mxu0
        %v9890 = vadd.f32 %v8986, %v9889
        %9891 = vmatmul.bf16.gmra.mxu0 %v9110
        %v9892 = vpop.f32.mrf.mxu0
        %v9893 = vadd.f32 %v8986, %v9892
        %v9894 = vpop.f32.mrf.mxu0
        %v9895 = vadd.f32 %v8986, %v9894
        %9896 = vmatmul.bf16.gmra.mxu0 %v9112
        %v9897 = vpop.f32.mrf.mxu0
        %v9898 = vadd.f32 %v8986, %v9897
        %v9899 = vpop.f32.mrf.mxu0
        %v9900 = vadd.f32 %v8986, %v9899
        %9901 = vmatmul.bf16.gmra.mxu0 %v9114
        %v9902 = vpop.f32.mrf.mxu0
        %v9903 = vadd.f32 %v8986, %v9902
        %v9904 = vpop.f32.mrf.mxu0
        %v9905 = vadd.f32 %v8986, %v9904
        %9906 = vmatmul.bf16.gmra.mxu0 %v9116
        %v9907 = vpop.f32.mrf.mxu0
        %v9908 = vadd.f32 %v8986, %v9907
        %v9909 = vpop.f32.mrf.mxu0
        %v9910 = vadd.f32 %v8986, %v9909
        %9911 = vmatmul.bf16.gmra.mxu0 %v9118
        %v9912 = vpop.f32.mrf.mxu0
        %v9913 = vadd.f32 %v8986, %v9912
        %v9914 = vpop.f32.mrf.mxu0
        %v9915 = vadd.f32 %v8986, %v9914
        %9916 = vdwg.mxu0
        %9917 = vmatpush.bf16.msra.mxu0 %v9406
        %9918 = vmatpush.bf16.msra.mxu0 %v9402
        %9919 = vmatpush.bf16.msra.mxu0 %v9398
        %9920 = vmatpush.bf16.msra.mxu0 %v9394
        %9921 = vmatpush.bf16.msra.mxu0 %v9390
        %9922 = vmatpush.bf16.msra.mxu0 %v9386
        %9923 = vmatpush.bf16.msra.mxu0 %v9382
        %9924 = vmatpush.bf16.msra.mxu0 %v9378
        %9925 = vmatmul.bf16.gmra.mxu0 %v9089
        %v9926 = vpop.f32.mrf.mxu0
        %v9927 = vadd.f32 %v9838, %v9926
        %v9928 = vpop.f32.mrf.mxu0
        %v9929 = vadd.f32 %v9840, %v9928
        %9930 = vmatmul.bf16.gmra.mxu0 %v9091
        %v9931 = vpop.f32.mrf.mxu0
        %v9932 = vadd.f32 %v9843, %v9931
        %v9933 = vpop.f32.mrf.mxu0
        %v9934 = vadd.f32 %v9845, %v9933
        %9935 = vmatmul.bf16.gmra.mxu0 %v9093
        %v9936 = vpop.f32.mrf.mxu0
        %v9937 = vadd.f32 %v9848, %v9936
        %v9938 = vpop.f32.mrf.mxu0
        %v9939 = vadd.f32 %v9850, %v9938
        %9940 = vmatmul.bf16.gmra.mxu0 %v9095
        %v9941 = vpop.f32.mrf.mxu0
        %v9942 = vadd.f32 %v9853, %v9941
        %v9943 = vpop.f32.mrf.mxu0
        %v9944 = vadd.f32 %v9855, %v9943
        %9945 = vmatmul.bf16.gmra.mxu0 %v9097
        %v9946 = vpop.f32.mrf.mxu0
        %v9947 = vadd.f32 %v9858, %v9946
        %v9948 = vpop.f32.mrf.mxu0
        %v9949 = vadd.f32 %v9860, %v9948
        %9950 = vmatmul.bf16.gmra.mxu0 %v9099
        %v9951 = vpop.f32.mrf.mxu0
        %v9952 = vadd.f32 %v9863, %v9951
        %v9953 = vpop.f32.mrf.mxu0
        %v9954 = vadd.f32 %v9865, %v9953
        %9955 = vmatmul.bf16.gmra.mxu0 %v9101
        %v9956 = vpop.f32.mrf.mxu0
        %v9957 = vadd.f32 %v9868, %v9956
        %v9958 = vpop.f32.mrf.mxu0
        %v9959 = vadd.f32 %v9870, %v9958
        %9960 = vmatmul.bf16.gmra.mxu0 %v9103
        %v9961 = vpop.f32.mrf.mxu0
        %v9962 = vadd.f32 %v9873, %v9961
        %v9963 = vpop.f32.mrf.mxu0
        %v9964 = vadd.f32 %v9875, %v9963
        %9965 = vmatmul.bf16.gmra.mxu0 %v9105
        %v9966 = vpop.f32.mrf.mxu0
        %v9967 = vadd.f32 %v9878, %v9966
        %v9968 = vpop.f32.mrf.mxu0
        %v9969 = vadd.f32 %v9880, %v9968
        %9970 = vmatmul.bf16.gmra.mxu0 %v9107
        %v9971 = vpop.f32.mrf.mxu0
        %v9972 = vadd.f32 %v9883, %v9971
        %v9973 = vpop.f32.mrf.mxu0
        %v9974 = vadd.f32 %v9885, %v9973
        %9975 = vmatmul.bf16.gmra.mxu0 %v9109
        %v9976 = vpop.f32.mrf.mxu0
        %v9977 = vadd.f32 %v9888, %v9976
        %v9978 = vpop.f32.mrf.mxu0
        %v9979 = vadd.f32 %v9890, %v9978
        %9980 = vmatmul.bf16.gmra.mxu0 %v9111
        %v9981 = vpop.f32.mrf.mxu0
        %v9982 = vadd.f32 %v9893, %v9981
        %v9983 = vpop.f32.mrf.mxu0
        %v9984 = vadd.f32 %v9895, %v9983
        %9985 = vmatmul.bf16.gmra.mxu0 %v9113
        %v9986 = vpop.f32.mrf.mxu0
        %v9987 = vadd.f32 %v9898, %v9986
        %v9988 = vpop.f32.mrf.mxu0
        %v9989 = vadd.f32 %v9900, %v9988
        %9990 = vmatmul.bf16.gmra.mxu0 %v9115
        %v9991 = vpop.f32.mrf.mxu0
        %v9992 = vadd.f32 %v9903, %v9991
        %v9993 = vpop.f32.mrf.mxu0
        %v9994 = vadd.f32 %v9905, %v9993
        %9995 = vmatmul.bf16.gmra.mxu0 %v9117
        %v9996 = vpop.f32.mrf.mxu0
        %v9997 = vadd.f32 %v9908, %v9996
        %v9998 = vpop.f32.mrf.mxu0
        %v9999 = vadd.f32 %v9910, %v9998
        %10000 = vmatmul.bf16.gmra.mxu0 %v9119
        %v10001 = vpop.f32.mrf.mxu0
        %v10002 = vadd.f32 %v9913, %v10001
        %v10003 = vpop.f32.mrf.mxu0
        %v10004 = vadd.f32 %v9915, %v10003
        %10005 = vdwg.mxu0
        %10006 = vmatpush.bf16.msra.mxu0 %v9375
        %10007 = vmatpush.bf16.msra.mxu0 %v9371
        %10008 = vmatpush.bf16.msra.mxu0 %v9367
        %10009 = vmatpush.bf16.msra.mxu0 %v9363
        %10010 = vmatpush.bf16.msra.mxu0 %v9359
        %10011 = vmatpush.bf16.msra.mxu0 %v9355
        %10012 = vmatpush.bf16.msra.mxu0 %v9351
        %10013 = vmatpush.bf16.msra.mxu0 %v9347
        %10014 = vmatmul.bf16.gmra.mxu0 %v9088
        %v10015 = vpop.f32.mrf.mxu0
        %v10016 = vadd.f32 %v8987, %v10015
        %v10017 = vpop.f32.mrf.mxu0
        %v10018 = vadd.f32 %v8987, %v10017
        %10019 = vmatmul.bf16.gmra.mxu0 %v9090
        %v10020 = vpop.f32.mrf.mxu0
        %v10021 = vadd.f32 %v8987, %v10020
        %v10022 = vpop.f32.mrf.mxu0
        %v10023 = vadd.f32 %v8987, %v10022
        %10024 = vmatmul.bf16.gmra.mxu0 %v9092
        %v10025 = vpop.f32.mrf.mxu0
        %v10026 = vadd.f32 %v8987, %v10025
        %v10027 = vpop.f32.mrf.mxu0
        %v10028 = vadd.f32 %v8987, %v10027
        %10029 = vmatmul.bf16.gmra.mxu0 %v9094
        %v10030 = vpop.f32.mrf.mxu0
        %v10031 = vadd.f32 %v8987, %v10030
        %v10032 = vpop.f32.mrf.mxu0
        %v10033 = vadd.f32 %v8987, %v10032
        %10034 = vmatmul.bf16.gmra.mxu0 %v9096
        %v10035 = vpop.f32.mrf.mxu0
        %v10036 = vadd.f32 %v8987, %v10035
        %v10037 = vpop.f32.mrf.mxu0
        %v10038 = vadd.f32 %v8987, %v10037
        %10039 = vmatmul.bf16.gmra.mxu0 %v9098
        %v10040 = vpop.f32.mrf.mxu0
        %v10041 = vadd.f32 %v8987, %v10040
        %v10042 = vpop.f32.mrf.mxu0
        %v10043 = vadd.f32 %v8987, %v10042
        %10044 = vmatmul.bf16.gmra.mxu0 %v9100
        %v10045 = vpop.f32.mrf.mxu0
        %v10046 = vadd.f32 %v8987, %v10045
        %v10047 = vpop.f32.mrf.mxu0
        %v10048 = vadd.f32 %v8987, %v10047
        %10049 = vmatmul.bf16.gmra.mxu0 %v9102
        %v10050 = vpop.f32.mrf.mxu0
        %v10051 = vadd.f32 %v8987, %v10050
        %v10052 = vpop.f32.mrf.mxu0
        %v10053 = vadd.f32 %v8987, %v10052
        %10054 = vmatmul.bf16.gmra.mxu0 %v9104
        %v10055 = vpop.f32.mrf.mxu0
        %v10056 = vadd.f32 %v8987, %v10055
        %v10057 = vpop.f32.mrf.mxu0
        %v10058 = vadd.f32 %v8987, %v10057
        %10059 = vmatmul.bf16.gmra.mxu0 %v9106
        %v10060 = vpop.f32.mrf.mxu0
        %v10061 = vadd.f32 %v8987, %v10060
        %v10062 = vpop.f32.mrf.mxu0
        %v10063 = vadd.f32 %v8987, %v10062
        %10064 = vmatmul.bf16.gmra.mxu0 %v9108
        %v10065 = vpop.f32.mrf.mxu0
        %v10066 = vadd.f32 %v8987, %v10065
        %v10067 = vpop.f32.mrf.mxu0
        %v10068 = vadd.f32 %v8987, %v10067
        %10069 = vmatmul.bf16.gmra.mxu0 %v9110
        %v10070 = vpop.f32.mrf.mxu0
        %v10071 = vadd.f32 %v8987, %v10070
        %v10072 = vpop.f32.mrf.mxu0
        %v10073 = vadd.f32 %v8987, %v10072
        %10074 = vmatmul.bf16.gmra.mxu0 %v9112
        %v10075 = vpop.f32.mrf.mxu0
        %v10076 = vadd.f32 %v8987, %v10075
        %v10077 = vpop.f32.mrf.mxu0
        %v10078 = vadd.f32 %v8987, %v10077
        %10079 = vmatmul.bf16.gmra.mxu0 %v9114
        %v10080 = vpop.f32.mrf.mxu0
        %v10081 = vadd.f32 %v8987, %v10080
        %v10082 = vpop.f32.mrf.mxu0
        %v10083 = vadd.f32 %v8987, %v10082
        %10084 = vmatmul.bf16.gmra.mxu0 %v9116
        %v10085 = vpop.f32.mrf.mxu0
        %v10086 = vadd.f32 %v8987, %v10085
        %v10087 = vpop.f32.mrf.mxu0
        %v10088 = vadd.f32 %v8987, %v10087
        %10089 = vmatmul.bf16.gmra.mxu0 %v9118
        %v10090 = vpop.f32.mrf.mxu0
        %v10091 = vadd.f32 %v8987, %v10090
        %v10092 = vpop.f32.mrf.mxu0
        %v10093 = vadd.f32 %v8987, %v10092
        %10094 = vdwg.mxu0
        %10095 = vmatpush.bf16.msra.mxu0 %v9407
        %10096 = vmatpush.bf16.msra.mxu0 %v9403
        %10097 = vmatpush.bf16.msra.mxu0 %v9399
        %10098 = vmatpush.bf16.msra.mxu0 %v9395
        %10099 = vmatpush.bf16.msra.mxu0 %v9391
        %10100 = vmatpush.bf16.msra.mxu0 %v9387
        %10101 = vmatpush.bf16.msra.mxu0 %v9383
        %10102 = vmatpush.bf16.msra.mxu0 %v9379
        %10103 = vmatmul.bf16.gmra.mxu0 %v9089
        %v10104 = vpop.f32.mrf.mxu0
        %v10105 = vadd.f32 %v10016, %v10104
        %v10106 = vpop.f32.mrf.mxu0
        %v10107 = vadd.f32 %v10018, %v10106
        %10108 = vmatmul.bf16.gmra.mxu0 %v9091
        %v10109 = vpop.f32.mrf.mxu0
        %v10110 = vadd.f32 %v10021, %v10109
        %v10111 = vpop.f32.mrf.mxu0
        %v10112 = vadd.f32 %v10023, %v10111
        %10113 = vmatmul.bf16.gmra.mxu0 %v9093
        %v10114 = vpop.f32.mrf.mxu0
        %v10115 = vadd.f32 %v10026, %v10114
        %v10116 = vpop.f32.mrf.mxu0
        %v10117 = vadd.f32 %v10028, %v10116
        %10118 = vmatmul.bf16.gmra.mxu0 %v9095
        %v10119 = vpop.f32.mrf.mxu0
        %v10120 = vadd.f32 %v10031, %v10119
        %v10121 = vpop.f32.mrf.mxu0
        %v10122 = vadd.f32 %v10033, %v10121
        %10123 = vmatmul.bf16.gmra.mxu0 %v9097
        %v10124 = vpop.f32.mrf.mxu0
        %v10125 = vadd.f32 %v10036, %v10124
        %v10126 = vpop.f32.mrf.mxu0
        %v10127 = vadd.f32 %v10038, %v10126
        %10128 = vmatmul.bf16.gmra.mxu0 %v9099
        %v10129 = vpop.f32.mrf.mxu0
        %v10130 = vadd.f32 %v10041, %v10129
        %v10131 = vpop.f32.mrf.mxu0
        %v10132 = vadd.f32 %v10043, %v10131
        %10133 = vmatmul.bf16.gmra.mxu0 %v9101
        %v10134 = vpop.f32.mrf.mxu0
        %v10135 = vadd.f32 %v10046, %v10134
        %v10136 = vpop.f32.mrf.mxu0
        %v10137 = vadd.f32 %v10048, %v10136
        %10138 = vmatmul.bf16.gmra.mxu0 %v9103
        %v10139 = vpop.f32.mrf.mxu0
        %v10140 = vadd.f32 %v10051, %v10139
        %v10141 = vpop.f32.mrf.mxu0
        %v10142 = vadd.f32 %v10053, %v10141
        %10143 = vmatmul.bf16.gmra.mxu0 %v9105
        %v10144 = vpop.f32.mrf.mxu0
        %v10145 = vadd.f32 %v10056, %v10144
        %v10146 = vpop.f32.mrf.mxu0
        %v10147 = vadd.f32 %v10058, %v10146
        %10148 = vmatmul.bf16.gmra.mxu0 %v9107
        %v10149 = vpop.f32.mrf.mxu0
        %v10150 = vadd.f32 %v10061, %v10149
        %v10151 = vpop.f32.mrf.mxu0
        %v10152 = vadd.f32 %v10063, %v10151
        %10153 = vmatmul.bf16.gmra.mxu0 %v9109
        %v10154 = vpop.f32.mrf.mxu0
        %v10155 = vadd.f32 %v10066, %v10154
        %v10156 = vpop.f32.mrf.mxu0
        %v10157 = vadd.f32 %v10068, %v10156
        %10158 = vmatmul.bf16.gmra.mxu0 %v9111
        %v10159 = vpop.f32.mrf.mxu0
        %v10160 = vadd.f32 %v10071, %v10159
        %v10161 = vpop.f32.mrf.mxu0
        %v10162 = vadd.f32 %v10073, %v10161
        %10163 = vmatmul.bf16.gmra.mxu0 %v9113
        %v10164 = vpop.f32.mrf.mxu0
        %v10165 = vadd.f32 %v10076, %v10164
        %v10166 = vpop.f32.mrf.mxu0
        %v10167 = vadd.f32 %v10078, %v10166
        %10168 = vmatmul.bf16.gmra.mxu0 %v9115
        %v10169 = vpop.f32.mrf.mxu0
        %v10170 = vadd.f32 %v10081, %v10169
        %v10171 = vpop.f32.mrf.mxu0
        %v10172 = vadd.f32 %v10083, %v10171
        %10173 = vmatmul.bf16.gmra.mxu0 %v9117
        %v10174 = vpop.f32.mrf.mxu0
        %v10175 = vadd.f32 %v10086, %v10174
        %v10176 = vpop.f32.mrf.mxu0
        %v10177 = vadd.f32 %v10088, %v10176
        %10178 = vmatmul.bf16.gmra.mxu0 %v9119
        %v10179 = vpop.f32.mrf.mxu0
        %v10180 = vadd.f32 %v10091, %v10179
        %v10181 = vpop.f32.mrf.mxu0
        %v10182 = vadd.f32 %v10093, %v10181
        %10183 = vdwg.mxu0
        %v10184 = vmul.f32 %v9571, 0.2
        %v10185 = vmul.f32 %v9749, 0.2
        %v10186 = vmul.f32 %v9927, 0.2
        %v10187 = vmul.f32 %v10105, 0.2
        %v10188 = vmul.f32 %v9573, 0.2
        %v10189 = vmul.f32 %v9751, 0.2
        %v10190 = vmul.f32 %v9929, 0.2
        %v10191 = vmul.f32 %v10107, 0.2
        %v10192 = vmul.f32 %v9576, 0.2
        %v10193 = vmul.f32 %v9754, 0.2
        %v10194 = vmul.f32 %v9932, 0.2
        %v10195 = vmul.f32 %v10110, 0.2
        %v10196 = vmul.f32 %v9578, 0.2
        %v10197 = vmul.f32 %v9756, 0.2
        %v10198 = vmul.f32 %v9934, 0.2
        %v10199 = vmul.f32 %v10112, 0.2
        %v10200 = vmul.f32 %v9581, 0.2
        %v10201 = vmul.f32 %v9759, 0.2
        %v10202 = vmul.f32 %v9937, 0.2
        %v10203 = vmul.f32 %v10115, 0.2
        %v10204 = vmul.f32 %v9583, 0.2
        %v10205 = vmul.f32 %v9761, 0.2
        %v10206 = vmul.f32 %v9939, 0.2
        %v10207 = vmul.f32 %v10117, 0.2
        %v10208 = vmul.f32 %v9586, 0.2
        %v10209 = vmul.f32 %v9764, 0.2
        %v10210 = vmul.f32 %v9942, 0.2
        %v10211 = vmul.f32 %v10120, 0.2
        %v10212 = vmul.f32 %v9588, 0.2
        %v10213 = vmul.f32 %v9766, 0.2
        %v10214 = vmul.f32 %v9944, 0.2
        %v10215 = vmul.f32 %v10122, 0.2
        %v10216 = vmul.f32 %v9591, 0.2
        %v10217 = vmul.f32 %v9769, 0.2
        %v10218 = vmul.f32 %v9947, 0.2
        %v10219 = vmul.f32 %v10125, 0.2
        %v10220 = vmul.f32 %v9593, 0.2
        %v10221 = vmul.f32 %v9771, 0.2
        %v10222 = vmul.f32 %v9949, 0.2
        %v10223 = vmul.f32 %v10127, 0.2
        %v10224 = vmul.f32 %v9596, 0.2
        %v10225 = vmul.f32 %v9774, 0.2
        %v10226 = vmul.f32 %v9952, 0.2
        %v10227 = vmul.f32 %v10130, 0.2
        %v10228 = vmul.f32 %v9598, 0.2
        %v10229 = vmul.f32 %v9776, 0.2
        %v10230 = vmul.f32 %v9954, 0.2
        %v10231 = vmul.f32 %v10132, 0.2
        %v10232 = vmul.f32 %v9601, 0.2
        %v10233 = vmul.f32 %v9779, 0.2
        %v10234 = vmul.f32 %v9957, 0.2
        %v10235 = vmul.f32 %v10135, 0.2
        %v10236 = vmul.f32 %v9603, 0.2
        %v10237 = vmul.f32 %v9781, 0.2
        %v10238 = vmul.f32 %v9959, 0.2
        %v10239 = vmul.f32 %v10137, 0.2
        %v10240 = vmul.f32 %v9606, 0.2
        %v10241 = vmul.f32 %v9784, 0.2
        %v10242 = vmul.f32 %v9962, 0.2
        %v10243 = vmul.f32 %v10140, 0.2
        %v10244 = vmul.f32 %v9608, 0.2
        %v10245 = vmul.f32 %v9786, 0.2
        %v10246 = vmul.f32 %v9964, 0.2
        %v10247 = vmul.f32 %v10142, 0.2
        %v10248 = vmul.f32 %v9611, 0.2
        %v10249 = vmul.f32 %v9789, 0.2
        %v10250 = vmul.f32 %v9967, 0.2
        %v10251 = vmul.f32 %v10145, 0.2
        %v10252 = vmul.f32 %v9613, 0.2
        %v10253 = vmul.f32 %v9791, 0.2
        %v10254 = vmul.f32 %v9969, 0.2
        %v10255 = vmul.f32 %v10147, 0.2
        %v10256 = vmul.f32 %v9616, 0.2
        %v10257 = vmul.f32 %v9794, 0.2
        %v10258 = vmul.f32 %v9972, 0.2
        %v10259 = vmul.f32 %v10150, 0.2
        %v10260 = vmul.f32 %v9618, 0.2
        %v10261 = vmul.f32 %v9796, 0.2
        %v10262 = vmul.f32 %v9974, 0.2
        %v10263 = vmul.f32 %v10152, 0.2
        %v10264 = vmul.f32 %v9621, 0.2
        %v10265 = vmul.f32 %v9799, 0.2
        %v10266 = vmul.f32 %v9977, 0.2
        %v10267 = vmul.f32 %v10155, 0.2
        %v10268 = vmul.f32 %v9623, 0.2
        %v10269 = vmul.f32 %v9801, 0.2
        %v10270 = vmul.f32 %v9979, 0.2
        %v10271 = vmul.f32 %v10157, 0.2
        %v10272 = vmul.f32 %v9626, 0.2
        %v10273 = vmul.f32 %v9804, 0.2
        %v10274 = vmul.f32 %v9982, 0.2
        %v10275 = vmul.f32 %v10160, 0.2
        %v10276 = vmul.f32 %v9628, 0.2
        %v10277 = vmul.f32 %v9806, 0.2
        %v10278 = vmul.f32 %v9984, 0.2
        %v10279 = vmul.f32 %v10162, 0.2
        %v10280 = vmul.f32 %v9631, 0.2
        %v10281 = vmul.f32 %v9809, 0.2
        %v10282 = vmul.f32 %v9987, 0.2
        %v10283 = vmul.f32 %v10165, 0.2
        %v10284 = vmul.f32 %v9633, 0.2
        %v10285 = vmul.f32 %v9811, 0.2
        %v10286 = vmul.f32 %v9989, 0.2
        %v10287 = vmul.f32 %v10167, 0.2
        %v10288 = vmul.f32 %v9636, 0.2
        %v10289 = vmul.f32 %v9814, 0.2
        %v10290 = vmul.f32 %v9992, 0.2
        %v10291 = vmul.f32 %v10170, 0.2
        %v10292 = vmul.f32 %v9638, 0.2
        %v10293 = vmul.f32 %v9816, 0.2
        %v10294 = vmul.f32 %v9994, 0.2
        %v10295 = vmul.f32 %v10172, 0.2
        %v10296 = vmul.f32 %v9641, 0.2
        %v10297 = vmul.f32 %v9819, 0.2
        %v10298 = vmul.f32 %v9997, 0.2
        %v10299 = vmul.f32 %v10175, 0.2
        %v10300 = vmul.f32 %v9643, 0.2
        %v10301 = vmul.f32 %v9821, 0.2
        %v10302 = vmul.f32 %v9999, 0.2
        %v10303 = vmul.f32 %v10177, 0.2
        %v10304 = vmul.f32 %v9646, 0.2
        %v10305 = vmul.f32 %v9824, 0.2
        %v10306 = vmul.f32 %v10002, 0.2
        %v10307 = vmul.f32 %v10180, 0.2
        %v10308 = vmul.f32 %v9648, 0.2
        %v10309 = vmul.f32 %v9826, 0.2
        %v10310 = vmul.f32 %v10004, 0.2
        %v10311 = vmul.f32 %v10182, 0.2
        %v10312 = vmax.f32 %v9571, %v10184
        %v10313 = vmax.f32 %v9749, %v10185
        %v10314 = vmax.f32 %v9927, %v10186
        %v10315 = vmax.f32 %v10105, %v10187
        %v10316 = vmax.f32 %v9573, %v10188
        %v10317 = vmax.f32 %v9751, %v10189
        %v10318 = vmax.f32 %v9929, %v10190
        %v10319 = vmax.f32 %v10107, %v10191
        %v10320 = vmax.f32 %v9576, %v10192
        %v10321 = vmax.f32 %v9754, %v10193
        %v10322 = vmax.f32 %v9932, %v10194
        %v10323 = vmax.f32 %v10110, %v10195
        %v10324 = vmax.f32 %v9578, %v10196
        %v10325 = vmax.f32 %v9756, %v10197
        %v10326 = vmax.f32 %v9934, %v10198
        %v10327 = vmax.f32 %v10112, %v10199
        %v10328 = vmax.f32 %v9581, %v10200
        %v10329 = vmax.f32 %v9759, %v10201
        %v10330 = vmax.f32 %v9937, %v10202
        %v10331 = vmax.f32 %v10115, %v10203
        %v10332 = vmax.f32 %v9583, %v10204
        %v10333 = vmax.f32 %v9761, %v10205
        %v10334 = vmax.f32 %v9939, %v10206
        %v10335 = vmax.f32 %v10117, %v10207
        %v10336 = vmax.f32 %v9586, %v10208
        %v10337 = vmax.f32 %v9764, %v10209
        %v10338 = vmax.f32 %v9942, %v10210
        %v10339 = vmax.f32 %v10120, %v10211
        %v10340 = vmax.f32 %v9588, %v10212
        %v10341 = vmax.f32 %v9766, %v10213
        %v10342 = vmax.f32 %v9944, %v10214
        %v10343 = vmax.f32 %v10122, %v10215
        %v10344 = vmax.f32 %v9591, %v10216
        %v10345 = vmax.f32 %v9769, %v10217
        %v10346 = vmax.f32 %v9947, %v10218
        %v10347 = vmax.f32 %v10125, %v10219
        %v10348 = vmax.f32 %v9593, %v10220
        %v10349 = vmax.f32 %v9771, %v10221
        %v10350 = vmax.f32 %v9949, %v10222
        %v10351 = vmax.f32 %v10127, %v10223
        %v10352 = vmax.f32 %v9596, %v10224
        %v10353 = vmax.f32 %v9774, %v10225
        %v10354 = vmax.f32 %v9952, %v10226
        %v10355 = vmax.f32 %v10130, %v10227
        %v10356 = vmax.f32 %v9598, %v10228
        %v10357 = vmax.f32 %v9776, %v10229
        %v10358 = vmax.f32 %v9954, %v10230
        %v10359 = vmax.f32 %v10132, %v10231
        %v10360 = vmax.f32 %v9601, %v10232
        %v10361 = vmax.f32 %v9779, %v10233
        %v10362 = vmax.f32 %v9957, %v10234
        %v10363 = vmax.f32 %v10135, %v10235
        %v10364 = vmax.f32 %v9603, %v10236
        %v10365 = vmax.f32 %v9781, %v10237
        %v10366 = vmax.f32 %v9959, %v10238
        %v10367 = vmax.f32 %v10137, %v10239
        %v10368 = vmax.f32 %v9606, %v10240
        %v10369 = vmax.f32 %v9784, %v10241
        %v10370 = vmax.f32 %v9962, %v10242
        %v10371 = vmax.f32 %v10140, %v10243
        %v10372 = vmax.f32 %v9608, %v10244
        %v10373 = vmax.f32 %v9786, %v10245
        %v10374 = vmax.f32 %v9964, %v10246
        %v10375 = vmax.f32 %v10142, %v10247
        %v10376 = vmax.f32 %v9611, %v10248
        %v10377 = vmax.f32 %v9789, %v10249
        %v10378 = vmax.f32 %v9967, %v10250
        %v10379 = vmax.f32 %v10145, %v10251
        %v10380 = vmax.f32 %v9613, %v10252
        %v10381 = vmax.f32 %v9791, %v10253
        %v10382 = vmax.f32 %v9969, %v10254
        %v10383 = vmax.f32 %v10147, %v10255
        %v10384 = vmax.f32 %v9616, %v10256
        %v10385 = vmax.f32 %v9794, %v10257
        %v10386 = vmax.f32 %v9972, %v10258
        %v10387 = vmax.f32 %v10150, %v10259
        %v10388 = vmax.f32 %v9618, %v10260
        %v10389 = vmax.f32 %v9796, %v10261
        %v10390 = vmax.f32 %v9974, %v10262
        %v10391 = vmax.f32 %v10152, %v10263
        %v10392 = vmax.f32 %v9621, %v10264
        %v10393 = vmax.f32 %v9799, %v10265
        %v10394 = vmax.f32 %v9977, %v10266
        %v10395 = vmax.f32 %v10155, %v10267
        %v10396 = vmax.f32 %v9623, %v10268
        %v10397 = vmax.f32 %v9801, %v10269
        %v10398 = vmax.f32 %v9979, %v10270
        %v10399 = vmax.f32 %v10157, %v10271
        %v10400 = vmax.f32 %v9626, %v10272
        %v10401 = vmax.f32 %v9804, %v10273
        %v10402 = vmax.f32 %v9982, %v10274
        %v10403 = vmax.f32 %v10160, %v10275
        %v10404 = vmax.f32 %v9628, %v10276
        %v10405 = vmax.f32 %v9806, %v10277
        %v10406 = vmax.f32 %v9984, %v10278
        %v10407 = vmax.f32 %v10162, %v10279
        %v10408 = vmax.f32 %v9631, %v10280
        %v10409 = vmax.f32 %v9809, %v10281
        %v10410 = vmax.f32 %v9987, %v10282
        %v10411 = vmax.f32 %v10165, %v10283
        %v10412 = vmax.f32 %v9633, %v10284
        %v10413 = vmax.f32 %v9811, %v10285
        %v10414 = vmax.f32 %v9989, %v10286
        %v10415 = vmax.f32 %v10167, %v10287
        %v10416 = vmax.f32 %v9636, %v10288
        %v10417 = vmax.f32 %v9814, %v10289
        %v10418 = vmax.f32 %v9992, %v10290
        %v10419 = vmax.f32 %v10170, %v10291
        %v10420 = vmax.f32 %v9638, %v10292
        %v10421 = vmax.f32 %v9816, %v10293
        %v10422 = vmax.f32 %v9994, %v10294
        %v10423 = vmax.f32 %v10172, %v10295
        %v10424 = vmax.f32 %v9641, %v10296
        %v10425 = vmax.f32 %v9819, %v10297
        %v10426 = vmax.f32 %v9997, %v10298
        %v10427 = vmax.f32 %v10175, %v10299
        %v10428 = vmax.f32 %v9643, %v10300
        %v10429 = vmax.f32 %v9821, %v10301
        %v10430 = vmax.f32 %v9999, %v10302
        %v10431 = vmax.f32 %v10177, %v10303
        %v10432 = vmax.f32 %v9646, %v10304
        %v10433 = vmax.f32 %v9824, %v10305
        %v10434 = vmax.f32 %v10002, %v10306
        %v10435 = vmax.f32 %v10180, %v10307
        %v10436 = vmax.f32 %v9648, %v10308
        %v10437 = vmax.f32 %v9826, %v10309
        %v10438 = vmax.f32 %v10004, %v10310
        %v10439 = vmax.f32 %v10182, %v10311
        %v10440 = vld [vmem:[%s16] sm:$0xf]
        %v10442 = vperm.slane %v10440, 0
        %v10443 = vperm.slane %v10440, 1
        %v10444 = vperm.slane %v10440, 2
        %v10445 = vperm.slane %v10440, 3
        %v10450 = vmul.f32 %v10312, %v10442
        %v10451 = vmul.f32 %v10313, %v10443
        %v10452 = vmul.f32 %v10314, %v10444
        %v10453 = vmul.f32 %v10315, %v10445
        %v10454 = vmul.f32 %v10316, %v10442
        %v10455 = vmul.f32 %v10317, %v10443
        %v10456 = vmul.f32 %v10318, %v10444
        %v10457 = vmul.f32 %v10319, %v10445
        %v10458 = vmul.f32 %v10320, %v10442
        %v10459 = vmul.f32 %v10321, %v10443
        %v10460 = vmul.f32 %v10322, %v10444
        %v10461 = vmul.f32 %v10323, %v10445
        %v10462 = vmul.f32 %v10324, %v10442
        %v10463 = vmul.f32 %v10325, %v10443
        %v10464 = vmul.f32 %v10326, %v10444
        %v10465 = vmul.f32 %v10327, %v10445
        %v10466 = vmul.f32 %v10328, %v10442
        %v10467 = vmul.f32 %v10329, %v10443
        %v10468 = vmul.f32 %v10330, %v10444
        %v10469 = vmul.f32 %v10331, %v10445
        %v10470 = vmul.f32 %v10332, %v10442
        %v10471 = vmul.f32 %v10333, %v10443
        %v10472 = vmul.f32 %v10334, %v10444
        %v10473 = vmul.f32 %v10335, %v10445
        %v10474 = vmul.f32 %v10336, %v10442
        %v10475 = vmul.f32 %v10337, %v10443
        %v10476 = vmul.f32 %v10338, %v10444
        %v10477 = vmul.f32 %v10339, %v10445
        %v10478 = vmul.f32 %v10340, %v10442
        %v10479 = vmul.f32 %v10341, %v10443
        %v10480 = vmul.f32 %v10342, %v10444
        %v10481 = vmul.f32 %v10343, %v10445
        %v10482 = vmul.f32 %v10344, %v10442
        %v10483 = vmul.f32 %v10345, %v10443
        %v10484 = vmul.f32 %v10346, %v10444
        %v10485 = vmul.f32 %v10347, %v10445
        %v10486 = vmul.f32 %v10348, %v10442
        %v10487 = vmul.f32 %v10349, %v10443
        %v10488 = vmul.f32 %v10350, %v10444
        %v10489 = vmul.f32 %v10351, %v10445
        %v10490 = vmul.f32 %v10352, %v10442
        %v10491 = vmul.f32 %v10353, %v10443
        %v10492 = vmul.f32 %v10354, %v10444
        %v10493 = vmul.f32 %v10355, %v10445
        %v10494 = vmul.f32 %v10356, %v10442
        %v10495 = vmul.f32 %v10357, %v10443
        %v10496 = vmul.f32 %v10358, %v10444
        %v10497 = vmul.f32 %v10359, %v10445
        %v10498 = vmul.f32 %v10360, %v10442
        %v10499 = vmul.f32 %v10361, %v10443
        %v10500 = vmul.f32 %v10362, %v10444
        %v10501 = vmul.f32 %v10363, %v10445
        %v10502 = vmul.f32 %v10364, %v10442
        %v10503 = vmul.f32 %v10365, %v10443
        %v10504 = vmul.f32 %v10366, %v10444
        %v10505 = vmul.f32 %v10367, %v10445
        %v10506 = vmul.f32 %v10368, %v10442
        %v10507 = vmul.f32 %v10369, %v10443
        %v10508 = vmul.f32 %v10370, %v10444
        %v10509 = vmul.f32 %v10371, %v10445
        %v10510 = vmul.f32 %v10372, %v10442
        %v10511 = vmul.f32 %v10373, %v10443
        %v10512 = vmul.f32 %v10374, %v10444
        %v10513 = vmul.f32 %v10375, %v10445
        %v10514 = vmul.f32 %v10376, %v10442
        %v10515 = vmul.f32 %v10377, %v10443
        %v10516 = vmul.f32 %v10378, %v10444
        %v10517 = vmul.f32 %v10379, %v10445
        %v10518 = vmul.f32 %v10380, %v10442
        %v10519 = vmul.f32 %v10381, %v10443
        %v10520 = vmul.f32 %v10382, %v10444
        %v10521 = vmul.f32 %v10383, %v10445
        %v10522 = vmul.f32 %v10384, %v10442
        %v10523 = vmul.f32 %v10385, %v10443
        %v10524 = vmul.f32 %v10386, %v10444
        %v10525 = vmul.f32 %v10387, %v10445
        %v10526 = vmul.f32 %v10388, %v10442
        %v10527 = vmul.f32 %v10389, %v10443
        %v10528 = vmul.f32 %v10390, %v10444
        %v10529 = vmul.f32 %v10391, %v10445
        %v10530 = vmul.f32 %v10392, %v10442
        %v10531 = vmul.f32 %v10393, %v10443
        %v10532 = vmul.f32 %v10394, %v10444
        %v10533 = vmul.f32 %v10395, %v10445
        %v10534 = vmul.f32 %v10396, %v10442
        %v10535 = vmul.f32 %v10397, %v10443
        %v10536 = vmul.f32 %v10398, %v10444
        %v10537 = vmul.f32 %v10399, %v10445
        %v10538 = vmul.f32 %v10400, %v10442
        %v10539 = vmul.f32 %v10401, %v10443
        %v10540 = vmul.f32 %v10402, %v10444
        %v10541 = vmul.f32 %v10403, %v10445
        %v10542 = vmul.f32 %v10404, %v10442
        %v10543 = vmul.f32 %v10405, %v10443
        %v10544 = vmul.f32 %v10406, %v10444
        %v10545 = vmul.f32 %v10407, %v10445
        %v10546 = vmul.f32 %v10408, %v10442
        %v10547 = vmul.f32 %v10409, %v10443
        %v10548 = vmul.f32 %v10410, %v10444
        %v10549 = vmul.f32 %v10411, %v10445
        %v10550 = vmul.f32 %v10412, %v10442
        %v10551 = vmul.f32 %v10413, %v10443
        %v10552 = vmul.f32 %v10414, %v10444
        %v10553 = vmul.f32 %v10415, %v10445
        %v10554 = vmul.f32 %v10416, %v10442
        %v10555 = vmul.f32 %v10417, %v10443
        %v10556 = vmul.f32 %v10418, %v10444
        %v10557 = vmul.f32 %v10419, %v10445
        %v10558 = vmul.f32 %v10420, %v10442
        %v10559 = vmul.f32 %v10421, %v10443
        %v10560 = vmul.f32 %v10422, %v10444
        %v10561 = vmul.f32 %v10423, %v10445
        %v10562 = vmul.f32 %v10424, %v10442
        %v10563 = vmul.f32 %v10425, %v10443
        %v10564 = vmul.f32 %v10426, %v10444
        %v10565 = vmul.f32 %v10427, %v10445
        %v10566 = vmul.f32 %v10428, %v10442
        %v10567 = vmul.f32 %v10429, %v10443
        %v10568 = vmul.f32 %v10430, %v10444
        %v10569 = vmul.f32 %v10431, %v10445
        %v10570 = vmul.f32 %v10432, %v10442
        %v10571 = vmul.f32 %v10433, %v10443
        %v10572 = vmul.f32 %v10434, %v10444
        %v10573 = vmul.f32 %v10435, %v10445
        %v10574 = vmul.f32 %v10436, %v10442
        %v10575 = vmul.f32 %v10437, %v10443
        %v10576 = vmul.f32 %v10438, %v10444
        %v10577 = vmul.f32 %v10439, %v10445
        %v10578 = vadd.f32 %v10450, %v10451
        %v10579 = vadd.f32 %v10578, %v10452
        %v10580 = vadd.f32 %v10579, %v10453
        %10581 = vadd.xlane.f32.xlu0 %v10580
        %v10582 = vpop.xlane.xlu0 %10581
        %v10583 = vadd.f32 %v10454, %v10455
        %v10584 = vadd.f32 %v10583, %v10456
        %v10585 = vadd.f32 %v10584, %v10457
        %10586 = vadd.xlane.f32.xlu0 %v10585
        %v10587 = vpop.xlane.xlu0 %10586
        %v10588 = vadd.f32 %v10458, %v10459
        %v10589 = vadd.f32 %v10588, %v10460
        %v10590 = vadd.f32 %v10589, %v10461
        %10591 = vadd.xlane.f32.xlu0 %v10590
        %v10592 = vpop.xlane.xlu0 %10591
        %v10593 = vadd.f32 %v10462, %v10463
        %v10594 = vadd.f32 %v10593, %v10464
        %v10595 = vadd.f32 %v10594, %v10465
        %10596 = vadd.xlane.f32.xlu0 %v10595
        %v10597 = vpop.xlane.xlu0 %10596
        %v10598 = vadd.f32 %v10466, %v10467
        %v10599 = vadd.f32 %v10598, %v10468
        %v10600 = vadd.f32 %v10599, %v10469
        %10601 = vadd.xlane.f32.xlu0 %v10600
        %v10602 = vpop.xlane.xlu0 %10601
        %v10603 = vadd.f32 %v10470, %v10471
        %v10604 = vadd.f32 %v10603, %v10472
        %v10605 = vadd.f32 %v10604, %v10473
        %10606 = vadd.xlane.f32.xlu0 %v10605
        %v10607 = vpop.xlane.xlu0 %10606
        %v10608 = vadd.f32 %v10474, %v10475
        %v10609 = vadd.f32 %v10608, %v10476
        %v10610 = vadd.f32 %v10609, %v10477
        %10611 = vadd.xlane.f32.xlu0 %v10610
        %v10612 = vpop.xlane.xlu0 %10611
        %v10613 = vadd.f32 %v10478, %v10479
        %v10614 = vadd.f32 %v10613, %v10480
        %v10615 = vadd.f32 %v10614, %v10481
        %10616 = vadd.xlane.f32.xlu0 %v10615
        %v10617 = vpop.xlane.xlu0 %10616
        %v10618 = vadd.f32 %v10482, %v10483
        %v10619 = vadd.f32 %v10618, %v10484
        %v10620 = vadd.f32 %v10619, %v10485
        %10621 = vadd.xlane.f32.xlu0 %v10620
        %v10622 = vpop.xlane.xlu0 %10621
        %v10623 = vadd.f32 %v10486, %v10487
        %v10624 = vadd.f32 %v10623, %v10488
        %v10625 = vadd.f32 %v10624, %v10489
        %10626 = vadd.xlane.f32.xlu0 %v10625
        %v10627 = vpop.xlane.xlu0 %10626
        %v10628 = vadd.f32 %v10490, %v10491
        %v10629 = vadd.f32 %v10628, %v10492
        %v10630 = vadd.f32 %v10629, %v10493
        %10631 = vadd.xlane.f32.xlu0 %v10630
        %v10632 = vpop.xlane.xlu0 %10631
        %v10633 = vadd.f32 %v10494, %v10495
        %v10634 = vadd.f32 %v10633, %v10496
        %v10635 = vadd.f32 %v10634, %v10497
        %10636 = vadd.xlane.f32.xlu0 %v10635
        %v10637 = vpop.xlane.xlu0 %10636
        %v10638 = vadd.f32 %v10498, %v10499
        %v10639 = vadd.f32 %v10638, %v10500
        %v10640 = vadd.f32 %v10639, %v10501
        %10641 = vadd.xlane.f32.xlu0 %v10640
        %v10642 = vpop.xlane.xlu0 %10641
        %v10643 = vadd.f32 %v10502, %v10503
        %v10644 = vadd.f32 %v10643, %v10504
        %v10645 = vadd.f32 %v10644, %v10505
        %10646 = vadd.xlane.f32.xlu0 %v10645
        %v10647 = vpop.xlane.xlu0 %10646
        %v10648 = vadd.f32 %v10506, %v10507
        %v10649 = vadd.f32 %v10648, %v10508
        %v10650 = vadd.f32 %v10649, %v10509
        %10651 = vadd.xlane.f32.xlu0 %v10650
        %v10652 = vpop.xlane.xlu0 %10651
        %v10653 = vadd.f32 %v10510, %v10511
        %v10654 = vadd.f32 %v10653, %v10512
        %v10655 = vadd.f32 %v10654, %v10513
        %10656 = vadd.xlane.f32.xlu0 %v10655
        %v10657 = vpop.xlane.xlu0 %10656
        %v10658 = vadd.f32 %v10514, %v10515
        %v10659 = vadd.f32 %v10658, %v10516
        %v10660 = vadd.f32 %v10659, %v10517
        %10661 = vadd.xlane.f32.xlu0 %v10660
        %v10662 = vpop.xlane.xlu0 %10661
        %v10663 = vadd.f32 %v10518, %v10519
        %v10664 = vadd.f32 %v10663, %v10520
        %v10665 = vadd.f32 %v10664, %v10521
        %10666 = vadd.xlane.f32.xlu0 %v10665
        %v10667 = vpop.xlane.xlu0 %10666
        %v10668 = vadd.f32 %v10522, %v10523
        %v10669 = vadd.f32 %v10668, %v10524
        %v10670 = vadd.f32 %v10669, %v10525
        %10671 = vadd.xlane.f32.xlu0 %v10670
        %v10672 = vpop.xlane.xlu0 %10671
        %v10673 = vadd.f32 %v10526, %v10527
        %v10674 = vadd.f32 %v10673, %v10528
        %v10675 = vadd.f32 %v10674, %v10529
        %10676 = vadd.xlane.f32.xlu0 %v10675
        %v10677 = vpop.xlane.xlu0 %10676
        %v10678 = vadd.f32 %v10530, %v10531
        %v10679 = vadd.f32 %v10678, %v10532
        %v10680 = vadd.f32 %v10679, %v10533
        %10681 = vadd.xlane.f32.xlu0 %v10680
        %v10682 = vpop.xlane.xlu0 %10681
        %v10683 = vadd.f32 %v10534, %v10535
        %v10684 = vadd.f32 %v10683, %v10536
        %v10685 = vadd.f32 %v10684, %v10537
        %10686 = vadd.xlane.f32.xlu0 %v10685
        %v10687 = vpop.xlane.xlu0 %10686
        %v10688 = vadd.f32 %v10538, %v10539
        %v10689 = vadd.f32 %v10688, %v10540
        %v10690 = vadd.f32 %v10689, %v10541
        %10691 = vadd.xlane.f32.xlu0 %v10690
        %v10692 = vpop.xlane.xlu0 %10691
        %v10693 = vadd.f32 %v10542, %v10543
        %v10694 = vadd.f32 %v10693, %v10544
        %v10695 = vadd.f32 %v10694, %v10545
        %10696 = vadd.xlane.f32.xlu0 %v10695
        %v10697 = vpop.xlane.xlu0 %10696
        %v10698 = vadd.f32 %v10546, %v10547
        %v10699 = vadd.f32 %v10698, %v10548
        %v10700 = vadd.f32 %v10699, %v10549
        %10701 = vadd.xlane.f32.xlu0 %v10700
        %v10702 = vpop.xlane.xlu0 %10701
        %v10703 = vadd.f32 %v10550, %v10551
        %v10704 = vadd.f32 %v10703, %v10552
        %v10705 = vadd.f32 %v10704, %v10553
        %10706 = vadd.xlane.f32.xlu0 %v10705
        %v10707 = vpop.xlane.xlu0 %10706
        %v10708 = vadd.f32 %v10554, %v10555
        %v10709 = vadd.f32 %v10708, %v10556
        %v10710 = vadd.f32 %v10709, %v10557
        %10711 = vadd.xlane.f32.xlu0 %v10710
        %v10712 = vpop.xlane.xlu0 %10711
        %v10713 = vadd.f32 %v10558, %v10559
        %v10714 = vadd.f32 %v10713, %v10560
        %v10715 = vadd.f32 %v10714, %v10561
        %10716 = vadd.xlane.f32.xlu0 %v10715
        %v10717 = vpop.xlane.xlu0 %10716
        %v10718 = vadd.f32 %v10562, %v10563
        %v10719 = vadd.f32 %v10718, %v10564
        %v10720 = vadd.f32 %v10719, %v10565
        %10721 = vadd.xlane.f32.xlu0 %v10720
        %v10722 = vpop.xlane.xlu0 %10721
        %v10723 = vadd.f32 %v10566, %v10567
        %v10724 = vadd.f32 %v10723, %v10568
        %v10725 = vadd.f32 %v10724, %v10569
        %10726 = vadd.xlane.f32.xlu0 %v10725
        %v10727 = vpop.xlane.xlu0 %10726
        %v10728 = vadd.f32 %v10570, %v10571
        %v10729 = vadd.f32 %v10728, %v10572
        %v10730 = vadd.f32 %v10729, %v10573
        %10731 = vadd.xlane.f32.xlu0 %v10730
        %v10732 = vpop.xlane.xlu0 %10731
        %v10733 = vadd.f32 %v10574, %v10575
        %v10734 = vadd.f32 %v10733, %v10576
        %v10735 = vadd.f32 %v10734, %v10577
        %10736 = vadd.xlane.f32.xlu0 %v10735
        %v10737 = vpop.xlane.xlu0 %10736
        %v10738 = vld [vmem:[#allocation3] sm:$0x1]
        %10740 = vset.pattern.permute.xlu0 0
        %10741 = vperm.xlu0 %10740, %v10738
        %v10742 = vpop.permute.xlu0 %10741
        %v10744 = vperm.slane %v10742, 0
        %v10745 = vadd.f32 %v10582, %v10744
        %v10746 = vadd.f32 %v10587, %v10744
        %v10747 = vadd.f32 %v10592, %v10744
        %v10748 = vadd.f32 %v10597, %v10744
        %v10749 = vadd.f32 %v10602, %v10744
        %v10750 = vadd.f32 %v10607, %v10744
        %v10751 = vadd.f32 %v10612, %v10744
        %v10752 = vadd.f32 %v10617, %v10744
        %v10753 = vadd.f32 %v10622, %v10744
        %v10754 = vadd.f32 %v10627, %v10744
        %v10755 = vadd.f32 %v10632, %v10744
        %v10756 = vadd.f32 %v10637, %v10744
        %v10757 = vadd.f32 %v10642, %v10744
        %v10758 = vadd.f32 %v10647, %v10744
        %v10759 = vadd.f32 %v10652, %v10744
        %v10760 = vadd.f32 %v10657, %v10744
        %v10761 = vadd.f32 %v10662, %v10744
        %v10762 = vadd.f32 %v10667, %v10744
        %v10763 = vadd.f32 %v10672, %v10744
        %v10764 = vadd.f32 %v10677, %v10744
        %v10765 = vadd.f32 %v10682, %v10744
        %v10766 = vadd.f32 %v10687, %v10744
        %v10767 = vadd.f32 %v10692, %v10744
        %v10768 = vadd.f32 %v10697, %v10744
        %v10769 = vadd.f32 %v10702, %v10744
        %v10770 = vadd.f32 %v10707, %v10744
        %v10771 = vadd.f32 %v10712, %v10744
        %v10772 = vadd.f32 %v10717, %v10744
        %v10773 = vadd.f32 %v10722, %v10744
        %v10774 = vadd.f32 %v10727, %v10744
        %v10775 = vadd.f32 %v10732, %v10744
        %v10776 = vadd.f32 %v10737, %v10744
        %v10809 = vperm.slane %v10745, 0
        %v10810 = vperm.slane %v10745, 1
        %v10811 = vperm.slane %v10745, 2
        %v10812 = vperm.slane %v10745, 3
        %v10813 = vperm.slane %v10745, 4
        %v10814 = vperm.slane %v10745, 5
        %v10815 = vperm.slane %v10745, 6
        %v10816 = vperm.slane %v10745, 7
        %v10817 = vperm.slane %v10746, 0
        %v10818 = vperm.slane %v10746, 1
        %v10819 = vperm.slane %v10746, 2
        %v10820 = vperm.slane %v10746, 3
        %v10821 = vperm.slane %v10746, 4
        %v10822 = vperm.slane %v10746, 5
        %v10823 = vperm.slane %v10746, 6
        %v10824 = vperm.slane %v10746, 7
        %v10825 = vperm.slane %v10747, 0
        %v10826 = vperm.slane %v10747, 1
        %v10827 = vperm.slane %v10747, 2
        %v10828 = vperm.slane %v10747, 3
        %v10829 = vperm.slane %v10747, 4
        %v10830 = vperm.slane %v10747, 5
        %v10831 = vperm.slane %v10747, 6
        %v10832 = vperm.slane %v10747, 7
        %v10833 = vperm.slane %v10748, 0
        %v10834 = vperm.slane %v10748, 1
        %v10835 = vperm.slane %v10748, 2
        %v10836 = vperm.slane %v10748, 3
        %v10837 = vperm.slane %v10748, 4
        %v10838 = vperm.slane %v10748, 5
        %v10839 = vperm.slane %v10748, 6
        %v10840 = vperm.slane %v10748, 7
        %v10841 = vperm.slane %v10749, 0
        %v10842 = vperm.slane %v10749, 1
        %v10843 = vperm.slane %v10749, 2
        %v10844 = vperm.slane %v10749, 3
        %v10845 = vperm.slane %v10749, 4
        %v10846 = vperm.slane %v10749, 5
        %v10847 = vperm.slane %v10749, 6
        %v10848 = vperm.slane %v10749, 7
        %v10849 = vperm.slane %v10750, 0
        %v10850 = vperm.slane %v10750, 1
        %v10851 = vperm.slane %v10750, 2
        %v10852 = vperm.slane %v10750, 3
        %v10853 = vperm.slane %v10750, 4
        %v10854 = vperm.slane %v10750, 5
        %v10855 = vperm.slane %v10750, 6
        %v10856 = vperm.slane %v10750, 7
        %v10857 = vperm.slane %v10751, 0
        %v10858 = vperm.slane %v10751, 1
        %v10859 = vperm.slane %v10751, 2
        %v10860 = vperm.slane %v10751, 3
        %v10861 = vperm.slane %v10751, 4
        %v10862 = vperm.slane %v10751, 5
        %v10863 = vperm.slane %v10751, 6
        %v10864 = vperm.slane %v10751, 7
        %v10865 = vperm.slane %v10752, 0
        %v10866 = vperm.slane %v10752, 1
        %v10867 = vperm.slane %v10752, 2
        %v10868 = vperm.slane %v10752, 3
        %v10869 = vperm.slane %v10752, 4
        %v10870 = vperm.slane %v10752, 5
        %v10871 = vperm.slane %v10752, 6
        %v10872 = vperm.slane %v10752, 7
        %v10873 = vperm.slane %v10753, 0
        %v10874 = vperm.slane %v10753, 1
        %v10875 = vperm.slane %v10753, 2
        %v10876 = vperm.slane %v10753, 3
        %v10877 = vperm.slane %v10753, 4
        %v10878 = vperm.slane %v10753, 5
        %v10879 = vperm.slane %v10753, 6
        %v10880 = vperm.slane %v10753, 7
        %v10881 = vperm.slane %v10754, 0
        %v10882 = vperm.slane %v10754, 1
        %v10883 = vperm.slane %v10754, 2
        %v10884 = vperm.slane %v10754, 3
        %v10885 = vperm.slane %v10754, 4
        %v10886 = vperm.slane %v10754, 5
        %v10887 = vperm.slane %v10754, 6
        %v10888 = vperm.slane %v10754, 7
        %v10889 = vperm.slane %v10755, 0
        %v10890 = vperm.slane %v10755, 1
        %v10891 = vperm.slane %v10755, 2
        %v10892 = vperm.slane %v10755, 3
        %v10893 = vperm.slane %v10755, 4
        %v10894 = vperm.slane %v10755, 5
        %v10895 = vperm.slane %v10755, 6
        %v10896 = vperm.slane %v10755, 7
        %v10897 = vperm.slane %v10756, 0
        %v10898 = vperm.slane %v10756, 1
        %v10899 = vperm.slane %v10756, 2
        %v10900 = vperm.slane %v10756, 3
        %v10901 = vperm.slane %v10756, 4
        %v10902 = vperm.slane %v10756, 5
        %v10903 = vperm.slane %v10756, 6
        %v10904 = vperm.slane %v10756, 7
        %v10905 = vperm.slane %v10757, 0
        %v10906 = vperm.slane %v10757, 1
        %v10907 = vperm.slane %v10757, 2
        %v10908 = vperm.slane %v10757, 3
        %v10909 = vperm.slane %v10757, 4
        %v10910 = vperm.slane %v10757, 5
        %v10911 = vperm.slane %v10757, 6
        %v10912 = vperm.slane %v10757, 7
        %v10913 = vperm.slane %v10758, 0
        %v10914 = vperm.slane %v10758, 1
        %v10915 = vperm.slane %v10758, 2
        %v10916 = vperm.slane %v10758, 3
        %v10917 = vperm.slane %v10758, 4
        %v10918 = vperm.slane %v10758, 5
        %v10919 = vperm.slane %v10758, 6
        %v10920 = vperm.slane %v10758, 7
        %v10921 = vperm.slane %v10759, 0
        %v10922 = vperm.slane %v10759, 1
        %v10923 = vperm.slane %v10759, 2
        %v10924 = vperm.slane %v10759, 3
        %v10925 = vperm.slane %v10759, 4
        %v10926 = vperm.slane %v10759, 5
        %v10927 = vperm.slane %v10759, 6
        %v10928 = vperm.slane %v10759, 7
        %v10929 = vperm.slane %v10760, 0
        %v10930 = vperm.slane %v10760, 1
        %v10931 = vperm.slane %v10760, 2
        %v10932 = vperm.slane %v10760, 3
        %v10933 = vperm.slane %v10760, 4
        %v10934 = vperm.slane %v10760, 5
        %v10935 = vperm.slane %v10760, 6
        %v10936 = vperm.slane %v10760, 7
        %v10937 = vperm.slane %v10761, 0
        %v10938 = vperm.slane %v10761, 1
        %v10939 = vperm.slane %v10761, 2
        %v10940 = vperm.slane %v10761, 3
        %v10941 = vperm.slane %v10761, 4
        %v10942 = vperm.slane %v10761, 5
        %v10943 = vperm.slane %v10761, 6
        %v10944 = vperm.slane %v10761, 7
        %v10945 = vperm.slane %v10762, 0
        %v10946 = vperm.slane %v10762, 1
        %v10947 = vperm.slane %v10762, 2
        %v10948 = vperm.slane %v10762, 3
        %v10949 = vperm.slane %v10762, 4
        %v10950 = vperm.slane %v10762, 5
        %v10951 = vperm.slane %v10762, 6
        %v10952 = vperm.slane %v10762, 7
        %v10953 = vperm.slane %v10763, 0
        %v10954 = vperm.slane %v10763, 1
        %v10955 = vperm.slane %v10763, 2
        %v10956 = vperm.slane %v10763, 3
        %v10957 = vperm.slane %v10763, 4
        %v10958 = vperm.slane %v10763, 5
        %v10959 = vperm.slane %v10763, 6
        %v10960 = vperm.slane %v10763, 7
        %v10961 = vperm.slane %v10764, 0
        %v10962 = vperm.slane %v10764, 1
        %v10963 = vperm.slane %v10764, 2
        %v10964 = vperm.slane %v10764, 3
        %v10965 = vperm.slane %v10764, 4
        %v10966 = vperm.slane %v10764, 5
        %v10967 = vperm.slane %v10764, 6
        %v10968 = vperm.slane %v10764, 7
        %v10969 = vperm.slane %v10765, 0
        %v10970 = vperm.slane %v10765, 1
        %v10971 = vperm.slane %v10765, 2
        %v10972 = vperm.slane %v10765, 3
        %v10973 = vperm.slane %v10765, 4
        %v10974 = vperm.slane %v10765, 5
        %v10975 = vperm.slane %v10765, 6
        %v10976 = vperm.slane %v10765, 7
        %v10977 = vperm.slane %v10766, 0
        %v10978 = vperm.slane %v10766, 1
        %v10979 = vperm.slane %v10766, 2
        %v10980 = vperm.slane %v10766, 3
        %v10981 = vperm.slane %v10766, 4
        %v10982 = vperm.slane %v10766, 5
        %v10983 = vperm.slane %v10766, 6
        %v10984 = vperm.slane %v10766, 7
        %v10985 = vperm.slane %v10767, 0
        %v10986 = vperm.slane %v10767, 1
        %v10987 = vperm.slane %v10767, 2
        %v10988 = vperm.slane %v10767, 3
        %v10989 = vperm.slane %v10767, 4
        %v10990 = vperm.slane %v10767, 5
        %v10991 = vperm.slane %v10767, 6
        %v10992 = vperm.slane %v10767, 7
        %v10993 = vperm.slane %v10768, 0
        %v10994 = vperm.slane %v10768, 1
        %v10995 = vperm.slane %v10768, 2
        %v10996 = vperm.slane %v10768, 3
        %v10997 = vperm.slane %v10768, 4
        %v10998 = vperm.slane %v10768, 5
        %v10999 = vperm.slane %v10768, 6
        %v11000 = vperm.slane %v10768, 7
        %v11001 = vperm.slane %v10769, 0
        %v11002 = vperm.slane %v10769, 1
        %v11003 = vperm.slane %v10769, 2
        %v11004 = vperm.slane %v10769, 3
        %v11005 = vperm.slane %v10769, 4
        %v11006 = vperm.slane %v10769, 5
        %v11007 = vperm.slane %v10769, 6
        %v11008 = vperm.slane %v10769, 7
        %v11009 = vperm.slane %v10770, 0
        %v11010 = vperm.slane %v10770, 1
        %v11011 = vperm.slane %v10770, 2
        %v11012 = vperm.slane %v10770, 3
        %v11013 = vperm.slane %v10770, 4
        %v11014 = vperm.slane %v10770, 5
        %v11015 = vperm.slane %v10770, 6
        %v11016 = vperm.slane %v10770, 7
        %v11017 = vperm.slane %v10771, 0
        %v11018 = vperm.slane %v10771, 1
        %v11019 = vperm.slane %v10771, 2
        %v11020 = vperm.slane %v10771, 3
        %v11021 = vperm.slane %v10771, 4
        %v11022 = vperm.slane %v10771, 5
        %v11023 = vperm.slane %v10771, 6
        %v11024 = vperm.slane %v10771, 7
        %v11025 = vperm.slane %v10772, 0
        %v11026 = vperm.slane %v10772, 1
        %v11027 = vperm.slane %v10772, 2
        %v11028 = vperm.slane %v10772, 3
        %v11029 = vperm.slane %v10772, 4
        %v11030 = vperm.slane %v10772, 5
        %v11031 = vperm.slane %v10772, 6
        %v11032 = vperm.slane %v10772, 7
        %v11033 = vperm.slane %v10773, 0
        %v11034 = vperm.slane %v10773, 1
        %v11035 = vperm.slane %v10773, 2
        %v11036 = vperm.slane %v10773, 3
        %v11037 = vperm.slane %v10773, 4
        %v11038 = vperm.slane %v10773, 5
        %v11039 = vperm.slane %v10773, 6
        %v11040 = vperm.slane %v10773, 7
        %v11041 = vperm.slane %v10774, 0
        %v11042 = vperm.slane %v10774, 1
        %v11043 = vperm.slane %v10774, 2
        %v11044 = vperm.slane %v10774, 3
        %v11045 = vperm.slane %v10774, 4
        %v11046 = vperm.slane %v10774, 5
        %v11047 = vperm.slane %v10774, 6
        %v11048 = vperm.slane %v10774, 7
        %v11049 = vperm.slane %v10775, 0
        %v11050 = vperm.slane %v10775, 1
        %v11051 = vperm.slane %v10775, 2
        %v11052 = vperm.slane %v10775, 3
        %v11053 = vperm.slane %v10775, 4
        %v11054 = vperm.slane %v10775, 5
        %v11055 = vperm.slane %v10775, 6
        %v11056 = vperm.slane %v10775, 7
        %v11057 = vperm.slane %v10776, 0
        %v11058 = vperm.slane %v10776, 1
        %v11059 = vperm.slane %v10776, 2
        %v11060 = vperm.slane %v10776, 3
        %v11061 = vperm.slane %v10776, 4
        %v11062 = vperm.slane %v10776, 5
        %v11063 = vperm.slane %v10776, 6
        %v11064 = vperm.slane %v10776, 7
        %11065 = vst [vmem:[#allocation1] ss:$9 sm:$0xff] %v10809
        %s11066 = scalar_lea.vmem [#allocation1], 1
        %11067 = vst [vmem:[%s11066] ss:$9 sm:$0xff] %v10810
        %s11068 = scalar_lea.vmem [#allocation1], 2
        %11069 = vst [vmem:[%s11068] ss:$9 sm:$0xff] %v10811
        %s11070 = scalar_lea.vmem [#allocation1], 3
        %11071 = vst [vmem:[%s11070] ss:$9 sm:$0xff] %v10812
        %s11072 = scalar_lea.vmem [#allocation1], 4
        %11073 = vst [vmem:[%s11072] ss:$9 sm:$0xff] %v10813
        %s11074 = scalar_lea.vmem [#allocation1], 5
        %11075 = vst [vmem:[%s11074] ss:$9 sm:$0xff] %v10814
        %s11076 = scalar_lea.vmem [#allocation1], 6
        %11077 = vst [vmem:[%s11076] ss:$9 sm:$0xff] %v10815
        %s11078 = scalar_lea.vmem [#allocation1], 7
        %11079 = vst [vmem:[%s11078] ss:$9 sm:$0xff] %v10816
        %v11080 = vld [vmem:[#allocation1] sm:$0xff]
        %11081 = vst [vmem:[#allocation1] ss:$9 sm:$0xff] %v10817
        %11082 = vst [vmem:[%s11066] ss:$9 sm:$0xff] %v10818
        %11083 = vst [vmem:[%s11068] ss:$9 sm:$0xff] %v10819
        %11084 = vst [vmem:[%s11070] ss:$9 sm:$0xff] %v10820
        %11085 = vst [vmem:[%s11072] ss:$9 sm:$0xff] %v10821
        %11086 = vst [vmem:[%s11074] ss:$9 sm:$0xff] %v10822
        %11087 = vst [vmem:[%s11076] ss:$9 sm:$0xff] %v10823
        %11088 = vst [vmem:[%s11078] ss:$9 sm:$0xff] %v10824
        %v11089 = vld [vmem:[#allocation1] sm:$0xff]
        %11090 = vst [vmem:[#allocation1] ss:$9 sm:$0xff] %v10825
        %11091 = vst [vmem:[%s11066] ss:$9 sm:$0xff] %v10826
        %11092 = vst [vmem:[%s11068] ss:$9 sm:$0xff] %v10827
        %11093 = vst [vmem:[%s11070] ss:$9 sm:$0xff] %v10828
        %11094 = vst [vmem:[%s11072] ss:$9 sm:$0xff] %v10829
        %11095 = vst [vmem:[%s11074] ss:$9 sm:$0xff] %v10830
        %11096 = vst [vmem:[%s11076] ss:$9 sm:$0xff] %v10831
        %11097 = vst [vmem:[%s11078] ss:$9 sm:$0xff] %v10832
        %v11098 = vld [vmem:[#allocation1] sm:$0xff]
        %11099 = vst [vmem:[#allocation1] ss:$9 sm:$0xff] %v10833
        %11100 = vst [vmem:[%s11066] ss:$9 sm:$0xff] %v10834
        %11101 = vst [vmem:[%s11068] ss:$9 sm:$0xff] %v10835
        %11102 = vst [vmem:[%s11070] ss:$9 sm:$0xff] %v10836
        %11103 = vst [vmem:[%s11072] ss:$9 sm:$0xff] %v10837
        %11104 = vst [vmem:[%s11074] ss:$9 sm:$0xff] %v10838
        %11105 = vst [vmem:[%s11076] ss:$9 sm:$0xff] %v10839
        %11106 = vst [vmem:[%s11078] ss:$9 sm:$0xff] %v10840
        %v11107 = vld [vmem:[#allocation1] sm:$0xff]
        %11108 = vst [vmem:[#allocation1] ss:$9 sm:$0xff] %v10841
        %11109 = vst [vmem:[%s11066] ss:$9 sm:$0xff] %v10842
        %11110 = vst [vmem:[%s11068] ss:$9 sm:$0xff] %v10843
        %11111 = vst [vmem:[%s11070] ss:$9 sm:$0xff] %v10844
        %11112 = vst [vmem:[%s11072] ss:$9 sm:$0xff] %v10845
        %11113 = vst [vmem:[%s11074] ss:$9 sm:$0xff] %v10846
        %11114 = vst [vmem:[%s11076] ss:$9 sm:$0xff] %v10847
        %11115 = vst [vmem:[%s11078] ss:$9 sm:$0xff] %v10848
        %v11116 = vld [vmem:[#allocation1] sm:$0xff]
        %11117 = vst [vmem:[#allocation1] ss:$9 sm:$0xff] %v10849
        %11118 = vst [vmem:[%s11066] ss:$9 sm:$0xff] %v10850
        %11119 = vst [vmem:[%s11068] ss:$9 sm:$0xff] %v10851
        %11120 = vst [vmem:[%s11070] ss:$9 sm:$0xff] %v10852
        %11121 = vst [vmem:[%s11072] ss:$9 sm:$0xff] %v10853
        %11122 = vst [vmem:[%s11074] ss:$9 sm:$0xff] %v10854
        %11123 = vst [vmem:[%s11076] ss:$9 sm:$0xff] %v10855
        %11124 = vst [vmem:[%s11078] ss:$9 sm:$0xff] %v10856
        %v11125 = vld [vmem:[#allocation1] sm:$0xff]
        %11126 = vst [vmem:[#allocation1] ss:$9 sm:$0xff] %v10857
        %11127 = vst [vmem:[%s11066] ss:$9 sm:$0xff] %v10858
        %11128 = vst [vmem:[%s11068] ss:$9 sm:$0xff] %v10859
        %11129 = vst [vmem:[%s11070] ss:$9 sm:$0xff] %v10860
        %11130 = vst [vmem:[%s11072] ss:$9 sm:$0xff] %v10861
        %11131 = vst [vmem:[%s11074] ss:$9 sm:$0xff] %v10862
        %11132 = vst [vmem:[%s11076] ss:$9 sm:$0xff] %v10863
        %11133 = vst [vmem:[%s11078] ss:$9 sm:$0xff] %v10864
        %v11134 = vld [vmem:[#allocation1] sm:$0xff]
        %11135 = vst [vmem:[#allocation1] ss:$9 sm:$0xff] %v10865
        %11136 = vst [vmem:[%s11066] ss:$9 sm:$0xff] %v10866
        %11137 = vst [vmem:[%s11068] ss:$9 sm:$0xff] %v10867
        %11138 = vst [vmem:[%s11070] ss:$9 sm:$0xff] %v10868
        %11139 = vst [vmem:[%s11072] ss:$9 sm:$0xff] %v10869
        %11140 = vst [vmem:[%s11074] ss:$9 sm:$0xff] %v10870
        %11141 = vst [vmem:[%s11076] ss:$9 sm:$0xff] %v10871
        %11142 = vst [vmem:[%s11078] ss:$9 sm:$0xff] %v10872
        %v11143 = vld [vmem:[#allocation1] sm:$0xff]
        %11144 = vst [vmem:[#allocation1] ss:$9 sm:$0xff] %v10873
        %11145 = vst [vmem:[%s11066] ss:$9 sm:$0xff] %v10874
        %11146 = vst [vmem:[%s11068] ss:$9 sm:$0xff] %v10875
        %11147 = vst [vmem:[%s11070] ss:$9 sm:$0xff] %v10876
        %11148 = vst [vmem:[%s11072] ss:$9 sm:$0xff] %v10877
        %11149 = vst [vmem:[%s11074] ss:$9 sm:$0xff] %v10878
        %11150 = vst [vmem:[%s11076] ss:$9 sm:$0xff] %v10879
        %11151 = vst [vmem:[%s11078] ss:$9 sm:$0xff] %v10880
        %v11152 = vld [vmem:[#allocation1] sm:$0xff]
        %11153 = vst [vmem:[#allocation1] ss:$9 sm:$0xff] %v10881
        %11154 = vst [vmem:[%s11066] ss:$9 sm:$0xff] %v10882
        %11155 = vst [vmem:[%s11068] ss:$9 sm:$0xff] %v10883
        %11156 = vst [vmem:[%s11070] ss:$9 sm:$0xff] %v10884
        %11157 = vst [vmem:[%s11072] ss:$9 sm:$0xff] %v10885
        %11158 = vst [vmem:[%s11074] ss:$9 sm:$0xff] %v10886
        %11159 = vst [vmem:[%s11076] ss:$9 sm:$0xff] %v10887
        %11160 = vst [vmem:[%s11078] ss:$9 sm:$0xff] %v10888
        %v11161 = vld [vmem:[#allocation1] sm:$0xff]
        %11162 = vst [vmem:[#allocation1] ss:$9 sm:$0xff] %v10889
        %11163 = vst [vmem:[%s11066] ss:$9 sm:$0xff] %v10890
        %11164 = vst [vmem:[%s11068] ss:$9 sm:$0xff] %v10891
        %11165 = vst [vmem:[%s11070] ss:$9 sm:$0xff] %v10892
        %11166 = vst [vmem:[%s11072] ss:$9 sm:$0xff] %v10893
        %11167 = vst [vmem:[%s11074] ss:$9 sm:$0xff] %v10894
        %11168 = vst [vmem:[%s11076] ss:$9 sm:$0xff] %v10895
        %11169 = vst [vmem:[%s11078] ss:$9 sm:$0xff] %v10896
        %v11170 = vld [vmem:[#allocation1] sm:$0xff]
        %11171 = vst [vmem:[#allocation1] ss:$9 sm:$0xff] %v10897
        %11172 = vst [vmem:[%s11066] ss:$9 sm:$0xff] %v10898
        %11173 = vst [vmem:[%s11068] ss:$9 sm:$0xff] %v10899
        %11174 = vst [vmem:[%s11070] ss:$9 sm:$0xff] %v10900
        %11175 = vst [vmem:[%s11072] ss:$9 sm:$0xff] %v10901
        %11176 = vst [vmem:[%s11074] ss:$9 sm:$0xff] %v10902
        %11177 = vst [vmem:[%s11076] ss:$9 sm:$0xff] %v10903
        %11178 = vst [vmem:[%s11078] ss:$9 sm:$0xff] %v10904
        %v11179 = vld [vmem:[#allocation1] sm:$0xff]
        %11180 = vst [vmem:[#allocation1] ss:$9 sm:$0xff] %v10905
        %11181 = vst [vmem:[%s11066] ss:$9 sm:$0xff] %v10906
        %11182 = vst [vmem:[%s11068] ss:$9 sm:$0xff] %v10907
        %11183 = vst [vmem:[%s11070] ss:$9 sm:$0xff] %v10908
        %11184 = vst [vmem:[%s11072] ss:$9 sm:$0xff] %v10909
        %11185 = vst [vmem:[%s11074] ss:$9 sm:$0xff] %v10910
        %11186 = vst [vmem:[%s11076] ss:$9 sm:$0xff] %v10911
        %11187 = vst [vmem:[%s11078] ss:$9 sm:$0xff] %v10912
        %v11188 = vld [vmem:[#allocation1] sm:$0xff]
        %11189 = vst [vmem:[#allocation1] ss:$9 sm:$0xff] %v10913
        %11190 = vst [vmem:[%s11066] ss:$9 sm:$0xff] %v10914
        %11191 = vst [vmem:[%s11068] ss:$9 sm:$0xff] %v10915
        %11192 = vst [vmem:[%s11070] ss:$9 sm:$0xff] %v10916
        %11193 = vst [vmem:[%s11072] ss:$9 sm:$0xff] %v10917
        %11194 = vst [vmem:[%s11074] ss:$9 sm:$0xff] %v10918
        %11195 = vst [vmem:[%s11076] ss:$9 sm:$0xff] %v10919
        %11196 = vst [vmem:[%s11078] ss:$9 sm:$0xff] %v10920
        %v11197 = vld [vmem:[#allocation1] sm:$0xff]
        %11198 = vst [vmem:[#allocation1] ss:$9 sm:$0xff] %v10921
        %11199 = vst [vmem:[%s11066] ss:$9 sm:$0xff] %v10922
        %11200 = vst [vmem:[%s11068] ss:$9 sm:$0xff] %v10923
        %11201 = vst [vmem:[%s11070] ss:$9 sm:$0xff] %v10924
        %11202 = vst [vmem:[%s11072] ss:$9 sm:$0xff] %v10925
        %11203 = vst [vmem:[%s11074] ss:$9 sm:$0xff] %v10926
        %11204 = vst [vmem:[%s11076] ss:$9 sm:$0xff] %v10927
        %11205 = vst [vmem:[%s11078] ss:$9 sm:$0xff] %v10928
        %v11206 = vld [vmem:[#allocation1] sm:$0xff]
        %11207 = vst [vmem:[#allocation1] ss:$9 sm:$0xff] %v10929
        %11208 = vst [vmem:[%s11066] ss:$9 sm:$0xff] %v10930
        %11209 = vst [vmem:[%s11068] ss:$9 sm:$0xff] %v10931
        %11210 = vst [vmem:[%s11070] ss:$9 sm:$0xff] %v10932
        %11211 = vst [vmem:[%s11072] ss:$9 sm:$0xff] %v10933
        %11212 = vst [vmem:[%s11074] ss:$9 sm:$0xff] %v10934
        %11213 = vst [vmem:[%s11076] ss:$9 sm:$0xff] %v10935
        %11214 = vst [vmem:[%s11078] ss:$9 sm:$0xff] %v10936
        %v11215 = vld [vmem:[#allocation1] sm:$0xff]
        %11216 = vst [vmem:[#allocation1] ss:$9 sm:$0xff] %v10937
        %11217 = vst [vmem:[%s11066] ss:$9 sm:$0xff] %v10938
        %11218 = vst [vmem:[%s11068] ss:$9 sm:$0xff] %v10939
        %11219 = vst [vmem:[%s11070] ss:$9 sm:$0xff] %v10940
        %11220 = vst [vmem:[%s11072] ss:$9 sm:$0xff] %v10941
        %11221 = vst [vmem:[%s11074] ss:$9 sm:$0xff] %v10942
        %11222 = vst [vmem:[%s11076] ss:$9 sm:$0xff] %v10943
        %11223 = vst [vmem:[%s11078] ss:$9 sm:$0xff] %v10944
        %v11224 = vld [vmem:[#allocation1] sm:$0xff]
        %11225 = vst [vmem:[#allocation1] ss:$9 sm:$0xff] %v10945
        %11226 = vst [vmem:[%s11066] ss:$9 sm:$0xff] %v10946
        %11227 = vst [vmem:[%s11068] ss:$9 sm:$0xff] %v10947
        %11228 = vst [vmem:[%s11070] ss:$9 sm:$0xff] %v10948
        %11229 = vst [vmem:[%s11072] ss:$9 sm:$0xff] %v10949
        %11230 = vst [vmem:[%s11074] ss:$9 sm:$0xff] %v10950
        %11231 = vst [vmem:[%s11076] ss:$9 sm:$0xff] %v10951
        %11232 = vst [vmem:[%s11078] ss:$9 sm:$0xff] %v10952
        %v11233 = vld [vmem:[#allocation1] sm:$0xff]
        %11234 = vst [vmem:[#allocation1] ss:$9 sm:$0xff] %v10953
        %11235 = vst [vmem:[%s11066] ss:$9 sm:$0xff] %v10954
        %11236 = vst [vmem:[%s11068] ss:$9 sm:$0xff] %v10955
        %11237 = vst [vmem:[%s11070] ss:$9 sm:$0xff] %v10956
        %11238 = vst [vmem:[%s11072] ss:$9 sm:$0xff] %v10957
        %11239 = vst [vmem:[%s11074] ss:$9 sm:$0xff] %v10958
        %11240 = vst [vmem:[%s11076] ss:$9 sm:$0xff] %v10959
        %11241 = vst [vmem:[%s11078] ss:$9 sm:$0xff] %v10960
        %v11242 = vld [vmem:[#allocation1] sm:$0xff]
        %11243 = vst [vmem:[#allocation1] ss:$9 sm:$0xff] %v10961
        %11244 = vst [vmem:[%s11066] ss:$9 sm:$0xff] %v10962
        %11245 = vst [vmem:[%s11068] ss:$9 sm:$0xff] %v10963
        %11246 = vst [vmem:[%s11070] ss:$9 sm:$0xff] %v10964
        %11247 = vst [vmem:[%s11072] ss:$9 sm:$0xff] %v10965
        %11248 = vst [vmem:[%s11074] ss:$9 sm:$0xff] %v10966
        %11249 = vst [vmem:[%s11076] ss:$9 sm:$0xff] %v10967
        %11250 = vst [vmem:[%s11078] ss:$9 sm:$0xff] %v10968
        %v11251 = vld [vmem:[#allocation1] sm:$0xff]
        %11252 = vst [vmem:[#allocation1] ss:$9 sm:$0xff] %v10969
        %11253 = vst [vmem:[%s11066] ss:$9 sm:$0xff] %v10970
        %11254 = vst [vmem:[%s11068] ss:$9 sm:$0xff] %v10971
        %11255 = vst [vmem:[%s11070] ss:$9 sm:$0xff] %v10972
        %11256 = vst [vmem:[%s11072] ss:$9 sm:$0xff] %v10973
        %11257 = vst [vmem:[%s11074] ss:$9 sm:$0xff] %v10974
        %11258 = vst [vmem:[%s11076] ss:$9 sm:$0xff] %v10975
        %11259 = vst [vmem:[%s11078] ss:$9 sm:$0xff] %v10976
        %v11260 = vld [vmem:[#allocation1] sm:$0xff]
        %11261 = vst [vmem:[#allocation1] ss:$9 sm:$0xff] %v10977
        %11262 = vst [vmem:[%s11066] ss:$9 sm:$0xff] %v10978
        %11263 = vst [vmem:[%s11068] ss:$9 sm:$0xff] %v10979
        %11264 = vst [vmem:[%s11070] ss:$9 sm:$0xff] %v10980
        %11265 = vst [vmem:[%s11072] ss:$9 sm:$0xff] %v10981
        %11266 = vst [vmem:[%s11074] ss:$9 sm:$0xff] %v10982
        %11267 = vst [vmem:[%s11076] ss:$9 sm:$0xff] %v10983
        %11268 = vst [vmem:[%s11078] ss:$9 sm:$0xff] %v10984
        %v11269 = vld [vmem:[#allocation1] sm:$0xff]
        %11270 = vst [vmem:[#allocation1] ss:$9 sm:$0xff] %v10985
        %11271 = vst [vmem:[%s11066] ss:$9 sm:$0xff] %v10986
        %11272 = vst [vmem:[%s11068] ss:$9 sm:$0xff] %v10987
        %11273 = vst [vmem:[%s11070] ss:$9 sm:$0xff] %v10988
        %11274 = vst [vmem:[%s11072] ss:$9 sm:$0xff] %v10989
        %11275 = vst [vmem:[%s11074] ss:$9 sm:$0xff] %v10990
        %11276 = vst [vmem:[%s11076] ss:$9 sm:$0xff] %v10991
        %11277 = vst [vmem:[%s11078] ss:$9 sm:$0xff] %v10992
        %v11278 = vld [vmem:[#allocation1] sm:$0xff]
        %11279 = vst [vmem:[#allocation1] ss:$9 sm:$0xff] %v10993
        %11280 = vst [vmem:[%s11066] ss:$9 sm:$0xff] %v10994
        %11281 = vst [vmem:[%s11068] ss:$9 sm:$0xff] %v10995
        %11282 = vst [vmem:[%s11070] ss:$9 sm:$0xff] %v10996
        %11283 = vst [vmem:[%s11072] ss:$9 sm:$0xff] %v10997
        %11284 = vst [vmem:[%s11074] ss:$9 sm:$0xff] %v10998
        %11285 = vst [vmem:[%s11076] ss:$9 sm:$0xff] %v10999
        %11286 = vst [vmem:[%s11078] ss:$9 sm:$0xff] %v11000
        %v11287 = vld [vmem:[#allocation1] sm:$0xff]
        %11288 = vst [vmem:[#allocation1] ss:$9 sm:$0xff] %v11001
        %11289 = vst [vmem:[%s11066] ss:$9 sm:$0xff] %v11002
        %11290 = vst [vmem:[%s11068] ss:$9 sm:$0xff] %v11003
        %11291 = vst [vmem:[%s11070] ss:$9 sm:$0xff] %v11004
        %11292 = vst [vmem:[%s11072] ss:$9 sm:$0xff] %v11005
        %11293 = vst [vmem:[%s11074] ss:$9 sm:$0xff] %v11006
        %11294 = vst [vmem:[%s11076] ss:$9 sm:$0xff] %v11007
        %11295 = vst [vmem:[%s11078] ss:$9 sm:$0xff] %v11008
        %v11296 = vld [vmem:[#allocation1] sm:$0xff]
        %11297 = vst [vmem:[#allocation1] ss:$9 sm:$0xff] %v11009
        %11298 = vst [vmem:[%s11066] ss:$9 sm:$0xff] %v11010
        %11299 = vst [vmem:[%s11068] ss:$9 sm:$0xff] %v11011
        %11300 = vst [vmem:[%s11070] ss:$9 sm:$0xff] %v11012
        %11301 = vst [vmem:[%s11072] ss:$9 sm:$0xff] %v11013
        %11302 = vst [vmem:[%s11074] ss:$9 sm:$0xff] %v11014
        %11303 = vst [vmem:[%s11076] ss:$9 sm:$0xff] %v11015
        %11304 = vst [vmem:[%s11078] ss:$9 sm:$0xff] %v11016
        %v11305 = vld [vmem:[#allocation1] sm:$0xff]
        %11306 = vst [vmem:[#allocation1] ss:$9 sm:$0xff] %v11017
        %11307 = vst [vmem:[%s11066] ss:$9 sm:$0xff] %v11018
        %11308 = vst [vmem:[%s11068] ss:$9 sm:$0xff] %v11019
        %11309 = vst [vmem:[%s11070] ss:$9 sm:$0xff] %v11020
        %11310 = vst [vmem:[%s11072] ss:$9 sm:$0xff] %v11021
        %11311 = vst [vmem:[%s11074] ss:$9 sm:$0xff] %v11022
        %11312 = vst [vmem:[%s11076] ss:$9 sm:$0xff] %v11023
        %11313 = vst [vmem:[%s11078] ss:$9 sm:$0xff] %v11024
        %v11314 = vld [vmem:[#allocation1] sm:$0xff]
        %11315 = vst [vmem:[#allocation1] ss:$9 sm:$0xff] %v11025
        %11316 = vst [vmem:[%s11066] ss:$9 sm:$0xff] %v11026
        %11317 = vst [vmem:[%s11068] ss:$9 sm:$0xff] %v11027
        %11318 = vst [vmem:[%s11070] ss:$9 sm:$0xff] %v11028
        %11319 = vst [vmem:[%s11072] ss:$9 sm:$0xff] %v11029
        %11320 = vst [vmem:[%s11074] ss:$9 sm:$0xff] %v11030
        %11321 = vst [vmem:[%s11076] ss:$9 sm:$0xff] %v11031
        %11322 = vst [vmem:[%s11078] ss:$9 sm:$0xff] %v11032
        %v11323 = vld [vmem:[#allocation1] sm:$0xff]
        %11324 = vst [vmem:[#allocation1] ss:$9 sm:$0xff] %v11033
        %11325 = vst [vmem:[%s11066] ss:$9 sm:$0xff] %v11034
        %11326 = vst [vmem:[%s11068] ss:$9 sm:$0xff] %v11035
        %11327 = vst [vmem:[%s11070] ss:$9 sm:$0xff] %v11036
        %11328 = vst [vmem:[%s11072] ss:$9 sm:$0xff] %v11037
        %11329 = vst [vmem:[%s11074] ss:$9 sm:$0xff] %v11038
        %11330 = vst [vmem:[%s11076] ss:$9 sm:$0xff] %v11039
        %11331 = vst [vmem:[%s11078] ss:$9 sm:$0xff] %v11040
        %v11332 = vld [vmem:[#allocation1] sm:$0xff]
        %11333 = vst [vmem:[#allocation1] ss:$9 sm:$0xff] %v11041
        %11334 = vst [vmem:[%s11066] ss:$9 sm:$0xff] %v11042
        %11335 = vst [vmem:[%s11068] ss:$9 sm:$0xff] %v11043
        %11336 = vst [vmem:[%s11070] ss:$9 sm:$0xff] %v11044
        %11337 = vst [vmem:[%s11072] ss:$9 sm:$0xff] %v11045
        %11338 = vst [vmem:[%s11074] ss:$9 sm:$0xff] %v11046
        %11339 = vst [vmem:[%s11076] ss:$9 sm:$0xff] %v11047
        %11340 = vst [vmem:[%s11078] ss:$9 sm:$0xff] %v11048
        %v11341 = vld [vmem:[#allocation1] sm:$0xff]
        %11342 = vst [vmem:[#allocation1] ss:$9 sm:$0xff] %v11049
        %11343 = vst [vmem:[%s11066] ss:$9 sm:$0xff] %v11050
        %11344 = vst [vmem:[%s11068] ss:$9 sm:$0xff] %v11051
        %11345 = vst [vmem:[%s11070] ss:$9 sm:$0xff] %v11052
        %11346 = vst [vmem:[%s11072] ss:$9 sm:$0xff] %v11053
        %11347 = vst [vmem:[%s11074] ss:$9 sm:$0xff] %v11054
        %11348 = vst [vmem:[%s11076] ss:$9 sm:$0xff] %v11055
        %11349 = vst [vmem:[%s11078] ss:$9 sm:$0xff] %v11056
        %v11350 = vld [vmem:[#allocation1] sm:$0xff]
        %11351 = vst [vmem:[#allocation1] ss:$9 sm:$0xff] %v11057
        %11352 = vst [vmem:[%s11066] ss:$9 sm:$0xff] %v11058
        %11353 = vst [vmem:[%s11068] ss:$9 sm:$0xff] %v11059
        %11354 = vst [vmem:[%s11070] ss:$9 sm:$0xff] %v11060
        %11355 = vst [vmem:[%s11072] ss:$9 sm:$0xff] %v11061
        %11356 = vst [vmem:[%s11074] ss:$9 sm:$0xff] %v11062
        %11357 = vst [vmem:[%s11076] ss:$9 sm:$0xff] %v11063
        %11358 = vst [vmem:[%s11078] ss:$9 sm:$0xff] %v11064
        %v11359 = vld [vmem:[#allocation1] sm:$0xff]
        %11360 = vset.pattern.permute.xlu0 0
        %11361 = vperm.xlu0 %11360, %v11080
        %v11362 = vpop.permute.xlu0 %11361
        %11363 = vset.pattern.permute.xlu0 0
        %11364 = vperm.xlu0 %11363, %v11089
        %v11365 = vpop.permute.xlu0 %11364
        %11366 = vset.pattern.permute.xlu0 0
        %11367 = vperm.xlu0 %11366, %v11098
        %v11368 = vpop.permute.xlu0 %11367
        %11369 = vset.pattern.permute.xlu0 0
        %11370 = vperm.xlu0 %11369, %v11107
        %v11371 = vpop.permute.xlu0 %11370
        %11372 = vset.pattern.permute.xlu0 0
        %11373 = vperm.xlu0 %11372, %v11116
        %v11374 = vpop.permute.xlu0 %11373
        %11375 = vset.pattern.permute.xlu0 0
        %11376 = vperm.xlu0 %11375, %v11125
        %v11377 = vpop.permute.xlu0 %11376
        %11378 = vset.pattern.permute.xlu0 0
        %11379 = vperm.xlu0 %11378, %v11134
        %v11380 = vpop.permute.xlu0 %11379
        %11381 = vset.pattern.permute.xlu0 0
        %11382 = vperm.xlu0 %11381, %v11143
        %v11383 = vpop.permute.xlu0 %11382
        %11384 = vset.pattern.permute.xlu0 0
        %11385 = vperm.xlu0 %11384, %v11152
        %v11386 = vpop.permute.xlu0 %11385
        %11387 = vset.pattern.permute.xlu0 0
        %11388 = vperm.xlu0 %11387, %v11161
        %v11389 = vpop.permute.xlu0 %11388
        %11390 = vset.pattern.permute.xlu0 0
        %11391 = vperm.xlu0 %11390, %v11170
        %v11392 = vpop.permute.xlu0 %11391
        %11393 = vset.pattern.permute.xlu0 0
        %11394 = vperm.xlu0 %11393, %v11179
        %v11395 = vpop.permute.xlu0 %11394
        %11396 = vset.pattern.permute.xlu0 0
        %11397 = vperm.xlu0 %11396, %v11188
        %v11398 = vpop.permute.xlu0 %11397
        %11399 = vset.pattern.permute.xlu0 0
        %11400 = vperm.xlu0 %11399, %v11197
        %v11401 = vpop.permute.xlu0 %11400
        %11402 = vset.pattern.permute.xlu0 0
        %11403 = vperm.xlu0 %11402, %v11206
        %v11404 = vpop.permute.xlu0 %11403
        %11405 = vset.pattern.permute.xlu0 0
        %11406 = vperm.xlu0 %11405, %v11215
        %v11407 = vpop.permute.xlu0 %11406
        %11408 = vset.pattern.permute.xlu0 0
        %11409 = vperm.xlu0 %11408, %v11224
        %v11410 = vpop.permute.xlu0 %11409
        %11411 = vset.pattern.permute.xlu0 0
        %11412 = vperm.xlu0 %11411, %v11233
        %v11413 = vpop.permute.xlu0 %11412
        %11414 = vset.pattern.permute.xlu0 0
        %11415 = vperm.xlu0 %11414, %v11242
        %v11416 = vpop.permute.xlu0 %11415
        %11417 = vset.pattern.permute.xlu0 0
        %11418 = vperm.xlu0 %11417, %v11251
        %v11419 = vpop.permute.xlu0 %11418
        %11420 = vset.pattern.permute.xlu0 0
        %11421 = vperm.xlu0 %11420, %v11260
        %v11422 = vpop.permute.xlu0 %11421
        %11423 = vset.pattern.permute.xlu0 0
        %11424 = vperm.xlu0 %11423, %v11269
        %v11425 = vpop.permute.xlu0 %11424
        %11426 = vset.pattern.permute.xlu0 0
        %11427 = vperm.xlu0 %11426, %v11278
        %v11428 = vpop.permute.xlu0 %11427
        %11429 = vset.pattern.permute.xlu0 0
        %11430 = vperm.xlu0 %11429, %v11287
        %v11431 = vpop.permute.xlu0 %11430
        %11432 = vset.pattern.permute.xlu0 0
        %11433 = vperm.xlu0 %11432, %v11296
        %v11434 = vpop.permute.xlu0 %11433
        %11435 = vset.pattern.permute.xlu0 0
        %11436 = vperm.xlu0 %11435, %v11305
        %v11437 = vpop.permute.xlu0 %11436
        %11438 = vset.pattern.permute.xlu0 0
        %11439 = vperm.xlu0 %11438, %v11314
        %v11440 = vpop.permute.xlu0 %11439
        %11441 = vset.pattern.permute.xlu0 0
        %11442 = vperm.xlu0 %11441, %v11323
        %v11443 = vpop.permute.xlu0 %11442
        %11444 = vset.pattern.permute.xlu0 0
        %11445 = vperm.xlu0 %11444, %v11332
        %v11446 = vpop.permute.xlu0 %11445
        %11447 = vset.pattern.permute.xlu0 0
        %11448 = vperm.xlu0 %11447, %v11341
        %v11449 = vpop.permute.xlu0 %11448
        %11450 = vset.pattern.permute.xlu0 0
        %11451 = vperm.xlu0 %11450, %v11350
        %v11452 = vpop.permute.xlu0 %11451
        %11453 = vset.pattern.permute.xlu0 0
        %11454 = vperm.xlu0 %11453, %v11359
        %v11455 = vpop.permute.xlu0 %11454
        %v11456 = vlaneseq
        %v11457 = vand.u32 %v11456, 127
        %v11458 = vperm.slane %v11362, %v11457
        %v11459 = vadd.s32 %v11457, 4294967288
        %v11460 = vperm.slane %v11365, %v11459
        %vm11461 = vcmask 130112
        %v11462 = vsel %vm11461, %v11460, %v11458
        %v11463 = vadd.s32 %v11457, 4294967280
        %v11464 = vperm.slane %v11368, %v11463
        %vm11465 = vcmask 195712
        %v11466 = vsel %vm11465, %v11464, %v11462
        %v11467 = vadd.s32 %v11457, 4294967272
        %v11468 = vperm.slane %v11371, %v11467
        %vm11469 = vcmask 261312
        %v11470 = vsel %vm11469, %v11468, %v11466
        %v11471 = vadd.s32 %v11457, 4294967264
        %v11472 = vperm.slane %v11374, %v11471
        %vm11473 = vcmask 326912
        %v11474 = vsel %vm11473, %v11472, %v11470
        %v11475 = vadd.s32 %v11457, 4294967256
        %v11476 = vperm.slane %v11377, %v11475
        %vm11477 = vcmask 392512
        %v11478 = vsel %vm11477, %v11476, %v11474
        %v11479 = vadd.s32 %v11457, 4294967248
        %v11480 = vperm.slane %v11380, %v11479
        %vm11481 = vcmask 458112
        %v11482 = vsel %vm11481, %v11480, %v11478
        %v11483 = vadd.s32 %v11457, 4294967240
        %v11484 = vperm.slane %v11383, %v11483
        %vm11485 = vcmask 523712
        %v11486 = vsel %vm11485, %v11484, %v11482
        %v11487 = vadd.s32 %v11457, 4294967232
        %v11488 = vperm.slane %v11386, %v11487
        %vm11489 = vcmask 589312
        %v11490 = vsel %vm11489, %v11488, %v11486
        %v11491 = vadd.s32 %v11457, 4294967224
        %v11492 = vperm.slane %v11389, %v11491
        %vm11493 = vcmask 654912
        %v11494 = vsel %vm11493, %v11492, %v11490
        %v11495 = vadd.s32 %v11457, 4294967216
        %v11496 = vperm.slane %v11392, %v11495
        %vm11497 = vcmask 720512
        %v11498 = vsel %vm11497, %v11496, %v11494
        %v11499 = vadd.s32 %v11457, 4294967208
        %v11500 = vperm.slane %v11395, %v11499
        %vm11501 = vcmask 786112
        %v11502 = vsel %vm11501, %v11500, %v11498
        %v11503 = vadd.s32 %v11457, 4294967200
        %v11504 = vperm.slane %v11398, %v11503
        %vm11505 = vcmask 851712
        %v11506 = vsel %vm11505, %v11504, %v11502
        %v11507 = vadd.s32 %v11457, 4294967192
        %v11508 = vperm.slane %v11401, %v11507
        %vm11509 = vcmask 917312
        %v11510 = vsel %vm11509, %v11508, %v11506
        %v11511 = vadd.s32 %v11457, 4294967184
        %v11512 = vperm.slane %v11404, %v11511
        %vm11513 = vcmask 982912
        %v11514 = vsel %vm11513, %v11512, %v11510
        %v11515 = vadd.s32 %v11457, 4294967176
        %v11516 = vperm.slane %v11407, %v11515
        %vm11517 = vcmask 1048512
        %v11518 = vsel %vm11517, %v11516, %v11514
        %v11519 = vperm.slane %v11410, %v11457
        %v11520 = vperm.slane %v11413, %v11459
        %v11521 = vsel %vm11461, %v11520, %v11519
        %v11522 = vperm.slane %v11416, %v11463
        %v11523 = vsel %vm11465, %v11522, %v11521
        %v11524 = vperm.slane %v11419, %v11467
        %v11525 = vsel %vm11469, %v11524, %v11523
        %v11526 = vperm.slane %v11422, %v11471
        %v11527 = vsel %vm11473, %v11526, %v11525
        %v11528 = vperm.slane %v11425, %v11475
        %v11529 = vsel %vm11477, %v11528, %v11527
        %v11530 = vperm.slane %v11428, %v11479
        %v11531 = vsel %vm11481, %v11530, %v11529
        %v11532 = vperm.slane %v11431, %v11483
        %v11533 = vsel %vm11485, %v11532, %v11531
        %v11534 = vperm.slane %v11434, %v11487
        %v11535 = vsel %vm11489, %v11534, %v11533
        %v11536 = vperm.slane %v11437, %v11491
        %v11537 = vsel %vm11493, %v11536, %v11535
        %v11538 = vperm.slane %v11440, %v11495
        %v11539 = vsel %vm11497, %v11538, %v11537
        %v11540 = vperm.slane %v11443, %v11499
        %v11541 = vsel %vm11501, %v11540, %v11539
        %v11542 = vperm.slane %v11446, %v11503
        %v11543 = vsel %vm11505, %v11542, %v11541
        %v11544 = vperm.slane %v11449, %v11507
        %v11545 = vsel %vm11509, %v11544, %v11543
        %v11546 = vperm.slane %v11452, %v11511
        %v11547 = vsel %vm11513, %v11546, %v11545
        %v11548 = vperm.slane %v11455, %v11515
        %v11549 = vsel %vm11517, %v11548, %v11547
        %v11550 = vrot.slane %v11549, 7
        %vm11551 = vcmask 1040384
        %v11552 = vsel %vm11551, %v11518, %v11550
        %v11554 = vlaneseq
        %vm11555 = vcmp.ge.s32.totalorder %v11554, 0
        %vm11556 = vcmp.lt.s32.totalorder %v11554, 256
        %vm11557 = vmand %vm11555, %vm11556
        %11558 = vst.msk [vmem:[%s813] sm:$0x3] %vm11557, %v11552
        %s11559 = sand.u32 %s441, 1
        %s11560 = scalar_lea.sflag [#allocation6], %s11559
        %s11561 = sand.u32 %s441, 1
        %s11562 = smul.addr %s11561, 2
        %s11563 = scalar_lea.vmem [#allocation25], %s11562
        // Predicated region
        $region145: #{tpu_custom_call.1} parent=91 // pred_check
          %p11564 = pneg %p451
        $region146: #{tpu_custom_call.1} parent=91 // pred_check_branch
          %11566 = sbr.rel (%p11564) target = $region148
        $region147: #{tpu_custom_call.1} parent=91 // pred_region
          %s11567 = smul.u32 2, %s45
          %11569 = vsyncadd %s11560, 0
          %s11570 = scalar_lea.hbm %s18, %s11567
          %s11572 = sshll.u32 %s11563, 4
          %s11573 = int_to_ptr.vmem [resolvable:$true] %s11572
          %s11574 = sshll.u32 %s11570, 4
          %s11575 = int_to_ptr.hbm [resolvable:$true] %s11574
          %11577 = dma.vmem_to_hbm [thread:$0]  %s11573, 32, %s11575, %s11560
        $region148: #{tpu_custom_call.1} parent=91 // pred_fallthru
          _
      $region92: #{tpu_custom_call.1} parent=5 // pred_fallthru
        _
      %p11578 = scmp.le.s32.totalorder 2, %s40
      // Predicated region
      $region149: #{tpu_custom_call.1} parent=5 // pred_check
        %p11579 = pneg %p11578
      $region150: #{tpu_custom_call.1} parent=5 // pred_check_branch
        %11581 = sbr.rel (%p11579) target = $region152
      $region151: #{tpu_custom_call.1} parent=5 // pred_region
        %s11582 = ssub.s32 %s40, 2
        // Predicated region
        $region153: #{tpu_custom_call.1} parent=151 // pred_check
          %p11583 = pneg %p457
        $region154: #{tpu_custom_call.1} parent=151 // pred_check_branch
          %11585 = sbr.rel (%p11583) target = $region156
        $region155: #{tpu_custom_call.1} parent=151 // pred_region
          %s11586 = sand.u32 %s442, 1
          %s11587 = scalar_lea.sflag [#allocation6], %s11586
          %s11588 = sand.u32 %s442, 1
          %s11589 = smul.addr %s11588, 2
          %s11590 = scalar_lea.vmem [#allocation25], %s11589
          %11592 = dma.done %s11587, 32
        $region156: #{tpu_custom_call.1} parent=151 // pred_fallthru
          _
      $region152: #{tpu_custom_call.1} parent=5 // pred_fallthru
        _
    $region6: #{tpu_custom_call.1} parent=1 // loop_footer
      %s44 = sadd.s32 1, %s40
    $region7: #{tpu_custom_call.1} parent=1 // loop_footer_branch
      %39 = sbr.rel target = $region3
    $region8: #{tpu_custom_call.1} parent=1 // loop_exit
      _
    %11593 = vsyncpa [#allocation5], 1
    %s11594 = scalar_lea.sflag [#allocation5], 1
    %11595 = vsyncpa %s11594, 1
    %11596 = vsyncpa [#allocation8], 1
    %s11597 = scalar_lea.sflag [#allocation8], 1
    %11598 = vsyncpa %s11597, 1
    %11599 = vsyncpa [#allocation11], 1
    %11600 = vsyncpa [#allocation14], 1
    %11601 = vsyncpa [#allocation17], 1
    %11602 = vsyncpa [#allocation20], 1
    %11603 = vsyncpa [#allocation23], 1
    %11604 = vsyncpa [#allocation6], 1
    %s11605 = scalar_lea.sflag [#allocation6], 1
    %11606 = vsyncpa %s11605, 1

</llo_original>
